<compile_context>
chip_gen: v5e
topology: v5e:2x2
jax: 0.10.0
libtpu: 0.0.40
codegen_flags: <defaults>
</compile_context>

<pallas_src>
import functools

import jax
import jax.numpy as jnp
from jax.experimental import pallas as pl
from jax.experimental.pallas import tpu as pltpu


# ---------------------------------------------------------------------------
# Dimensions (padded to multiples of 128 for lane alignment)
# ---------------------------------------------------------------------------
D_IN, D_H1, D_H2, D_H3, D_OUT = 773, 1048, 500, 50, 1


def _round_up(x, m):
    return (x + m - 1) // m * m


P_IN = _round_up(D_IN, 128)    # 896
P_H1 = _round_up(D_H1, 128)    # 1152
P_H2 = _round_up(D_H2, 128)    # 512
P_H3 = _round_up(D_H3, 128)    # 128
P_OUT = _round_up(D_OUT, 128)  # 128


# ---------------------------------------------------------------------------
# Kernel: full 4-layer MLP forward on one batch tile (everything fits VMEM)
# ---------------------------------------------------------------------------
def mlp_kernel(x_ref,
               w1_ref, b1_ref,
               w2_ref, b2_ref,
               w3_ref, b3_ref,
               w4_ref, b4_ref,
               o_ref):
    x = x_ref[...]                                            # (Bt, P_IN) bf16

    # fc1 + ReLU   (dropout = identity in eval mode)
    h1 = jnp.dot(x, w1_ref[...], preferred_element_type=jnp.float32) + b1_ref[...]
    h1 = jnp.maximum(h1, 0.0).astype(jnp.bfloat16)

    # fc2 + ReLU
    h2 = jnp.dot(h1, w2_ref[...], preferred_element_type=jnp.float32) + b2_ref[...]
    h2 = jnp.maximum(h2, 0.0).astype(jnp.bfloat16)

    # fc3 + ReLU
    h3 = jnp.dot(h2, w3_ref[...], preferred_element_type=jnp.float32) + b3_ref[...]
    h3 = jnp.maximum(h3, 0.0).astype(jnp.bfloat16)

    # fc4 + sigmoid (clip avoids exp overflow; divide goes to the EUP)
    h4 = jnp.dot(h3, w4_ref[...], preferred_element_type=jnp.float32) + b4_ref[...]
    z = jnp.exp(-jnp.clip(h4, -30.0, 30.0))
    o_ref[...] = pl.reciprocal(1.0 + z, approx=True)


# ---------------------------------------------------------------------------
# One-time parameter preparation: pad to lane-aligned shapes, cast to bf16
# ---------------------------------------------------------------------------
def _pad2d(a, rows, cols, dtype=None):
    out = jnp.pad(a, ((0, rows - a.shape[0]), (0, cols - a.shape[1])))
    return out.astype(dtype) if dtype is not None else out


def prepare_params(params):
    """Pad/cast weights once, outside the per-call forward."""
    (w1, b1), (w2, b2), (w3, b3), (w4, b4) = params
    return (
        _pad2d(w1, P_IN, P_H1, jnp.bfloat16),
        _pad2d(b1.reshape(1, -1), 1, P_H1, jnp.float32),
        _pad2d(w2, P_H1, P_H2, jnp.bfloat16),
        _pad2d(b2.reshape(1, -1), 1, P_H2, jnp.float32),
        _pad2d(w3, P_H2, P_H3, jnp.bfloat16),
        _pad2d(b3.reshape(1, -1), 1, P_H3, jnp.float32),
        _pad2d(w4, P_H3, P_OUT, jnp.bfloat16),
        _pad2d(b4.reshape(1, -1), 1, P_OUT, jnp.float32),
    )


# ---------------------------------------------------------------------------
# Forward wrapper
# ---------------------------------------------------------------------------
@functools.partial(jax.jit, static_argnames=("batch_tile",))
def _net_forward_impl(x, padded_params, batch_tile):
    B = x.shape[0]
    B_pad = _round_up(max(B, batch_tile), batch_tile)

    # Only the activations are padded per call (weights were prepared once).
    x_p = _pad2d(x, B_pad, P_IN, jnp.bfloat16)

    def rep(shape):
        # Constant index map: block never changes across the grid -> a single
        # VMEM buffer is enough (no "next block" to prefetch).
        return pl.BlockSpec(shape, lambda i: (0, 0), pipeline_mode=pl.Buffered(1))

    out_p = pl.pallas_call(
        mlp_kernel,
        out_shape=jax.ShapeDtypeStruct((B_pad, P_OUT), jnp.float32),
        grid_spec=pltpu.PrefetchScalarGridSpec(
            num_scalar_prefetch=0,
            grid=(B_pad // batch_tile,),
            in_specs=[
                pl.BlockSpec((batch_tile, P_IN), lambda i: (i, 0)),
                rep((P_IN, P_H1)), rep((1, P_H1)),
                rep((P_H1, P_H2)), rep((1, P_H2)),
                rep((P_H2, P_H3)), rep((1, P_H3)),
                rep((P_H3, P_OUT)), rep((1, P_OUT)),
            ],
            out_specs=pl.BlockSpec((batch_tile, P_OUT), lambda i: (i, 0)),
        ),
        compiler_params=pltpu.CompilerParams(
            dimension_semantics=("parallel",),
            vmem_limit_bytes=48 * 1024 * 1024,
        ),
    )(x_p, *padded_params)

    return out_p[:B, :D_OUT]


def net_forward(x, padded_params, batch_tile=None):
    """x: (B, 773) float32 -> (B, 1) float32 (uses bf16 MXU internally)."""
    if batch_tile is None:
        # Fill the MXU M dimension (floor 128); cap at 256 so large batches
        # still produce >=2 grid steps (megacore sharding on v7x).
        batch_tile = min(256, _round_up(max(x.shape[0], 1), 128))
    return _net_forward_impl(x, padded_params, batch_tile)


# ---------------------------------------------------------------------------
# Deterministic parameter initialization (PyTorch nn.Linear-style uniform)
# ---------------------------------------------------------------------------
def init_params(key):
    dims = [(D_IN, D_H1), (D_H1, D_H2), (D_H2, D_H3), (D_H3, D_OUT)]
    params = []
    for (fan_in, fan_out) in dims:
        key, kw, kb = jax.random.split(key, 3)
        bound = 1.0 / jnp.sqrt(fan_in)
        w = jax.random.uniform(kw, (fan_in, fan_out), jnp.float32, -bound, bound)
        b = jax.random.uniform(kb, (fan_out,), jnp.float32, -bound, bound)
        params.append((w, b))
    return params


# ---------------------------------------------------------------------------
# Pure-JAX f32 reference for a sanity check
# ---------------------------------------------------------------------------
def net_forward_ref(x, params):
    (w1, b1), (w2, b2), (w3, b3), (w4, b4) = params
    h = jnp.maximum(x @ w1 + b1, 0.0)
    h = jnp.maximum(h @ w2 + b2, 0.0)
    h = jnp.maximum(h @ w3 + b3, 0.0)
    return jax.nn.sigmoid(h @ w4 + b4)


if __name__ == "__main__":
    key = jax.random.PRNGKey(0)
    key, kx = jax.random.split(key)

    params = init_params(key)
    padded_params = prepare_params(params)          # one-time pad + bf16 cast

    x = jax.random.normal(kx, (4, D_IN), jnp.float32)  # small batch = 4

    out = net_forward(x, padded_params)
    out = jax.block_until_ready(out)

    ref = net_forward_ref(x, params)
    assert out.shape == (4, 1), out.shape
    max_err = jnp.max(jnp.abs(out - ref))
    # bf16 matmuls + approx reciprocal vs f32 reference -> loose tolerance.
    assert max_err < 2e-2, f"max abs err = {max_err}"

    print("KERNEL_OK")
</pallas_src>

<mosaic_0001>
module attributes {stable_mosaic.version = 11 : i64} {
  func.func @mlp_kernel(%arg0: i32, %arg1: memref<128x896xbf16, #tpu.memory_space<vmem>>, %arg2: memref<896x1152xbf16, #tpu.memory_space<vmem>>, %arg3: memref<1x1152xf32, #tpu.memory_space<vmem>>, %arg4: memref<1152x512xbf16, #tpu.memory_space<vmem>>, %arg5: memref<1x512xf32, #tpu.memory_space<vmem>>, %arg6: memref<512x128xbf16, #tpu.memory_space<vmem>>, %arg7: memref<1x128xf32, #tpu.memory_space<vmem>>, %arg8: memref<128x128xbf16, #tpu.memory_space<vmem>>, %arg9: memref<1x128xf32, #tpu.memory_space<vmem>>, %arg10: memref<128x128xf32, #tpu.memory_space<vmem>>) attributes {dimension_semantics = [#tpu.dimension_semantics<parallel>], iteration_bounds = array<i64: 1>, scalar_prefetch = 0 : i64, scratch_operands = 0 : i64, tpu.core_type = #tpu.core_type<tc>, window_params = [{transform_indices = @transform_0, window_bounds = array<i64: 128, 896>}, {pipeline_mode = #tpu.pipeline_mode<synchronous>, transform_indices = @transform_1, window_bounds = array<i64: 896, 1152>}, {pipeline_mode = #tpu.pipeline_mode<synchronous>, transform_indices = @transform_2, window_bounds = array<i64: 1, 1152>}, {pipeline_mode = #tpu.pipeline_mode<synchronous>, transform_indices = @transform_3, window_bounds = array<i64: 1152, 512>}, {pipeline_mode = #tpu.pipeline_mode<synchronous>, transform_indices = @transform_4, window_bounds = array<i64: 1, 512>}, {pipeline_mode = #tpu.pipeline_mode<synchronous>, transform_indices = @transform_5, window_bounds = array<i64: 512, 128>}, {pipeline_mode = #tpu.pipeline_mode<synchronous>, transform_indices = @transform_6, window_bounds = array<i64: 1, 128>}, {pipeline_mode = #tpu.pipeline_mode<synchronous>, transform_indices = @transform_7, window_bounds = array<i64: 128, 128>}, {pipeline_mode = #tpu.pipeline_mode<synchronous>, transform_indices = @transform_8, window_bounds = array<i64: 1, 128>}, {transform_indices = @transform_9, window_bounds = array<i64: 128, 128>}]} {
    %c0 = arith.constant 0 : index
    %c0_0 = arith.constant 0 : index
    %0 = vector.load %arg1[%c0, %c0_0] : memref<128x896xbf16, #tpu.memory_space<vmem>>, vector<128x896xbf16>
    %c0_1 = arith.constant 0 : index
    %c0_2 = arith.constant 0 : index
    %1 = vector.load %arg2[%c0_1, %c0_2] : memref<896x1152xbf16, #tpu.memory_space<vmem>>, vector<896x1152xbf16>
    %cst = arith.constant dense<0.000000e+00> : vector<128x1152xf32>
    %2 = tpu.matmul %0, %1, %cst {dimension_numbers = #tpu.dot_dimension_numbers<[1], [0], [0], [1], [0, 0, 1, 1], [], []>} : vector<128x896xbf16>, vector<896x1152xbf16>, vector<128x1152xf32> -> vector<128x1152xf32>
    %c0_3 = arith.constant 0 : index
    %c0_4 = arith.constant 0 : index
    %3 = vector.load %arg3[%c0_3, %c0_4] : memref<1x1152xf32, #tpu.memory_space<vmem>>, vector<1x1152xf32>
    %4 = vector.broadcast %3 : vector<1x1152xf32> to vector<128x1152xf32>
    %5 = arith.addf %2, %4 : vector<128x1152xf32>
    %cst_5 = arith.constant 0.000000e+00 : f32
    %6 = vector.broadcast %cst_5 : f32 to vector<128x1152xf32>
    %7 = arith.maximumf %5, %6 : vector<128x1152xf32>
    %8 = arith.truncf %7 : vector<128x1152xf32> to vector<128x1152xbf16>
    %c0_6 = arith.constant 0 : index
    %c0_7 = arith.constant 0 : index
    %9 = vector.load %arg4[%c0_6, %c0_7] : memref<1152x512xbf16, #tpu.memory_space<vmem>>, vector<1152x512xbf16>
    %cst_8 = arith.constant dense<0.000000e+00> : vector<128x512xf32>
    %10 = tpu.matmul %8, %9, %cst_8 {dimension_numbers = #tpu.dot_dimension_numbers<[1], [0], [0], [1], [0, 0, 1, 1], [], []>} : vector<128x1152xbf16>, vector<1152x512xbf16>, vector<128x512xf32> -> vector<128x512xf32>
    %c0_9 = arith.constant 0 : index
    %c0_10 = arith.constant 0 : index
    %11 = vector.load %arg5[%c0_9, %c0_10] : memref<1x512xf32, #tpu.memory_space<vmem>>, vector<1x512xf32>
    %12 = vector.broadcast %11 : vector<1x512xf32> to vector<128x512xf32>
    %13 = arith.addf %10, %12 : vector<128x512xf32>
    %cst_11 = arith.constant 0.000000e+00 : f32
    %14 = vector.broadcast %cst_11 : f32 to vector<128x512xf32>
    %15 = arith.maximumf %13, %14 : vector<128x512xf32>
    %16 = arith.truncf %15 : vector<128x512xf32> to vector<128x512xbf16>
    %c0_12 = arith.constant 0 : index
    %c0_13 = arith.constant 0 : index
    %17 = vector.load %arg6[%c0_12, %c0_13] : memref<512x128xbf16, #tpu.memory_space<vmem>>, vector<512x128xbf16>
    %cst_14 = arith.constant dense<0.000000e+00> : vector<128x128xf32>
    %18 = tpu.matmul %16, %17, %cst_14 {dimension_numbers = #tpu.dot_dimension_numbers<[1], [0], [0], [1], [0, 0, 1, 1], [], []>} : vector<128x512xbf16>, vector<512x128xbf16>, vector<128x128xf32> -> vector<128x128xf32>
    %c0_15 = arith.constant 0 : index
    %c0_16 = arith.constant 0 : index
    %19 = vector.load %arg7[%c0_15, %c0_16] : memref<1x128xf32, #tpu.memory_space<vmem>>, vector<1x128xf32>
    %20 = vector.broadcast %19 : vector<1x128xf32> to vector<128x128xf32>
    %21 = arith.addf %18, %20 : vector<128x128xf32>
    %cst_17 = arith.constant 0.000000e+00 : f32
    %22 = vector.broadcast %cst_17 : f32 to vector<128x128xf32>
    %23 = arith.maximumf %21, %22 : vector<128x128xf32>
    %24 = arith.truncf %23 : vector<128x128xf32> to vector<128x128xbf16>
    %c0_18 = arith.constant 0 : index
    %c0_19 = arith.constant 0 : index
    %25 = vector.load %arg8[%c0_18, %c0_19] : memref<128x128xbf16, #tpu.memory_space<vmem>>, vector<128x128xbf16>
    %cst_20 = arith.constant dense<0.000000e+00> : vector<128x128xf32>
    %26 = tpu.matmul %24, %25, %cst_20 {dimension_numbers = #tpu.dot_dimension_numbers<[1], [0], [0], [1], [0, 0, 1, 1], [], []>} : vector<128x128xbf16>, vector<128x128xbf16>, vector<128x128xf32> -> vector<128x128xf32>
    %c0_21 = arith.constant 0 : index
    %c0_22 = arith.constant 0 : index
    %27 = vector.load %arg9[%c0_21, %c0_22] : memref<1x128xf32, #tpu.memory_space<vmem>>, vector<1x128xf32>
    %28 = vector.broadcast %27 : vector<1x128xf32> to vector<128x128xf32>
    %29 = arith.addf %26, %28 : vector<128x128xf32>
    %cst_23 = arith.constant -3.000000e+01 : f32
    %cst_24 = arith.constant 3.000000e+01 : f32
    %30 = vector.broadcast %cst_23 : f32 to vector<128x128xf32>
    %31 = arith.maximumf %30, %29 : vector<128x128xf32>
    %32 = vector.broadcast %cst_24 : f32 to vector<128x128xf32>
    %33 = arith.minimumf %32, %31 : vector<128x128xf32>
    %cst_25 = arith.constant 0.000000e+00 : f32
    %34 = vector.broadcast %cst_25 : f32 to vector<128x128xf32>
    %35 = arith.subf %34, %33 : vector<128x128xf32>
    %36 = math.exp %35 : vector<128x128xf32>
    %cst_26 = arith.constant 1.000000e+00 : f32
    %37 = vector.broadcast %cst_26 : f32 to vector<128x128xf32>
    %38 = arith.addf %37, %36 : vector<128x128xf32>
    %39 = tpu.reciprocal %38 {approx = true} : vector<128x128xf32> -> vector<128x128xf32>
    %c0_27 = arith.constant 0 : index
    %c0_28 = arith.constant 0 : index
    %40 = vector.load %arg10[%c0_27, %c0_28] : memref<128x128xf32, #tpu.memory_space<vmem>>, vector<128x128xf32>
    tpu.vector_store %arg10[%c0_27, %c0_28], %39 {strides = array<i32>} : memref<128x128xf32, #tpu.memory_space<vmem>>, vector<128x128xf32>,
    return
  }
  func.func @transform_0(%arg0: i32) -> (i32, i32) {
    %c0_i32 = arith.constant 0 : i32
    %c0_i32_0 = arith.constant 0 : i32
    return %arg0, %c0_i32 : i32, i32
  }
  func.func @transform_1(%arg0: i32) -> (i32, i32) {
    %c0_i32 = arith.constant 0 : i32
    %c0_i32_0 = arith.constant 0 : i32
    %c0_i32_1 = arith.constant 0 : i32
    return %c0_i32, %c0_i32_0 : i32, i32
  }
  func.func @transform_2(%arg0: i32) -> (i32, i32) {
    %c0_i32 = arith.constant 0 : i32
    %c0_i32_0 = arith.constant 0 : i32
    %c0_i32_1 = arith.constant 0 : i32
    return %c0_i32, %c0_i32_0 : i32, i32
  }
  func.func @transform_3(%arg0: i32) -> (i32, i32) {
    %c0_i32 = arith.constant 0 : i32
    %c0_i32_0 = arith.constant 0 : i32
    %c0_i32_1 = arith.constant 0 : i32
    return %c0_i32, %c0_i32_0 : i32, i32
  }
  func.func @transform_4(%arg0: i32) -> (i32, i32) {
    %c0_i32 = arith.constant 0 : i32
    %c0_i32_0 = arith.constant 0 : i32
    %c0_i32_1 = arith.constant 0 : i32
    return %c0_i32, %c0_i32_0 : i32, i32
  }
  func.func @transform_5(%arg0: i32) -> (i32, i32) {
    %c0_i32 = arith.constant 0 : i32
    %c0_i32_0 = arith.constant 0 : i32
    %c0_i32_1 = arith.constant 0 : i32
    return %c0_i32, %c0_i32_0 : i32, i32
  }
  func.func @transform_6(%arg0: i32) -> (i32, i32) {
    %c0_i32 = arith.constant 0 : i32
    %c0_i32_0 = arith.constant 0 : i32
    %c0_i32_1 = arith.constant 0 : i32
    return %c0_i32, %c0_i32_0 : i32, i32
  }
  func.func @transform_7(%arg0: i32) -> (i32, i32) {
    %c0_i32 = arith.constant 0 : i32
    %c0_i32_0 = arith.constant 0 : i32
    %c0_i32_1 = arith.constant 0 : i32
    return %c0_i32, %c0_i32_0 : i32, i32
  }
  func.func @transform_8(%arg0: i32) -> (i32, i32) {
    %c0_i32 = arith.constant 0 : i32
    %c0_i32_0 = arith.constant 0 : i32
    %c0_i32_1 = arith.constant 0 : i32
    return %c0_i32, %c0_i32_0 : i32, i32
  }
  func.func @transform_9(%arg0: i32) -> (i32, i32) {
    %c0_i32 = arith.constant 0 : i32
    %c0_i32_0 = arith.constant 0 : i32
    return %arg0, %c0_i32 : i32, i32
  }
}

</mosaic_0001>

<llo_original>
// kernel: _net_forward_impl.1
$region0: #{_net_forward_impl.1}
  #allocation0 [shape = 'u32[]', space=smem, size = 0x4, offset = 0x4, fixed_abs, tag = 'smem constant byte address 0x4 - core index']
  #allocation1 [shape = 'u32[72,128]{1,0:T(1,128)}', space=vmem, size = 0x9000, scoped, tag = 'internal scratch']
  %s0 = inlined_call_operand.vmem [shape: bf16[128,896], index: 0, kind: input, shape index: {}]
  %s1 = inlined_call_operand.hbm [shape: bf16[896,1152], index: 1, kind: input, shape index: {}]
  %s2 = inlined_call_operand.hbm [shape: f32[1,1152], index: 2, kind: input, shape index: {}]
  %s3 = inlined_call_operand.hbm [shape: bf16[1152,512], index: 3, kind: input, shape index: {}]
  %s4 = inlined_call_operand.hbm [shape: f32[1,512], index: 4, kind: input, shape index: {}]
  %s5 = inlined_call_operand.hbm [shape: bf16[512,128], index: 5, kind: input, shape index: {}]
  %s6 = inlined_call_operand.hbm [shape: f32[1,128], index: 6, kind: input, shape index: {}]
  %s7 = inlined_call_operand.hbm [shape: bf16[128,128], index: 7, kind: input, shape index: {}]
  %s8 = inlined_call_operand.hbm [shape: f32[1,128], index: 8, kind: input, shape index: {}]
  %s9 = inlined_call_operand.vmem [shape: f32[128,128], index: 9, kind: output, shape index: {}]
  %s10 = sld [smem:[#allocation0]]
  $region78: #{_net_forward_impl.1} parent=0
    _
  %s12 = ssub.s32 1, %s10
  %s13 = scalar_select 0, %s12, %s10
  $region1: #{_net_forward_impl.1} parent=0
    #allocation2 [shape = 'u8[2064384]{0}', space=vmem, size = 0x1f8000, scoped, tag = 'input window, operand 1, single buffered']
    #allocation3 [shape = 's32[1]{0}', space=sflag, size = 0x4, scoped, tag = 'scoped memory for _net_forward_impl.1']
    #allocation4 [shape = 'u8[4608]{0}', space=vmem, size = 0x1400, scoped, tag = 'input window, operand 2, single buffered']
    #allocation5 [shape = 's32[1]{0}', space=sflag, size = 0x4, scoped, tag = 'scoped memory for _net_forward_impl.1']
    #allocation6 [shape = 'u8[1179648]{0}', space=vmem, size = 0x120000, scoped, tag = 'input window, operand 3, single buffered']
    #allocation7 [shape = 'u8[2048]{0}', space=vmem, size = 0x800, scoped, tag = 'input window, operand 4, single buffered']
    #allocation8 [shape = 's32[1]{0}', space=sflag, size = 0x4, scoped, tag = 'scoped memory for _net_forward_impl.1']
    #allocation9 [shape = 'u8[131072]{0}', space=vmem, size = 0x20000, scoped, tag = 'input window, operand 5, single buffered']
    #allocation10 [shape = 'u8[512]{0}', space=vmem, size = 0x400, scoped, tag = 'input window, operand 6, single buffered']
    #allocation11 [shape = 's32[1]{0}', space=sflag, size = 0x4, scoped, tag = 'scoped memory for _net_forward_impl.1']
    #allocation12 [shape = 'u8[32768]{0}', space=vmem, size = 0x8000, scoped, tag = 'input window, operand 7, single buffered']
    #allocation13 [shape = 'u8[512]{0}', space=vmem, size = 0x400, scoped, tag = 'input window, operand 8, single buffered']
    #allocation14 [shape = 's32[1]{0}', space=sflag, size = 0x4, scoped, tag = 'scoped memory for _net_forward_impl.1']
    %14 = vsyncpa [#allocation3], 0
    %15 = vsyncpa [#allocation5], 0
    %16 = vsyncpa [#allocation8], 0
    %17 = vsyncpa [#allocation11], 0
    %18 = vsyncpa [#allocation14], 0
    // Predicated region
    $region2: #{_net_forward_impl.1} parent=1 // pred_check
      _
    $region3: #{_net_forward_impl.1} parent=1 // pred_check_branch
      %20 = sbr.rel (0) target = $region5
    $region4: #{_net_forward_impl.1} parent=1 // pred_region
      _
    $region5: #{_net_forward_impl.1} parent=1 // pred_fallthru
      _
    // Predicated region
    $region6: #{_net_forward_impl.1} parent=1 // pred_check
      _
    $region7: #{_net_forward_impl.1} parent=1 // pred_check_branch
      %22 = sbr.rel (0) target = $region9
    $region8: #{_net_forward_impl.1} parent=1 // pred_region
      %24 = vsyncadd [#allocation3], 0
      %s25 = sshll.u32 %s1, 4
      %s26 = int_to_ptr.hbm [resolvable:$true] %s25
      %s27 = sshll.u32 [#allocation2], 4
      %s28 = int_to_ptr.vmem [resolvable:$true] %s27
      %33 = dma.hbm_to_vmem [thread:$0]  %s26, 64512, %s28, [#allocation3], 576, 576, 36
    $region9: #{_net_forward_impl.1} parent=1 // pred_fallthru
      _
    // Predicated region
    $region10: #{_net_forward_impl.1} parent=1 // pred_check
      _
    $region11: #{_net_forward_impl.1} parent=1 // pred_check_branch
      %35 = sbr.rel (0) target = $region13
    $region12: #{_net_forward_impl.1} parent=1 // pred_region
      %37 = vsyncadd [#allocation5], 0
      %s39 = sshll.u32 %s2, 4
      %s40 = int_to_ptr.hbm [resolvable:$true] %s39
      %s41 = sshll.u32 [#allocation4], 4
      %s42 = int_to_ptr.vmem [resolvable:$true] %s41
      %44 = dma.hbm_to_vmem [thread:$0]  %s40, 144, %s42, [#allocation5]
    $region13: #{_net_forward_impl.1} parent=1 // pred_fallthru
      _
    // Predicated region
    $region14: #{_net_forward_impl.1} parent=1 // pred_check
      _
    $region15: #{_net_forward_impl.1} parent=1 // pred_check_branch
      %46 = sbr.rel (0) target = $region17
    $region16: #{_net_forward_impl.1} parent=1 // pred_region
      %48 = vsyncadd [#allocation5], 0
      %s49 = sshll.u32 %s3, 4
      %s50 = int_to_ptr.hbm [resolvable:$true] %s49
      %s51 = sshll.u32 [#allocation6], 4
      %s52 = int_to_ptr.vmem [resolvable:$true] %s51
      %57 = dma.hbm_to_vmem [thread:$0]  %s50, 36864, %s52, [#allocation5], 256, 256, 16
    $region17: #{_net_forward_impl.1} parent=1 // pred_fallthru
      _
    // Predicated region
    $region18: #{_net_forward_impl.1} parent=1 // pred_check
      _
    $region19: #{_net_forward_impl.1} parent=1 // pred_check_branch
      %59 = sbr.rel (0) target = $region21
    $region20: #{_net_forward_impl.1} parent=1 // pred_region
      %61 = vsyncadd [#allocation8], 0
      %s63 = sshll.u32 %s4, 4
      %s64 = int_to_ptr.hbm [resolvable:$true] %s63
      %s65 = sshll.u32 [#allocation7], 4
      %s66 = int_to_ptr.vmem [resolvable:$true] %s65
      %68 = dma.hbm_to_vmem [thread:$0]  %s64, 64, %s66, [#allocation8]
    $region21: #{_net_forward_impl.1} parent=1 // pred_fallthru
      _
    // Predicated region
    $region22: #{_net_forward_impl.1} parent=1 // pred_check
      _
    $region23: #{_net_forward_impl.1} parent=1 // pred_check_branch
      %70 = sbr.rel (0) target = $region25
    $region24: #{_net_forward_impl.1} parent=1 // pred_region
      %72 = vsyncadd [#allocation8], 0
      %s73 = sshll.u32 %s5, 4
      %s74 = int_to_ptr.hbm [resolvable:$true] %s73
      %s75 = sshll.u32 [#allocation9], 4
      %s76 = int_to_ptr.vmem [resolvable:$true] %s75
      %81 = dma.hbm_to_vmem [thread:$0]  %s74, 4096, %s76, [#allocation8], 64, 64, 4
    $region25: #{_net_forward_impl.1} parent=1 // pred_fallthru
      _
    // Predicated region
    $region26: #{_net_forward_impl.1} parent=1 // pred_check
      _
    $region27: #{_net_forward_impl.1} parent=1 // pred_check_branch
      %83 = sbr.rel (0) target = $region29
    $region28: #{_net_forward_impl.1} parent=1 // pred_region
      %85 = vsyncadd [#allocation11], 0
      %s87 = sshll.u32 %s6, 4
      %s88 = int_to_ptr.hbm [resolvable:$true] %s87
      %s89 = sshll.u32 [#allocation10], 4
      %s90 = int_to_ptr.vmem [resolvable:$true] %s89
      %92 = dma.hbm_to_vmem [thread:$0]  %s88, 16, %s90, [#allocation11]
    $region29: #{_net_forward_impl.1} parent=1 // pred_fallthru
      _
    // Predicated region
    $region30: #{_net_forward_impl.1} parent=1 // pred_check
      _
    $region31: #{_net_forward_impl.1} parent=1 // pred_check_branch
      %94 = sbr.rel (0) target = $region33
    $region32: #{_net_forward_impl.1} parent=1 // pred_region
      %96 = vsyncadd [#allocation11], 0
      %s97 = sshll.u32 %s7, 4
      %s98 = int_to_ptr.hbm [resolvable:$true] %s97
      %s99 = sshll.u32 [#allocation12], 4
      %s100 = int_to_ptr.vmem [resolvable:$true] %s99
      %105 = dma.hbm_to_vmem [thread:$0]  %s98, 1024, %s100, [#allocation11], 64, 64, 4
    $region33: #{_net_forward_impl.1} parent=1 // pred_fallthru
      _
    // Predicated region
    $region34: #{_net_forward_impl.1} parent=1 // pred_check
      _
    $region35: #{_net_forward_impl.1} parent=1 // pred_check_branch
      %107 = sbr.rel (0) target = $region37
    $region36: #{_net_forward_impl.1} parent=1 // pred_region
      %109 = vsyncadd [#allocation14], 0
      %s111 = sshll.u32 %s8, 4
      %s112 = int_to_ptr.hbm [resolvable:$true] %s111
      %s113 = sshll.u32 [#allocation13], 4
      %s114 = int_to_ptr.vmem [resolvable:$true] %s113
      %116 = dma.hbm_to_vmem [thread:$0]  %s112, 16, %s114, [#allocation14]
    $region37: #{_net_forward_impl.1} parent=1 // pred_fallthru
      _
    // Predicated region
    $region38: #{_net_forward_impl.1} parent=1 // pred_check
      _
    $region39: #{_net_forward_impl.1} parent=1 // pred_check_branch
      %118 = sbr.rel (0) target = $region41
    $region40: #{_net_forward_impl.1} parent=1 // pred_region
      %120 = dma.done [#allocation3], 64512
    $region41: #{_net_forward_impl.1} parent=1 // pred_fallthru
      _
    // Predicated region
    $region42: #{_net_forward_impl.1} parent=1 // pred_check
      _
    $region43: #{_net_forward_impl.1} parent=1 // pred_check_branch
      %122 = sbr.rel (0) target = $region45
    $region44: #{_net_forward_impl.1} parent=1 // pred_region
      %124 = dma.done [#allocation5], 144
    $region45: #{_net_forward_impl.1} parent=1 // pred_fallthru
      _
    // Predicated region
    $region46: #{_net_forward_impl.1} parent=1 // pred_check
      _
    $region47: #{_net_forward_impl.1} parent=1 // pred_check_branch
      %126 = sbr.rel (0) target = $region49
    $region48: #{_net_forward_impl.1} parent=1 // pred_region
      %128 = dma.done [#allocation5], 36864
    $region49: #{_net_forward_impl.1} parent=1 // pred_fallthru
      _
    // Predicated region
    $region50: #{_net_forward_impl.1} parent=1 // pred_check
      _
    $region51: #{_net_forward_impl.1} parent=1 // pred_check_branch
      %130 = sbr.rel (0) target = $region53
    $region52: #{_net_forward_impl.1} parent=1 // pred_region
      %132 = dma.done [#allocation8], 64
    $region53: #{_net_forward_impl.1} parent=1 // pred_fallthru
      _
    // Predicated region
    $region54: #{_net_forward_impl.1} parent=1 // pred_check
      _
    $region55: #{_net_forward_impl.1} parent=1 // pred_check_branch
      %134 = sbr.rel (0) target = $region57
    $region56: #{_net_forward_impl.1} parent=1 // pred_region
      %136 = dma.done [#allocation8], 4096
    $region57: #{_net_forward_impl.1} parent=1 // pred_fallthru
      _
    // Predicated region
    $region58: #{_net_forward_impl.1} parent=1 // pred_check
      _
    $region59: #{_net_forward_impl.1} parent=1 // pred_check_branch
      %138 = sbr.rel (0) target = $region61
    $region60: #{_net_forward_impl.1} parent=1 // pred_region
      %140 = dma.done [#allocation11], 16
    $region61: #{_net_forward_impl.1} parent=1 // pred_fallthru
      _
    // Predicated region
    $region62: #{_net_forward_impl.1} parent=1 // pred_check
      _
    $region63: #{_net_forward_impl.1} parent=1 // pred_check_branch
      %142 = sbr.rel (0) target = $region65
    $region64: #{_net_forward_impl.1} parent=1 // pred_region
      %144 = dma.done [#allocation11], 1024
    $region65: #{_net_forward_impl.1} parent=1 // pred_fallthru
      _
    // Predicated region
    $region66: #{_net_forward_impl.1} parent=1 // pred_check
      _
    $region67: #{_net_forward_impl.1} parent=1 // pred_check_branch
      %146 = sbr.rel (0) target = $region69
    $region68: #{_net_forward_impl.1} parent=1 // pred_region
      %148 = dma.done [#allocation14], 16
    $region69: #{_net_forward_impl.1} parent=1 // pred_fallthru
      _
    %v149 = vld [vmem:[%s0] sm:$0xff]
    %v150 = vld [vmem:[%s0 + $0x8] sm:$0xff]
    %v151 = vld [vmem:[%s0 + $0x10] sm:$0xff]
    %v152 = vld [vmem:[%s0 + $0x18] sm:$0xf]
    %v153 = vld [vmem:[%s0 + $0x1c] sm:$0xff]
    %v154 = vld [vmem:[%s0 + $0x24] sm:$0xff]
    %v155 = vld [vmem:[%s0 + $0x2c] sm:$0xff]
    %v156 = vld [vmem:[%s0 + $0x34] sm:$0xf]
    %v157 = vld [vmem:[%s0 + $0x38] sm:$0xff]
    %v158 = vld [vmem:[%s0 + $0x40] sm:$0xff]
    %v159 = vld [vmem:[%s0 + $0x48] sm:$0xff]
    %v160 = vld [vmem:[%s0 + $0x50] sm:$0xf]
    %v161 = vld [vmem:[%s0 + $0x54] sm:$0xff]
    %v162 = vld [vmem:[%s0 + $0x5c] sm:$0xff]
    %v163 = vld [vmem:[%s0 + $0x64] sm:$0xff]
    %v164 = vld [vmem:[%s0 + $0x6c] sm:$0xf]
    %v165 = vld [vmem:[%s0 + $0x70] sm:$0xff]
    %v166 = vld [vmem:[%s0 + $0x78] sm:$0xff]
    %v167 = vld [vmem:[%s0 + $0x80] sm:$0xff]
    %v168 = vld [vmem:[%s0 + $0x88] sm:$0xf]
    %v169 = vld [vmem:[%s0 + $0x8c] sm:$0xff]
    %v170 = vld [vmem:[%s0 + $0x94] sm:$0xff]
    %v171 = vld [vmem:[%s0 + $0x9c] sm:$0xff]
    %v172 = vld [vmem:[%s0 + $0xa4] sm:$0xf]
    %v173 = vld [vmem:[%s0 + $0xa8] sm:$0xff]
    %v174 = vld [vmem:[%s0 + $0xb0] sm:$0xff]
    %v175 = vld [vmem:[%s0 + $0xb8] sm:$0xff]
    %v176 = vld [vmem:[%s0 + $0xc0] sm:$0xf]
    %v177 = vld [vmem:[%s0 + $0xc4] sm:$0xff]
    %v178 = vld [vmem:[%s0 + $0xcc] sm:$0xff]
    %v179 = vld [vmem:[%s0 + $0xd4] sm:$0xff]
    %v180 = vld [vmem:[%s0 + $0xdc] sm:$0xf]
    %v181 = vld [vmem:[%s0 + $0xe0] sm:$0xff]
    %v182 = vld [vmem:[%s0 + $0xe8] sm:$0xff]
    %v183 = vld [vmem:[%s0 + $0xf0] sm:$0xff]
    %v184 = vld [vmem:[%s0 + $0xf8] sm:$0xf]
    %v185 = vld [vmem:[%s0 + $0xfc] sm:$0xff]
    %v186 = vld [vmem:[%s0 + $0x104] sm:$0xff]
    %v187 = vld [vmem:[%s0 + $0x10c] sm:$0xff]
    %v188 = vld [vmem:[%s0 + $0x114] sm:$0xf]
    %v189 = vld [vmem:[%s0 + $0x118] sm:$0xff]
    %v190 = vld [vmem:[%s0 + $0x120] sm:$0xff]
    %v191 = vld [vmem:[%s0 + $0x128] sm:$0xff]
    %v192 = vld [vmem:[%s0 + $0x130] sm:$0xf]
    %v193 = vld [vmem:[%s0 + $0x134] sm:$0xff]
    %v194 = vld [vmem:[%s0 + $0x13c] sm:$0xff]
    %v195 = vld [vmem:[%s0 + $0x144] sm:$0xff]
    %v196 = vld [vmem:[%s0 + $0x14c] sm:$0xf]
    %v197 = vld [vmem:[%s0 + $0x150] sm:$0xff]
    %v198 = vld [vmem:[%s0 + $0x158] sm:$0xff]
    %v199 = vld [vmem:[%s0 + $0x160] sm:$0xff]
    %v200 = vld [vmem:[%s0 + $0x168] sm:$0xf]
    %v201 = vld [vmem:[%s0 + $0x16c] sm:$0xff]
    %v202 = vld [vmem:[%s0 + $0x174] sm:$0xff]
    %v203 = vld [vmem:[%s0 + $0x17c] sm:$0xff]
    %v204 = vld [vmem:[%s0 + $0x184] sm:$0xf]
    %v205 = vld [vmem:[%s0 + $0x188] sm:$0xff]
    %v206 = vld [vmem:[%s0 + $0x190] sm:$0xff]
    %v207 = vld [vmem:[%s0 + $0x198] sm:$0xff]
    %v208 = vld [vmem:[%s0 + $0x1a0] sm:$0xf]
    %v209 = vld [vmem:[%s0 + $0x1a4] sm:$0xff]
    %v210 = vld [vmem:[%s0 + $0x1ac] sm:$0xff]
    %v211 = vld [vmem:[%s0 + $0x1b4] sm:$0xff]
    %v212 = vld [vmem:[%s0 + $0x1bc] sm:$0xf]
    %v213 = vld [vmem:[#allocation2] sm:$0xff]
    %v214 = vld [vmem:[#allocation2 + $0x8] sm:$0xff]
    %v215 = vld [vmem:[#allocation2 + $0x10] sm:$0xff]
    %v216 = vld [vmem:[#allocation2 + $0x18] sm:$0xff]
    %v217 = vld [vmem:[#allocation2 + $0x20] sm:$0xf]
    %v218 = vld [vmem:[#allocation2 + $0x24] sm:$0xff]
    %v219 = vld [vmem:[#allocation2 + $0x2c] sm:$0xff]
    %v220 = vld [vmem:[#allocation2 + $0x34] sm:$0xff]
    %v221 = vld [vmem:[#allocation2 + $0x3c] sm:$0xff]
    %v222 = vld [vmem:[#allocation2 + $0x44] sm:$0xf]
    %v223 = vld [vmem:[#allocation2 + $0x48] sm:$0xff]
    %v224 = vld [vmem:[#allocation2 + $0x50] sm:$0xff]
    %v225 = vld [vmem:[#allocation2 + $0x58] sm:$0xff]
    %v226 = vld [vmem:[#allocation2 + $0x60] sm:$0xff]
    %v227 = vld [vmem:[#allocation2 + $0x68] sm:$0xf]
    %v228 = vld [vmem:[#allocation2 + $0x6c] sm:$0xff]
    %v229 = vld [vmem:[#allocation2 + $0x74] sm:$0xff]
    %v230 = vld [vmem:[#allocation2 + $0x7c] sm:$0xff]
    %v231 = vld [vmem:[#allocation2 + $0x84] sm:$0xff]
    %v232 = vld [vmem:[#allocation2 + $0x8c] sm:$0xf]
    %v233 = vld [vmem:[#allocation2 + $0x90] sm:$0xff]
    %v234 = vld [vmem:[#allocation2 + $0x98] sm:$0xff]
    %v235 = vld [vmem:[#allocation2 + $0xa0] sm:$0xff]
    %v236 = vld [vmem:[#allocation2 + $0xa8] sm:$0xff]
    %v237 = vld [vmem:[#allocation2 + $0xb0] sm:$0xf]
    %v238 = vld [vmem:[#allocation2 + $0xb4] sm:$0xff]
    %v239 = vld [vmem:[#allocation2 + $0xbc] sm:$0xff]
    %v240 = vld [vmem:[#allocation2 + $0xc4] sm:$0xff]
    %v241 = vld [vmem:[#allocation2 + $0xcc] sm:$0xff]
    %v242 = vld [vmem:[#allocation2 + $0xd4] sm:$0xf]
    %v243 = vld [vmem:[#allocation2 + $0xd8] sm:$0xff]
    %v244 = vld [vmem:[#allocation2 + $0xe0] sm:$0xff]
    %v245 = vld [vmem:[#allocation2 + $0xe8] sm:$0xff]
    %v246 = vld [vmem:[#allocation2 + $0xf0] sm:$0xff]
    %v247 = vld [vmem:[#allocation2 + $0xf8] sm:$0xf]
    %v248 = vld [vmem:[#allocation2 + $0xfc] sm:$0xff]
    %v249 = vld [vmem:[#allocation2 + $0x104] sm:$0xff]
    %v250 = vld [vmem:[#allocation2 + $0x10c] sm:$0xff]
    %v251 = vld [vmem:[#allocation2 + $0x114] sm:$0xff]
    %v252 = vld [vmem:[#allocation2 + $0x11c] sm:$0xf]
    %v253 = vld [vmem:[#allocation2 + $0x120] sm:$0xff]
    %v254 = vld [vmem:[#allocation2 + $0x128] sm:$0xff]
    %v255 = vld [vmem:[#allocation2 + $0x130] sm:$0xff]
    %v256 = vld [vmem:[#allocation2 + $0x138] sm:$0xff]
    %v257 = vld [vmem:[#allocation2 + $0x140] sm:$0xf]
    %v258 = vld [vmem:[#allocation2 + $0x144] sm:$0xff]
    %v259 = vld [vmem:[#allocation2 + $0x14c] sm:$0xff]
    %v260 = vld [vmem:[#allocation2 + $0x154] sm:$0xff]
    %v261 = vld [vmem:[#allocation2 + $0x15c] sm:$0xff]
    %v262 = vld [vmem:[#allocation2 + $0x164] sm:$0xf]
    %v263 = vld [vmem:[#allocation2 + $0x168] sm:$0xff]
    %v264 = vld [vmem:[#allocation2 + $0x170] sm:$0xff]
    %v265 = vld [vmem:[#allocation2 + $0x178] sm:$0xff]
    %v266 = vld [vmem:[#allocation2 + $0x180] sm:$0xff]
    %v267 = vld [vmem:[#allocation2 + $0x188] sm:$0xf]
    %v268 = vld [vmem:[#allocation2 + $0x18c] sm:$0xff]
    %v269 = vld [vmem:[#allocation2 + $0x194] sm:$0xff]
    %v270 = vld [vmem:[#allocation2 + $0x19c] sm:$0xff]
    %v271 = vld [vmem:[#allocation2 + $0x1a4] sm:$0xff]
    %v272 = vld [vmem:[#allocation2 + $0x1ac] sm:$0xf]
    %v273 = vld [vmem:[#allocation2 + $0x1b0] sm:$0xff]
    %v274 = vld [vmem:[#allocation2 + $0x1b8] sm:$0xff]
    %v275 = vld [vmem:[#allocation2 + $0x1c0] sm:$0xff]
    %v276 = vld [vmem:[#allocation2 + $0x1c8] sm:$0xff]
    %v277 = vld [vmem:[#allocation2 + $0x1d0] sm:$0xf]
    %v278 = vld [vmem:[#allocation2 + $0x1d4] sm:$0xff]
    %v279 = vld [vmem:[#allocation2 + $0x1dc] sm:$0xff]
    %v280 = vld [vmem:[#allocation2 + $0x1e4] sm:$0xff]
    %v281 = vld [vmem:[#allocation2 + $0x1ec] sm:$0xff]
    %v282 = vld [vmem:[#allocation2 + $0x1f4] sm:$0xf]
    %v283 = vld [vmem:[#allocation2 + $0x1f8] sm:$0xff]
    %v284 = vld [vmem:[#allocation2 + $0x200] sm:$0xff]
    %v285 = vld [vmem:[#allocation2 + $0x208] sm:$0xff]
    %v286 = vld [vmem:[#allocation2 + $0x210] sm:$0xff]
    %v287 = vld [vmem:[#allocation2 + $0x218] sm:$0xf]
    %v288 = vld [vmem:[#allocation2 + $0x21c] sm:$0xff]
    %v289 = vld [vmem:[#allocation2 + $0x224] sm:$0xff]
    %v290 = vld [vmem:[#allocation2 + $0x22c] sm:$0xff]
    %v291 = vld [vmem:[#allocation2 + $0x234] sm:$0xff]
    %v292 = vld [vmem:[#allocation2 + $0x23c] sm:$0xf]
    %v293 = vld [vmem:[#allocation2 + $0x240] sm:$0xff]
    %v294 = vld [vmem:[#allocation2 + $0x248] sm:$0xff]
    %v295 = vld [vmem:[#allocation2 + $0x250] sm:$0xff]
    %v296 = vld [vmem:[#allocation2 + $0x258] sm:$0xff]
    %v297 = vld [vmem:[#allocation2 + $0x260] sm:$0xf]
    %v298 = vld [vmem:[#allocation2 + $0x264] sm:$0xff]
    %v299 = vld [vmem:[#allocation2 + $0x26c] sm:$0xff]
    %v300 = vld [vmem:[#allocation2 + $0x274] sm:$0xff]
    %v301 = vld [vmem:[#allocation2 + $0x27c] sm:$0xff]
    %v302 = vld [vmem:[#allocation2 + $0x284] sm:$0xf]
    %v303 = vld [vmem:[#allocation2 + $0x288] sm:$0xff]
    %v304 = vld [vmem:[#allocation2 + $0x290] sm:$0xff]
    %v305 = vld [vmem:[#allocation2 + $0x298] sm:$0xff]
    %v306 = vld [vmem:[#allocation2 + $0x2a0] sm:$0xff]
    %v307 = vld [vmem:[#allocation2 + $0x2a8] sm:$0xf]
    %v308 = vld [vmem:[#allocation2 + $0x2ac] sm:$0xff]
    %v309 = vld [vmem:[#allocation2 + $0x2b4] sm:$0xff]
    %v310 = vld [vmem:[#allocation2 + $0x2bc] sm:$0xff]
    %v311 = vld [vmem:[#allocation2 + $0x2c4] sm:$0xff]
    %v312 = vld [vmem:[#allocation2 + $0x2cc] sm:$0xf]
    %v313 = vld [vmem:[#allocation2 + $0x2d0] sm:$0xff]
    %v314 = vld [vmem:[#allocation2 + $0x2d8] sm:$0xff]
    %v315 = vld [vmem:[#allocation2 + $0x2e0] sm:$0xff]
    %v316 = vld [vmem:[#allocation2 + $0x2e8] sm:$0xff]
    %v317 = vld [vmem:[#allocation2 + $0x2f0] sm:$0xf]
    %v318 = vld [vmem:[#allocation2 + $0x2f4] sm:$0xff]
    %v319 = vld [vmem:[#allocation2 + $0x2fc] sm:$0xff]
    %v320 = vld [vmem:[#allocation2 + $0x304] sm:$0xff]
    %v321 = vld [vmem:[#allocation2 + $0x30c] sm:$0xff]
    %v322 = vld [vmem:[#allocation2 + $0x314] sm:$0xf]
    %v323 = vld [vmem:[#allocation2 + $0x318] sm:$0xff]
    %v324 = vld [vmem:[#allocation2 + $0x320] sm:$0xff]
    %v325 = vld [vmem:[#allocation2 + $0x328] sm:$0xff]
    %v326 = vld [vmem:[#allocation2 + $0x330] sm:$0xff]
    %v327 = vld [vmem:[#allocation2 + $0x338] sm:$0xf]
    %v328 = vld [vmem:[#allocation2 + $0x33c] sm:$0xff]
    %v329 = vld [vmem:[#allocation2 + $0x344] sm:$0xff]
    %v330 = vld [vmem:[#allocation2 + $0x34c] sm:$0xff]
    %v331 = vld [vmem:[#allocation2 + $0x354] sm:$0xff]
    %v332 = vld [vmem:[#allocation2 + $0x35c] sm:$0xf]
    %v333 = vld [vmem:[#allocation2 + $0x360] sm:$0xff]
    %v334 = vld [vmem:[#allocation2 + $0x368] sm:$0xff]
    %v335 = vld [vmem:[#allocation2 + $0x370] sm:$0xff]
    %v336 = vld [vmem:[#allocation2 + $0x378] sm:$0xff]
    %v337 = vld [vmem:[#allocation2 + $0x380] sm:$0xf]
    %v338 = vld [vmem:[#allocation2 + $0x384] sm:$0xff]
    %v339 = vld [vmem:[#allocation2 + $0x38c] sm:$0xff]
    %v340 = vld [vmem:[#allocation2 + $0x394] sm:$0xff]
    %v341 = vld [vmem:[#allocation2 + $0x39c] sm:$0xff]
    %v342 = vld [vmem:[#allocation2 + $0x3a4] sm:$0xf]
    %v343 = vld [vmem:[#allocation2 + $0x3a8] sm:$0xff]
    %v344 = vld [vmem:[#allocation2 + $0x3b0] sm:$0xff]
    %v345 = vld [vmem:[#allocation2 + $0x3b8] sm:$0xff]
    %v346 = vld [vmem:[#allocation2 + $0x3c0] sm:$0xff]
    %v347 = vld [vmem:[#allocation2 + $0x3c8] sm:$0xf]
    %v348 = vld [vmem:[#allocation2 + $0x3cc] sm:$0xff]
    %v349 = vld [vmem:[#allocation2 + $0x3d4] sm:$0xff]
    %v350 = vld [vmem:[#allocation2 + $0x3dc] sm:$0xff]
    %v351 = vld [vmem:[#allocation2 + $0x3e4] sm:$0xff]
    %v352 = vld [vmem:[#allocation2 + $0x3ec] sm:$0xf]
    %v353 = vld [vmem:[#allocation2 + $0x3f0] sm:$0xff]
    %v354 = vld [vmem:[#allocation2 + $0x3f8] sm:$0xff]
    %v355 = vld [vmem:[#allocation2 + $0x400] sm:$0xff]
    %v356 = vld [vmem:[#allocation2 + $0x408] sm:$0xff]
    %v357 = vld [vmem:[#allocation2 + $0x410] sm:$0xf]
    %v358 = vld [vmem:[#allocation2 + $0x414] sm:$0xff]
    %v359 = vld [vmem:[#allocation2 + $0x41c] sm:$0xff]
    %v360 = vld [vmem:[#allocation2 + $0x424] sm:$0xff]
    %v361 = vld [vmem:[#allocation2 + $0x42c] sm:$0xff]
    %v362 = vld [vmem:[#allocation2 + $0x434] sm:$0xf]
    %v363 = vld [vmem:[#allocation2 + $0x438] sm:$0xff]
    %v364 = vld [vmem:[#allocation2 + $0x440] sm:$0xff]
    %v365 = vld [vmem:[#allocation2 + $0x448] sm:$0xff]
    %v366 = vld [vmem:[#allocation2 + $0x450] sm:$0xff]
    %v367 = vld [vmem:[#allocation2 + $0x458] sm:$0xf]
    %v368 = vld [vmem:[#allocation2 + $0x45c] sm:$0xff]
    %v369 = vld [vmem:[#allocation2 + $0x464] sm:$0xff]
    %v370 = vld [vmem:[#allocation2 + $0x46c] sm:$0xff]
    %v371 = vld [vmem:[#allocation2 + $0x474] sm:$0xff]
    %v372 = vld [vmem:[#allocation2 + $0x47c] sm:$0xf]
    %v373 = vld [vmem:[#allocation2 + $0x480] sm:$0xff]
    %v374 = vld [vmem:[#allocation2 + $0x488] sm:$0xff]
    %v375 = vld [vmem:[#allocation2 + $0x490] sm:$0xff]
    %v376 = vld [vmem:[#allocation2 + $0x498] sm:$0xff]
    %v377 = vld [vmem:[#allocation2 + $0x4a0] sm:$0xf]
    %v378 = vld [vmem:[#allocation2 + $0x4a4] sm:$0xff]
    %v379 = vld [vmem:[#allocation2 + $0x4ac] sm:$0xff]
    %v380 = vld [vmem:[#allocation2 + $0x4b4] sm:$0xff]
    %v381 = vld [vmem:[#allocation2 + $0x4bc] sm:$0xff]
    %v382 = vld [vmem:[#allocation2 + $0x4c4] sm:$0xf]
    %v383 = vld [vmem:[#allocation2 + $0x4c8] sm:$0xff]
    %v384 = vld [vmem:[#allocation2 + $0x4d0] sm:$0xff]
    %v385 = vld [vmem:[#allocation2 + $0x4d8] sm:$0xff]
    %v386 = vld [vmem:[#allocation2 + $0x4e0] sm:$0xff]
    %v387 = vld [vmem:[#allocation2 + $0x4e8] sm:$0xf]
    %v388 = vld [vmem:[#allocation2 + $0x4ec] sm:$0xff]
    %v389 = vld [vmem:[#allocation2 + $0x4f4] sm:$0xff]
    %v390 = vld [vmem:[#allocation2 + $0x4fc] sm:$0xff]
    %v391 = vld [vmem:[#allocation2 + $0x504] sm:$0xff]
    %v392 = vld [vmem:[#allocation2 + $0x50c] sm:$0xf]
    %v393 = vld [vmem:[#allocation2 + $0x510] sm:$0xff]
    %v394 = vld [vmem:[#allocation2 + $0x518] sm:$0xff]
    %v395 = vld [vmem:[#allocation2 + $0x520] sm:$0xff]
    %v396 = vld [vmem:[#allocation2 + $0x528] sm:$0xff]
    %v397 = vld [vmem:[#allocation2 + $0x530] sm:$0xf]
    %v398 = vld [vmem:[#allocation2 + $0x534] sm:$0xff]
    %v399 = vld [vmem:[#allocation2 + $0x53c] sm:$0xff]
    %v400 = vld [vmem:[#allocation2 + $0x544] sm:$0xff]
    %v401 = vld [vmem:[#allocation2 + $0x54c] sm:$0xff]
    %v402 = vld [vmem:[#allocation2 + $0x554] sm:$0xf]
    %v403 = vld [vmem:[#allocation2 + $0x558] sm:$0xff]
    %v404 = vld [vmem:[#allocation2 + $0x560] sm:$0xff]
    %v405 = vld [vmem:[#allocation2 + $0x568] sm:$0xff]
    %v406 = vld [vmem:[#allocation2 + $0x570] sm:$0xff]
    %v407 = vld [vmem:[#allocation2 + $0x578] sm:$0xf]
    %v408 = vld [vmem:[#allocation2 + $0x57c] sm:$0xff]
    %v409 = vld [vmem:[#allocation2 + $0x584] sm:$0xff]
    %v410 = vld [vmem:[#allocation2 + $0x58c] sm:$0xff]
    %v411 = vld [vmem:[#allocation2 + $0x594] sm:$0xff]
    %v412 = vld [vmem:[#allocation2 + $0x59c] sm:$0xf]
    %v413 = vld [vmem:[#allocation2 + $0x5a0] sm:$0xff]
    %v414 = vld [vmem:[#allocation2 + $0x5a8] sm:$0xff]
    %v415 = vld [vmem:[#allocation2 + $0x5b0] sm:$0xff]
    %v416 = vld [vmem:[#allocation2 + $0x5b8] sm:$0xff]
    %v417 = vld [vmem:[#allocation2 + $0x5c0] sm:$0xf]
    %v418 = vld [vmem:[#allocation2 + $0x5c4] sm:$0xff]
    %v419 = vld [vmem:[#allocation2 + $0x5cc] sm:$0xff]
    %v420 = vld [vmem:[#allocation2 + $0x5d4] sm:$0xff]
    %v421 = vld [vmem:[#allocation2 + $0x5dc] sm:$0xff]
    %v422 = vld [vmem:[#allocation2 + $0x5e4] sm:$0xf]
    %v423 = vld [vmem:[#allocation2 + $0x5e8] sm:$0xff]
    %v424 = vld [vmem:[#allocation2 + $0x5f0] sm:$0xff]
    %v425 = vld [vmem:[#allocation2 + $0x5f8] sm:$0xff]
    %v426 = vld [vmem:[#allocation2 + $0x600] sm:$0xff]
    %v427 = vld [vmem:[#allocation2 + $0x608] sm:$0xf]
    %v428 = vld [vmem:[#allocation2 + $0x60c] sm:$0xff]
    %v429 = vld [vmem:[#allocation2 + $0x614] sm:$0xff]
    %v430 = vld [vmem:[#allocation2 + $0x61c] sm:$0xff]
    %v431 = vld [vmem:[#allocation2 + $0x624] sm:$0xff]
    %v432 = vld [vmem:[#allocation2 + $0x62c] sm:$0xf]
    %v433 = vld [vmem:[#allocation2 + $0x630] sm:$0xff]
    %v434 = vld [vmem:[#allocation2 + $0x638] sm:$0xff]
    %v435 = vld [vmem:[#allocation2 + $0x640] sm:$0xff]
    %v436 = vld [vmem:[#allocation2 + $0x648] sm:$0xff]
    %v437 = vld [vmem:[#allocation2 + $0x650] sm:$0xf]
    %v438 = vld [vmem:[#allocation2 + $0x654] sm:$0xff]
    %v439 = vld [vmem:[#allocation2 + $0x65c] sm:$0xff]
    %v440 = vld [vmem:[#allocation2 + $0x664] sm:$0xff]
    %v441 = vld [vmem:[#allocation2 + $0x66c] sm:$0xff]
    %v442 = vld [vmem:[#allocation2 + $0x674] sm:$0xf]
    %v443 = vld [vmem:[#allocation2 + $0x678] sm:$0xff]
    %v444 = vld [vmem:[#allocation2 + $0x680] sm:$0xff]
    %v445 = vld [vmem:[#allocation2 + $0x688] sm:$0xff]
    %v446 = vld [vmem:[#allocation2 + $0x690] sm:$0xff]
    %v447 = vld [vmem:[#allocation2 + $0x698] sm:$0xf]
    %v448 = vld [vmem:[#allocation2 + $0x69c] sm:$0xff]
    %v449 = vld [vmem:[#allocation2 + $0x6a4] sm:$0xff]
    %v450 = vld [vmem:[#allocation2 + $0x6ac] sm:$0xff]
    %v451 = vld [vmem:[#allocation2 + $0x6b4] sm:$0xff]
    %v452 = vld [vmem:[#allocation2 + $0x6bc] sm:$0xf]
    %v453 = vld [vmem:[#allocation2 + $0x6c0] sm:$0xff]
    %v454 = vld [vmem:[#allocation2 + $0x6c8] sm:$0xff]
    %v455 = vld [vmem:[#allocation2 + $0x6d0] sm:$0xff]
    %v456 = vld [vmem:[#allocation2 + $0x6d8] sm:$0xff]
    %v457 = vld [vmem:[#allocation2 + $0x6e0] sm:$0xf]
    %v458 = vld [vmem:[#allocation2 + $0x6e4] sm:$0xff]
    %v459 = vld [vmem:[#allocation2 + $0x6ec] sm:$0xff]
    %v460 = vld [vmem:[#allocation2 + $0x6f4] sm:$0xff]
    %v461 = vld [vmem:[#allocation2 + $0x6fc] sm:$0xff]
    %v462 = vld [vmem:[#allocation2 + $0x704] sm:$0xf]
    %v463 = vld [vmem:[#allocation2 + $0x708] sm:$0xff]
    %v464 = vld [vmem:[#allocation2 + $0x710] sm:$0xff]
    %v465 = vld [vmem:[#allocation2 + $0x718] sm:$0xff]
    %v466 = vld [vmem:[#allocation2 + $0x720] sm:$0xff]
    %v467 = vld [vmem:[#allocation2 + $0x728] sm:$0xf]
    %v468 = vld [vmem:[#allocation2 + $0x72c] sm:$0xff]
    %v469 = vld [vmem:[#allocation2 + $0x734] sm:$0xff]
    %v470 = vld [vmem:[#allocation2 + $0x73c] sm:$0xff]
    %v471 = vld [vmem:[#allocation2 + $0x744] sm:$0xff]
    %v472 = vld [vmem:[#allocation2 + $0x74c] sm:$0xf]
    %v473 = vld [vmem:[#allocation2 + $0x750] sm:$0xff]
    %v474 = vld [vmem:[#allocation2 + $0x758] sm:$0xff]
    %v475 = vld [vmem:[#allocation2 + $0x760] sm:$0xff]
    %v476 = vld [vmem:[#allocation2 + $0x768] sm:$0xff]
    %v477 = vld [vmem:[#allocation2 + $0x770] sm:$0xf]
    %v478 = vld [vmem:[#allocation2 + $0x774] sm:$0xff]
    %v479 = vld [vmem:[#allocation2 + $0x77c] sm:$0xff]
    %v480 = vld [vmem:[#allocation2 + $0x784] sm:$0xff]
    %v481 = vld [vmem:[#allocation2 + $0x78c] sm:$0xff]
    %v482 = vld [vmem:[#allocation2 + $0x794] sm:$0xf]
    %v483 = vld [vmem:[#allocation2 + $0x798] sm:$0xff]
    %v484 = vld [vmem:[#allocation2 + $0x7a0] sm:$0xff]
    %v485 = vld [vmem:[#allocation2 + $0x7a8] sm:$0xff]
    %v486 = vld [vmem:[#allocation2 + $0x7b0] sm:$0xff]
    %v487 = vld [vmem:[#allocation2 + $0x7b8] sm:$0xf]
    %v488 = vld [vmem:[#allocation2 + $0x7bc] sm:$0xff]
    %v489 = vld [vmem:[#allocation2 + $0x7c4] sm:$0xff]
    %v490 = vld [vmem:[#allocation2 + $0x7cc] sm:$0xff]
    %v491 = vld [vmem:[#allocation2 + $0x7d4] sm:$0xff]
    %v492 = vld [vmem:[#allocation2 + $0x7dc] sm:$0xf]
    %v493 = vld [vmem:[#allocation2 + $0x7e0] sm:$0xff]
    %v494 = vld [vmem:[#allocation2 + $0x7e8] sm:$0xff]
    %v495 = vld [vmem:[#allocation2 + $0x7f0] sm:$0xff]
    %v496 = vld [vmem:[#allocation2 + $0x7f8] sm:$0xff]
    %v497 = vld [vmem:[#allocation2 + $0x800] sm:$0xf]
    %v498 = vld [vmem:[#allocation2 + $0x804] sm:$0xff]
    %v499 = vld [vmem:[#allocation2 + $0x80c] sm:$0xff]
    %v500 = vld [vmem:[#allocation2 + $0x814] sm:$0xff]
    %v501 = vld [vmem:[#allocation2 + $0x81c] sm:$0xff]
    %v502 = vld [vmem:[#allocation2 + $0x824] sm:$0xf]
    %v503 = vld [vmem:[#allocation2 + $0x828] sm:$0xff]
    %v504 = vld [vmem:[#allocation2 + $0x830] sm:$0xff]
    %v505 = vld [vmem:[#allocation2 + $0x838] sm:$0xff]
    %v506 = vld [vmem:[#allocation2 + $0x840] sm:$0xff]
    %v507 = vld [vmem:[#allocation2 + $0x848] sm:$0xf]
    %v508 = vld [vmem:[#allocation2 + $0x84c] sm:$0xff]
    %v509 = vld [vmem:[#allocation2 + $0x854] sm:$0xff]
    %v510 = vld [vmem:[#allocation2 + $0x85c] sm:$0xff]
    %v511 = vld [vmem:[#allocation2 + $0x864] sm:$0xff]
    %v512 = vld [vmem:[#allocation2 + $0x86c] sm:$0xf]
    %v513 = vld [vmem:[#allocation2 + $0x870] sm:$0xff]
    %v514 = vld [vmem:[#allocation2 + $0x878] sm:$0xff]
    %v515 = vld [vmem:[#allocation2 + $0x880] sm:$0xff]
    %v516 = vld [vmem:[#allocation2 + $0x888] sm:$0xff]
    %v517 = vld [vmem:[#allocation2 + $0x890] sm:$0xf]
    %v518 = vld [vmem:[#allocation2 + $0x894] sm:$0xff]
    %v519 = vld [vmem:[#allocation2 + $0x89c] sm:$0xff]
    %v520 = vld [vmem:[#allocation2 + $0x8a4] sm:$0xff]
    %v521 = vld [vmem:[#allocation2 + $0x8ac] sm:$0xff]
    %v522 = vld [vmem:[#allocation2 + $0x8b4] sm:$0xf]
    %v523 = vld [vmem:[#allocation2 + $0x8b8] sm:$0xff]
    %v524 = vld [vmem:[#allocation2 + $0x8c0] sm:$0xff]
    %v525 = vld [vmem:[#allocation2 + $0x8c8] sm:$0xff]
    %v526 = vld [vmem:[#allocation2 + $0x8d0] sm:$0xff]
    %v527 = vld [vmem:[#allocation2 + $0x8d8] sm:$0xf]
    %v528 = vld [vmem:[#allocation2 + $0x8dc] sm:$0xff]
    %v529 = vld [vmem:[#allocation2 + $0x8e4] sm:$0xff]
    %v530 = vld [vmem:[#allocation2 + $0x8ec] sm:$0xff]
    %v531 = vld [vmem:[#allocation2 + $0x8f4] sm:$0xff]
    %v532 = vld [vmem:[#allocation2 + $0x8fc] sm:$0xf]
    %v533 = vld [vmem:[#allocation2 + $0x900] sm:$0xff]
    %v534 = vld [vmem:[#allocation2 + $0x908] sm:$0xff]
    %v535 = vld [vmem:[#allocation2 + $0x910] sm:$0xff]
    %v536 = vld [vmem:[#allocation2 + $0x918] sm:$0xff]
    %v537 = vld [vmem:[#allocation2 + $0x920] sm:$0xf]
    %v538 = vld [vmem:[#allocation2 + $0x924] sm:$0xff]
    %v539 = vld [vmem:[#allocation2 + $0x92c] sm:$0xff]
    %v540 = vld [vmem:[#allocation2 + $0x934] sm:$0xff]
    %v541 = vld [vmem:[#allocation2 + $0x93c] sm:$0xff]
    %v542 = vld [vmem:[#allocation2 + $0x944] sm:$0xf]
    %v543 = vld [vmem:[#allocation2 + $0x948] sm:$0xff]
    %v544 = vld [vmem:[#allocation2 + $0x950] sm:$0xff]
    %v545 = vld [vmem:[#allocation2 + $0x958] sm:$0xff]
    %v546 = vld [vmem:[#allocation2 + $0x960] sm:$0xff]
    %v547 = vld [vmem:[#allocation2 + $0x968] sm:$0xf]
    %v548 = vld [vmem:[#allocation2 + $0x96c] sm:$0xff]
    %v549 = vld [vmem:[#allocation2 + $0x974] sm:$0xff]
    %v550 = vld [vmem:[#allocation2 + $0x97c] sm:$0xff]
    %v551 = vld [vmem:[#allocation2 + $0x984] sm:$0xff]
    %v552 = vld [vmem:[#allocation2 + $0x98c] sm:$0xf]
    %v553 = vld [vmem:[#allocation2 + $0x990] sm:$0xff]
    %v554 = vld [vmem:[#allocation2 + $0x998] sm:$0xff]
    %v555 = vld [vmem:[#allocation2 + $0x9a0] sm:$0xff]
    %v556 = vld [vmem:[#allocation2 + $0x9a8] sm:$0xff]
    %v557 = vld [vmem:[#allocation2 + $0x9b0] sm:$0xf]
    %v558 = vld [vmem:[#allocation2 + $0x9b4] sm:$0xff]
    %v559 = vld [vmem:[#allocation2 + $0x9bc] sm:$0xff]
    %v560 = vld [vmem:[#allocation2 + $0x9c4] sm:$0xff]
    %v561 = vld [vmem:[#allocation2 + $0x9cc] sm:$0xff]
    %v562 = vld [vmem:[#allocation2 + $0x9d4] sm:$0xf]
    %v563 = vld [vmem:[#allocation2 + $0x9d8] sm:$0xff]
    %v564 = vld [vmem:[#allocation2 + $0x9e0] sm:$0xff]
    %v565 = vld [vmem:[#allocation2 + $0x9e8] sm:$0xff]
    %v566 = vld [vmem:[#allocation2 + $0x9f0] sm:$0xff]
    %v567 = vld [vmem:[#allocation2 + $0x9f8] sm:$0xf]
    %v568 = vld [vmem:[#allocation2 + $0x9fc] sm:$0xff]
    %v569 = vld [vmem:[#allocation2 + $0xa04] sm:$0xff]
    %v570 = vld [vmem:[#allocation2 + $0xa0c] sm:$0xff]
    %v571 = vld [vmem:[#allocation2 + $0xa14] sm:$0xff]
    %v572 = vld [vmem:[#allocation2 + $0xa1c] sm:$0xf]
    %v573 = vld [vmem:[#allocation2 + $0xa20] sm:$0xff]
    %v574 = vld [vmem:[#allocation2 + $0xa28] sm:$0xff]
    %v575 = vld [vmem:[#allocation2 + $0xa30] sm:$0xff]
    %v576 = vld [vmem:[#allocation2 + $0xa38] sm:$0xff]
    %v577 = vld [vmem:[#allocation2 + $0xa40] sm:$0xf]
    %v578 = vld [vmem:[#allocation2 + $0xa44] sm:$0xff]
    %v579 = vld [vmem:[#allocation2 + $0xa4c] sm:$0xff]
    %v580 = vld [vmem:[#allocation2 + $0xa54] sm:$0xff]
    %v581 = vld [vmem:[#allocation2 + $0xa5c] sm:$0xff]
    %v582 = vld [vmem:[#allocation2 + $0xa64] sm:$0xf]
    %v583 = vld [vmem:[#allocation2 + $0xa68] sm:$0xff]
    %v584 = vld [vmem:[#allocation2 + $0xa70] sm:$0xff]
    %v585 = vld [vmem:[#allocation2 + $0xa78] sm:$0xff]
    %v586 = vld [vmem:[#allocation2 + $0xa80] sm:$0xff]
    %v587 = vld [vmem:[#allocation2 + $0xa88] sm:$0xf]
    %v588 = vld [vmem:[#allocation2 + $0xa8c] sm:$0xff]
    %v589 = vld [vmem:[#allocation2 + $0xa94] sm:$0xff]
    %v590 = vld [vmem:[#allocation2 + $0xa9c] sm:$0xff]
    %v591 = vld [vmem:[#allocation2 + $0xaa4] sm:$0xff]
    %v592 = vld [vmem:[#allocation2 + $0xaac] sm:$0xf]
    %v593 = vld [vmem:[#allocation2 + $0xab0] sm:$0xff]
    %v594 = vld [vmem:[#allocation2 + $0xab8] sm:$0xff]
    %v595 = vld [vmem:[#allocation2 + $0xac0] sm:$0xff]
    %v596 = vld [vmem:[#allocation2 + $0xac8] sm:$0xff]
    %v597 = vld [vmem:[#allocation2 + $0xad0] sm:$0xf]
    %v598 = vld [vmem:[#allocation2 + $0xad4] sm:$0xff]
    %v599 = vld [vmem:[#allocation2 + $0xadc] sm:$0xff]
    %v600 = vld [vmem:[#allocation2 + $0xae4] sm:$0xff]
    %v601 = vld [vmem:[#allocation2 + $0xaec] sm:$0xff]
    %v602 = vld [vmem:[#allocation2 + $0xaf4] sm:$0xf]
    %v603 = vld [vmem:[#allocation2 + $0xaf8] sm:$0xff]
    %v604 = vld [vmem:[#allocation2 + $0xb00] sm:$0xff]
    %v605 = vld [vmem:[#allocation2 + $0xb08] sm:$0xff]
    %v606 = vld [vmem:[#allocation2 + $0xb10] sm:$0xff]
    %v607 = vld [vmem:[#allocation2 + $0xb18] sm:$0xf]
    %v608 = vld [vmem:[#allocation2 + $0xb1c] sm:$0xff]
    %v609 = vld [vmem:[#allocation2 + $0xb24] sm:$0xff]
    %v610 = vld [vmem:[#allocation2 + $0xb2c] sm:$0xff]
    %v611 = vld [vmem:[#allocation2 + $0xb34] sm:$0xff]
    %v612 = vld [vmem:[#allocation2 + $0xb3c] sm:$0xf]
    %v613 = vld [vmem:[#allocation2 + $0xb40] sm:$0xff]
    %v614 = vld [vmem:[#allocation2 + $0xb48] sm:$0xff]
    %v615 = vld [vmem:[#allocation2 + $0xb50] sm:$0xff]
    %v616 = vld [vmem:[#allocation2 + $0xb58] sm:$0xff]
    %v617 = vld [vmem:[#allocation2 + $0xb60] sm:$0xf]
    %v618 = vld [vmem:[#allocation2 + $0xb64] sm:$0xff]
    %v619 = vld [vmem:[#allocation2 + $0xb6c] sm:$0xff]
    %v620 = vld [vmem:[#allocation2 + $0xb74] sm:$0xff]
    %v621 = vld [vmem:[#allocation2 + $0xb7c] sm:$0xff]
    %v622 = vld [vmem:[#allocation2 + $0xb84] sm:$0xf]
    %v623 = vld [vmem:[#allocation2 + $0xb88] sm:$0xff]
    %v624 = vld [vmem:[#allocation2 + $0xb90] sm:$0xff]
    %v625 = vld [vmem:[#allocation2 + $0xb98] sm:$0xff]
    %v626 = vld [vmem:[#allocation2 + $0xba0] sm:$0xff]
    %v627 = vld [vmem:[#allocation2 + $0xba8] sm:$0xf]
    %v628 = vld [vmem:[#allocation2 + $0xbac] sm:$0xff]
    %v629 = vld [vmem:[#allocation2 + $0xbb4] sm:$0xff]
    %v630 = vld [vmem:[#allocation2 + $0xbbc] sm:$0xff]
    %v631 = vld [vmem:[#allocation2 + $0xbc4] sm:$0xff]
    %v632 = vld [vmem:[#allocation2 + $0xbcc] sm:$0xf]
    %v633 = vld [vmem:[#allocation2 + $0xbd0] sm:$0xff]
    %v634 = vld [vmem:[#allocation2 + $0xbd8] sm:$0xff]
    %v635 = vld [vmem:[#allocation2 + $0xbe0] sm:$0xff]
    %v636 = vld [vmem:[#allocation2 + $0xbe8] sm:$0xff]
    %v637 = vld [vmem:[#allocation2 + $0xbf0] sm:$0xf]
    %v638 = vld [vmem:[#allocation2 + $0xbf4] sm:$0xff]
    %v639 = vld [vmem:[#allocation2 + $0xbfc] sm:$0xff]
    %v640 = vld [vmem:[#allocation2 + $0xc04] sm:$0xff]
    %v641 = vld [vmem:[#allocation2 + $0xc0c] sm:$0xff]
    %v642 = vld [vmem:[#allocation2 + $0xc14] sm:$0xf]
    %v643 = vld [vmem:[#allocation2 + $0xc18] sm:$0xff]
    %v644 = vld [vmem:[#allocation2 + $0xc20] sm:$0xff]
    %v645 = vld [vmem:[#allocation2 + $0xc28] sm:$0xff]
    %v646 = vld [vmem:[#allocation2 + $0xc30] sm:$0xff]
    %v647 = vld [vmem:[#allocation2 + $0xc38] sm:$0xf]
    %v648 = vld [vmem:[#allocation2 + $0xc3c] sm:$0xff]
    %v649 = vld [vmem:[#allocation2 + $0xc44] sm:$0xff]
    %v650 = vld [vmem:[#allocation2 + $0xc4c] sm:$0xff]
    %v651 = vld [vmem:[#allocation2 + $0xc54] sm:$0xff]
    %v652 = vld [vmem:[#allocation2 + $0xc5c] sm:$0xf]
    %v653 = vld [vmem:[#allocation2 + $0xc60] sm:$0xff]
    %v654 = vld [vmem:[#allocation2 + $0xc68] sm:$0xff]
    %v655 = vld [vmem:[#allocation2 + $0xc70] sm:$0xff]
    %v656 = vld [vmem:[#allocation2 + $0xc78] sm:$0xff]
    %v657 = vld [vmem:[#allocation2 + $0xc80] sm:$0xf]
    %v658 = vld [vmem:[#allocation2 + $0xc84] sm:$0xff]
    %v659 = vld [vmem:[#allocation2 + $0xc8c] sm:$0xff]
    %v660 = vld [vmem:[#allocation2 + $0xc94] sm:$0xff]
    %v661 = vld [vmem:[#allocation2 + $0xc9c] sm:$0xff]
    %v662 = vld [vmem:[#allocation2 + $0xca4] sm:$0xf]
    %v663 = vld [vmem:[#allocation2 + $0xca8] sm:$0xff]
    %v664 = vld [vmem:[#allocation2 + $0xcb0] sm:$0xff]
    %v665 = vld [vmem:[#allocation2 + $0xcb8] sm:$0xff]
    %v666 = vld [vmem:[#allocation2 + $0xcc0] sm:$0xff]
    %v667 = vld [vmem:[#allocation2 + $0xcc8] sm:$0xf]
    %v668 = vld [vmem:[#allocation2 + $0xccc] sm:$0xff]
    %v669 = vld [vmem:[#allocation2 + $0xcd4] sm:$0xff]
    %v670 = vld [vmem:[#allocation2 + $0xcdc] sm:$0xff]
    %v671 = vld [vmem:[#allocation2 + $0xce4] sm:$0xff]
    %v672 = vld [vmem:[#allocation2 + $0xcec] sm:$0xf]
    %v673 = vld [vmem:[#allocation2 + $0xcf0] sm:$0xff]
    %v674 = vld [vmem:[#allocation2 + $0xcf8] sm:$0xff]
    %v675 = vld [vmem:[#allocation2 + $0xd00] sm:$0xff]
    %v676 = vld [vmem:[#allocation2 + $0xd08] sm:$0xff]
    %v677 = vld [vmem:[#allocation2 + $0xd10] sm:$0xf]
    %v678 = vld [vmem:[#allocation2 + $0xd14] sm:$0xff]
    %v679 = vld [vmem:[#allocation2 + $0xd1c] sm:$0xff]
    %v680 = vld [vmem:[#allocation2 + $0xd24] sm:$0xff]
    %v681 = vld [vmem:[#allocation2 + $0xd2c] sm:$0xff]
    %v682 = vld [vmem:[#allocation2 + $0xd34] sm:$0xf]
    %v683 = vld [vmem:[#allocation2 + $0xd38] sm:$0xff]
    %v684 = vld [vmem:[#allocation2 + $0xd40] sm:$0xff]
    %v685 = vld [vmem:[#allocation2 + $0xd48] sm:$0xff]
    %v686 = vld [vmem:[#allocation2 + $0xd50] sm:$0xff]
    %v687 = vld [vmem:[#allocation2 + $0xd58] sm:$0xf]
    %v688 = vld [vmem:[#allocation2 + $0xd5c] sm:$0xff]
    %v689 = vld [vmem:[#allocation2 + $0xd64] sm:$0xff]
    %v690 = vld [vmem:[#allocation2 + $0xd6c] sm:$0xff]
    %v691 = vld [vmem:[#allocation2 + $0xd74] sm:$0xff]
    %v692 = vld [vmem:[#allocation2 + $0xd7c] sm:$0xf]
    %v693 = vld [vmem:[#allocation2 + $0xd80] sm:$0xff]
    %v694 = vld [vmem:[#allocation2 + $0xd88] sm:$0xff]
    %v695 = vld [vmem:[#allocation2 + $0xd90] sm:$0xff]
    %v696 = vld [vmem:[#allocation2 + $0xd98] sm:$0xff]
    %v697 = vld [vmem:[#allocation2 + $0xda0] sm:$0xf]
    %v698 = vld [vmem:[#allocation2 + $0xda4] sm:$0xff]
    %v699 = vld [vmem:[#allocation2 + $0xdac] sm:$0xff]
    %v700 = vld [vmem:[#allocation2 + $0xdb4] sm:$0xff]
    %v701 = vld [vmem:[#allocation2 + $0xdbc] sm:$0xff]
    %v702 = vld [vmem:[#allocation2 + $0xdc4] sm:$0xf]
    %v703 = vld [vmem:[#allocation2 + $0xdc8] sm:$0xff]
    %v704 = vld [vmem:[#allocation2 + $0xdd0] sm:$0xff]
    %v705 = vld [vmem:[#allocation2 + $0xdd8] sm:$0xff]
    %v706 = vld [vmem:[#allocation2 + $0xde0] sm:$0xff]
    %v707 = vld [vmem:[#allocation2 + $0xde8] sm:$0xf]
    %v708 = vld [vmem:[#allocation2 + $0xdec] sm:$0xff]
    %v709 = vld [vmem:[#allocation2 + $0xdf4] sm:$0xff]
    %v710 = vld [vmem:[#allocation2 + $0xdfc] sm:$0xff]
    %v711 = vld [vmem:[#allocation2 + $0xe04] sm:$0xff]
    %v712 = vld [vmem:[#allocation2 + $0xe0c] sm:$0xf]
    %v713 = vld [vmem:[#allocation2 + $0xe10] sm:$0xff]
    %v714 = vld [vmem:[#allocation2 + $0xe18] sm:$0xff]
    %v715 = vld [vmem:[#allocation2 + $0xe20] sm:$0xff]
    %v716 = vld [vmem:[#allocation2 + $0xe28] sm:$0xff]
    %v717 = vld [vmem:[#allocation2 + $0xe30] sm:$0xf]
    %v718 = vld [vmem:[#allocation2 + $0xe34] sm:$0xff]
    %v719 = vld [vmem:[#allocation2 + $0xe3c] sm:$0xff]
    %v720 = vld [vmem:[#allocation2 + $0xe44] sm:$0xff]
    %v721 = vld [vmem:[#allocation2 + $0xe4c] sm:$0xff]
    %v722 = vld [vmem:[#allocation2 + $0xe54] sm:$0xf]
    %v723 = vld [vmem:[#allocation2 + $0xe58] sm:$0xff]
    %v724 = vld [vmem:[#allocation2 + $0xe60] sm:$0xff]
    %v725 = vld [vmem:[#allocation2 + $0xe68] sm:$0xff]
    %v726 = vld [vmem:[#allocation2 + $0xe70] sm:$0xff]
    %v727 = vld [vmem:[#allocation2 + $0xe78] sm:$0xf]
    %v728 = vld [vmem:[#allocation2 + $0xe7c] sm:$0xff]
    %v729 = vld [vmem:[#allocation2 + $0xe84] sm:$0xff]
    %v730 = vld [vmem:[#allocation2 + $0xe8c] sm:$0xff]
    %v731 = vld [vmem:[#allocation2 + $0xe94] sm:$0xff]
    %v732 = vld [vmem:[#allocation2 + $0xe9c] sm:$0xf]
    %v733 = vld [vmem:[#allocation2 + $0xea0] sm:$0xff]
    %v734 = vld [vmem:[#allocation2 + $0xea8] sm:$0xff]
    %v735 = vld [vmem:[#allocation2 + $0xeb0] sm:$0xff]
    %v736 = vld [vmem:[#allocation2 + $0xeb8] sm:$0xff]
    %v737 = vld [vmem:[#allocation2 + $0xec0] sm:$0xf]
    %v738 = vld [vmem:[#allocation2 + $0xec4] sm:$0xff]
    %v739 = vld [vmem:[#allocation2 + $0xecc] sm:$0xff]
    %v740 = vld [vmem:[#allocation2 + $0xed4] sm:$0xff]
    %v741 = vld [vmem:[#allocation2 + $0xedc] sm:$0xff]
    %v742 = vld [vmem:[#allocation2 + $0xee4] sm:$0xf]
    %v743 = vld [vmem:[#allocation2 + $0xee8] sm:$0xff]
    %v744 = vld [vmem:[#allocation2 + $0xef0] sm:$0xff]
    %v745 = vld [vmem:[#allocation2 + $0xef8] sm:$0xff]
    %v746 = vld [vmem:[#allocation2 + $0xf00] sm:$0xff]
    %v747 = vld [vmem:[#allocation2 + $0xf08] sm:$0xf]
    %v748 = vld [vmem:[#allocation2 + $0xf0c] sm:$0xff]
    %v749 = vld [vmem:[#allocation2 + $0xf14] sm:$0xff]
    %v750 = vld [vmem:[#allocation2 + $0xf1c] sm:$0xff]
    %v751 = vld [vmem:[#allocation2 + $0xf24] sm:$0xff]
    %v752 = vld [vmem:[#allocation2 + $0xf2c] sm:$0xf]
    %v753 = vld [vmem:[#allocation2 + $0xf30] sm:$0xff]
    %v754 = vld [vmem:[#allocation2 + $0xf38] sm:$0xff]
    %v755 = vld [vmem:[#allocation2 + $0xf40] sm:$0xff]
    %v756 = vld [vmem:[#allocation2 + $0xf48] sm:$0xff]
    %v757 = vld [vmem:[#allocation2 + $0xf50] sm:$0xf]
    %v758 = vld [vmem:[#allocation2 + $0xf54] sm:$0xff]
    %v759 = vld [vmem:[#allocation2 + $0xf5c] sm:$0xff]
    %v760 = vld [vmem:[#allocation2 + $0xf64] sm:$0xff]
    %v761 = vld [vmem:[#allocation2 + $0xf6c] sm:$0xff]
    %v762 = vld [vmem:[#allocation2 + $0xf74] sm:$0xf]
    %v763 = vld [vmem:[#allocation2 + $0xf78] sm:$0xff]
    %v764 = vld [vmem:[#allocation2 + $0xf80] sm:$0xff]
    %v765 = vld [vmem:[#allocation2 + $0xf88] sm:$0xff]
    %v766 = vld [vmem:[#allocation2 + $0xf90] sm:$0xff]
    %v767 = vld [vmem:[#allocation2 + $0xf98] sm:$0xf]
    %v768 = vld [vmem:[#allocation2 + $0xf9c] sm:$0xff]
    %v769 = vld [vmem:[#allocation2 + $0xfa4] sm:$0xff]
    %v770 = vld [vmem:[#allocation2 + $0xfac] sm:$0xff]
    %v771 = vld [vmem:[#allocation2 + $0xfb4] sm:$0xff]
    %v772 = vld [vmem:[#allocation2 + $0xfbc] sm:$0xf]
    %v773 = vld [vmem:[#allocation4] sm:$0xff]
    %v774 = vld [vmem:[#allocation4 + $0x8] sm:$0x1]
    %v777 = vperm.slane %v773, 0
    %v778 = vperm.slane %v773, 1
    %v779 = vperm.slane %v773, 2
    %v780 = vperm.slane %v773, 3
    %v781 = vperm.slane %v773, 4
    %v782 = vperm.slane %v773, 5
    %v783 = vperm.slane %v773, 6
    %v784 = vperm.slane %v773, 7
    %v785 = vperm.slane %v774, 0
    %v859 = vunpack.c.l.b16 %v149
    %v860 = vunpack.c.h.b16 %v149
    %v861 = vunpack.c.l.b16 %v150
    %v862 = vunpack.c.h.b16 %v150
    %v863 = vunpack.c.l.b16 %v151
    %v864 = vunpack.c.h.b16 %v151
    %v865 = vunpack.c.l.b16 %v152
    %v866 = vunpack.c.l.b16 %v153
    %v867 = vunpack.c.h.b16 %v153
    %v868 = vunpack.c.l.b16 %v154
    %v869 = vunpack.c.h.b16 %v154
    %v870 = vunpack.c.l.b16 %v155
    %v871 = vunpack.c.h.b16 %v155
    %v872 = vunpack.c.l.b16 %v156
    %v873 = vunpack.c.l.b16 %v157
    %v874 = vunpack.c.h.b16 %v157
    %v875 = vunpack.c.l.b16 %v158
    %v876 = vunpack.c.h.b16 %v158
    %v877 = vunpack.c.l.b16 %v159
    %v878 = vunpack.c.h.b16 %v159
    %v879 = vunpack.c.l.b16 %v160
    %v880 = vunpack.c.l.b16 %v161
    %v881 = vunpack.c.h.b16 %v161
    %v882 = vunpack.c.l.b16 %v162
    %v883 = vunpack.c.h.b16 %v162
    %v884 = vunpack.c.l.b16 %v163
    %v885 = vunpack.c.h.b16 %v163
    %v886 = vunpack.c.l.b16 %v164
    %v887 = vunpack.c.l.b16 %v165
    %v888 = vunpack.c.h.b16 %v165
    %v889 = vunpack.c.l.b16 %v166
    %v890 = vunpack.c.h.b16 %v166
    %v891 = vunpack.c.l.b16 %v167
    %v892 = vunpack.c.h.b16 %v167
    %v893 = vunpack.c.l.b16 %v168
    %v894 = vunpack.c.l.b16 %v169
    %v895 = vunpack.c.h.b16 %v169
    %v896 = vunpack.c.l.b16 %v170
    %v897 = vunpack.c.h.b16 %v170
    %v898 = vunpack.c.l.b16 %v171
    %v899 = vunpack.c.h.b16 %v171
    %v900 = vunpack.c.l.b16 %v172
    %v901 = vunpack.c.l.b16 %v173
    %v902 = vunpack.c.h.b16 %v173
    %v903 = vunpack.c.l.b16 %v174
    %v904 = vunpack.c.h.b16 %v174
    %v905 = vunpack.c.l.b16 %v175
    %v906 = vunpack.c.h.b16 %v175
    %v907 = vunpack.c.l.b16 %v176
    %v908 = vunpack.c.l.b16 %v177
    %v909 = vunpack.c.h.b16 %v177
    %v910 = vunpack.c.l.b16 %v178
    %v911 = vunpack.c.h.b16 %v178
    %v912 = vunpack.c.l.b16 %v179
    %v913 = vunpack.c.h.b16 %v179
    %v914 = vunpack.c.l.b16 %v180
    %v915 = vunpack.c.l.b16 %v181
    %v916 = vunpack.c.h.b16 %v181
    %v917 = vunpack.c.l.b16 %v182
    %v918 = vunpack.c.h.b16 %v182
    %v919 = vunpack.c.l.b16 %v183
    %v920 = vunpack.c.h.b16 %v183
    %v921 = vunpack.c.l.b16 %v184
    %v922 = vunpack.c.l.b16 %v185
    %v923 = vunpack.c.h.b16 %v185
    %v924 = vunpack.c.l.b16 %v186
    %v925 = vunpack.c.h.b16 %v186
    %v926 = vunpack.c.l.b16 %v187
    %v927 = vunpack.c.h.b16 %v187
    %v928 = vunpack.c.l.b16 %v188
    %v929 = vunpack.c.l.b16 %v189
    %v930 = vunpack.c.h.b16 %v189
    %v931 = vunpack.c.l.b16 %v190
    %v932 = vunpack.c.h.b16 %v190
    %v933 = vunpack.c.l.b16 %v191
    %v934 = vunpack.c.h.b16 %v191
    %v935 = vunpack.c.l.b16 %v192
    %v936 = vunpack.c.l.b16 %v193
    %v937 = vunpack.c.h.b16 %v193
    %v938 = vunpack.c.l.b16 %v194
    %v939 = vunpack.c.h.b16 %v194
    %v940 = vunpack.c.l.b16 %v195
    %v941 = vunpack.c.h.b16 %v195
    %v942 = vunpack.c.l.b16 %v196
    %v943 = vunpack.c.l.b16 %v197
    %v944 = vunpack.c.h.b16 %v197
    %v945 = vunpack.c.l.b16 %v198
    %v946 = vunpack.c.h.b16 %v198
    %v947 = vunpack.c.l.b16 %v199
    %v948 = vunpack.c.h.b16 %v199
    %v949 = vunpack.c.l.b16 %v200
    %v950 = vunpack.c.l.b16 %v201
    %v951 = vunpack.c.h.b16 %v201
    %v952 = vunpack.c.l.b16 %v202
    %v953 = vunpack.c.h.b16 %v202
    %v954 = vunpack.c.l.b16 %v203
    %v955 = vunpack.c.h.b16 %v203
    %v956 = vunpack.c.l.b16 %v204
    %v957 = vunpack.c.l.b16 %v205
    %v958 = vunpack.c.h.b16 %v205
    %v959 = vunpack.c.l.b16 %v206
    %v960 = vunpack.c.h.b16 %v206
    %v961 = vunpack.c.l.b16 %v207
    %v962 = vunpack.c.h.b16 %v207
    %v963 = vunpack.c.l.b16 %v208
    %v964 = vunpack.c.l.b16 %v209
    %v965 = vunpack.c.h.b16 %v209
    %v966 = vunpack.c.l.b16 %v210
    %v967 = vunpack.c.h.b16 %v210
    %v968 = vunpack.c.l.b16 %v211
    %v969 = vunpack.c.h.b16 %v211
    %v970 = vunpack.c.l.b16 %v212
    %v971 = vpack.c.b16 %v866, %v859
    %v972 = vpack.c.b16 %v867, %v860
    %v973 = vpack.c.b16 %v868, %v861
    %v974 = vpack.c.b16 %v869, %v862
    %v975 = vpack.c.b16 %v870, %v863
    %v976 = vpack.c.b16 %v871, %v864
    %v977 = vpack.c.b16 %v872, %v865
    %v978 = vpack.c.b16 %v880, %v873
    %v979 = vpack.c.b16 %v881, %v874
    %v980 = vpack.c.b16 %v882, %v875
    %v981 = vpack.c.b16 %v883, %v876
    %v982 = vpack.c.b16 %v884, %v877
    %v983 = vpack.c.b16 %v885, %v878
    %v984 = vpack.c.b16 %v886, %v879
    %v985 = vpack.c.b16 %v894, %v887
    %v986 = vpack.c.b16 %v895, %v888
    %v987 = vpack.c.b16 %v896, %v889
    %v988 = vpack.c.b16 %v897, %v890
    %v989 = vpack.c.b16 %v898, %v891
    %v990 = vpack.c.b16 %v899, %v892
    %v991 = vpack.c.b16 %v900, %v893
    %v992 = vpack.c.b16 %v908, %v901
    %v993 = vpack.c.b16 %v909, %v902
    %v994 = vpack.c.b16 %v910, %v903
    %v995 = vpack.c.b16 %v911, %v904
    %v996 = vpack.c.b16 %v912, %v905
    %v997 = vpack.c.b16 %v913, %v906
    %v998 = vpack.c.b16 %v914, %v907
    %v999 = vpack.c.b16 %v922, %v915
    %v1000 = vpack.c.b16 %v923, %v916
    %v1001 = vpack.c.b16 %v924, %v917
    %v1002 = vpack.c.b16 %v925, %v918
    %v1003 = vpack.c.b16 %v926, %v919
    %v1004 = vpack.c.b16 %v927, %v920
    %v1005 = vpack.c.b16 %v928, %v921
    %v1006 = vpack.c.b16 %v936, %v929
    %v1007 = vpack.c.b16 %v937, %v930
    %v1008 = vpack.c.b16 %v938, %v931
    %v1009 = vpack.c.b16 %v939, %v932
    %v1010 = vpack.c.b16 %v940, %v933
    %v1011 = vpack.c.b16 %v941, %v934
    %v1012 = vpack.c.b16 %v942, %v935
    %v1013 = vpack.c.b16 %v950, %v943
    %v1014 = vpack.c.b16 %v951, %v944
    %v1015 = vpack.c.b16 %v952, %v945
    %v1016 = vpack.c.b16 %v953, %v946
    %v1017 = vpack.c.b16 %v954, %v947
    %v1018 = vpack.c.b16 %v955, %v948
    %v1019 = vpack.c.b16 %v956, %v949
    %v1020 = vpack.c.b16 %v964, %v957
    %v1021 = vpack.c.b16 %v965, %v958
    %v1022 = vpack.c.b16 %v966, %v959
    %v1023 = vpack.c.b16 %v967, %v960
    %v1024 = vpack.c.b16 %v968, %v961
    %v1025 = vpack.c.b16 %v969, %v962
    %v1026 = vpack.c.b16 %v970, %v963
    %v1643 = vunpack.c.l.b16 %v213
    %v1644 = vunpack.c.h.b16 %v213
    %v1645 = vunpack.c.l.b16 %v214
    %v1646 = vunpack.c.h.b16 %v214
    %v1647 = vunpack.c.l.b16 %v215
    %v1648 = vunpack.c.h.b16 %v215
    %v1649 = vunpack.c.l.b16 %v216
    %v1650 = vunpack.c.h.b16 %v216
    %v1651 = vunpack.c.l.b16 %v217
    %v1652 = vunpack.c.l.b16 %v218
    %v1653 = vunpack.c.h.b16 %v218
    %v1654 = vunpack.c.l.b16 %v219
    %v1655 = vunpack.c.h.b16 %v219
    %v1656 = vunpack.c.l.b16 %v220
    %v1657 = vunpack.c.h.b16 %v220
    %v1658 = vunpack.c.l.b16 %v221
    %v1659 = vunpack.c.h.b16 %v221
    %v1660 = vunpack.c.l.b16 %v222
    %v1661 = vunpack.c.l.b16 %v223
    %v1662 = vunpack.c.h.b16 %v223
    %v1663 = vunpack.c.l.b16 %v224
    %v1664 = vunpack.c.h.b16 %v224
    %v1665 = vunpack.c.l.b16 %v225
    %v1666 = vunpack.c.h.b16 %v225
    %v1667 = vunpack.c.l.b16 %v226
    %v1668 = vunpack.c.h.b16 %v226
    %v1669 = vunpack.c.l.b16 %v227
    %v1670 = vunpack.c.l.b16 %v228
    %v1671 = vunpack.c.h.b16 %v228
    %v1672 = vunpack.c.l.b16 %v229
    %v1673 = vunpack.c.h.b16 %v229
    %v1674 = vunpack.c.l.b16 %v230
    %v1675 = vunpack.c.h.b16 %v230
    %v1676 = vunpack.c.l.b16 %v231
    %v1677 = vunpack.c.h.b16 %v231
    %v1678 = vunpack.c.l.b16 %v232
    %v1679 = vunpack.c.l.b16 %v233
    %v1680 = vunpack.c.h.b16 %v233
    %v1681 = vunpack.c.l.b16 %v234
    %v1682 = vunpack.c.h.b16 %v234
    %v1683 = vunpack.c.l.b16 %v235
    %v1684 = vunpack.c.h.b16 %v235
    %v1685 = vunpack.c.l.b16 %v236
    %v1686 = vunpack.c.h.b16 %v236
    %v1687 = vunpack.c.l.b16 %v237
    %v1688 = vunpack.c.l.b16 %v238
    %v1689 = vunpack.c.h.b16 %v238
    %v1690 = vunpack.c.l.b16 %v239
    %v1691 = vunpack.c.h.b16 %v239
    %v1692 = vunpack.c.l.b16 %v240
    %v1693 = vunpack.c.h.b16 %v240
    %v1694 = vunpack.c.l.b16 %v241
    %v1695 = vunpack.c.h.b16 %v241
    %v1696 = vunpack.c.l.b16 %v242
    %v1697 = vunpack.c.l.b16 %v243
    %v1698 = vunpack.c.h.b16 %v243
    %v1699 = vunpack.c.l.b16 %v244
    %v1700 = vunpack.c.h.b16 %v244
    %v1701 = vunpack.c.l.b16 %v245
    %v1702 = vunpack.c.h.b16 %v245
    %v1703 = vunpack.c.l.b16 %v246
    %v1704 = vunpack.c.h.b16 %v246
    %v1705 = vunpack.c.l.b16 %v247
    %v1706 = vunpack.c.l.b16 %v248
    %v1707 = vunpack.c.h.b16 %v248
    %v1708 = vunpack.c.l.b16 %v249
    %v1709 = vunpack.c.h.b16 %v249
    %v1710 = vunpack.c.l.b16 %v250
    %v1711 = vunpack.c.h.b16 %v250
    %v1712 = vunpack.c.l.b16 %v251
    %v1713 = vunpack.c.h.b16 %v251
    %v1714 = vunpack.c.l.b16 %v252
    %v1715 = vunpack.c.l.b16 %v253
    %v1716 = vunpack.c.h.b16 %v253
    %v1717 = vunpack.c.l.b16 %v254
    %v1718 = vunpack.c.h.b16 %v254
    %v1719 = vunpack.c.l.b16 %v255
    %v1720 = vunpack.c.h.b16 %v255
    %v1721 = vunpack.c.l.b16 %v256
    %v1722 = vunpack.c.h.b16 %v256
    %v1723 = vunpack.c.l.b16 %v257
    %v1724 = vunpack.c.l.b16 %v258
    %v1725 = vunpack.c.h.b16 %v258
    %v1726 = vunpack.c.l.b16 %v259
    %v1727 = vunpack.c.h.b16 %v259
    %v1728 = vunpack.c.l.b16 %v260
    %v1729 = vunpack.c.h.b16 %v260
    %v1730 = vunpack.c.l.b16 %v261
    %v1731 = vunpack.c.h.b16 %v261
    %v1732 = vunpack.c.l.b16 %v262
    %v1733 = vunpack.c.l.b16 %v263
    %v1734 = vunpack.c.h.b16 %v263
    %v1735 = vunpack.c.l.b16 %v264
    %v1736 = vunpack.c.h.b16 %v264
    %v1737 = vunpack.c.l.b16 %v265
    %v1738 = vunpack.c.h.b16 %v265
    %v1739 = vunpack.c.l.b16 %v266
    %v1740 = vunpack.c.h.b16 %v266
    %v1741 = vunpack.c.l.b16 %v267
    %v1742 = vunpack.c.l.b16 %v268
    %v1743 = vunpack.c.h.b16 %v268
    %v1744 = vunpack.c.l.b16 %v269
    %v1745 = vunpack.c.h.b16 %v269
    %v1746 = vunpack.c.l.b16 %v270
    %v1747 = vunpack.c.h.b16 %v270
    %v1748 = vunpack.c.l.b16 %v271
    %v1749 = vunpack.c.h.b16 %v271
    %v1750 = vunpack.c.l.b16 %v272
    %v1751 = vunpack.c.l.b16 %v273
    %v1752 = vunpack.c.h.b16 %v273
    %v1753 = vunpack.c.l.b16 %v274
    %v1754 = vunpack.c.h.b16 %v274
    %v1755 = vunpack.c.l.b16 %v275
    %v1756 = vunpack.c.h.b16 %v275
    %v1757 = vunpack.c.l.b16 %v276
    %v1758 = vunpack.c.h.b16 %v276
    %v1759 = vunpack.c.l.b16 %v277
    %v1760 = vunpack.c.l.b16 %v278
    %v1761 = vunpack.c.h.b16 %v278
    %v1762 = vunpack.c.l.b16 %v279
    %v1763 = vunpack.c.h.b16 %v279
    %v1764 = vunpack.c.l.b16 %v280
    %v1765 = vunpack.c.h.b16 %v280
    %v1766 = vunpack.c.l.b16 %v281
    %v1767 = vunpack.c.h.b16 %v281
    %v1768 = vunpack.c.l.b16 %v282
    %v1769 = vunpack.c.l.b16 %v283
    %v1770 = vunpack.c.h.b16 %v283
    %v1771 = vunpack.c.l.b16 %v284
    %v1772 = vunpack.c.h.b16 %v284
    %v1773 = vunpack.c.l.b16 %v285
    %v1774 = vunpack.c.h.b16 %v285
    %v1775 = vunpack.c.l.b16 %v286
    %v1776 = vunpack.c.h.b16 %v286
    %v1777 = vunpack.c.l.b16 %v287
    %v1778 = vunpack.c.l.b16 %v288
    %v1779 = vunpack.c.h.b16 %v288
    %v1780 = vunpack.c.l.b16 %v289
    %v1781 = vunpack.c.h.b16 %v289
    %v1782 = vunpack.c.l.b16 %v290
    %v1783 = vunpack.c.h.b16 %v290
    %v1784 = vunpack.c.l.b16 %v291
    %v1785 = vunpack.c.h.b16 %v291
    %v1786 = vunpack.c.l.b16 %v292
    %v1787 = vunpack.c.l.b16 %v293
    %v1788 = vunpack.c.h.b16 %v293
    %v1789 = vunpack.c.l.b16 %v294
    %v1790 = vunpack.c.h.b16 %v294
    %v1791 = vunpack.c.l.b16 %v295
    %v1792 = vunpack.c.h.b16 %v295
    %v1793 = vunpack.c.l.b16 %v296
    %v1794 = vunpack.c.h.b16 %v296
    %v1795 = vunpack.c.l.b16 %v297
    %v1796 = vunpack.c.l.b16 %v298
    %v1797 = vunpack.c.h.b16 %v298
    %v1798 = vunpack.c.l.b16 %v299
    %v1799 = vunpack.c.h.b16 %v299
    %v1800 = vunpack.c.l.b16 %v300
    %v1801 = vunpack.c.h.b16 %v300
    %v1802 = vunpack.c.l.b16 %v301
    %v1803 = vunpack.c.h.b16 %v301
    %v1804 = vunpack.c.l.b16 %v302
    %v1805 = vunpack.c.l.b16 %v303
    %v1806 = vunpack.c.h.b16 %v303
    %v1807 = vunpack.c.l.b16 %v304
    %v1808 = vunpack.c.h.b16 %v304
    %v1809 = vunpack.c.l.b16 %v305
    %v1810 = vunpack.c.h.b16 %v305
    %v1811 = vunpack.c.l.b16 %v306
    %v1812 = vunpack.c.h.b16 %v306
    %v1813 = vunpack.c.l.b16 %v307
    %v1814 = vunpack.c.l.b16 %v308
    %v1815 = vunpack.c.h.b16 %v308
    %v1816 = vunpack.c.l.b16 %v309
    %v1817 = vunpack.c.h.b16 %v309
    %v1818 = vunpack.c.l.b16 %v310
    %v1819 = vunpack.c.h.b16 %v310
    %v1820 = vunpack.c.l.b16 %v311
    %v1821 = vunpack.c.h.b16 %v311
    %v1822 = vunpack.c.l.b16 %v312
    %v1823 = vunpack.c.l.b16 %v313
    %v1824 = vunpack.c.h.b16 %v313
    %v1825 = vunpack.c.l.b16 %v314
    %v1826 = vunpack.c.h.b16 %v314
    %v1827 = vunpack.c.l.b16 %v315
    %v1828 = vunpack.c.h.b16 %v315
    %v1829 = vunpack.c.l.b16 %v316
    %v1830 = vunpack.c.h.b16 %v316
    %v1831 = vunpack.c.l.b16 %v317
    %v1832 = vunpack.c.l.b16 %v318
    %v1833 = vunpack.c.h.b16 %v318
    %v1834 = vunpack.c.l.b16 %v319
    %v1835 = vunpack.c.h.b16 %v319
    %v1836 = vunpack.c.l.b16 %v320
    %v1837 = vunpack.c.h.b16 %v320
    %v1838 = vunpack.c.l.b16 %v321
    %v1839 = vunpack.c.h.b16 %v321
    %v1840 = vunpack.c.l.b16 %v322
    %v1841 = vunpack.c.l.b16 %v323
    %v1842 = vunpack.c.h.b16 %v323
    %v1843 = vunpack.c.l.b16 %v324
    %v1844 = vunpack.c.h.b16 %v324
    %v1845 = vunpack.c.l.b16 %v325
    %v1846 = vunpack.c.h.b16 %v325
    %v1847 = vunpack.c.l.b16 %v326
    %v1848 = vunpack.c.h.b16 %v326
    %v1849 = vunpack.c.l.b16 %v327
    %v1850 = vunpack.c.l.b16 %v328
    %v1851 = vunpack.c.h.b16 %v328
    %v1852 = vunpack.c.l.b16 %v329
    %v1853 = vunpack.c.h.b16 %v329
    %v1854 = vunpack.c.l.b16 %v330
    %v1855 = vunpack.c.h.b16 %v330
    %v1856 = vunpack.c.l.b16 %v331
    %v1857 = vunpack.c.h.b16 %v331
    %v1858 = vunpack.c.l.b16 %v332
    %v1859 = vunpack.c.l.b16 %v333
    %v1860 = vunpack.c.h.b16 %v333
    %v1861 = vunpack.c.l.b16 %v334
    %v1862 = vunpack.c.h.b16 %v334
    %v1863 = vunpack.c.l.b16 %v335
    %v1864 = vunpack.c.h.b16 %v335
    %v1865 = vunpack.c.l.b16 %v336
    %v1866 = vunpack.c.h.b16 %v336
    %v1867 = vunpack.c.l.b16 %v337
    %v1868 = vunpack.c.l.b16 %v338
    %v1869 = vunpack.c.h.b16 %v338
    %v1870 = vunpack.c.l.b16 %v339
    %v1871 = vunpack.c.h.b16 %v339
    %v1872 = vunpack.c.l.b16 %v340
    %v1873 = vunpack.c.h.b16 %v340
    %v1874 = vunpack.c.l.b16 %v341
    %v1875 = vunpack.c.h.b16 %v341
    %v1876 = vunpack.c.l.b16 %v342
    %v1877 = vunpack.c.l.b16 %v343
    %v1878 = vunpack.c.h.b16 %v343
    %v1879 = vunpack.c.l.b16 %v344
    %v1880 = vunpack.c.h.b16 %v344
    %v1881 = vunpack.c.l.b16 %v345
    %v1882 = vunpack.c.h.b16 %v345
    %v1883 = vunpack.c.l.b16 %v346
    %v1884 = vunpack.c.h.b16 %v346
    %v1885 = vunpack.c.l.b16 %v347
    %v1886 = vunpack.c.l.b16 %v348
    %v1887 = vunpack.c.h.b16 %v348
    %v1888 = vunpack.c.l.b16 %v349
    %v1889 = vunpack.c.h.b16 %v349
    %v1890 = vunpack.c.l.b16 %v350
    %v1891 = vunpack.c.h.b16 %v350
    %v1892 = vunpack.c.l.b16 %v351
    %v1893 = vunpack.c.h.b16 %v351
    %v1894 = vunpack.c.l.b16 %v352
    %v1895 = vunpack.c.l.b16 %v353
    %v1896 = vunpack.c.h.b16 %v353
    %v1897 = vunpack.c.l.b16 %v354
    %v1898 = vunpack.c.h.b16 %v354
    %v1899 = vunpack.c.l.b16 %v355
    %v1900 = vunpack.c.h.b16 %v355
    %v1901 = vunpack.c.l.b16 %v356
    %v1902 = vunpack.c.h.b16 %v356
    %v1903 = vunpack.c.l.b16 %v357
    %v1904 = vunpack.c.l.b16 %v358
    %v1905 = vunpack.c.h.b16 %v358
    %v1906 = vunpack.c.l.b16 %v359
    %v1907 = vunpack.c.h.b16 %v359
    %v1908 = vunpack.c.l.b16 %v360
    %v1909 = vunpack.c.h.b16 %v360
    %v1910 = vunpack.c.l.b16 %v361
    %v1911 = vunpack.c.h.b16 %v361
    %v1912 = vunpack.c.l.b16 %v362
    %v1913 = vunpack.c.l.b16 %v363
    %v1914 = vunpack.c.h.b16 %v363
    %v1915 = vunpack.c.l.b16 %v364
    %v1916 = vunpack.c.h.b16 %v364
    %v1917 = vunpack.c.l.b16 %v365
    %v1918 = vunpack.c.h.b16 %v365
    %v1919 = vunpack.c.l.b16 %v366
    %v1920 = vunpack.c.h.b16 %v366
    %v1921 = vunpack.c.l.b16 %v367
    %v1922 = vunpack.c.l.b16 %v368
    %v1923 = vunpack.c.h.b16 %v368
    %v1924 = vunpack.c.l.b16 %v369
    %v1925 = vunpack.c.h.b16 %v369
    %v1926 = vunpack.c.l.b16 %v370
    %v1927 = vunpack.c.h.b16 %v370
    %v1928 = vunpack.c.l.b16 %v371
    %v1929 = vunpack.c.h.b16 %v371
    %v1930 = vunpack.c.l.b16 %v372
    %v1931 = vunpack.c.l.b16 %v373
    %v1932 = vunpack.c.h.b16 %v373
    %v1933 = vunpack.c.l.b16 %v374
    %v1934 = vunpack.c.h.b16 %v374
    %v1935 = vunpack.c.l.b16 %v375
    %v1936 = vunpack.c.h.b16 %v375
    %v1937 = vunpack.c.l.b16 %v376
    %v1938 = vunpack.c.h.b16 %v376
    %v1939 = vunpack.c.l.b16 %v377
    %v1940 = vunpack.c.l.b16 %v378
    %v1941 = vunpack.c.h.b16 %v378
    %v1942 = vunpack.c.l.b16 %v379
    %v1943 = vunpack.c.h.b16 %v379
    %v1944 = vunpack.c.l.b16 %v380
    %v1945 = vunpack.c.h.b16 %v380
    %v1946 = vunpack.c.l.b16 %v381
    %v1947 = vunpack.c.h.b16 %v381
    %v1948 = vunpack.c.l.b16 %v382
    %v1949 = vunpack.c.l.b16 %v383
    %v1950 = vunpack.c.h.b16 %v383
    %v1951 = vunpack.c.l.b16 %v384
    %v1952 = vunpack.c.h.b16 %v384
    %v1953 = vunpack.c.l.b16 %v385
    %v1954 = vunpack.c.h.b16 %v385
    %v1955 = vunpack.c.l.b16 %v386
    %v1956 = vunpack.c.h.b16 %v386
    %v1957 = vunpack.c.l.b16 %v387
    %v1958 = vunpack.c.l.b16 %v388
    %v1959 = vunpack.c.h.b16 %v388
    %v1960 = vunpack.c.l.b16 %v389
    %v1961 = vunpack.c.h.b16 %v389
    %v1962 = vunpack.c.l.b16 %v390
    %v1963 = vunpack.c.h.b16 %v390
    %v1964 = vunpack.c.l.b16 %v391
    %v1965 = vunpack.c.h.b16 %v391
    %v1966 = vunpack.c.l.b16 %v392
    %v1967 = vunpack.c.l.b16 %v393
    %v1968 = vunpack.c.h.b16 %v393
    %v1969 = vunpack.c.l.b16 %v394
    %v1970 = vunpack.c.h.b16 %v394
    %v1971 = vunpack.c.l.b16 %v395
    %v1972 = vunpack.c.h.b16 %v395
    %v1973 = vunpack.c.l.b16 %v396
    %v1974 = vunpack.c.h.b16 %v396
    %v1975 = vunpack.c.l.b16 %v397
    %v1976 = vunpack.c.l.b16 %v398
    %v1977 = vunpack.c.h.b16 %v398
    %v1978 = vunpack.c.l.b16 %v399
    %v1979 = vunpack.c.h.b16 %v399
    %v1980 = vunpack.c.l.b16 %v400
    %v1981 = vunpack.c.h.b16 %v400
    %v1982 = vunpack.c.l.b16 %v401
    %v1983 = vunpack.c.h.b16 %v401
    %v1984 = vunpack.c.l.b16 %v402
    %v1985 = vunpack.c.l.b16 %v403
    %v1986 = vunpack.c.h.b16 %v403
    %v1987 = vunpack.c.l.b16 %v404
    %v1988 = vunpack.c.h.b16 %v404
    %v1989 = vunpack.c.l.b16 %v405
    %v1990 = vunpack.c.h.b16 %v405
    %v1991 = vunpack.c.l.b16 %v406
    %v1992 = vunpack.c.h.b16 %v406
    %v1993 = vunpack.c.l.b16 %v407
    %v1994 = vunpack.c.l.b16 %v408
    %v1995 = vunpack.c.h.b16 %v408
    %v1996 = vunpack.c.l.b16 %v409
    %v1997 = vunpack.c.h.b16 %v409
    %v1998 = vunpack.c.l.b16 %v410
    %v1999 = vunpack.c.h.b16 %v410
    %v2000 = vunpack.c.l.b16 %v411
    %v2001 = vunpack.c.h.b16 %v411
    %v2002 = vunpack.c.l.b16 %v412
    %v2003 = vunpack.c.l.b16 %v413
    %v2004 = vunpack.c.h.b16 %v413
    %v2005 = vunpack.c.l.b16 %v414
    %v2006 = vunpack.c.h.b16 %v414
    %v2007 = vunpack.c.l.b16 %v415
    %v2008 = vunpack.c.h.b16 %v415
    %v2009 = vunpack.c.l.b16 %v416
    %v2010 = vunpack.c.h.b16 %v416
    %v2011 = vunpack.c.l.b16 %v417
    %v2012 = vunpack.c.l.b16 %v418
    %v2013 = vunpack.c.h.b16 %v418
    %v2014 = vunpack.c.l.b16 %v419
    %v2015 = vunpack.c.h.b16 %v419
    %v2016 = vunpack.c.l.b16 %v420
    %v2017 = vunpack.c.h.b16 %v420
    %v2018 = vunpack.c.l.b16 %v421
    %v2019 = vunpack.c.h.b16 %v421
    %v2020 = vunpack.c.l.b16 %v422
    %v2021 = vunpack.c.l.b16 %v423
    %v2022 = vunpack.c.h.b16 %v423
    %v2023 = vunpack.c.l.b16 %v424
    %v2024 = vunpack.c.h.b16 %v424
    %v2025 = vunpack.c.l.b16 %v425
    %v2026 = vunpack.c.h.b16 %v425
    %v2027 = vunpack.c.l.b16 %v426
    %v2028 = vunpack.c.h.b16 %v426
    %v2029 = vunpack.c.l.b16 %v427
    %v2030 = vunpack.c.l.b16 %v428
    %v2031 = vunpack.c.h.b16 %v428
    %v2032 = vunpack.c.l.b16 %v429
    %v2033 = vunpack.c.h.b16 %v429
    %v2034 = vunpack.c.l.b16 %v430
    %v2035 = vunpack.c.h.b16 %v430
    %v2036 = vunpack.c.l.b16 %v431
    %v2037 = vunpack.c.h.b16 %v431
    %v2038 = vunpack.c.l.b16 %v432
    %v2039 = vunpack.c.l.b16 %v433
    %v2040 = vunpack.c.h.b16 %v433
    %v2041 = vunpack.c.l.b16 %v434
    %v2042 = vunpack.c.h.b16 %v434
    %v2043 = vunpack.c.l.b16 %v435
    %v2044 = vunpack.c.h.b16 %v435
    %v2045 = vunpack.c.l.b16 %v436
    %v2046 = vunpack.c.h.b16 %v436
    %v2047 = vunpack.c.l.b16 %v437
    %v2048 = vunpack.c.l.b16 %v438
    %v2049 = vunpack.c.h.b16 %v438
    %v2050 = vunpack.c.l.b16 %v439
    %v2051 = vunpack.c.h.b16 %v439
    %v2052 = vunpack.c.l.b16 %v440
    %v2053 = vunpack.c.h.b16 %v440
    %v2054 = vunpack.c.l.b16 %v441
    %v2055 = vunpack.c.h.b16 %v441
    %v2056 = vunpack.c.l.b16 %v442
    %v2057 = vunpack.c.l.b16 %v443
    %v2058 = vunpack.c.h.b16 %v443
    %v2059 = vunpack.c.l.b16 %v444
    %v2060 = vunpack.c.h.b16 %v444
    %v2061 = vunpack.c.l.b16 %v445
    %v2062 = vunpack.c.h.b16 %v445
    %v2063 = vunpack.c.l.b16 %v446
    %v2064 = vunpack.c.h.b16 %v446
    %v2065 = vunpack.c.l.b16 %v447
    %v2066 = vunpack.c.l.b16 %v448
    %v2067 = vunpack.c.h.b16 %v448
    %v2068 = vunpack.c.l.b16 %v449
    %v2069 = vunpack.c.h.b16 %v449
    %v2070 = vunpack.c.l.b16 %v450
    %v2071 = vunpack.c.h.b16 %v450
    %v2072 = vunpack.c.l.b16 %v451
    %v2073 = vunpack.c.h.b16 %v451
    %v2074 = vunpack.c.l.b16 %v452
    %v2075 = vunpack.c.l.b16 %v453
    %v2076 = vunpack.c.h.b16 %v453
    %v2077 = vunpack.c.l.b16 %v454
    %v2078 = vunpack.c.h.b16 %v454
    %v2079 = vunpack.c.l.b16 %v455
    %v2080 = vunpack.c.h.b16 %v455
    %v2081 = vunpack.c.l.b16 %v456
    %v2082 = vunpack.c.h.b16 %v456
    %v2083 = vunpack.c.l.b16 %v457
    %v2084 = vunpack.c.l.b16 %v458
    %v2085 = vunpack.c.h.b16 %v458
    %v2086 = vunpack.c.l.b16 %v459
    %v2087 = vunpack.c.h.b16 %v459
    %v2088 = vunpack.c.l.b16 %v460
    %v2089 = vunpack.c.h.b16 %v460
    %v2090 = vunpack.c.l.b16 %v461
    %v2091 = vunpack.c.h.b16 %v461
    %v2092 = vunpack.c.l.b16 %v462
    %v2093 = vunpack.c.l.b16 %v463
    %v2094 = vunpack.c.h.b16 %v463
    %v2095 = vunpack.c.l.b16 %v464
    %v2096 = vunpack.c.h.b16 %v464
    %v2097 = vunpack.c.l.b16 %v465
    %v2098 = vunpack.c.h.b16 %v465
    %v2099 = vunpack.c.l.b16 %v466
    %v2100 = vunpack.c.h.b16 %v466
    %v2101 = vunpack.c.l.b16 %v467
    %v2102 = vunpack.c.l.b16 %v468
    %v2103 = vunpack.c.h.b16 %v468
    %v2104 = vunpack.c.l.b16 %v469
    %v2105 = vunpack.c.h.b16 %v469
    %v2106 = vunpack.c.l.b16 %v470
    %v2107 = vunpack.c.h.b16 %v470
    %v2108 = vunpack.c.l.b16 %v471
    %v2109 = vunpack.c.h.b16 %v471
    %v2110 = vunpack.c.l.b16 %v472
    %v2111 = vunpack.c.l.b16 %v473
    %v2112 = vunpack.c.h.b16 %v473
    %v2113 = vunpack.c.l.b16 %v474
    %v2114 = vunpack.c.h.b16 %v474
    %v2115 = vunpack.c.l.b16 %v475
    %v2116 = vunpack.c.h.b16 %v475
    %v2117 = vunpack.c.l.b16 %v476
    %v2118 = vunpack.c.h.b16 %v476
    %v2119 = vunpack.c.l.b16 %v477
    %v2120 = vunpack.c.l.b16 %v478
    %v2121 = vunpack.c.h.b16 %v478
    %v2122 = vunpack.c.l.b16 %v479
    %v2123 = vunpack.c.h.b16 %v479
    %v2124 = vunpack.c.l.b16 %v480
    %v2125 = vunpack.c.h.b16 %v480
    %v2126 = vunpack.c.l.b16 %v481
    %v2127 = vunpack.c.h.b16 %v481
    %v2128 = vunpack.c.l.b16 %v482
    %v2129 = vunpack.c.l.b16 %v483
    %v2130 = vunpack.c.h.b16 %v483
    %v2131 = vunpack.c.l.b16 %v484
    %v2132 = vunpack.c.h.b16 %v484
    %v2133 = vunpack.c.l.b16 %v485
    %v2134 = vunpack.c.h.b16 %v485
    %v2135 = vunpack.c.l.b16 %v486
    %v2136 = vunpack.c.h.b16 %v486
    %v2137 = vunpack.c.l.b16 %v487
    %v2138 = vunpack.c.l.b16 %v488
    %v2139 = vunpack.c.h.b16 %v488
    %v2140 = vunpack.c.l.b16 %v489
    %v2141 = vunpack.c.h.b16 %v489
    %v2142 = vunpack.c.l.b16 %v490
    %v2143 = vunpack.c.h.b16 %v490
    %v2144 = vunpack.c.l.b16 %v491
    %v2145 = vunpack.c.h.b16 %v491
    %v2146 = vunpack.c.l.b16 %v492
    %v2147 = vunpack.c.l.b16 %v493
    %v2148 = vunpack.c.h.b16 %v493
    %v2149 = vunpack.c.l.b16 %v494
    %v2150 = vunpack.c.h.b16 %v494
    %v2151 = vunpack.c.l.b16 %v495
    %v2152 = vunpack.c.h.b16 %v495
    %v2153 = vunpack.c.l.b16 %v496
    %v2154 = vunpack.c.h.b16 %v496
    %v2155 = vunpack.c.l.b16 %v497
    %v2156 = vunpack.c.l.b16 %v498
    %v2157 = vunpack.c.h.b16 %v498
    %v2158 = vunpack.c.l.b16 %v499
    %v2159 = vunpack.c.h.b16 %v499
    %v2160 = vunpack.c.l.b16 %v500
    %v2161 = vunpack.c.h.b16 %v500
    %v2162 = vunpack.c.l.b16 %v501
    %v2163 = vunpack.c.h.b16 %v501
    %v2164 = vunpack.c.l.b16 %v502
    %v2165 = vunpack.c.l.b16 %v503
    %v2166 = vunpack.c.h.b16 %v503
    %v2167 = vunpack.c.l.b16 %v504
    %v2168 = vunpack.c.h.b16 %v504
    %v2169 = vunpack.c.l.b16 %v505
    %v2170 = vunpack.c.h.b16 %v505
    %v2171 = vunpack.c.l.b16 %v506
    %v2172 = vunpack.c.h.b16 %v506
    %v2173 = vunpack.c.l.b16 %v507
    %v2174 = vunpack.c.l.b16 %v508
    %v2175 = vunpack.c.h.b16 %v508
    %v2176 = vunpack.c.l.b16 %v509
    %v2177 = vunpack.c.h.b16 %v509
    %v2178 = vunpack.c.l.b16 %v510
    %v2179 = vunpack.c.h.b16 %v510
    %v2180 = vunpack.c.l.b16 %v511
    %v2181 = vunpack.c.h.b16 %v511
    %v2182 = vunpack.c.l.b16 %v512
    %v2183 = vunpack.c.l.b16 %v513
    %v2184 = vunpack.c.h.b16 %v513
    %v2185 = vunpack.c.l.b16 %v514
    %v2186 = vunpack.c.h.b16 %v514
    %v2187 = vunpack.c.l.b16 %v515
    %v2188 = vunpack.c.h.b16 %v515
    %v2189 = vunpack.c.l.b16 %v516
    %v2190 = vunpack.c.h.b16 %v516
    %v2191 = vunpack.c.l.b16 %v517
    %v2192 = vunpack.c.l.b16 %v518
    %v2193 = vunpack.c.h.b16 %v518
    %v2194 = vunpack.c.l.b16 %v519
    %v2195 = vunpack.c.h.b16 %v519
    %v2196 = vunpack.c.l.b16 %v520
    %v2197 = vunpack.c.h.b16 %v520
    %v2198 = vunpack.c.l.b16 %v521
    %v2199 = vunpack.c.h.b16 %v521
    %v2200 = vunpack.c.l.b16 %v522
    %v2201 = vunpack.c.l.b16 %v523
    %v2202 = vunpack.c.h.b16 %v523
    %v2203 = vunpack.c.l.b16 %v524
    %v2204 = vunpack.c.h.b16 %v524
    %v2205 = vunpack.c.l.b16 %v525
    %v2206 = vunpack.c.h.b16 %v525
    %v2207 = vunpack.c.l.b16 %v526
    %v2208 = vunpack.c.h.b16 %v526
    %v2209 = vunpack.c.l.b16 %v527
    %v2210 = vunpack.c.l.b16 %v528
    %v2211 = vunpack.c.h.b16 %v528
    %v2212 = vunpack.c.l.b16 %v529
    %v2213 = vunpack.c.h.b16 %v529
    %v2214 = vunpack.c.l.b16 %v530
    %v2215 = vunpack.c.h.b16 %v530
    %v2216 = vunpack.c.l.b16 %v531
    %v2217 = vunpack.c.h.b16 %v531
    %v2218 = vunpack.c.l.b16 %v532
    %v2219 = vunpack.c.l.b16 %v533
    %v2220 = vunpack.c.h.b16 %v533
    %v2221 = vunpack.c.l.b16 %v534
    %v2222 = vunpack.c.h.b16 %v534
    %v2223 = vunpack.c.l.b16 %v535
    %v2224 = vunpack.c.h.b16 %v535
    %v2225 = vunpack.c.l.b16 %v536
    %v2226 = vunpack.c.h.b16 %v536
    %v2227 = vunpack.c.l.b16 %v537
    %v2228 = vunpack.c.l.b16 %v538
    %v2229 = vunpack.c.h.b16 %v538
    %v2230 = vunpack.c.l.b16 %v539
    %v2231 = vunpack.c.h.b16 %v539
    %v2232 = vunpack.c.l.b16 %v540
    %v2233 = vunpack.c.h.b16 %v540
    %v2234 = vunpack.c.l.b16 %v541
    %v2235 = vunpack.c.h.b16 %v541
    %v2236 = vunpack.c.l.b16 %v542
    %v2237 = vunpack.c.l.b16 %v543
    %v2238 = vunpack.c.h.b16 %v543
    %v2239 = vunpack.c.l.b16 %v544
    %v2240 = vunpack.c.h.b16 %v544
    %v2241 = vunpack.c.l.b16 %v545
    %v2242 = vunpack.c.h.b16 %v545
    %v2243 = vunpack.c.l.b16 %v546
    %v2244 = vunpack.c.h.b16 %v546
    %v2245 = vunpack.c.l.b16 %v547
    %v2246 = vunpack.c.l.b16 %v548
    %v2247 = vunpack.c.h.b16 %v548
    %v2248 = vunpack.c.l.b16 %v549
    %v2249 = vunpack.c.h.b16 %v549
    %v2250 = vunpack.c.l.b16 %v550
    %v2251 = vunpack.c.h.b16 %v550
    %v2252 = vunpack.c.l.b16 %v551
    %v2253 = vunpack.c.h.b16 %v551
    %v2254 = vunpack.c.l.b16 %v552
    %v2255 = vunpack.c.l.b16 %v553
    %v2256 = vunpack.c.h.b16 %v553
    %v2257 = vunpack.c.l.b16 %v554
    %v2258 = vunpack.c.h.b16 %v554
    %v2259 = vunpack.c.l.b16 %v555
    %v2260 = vunpack.c.h.b16 %v555
    %v2261 = vunpack.c.l.b16 %v556
    %v2262 = vunpack.c.h.b16 %v556
    %v2263 = vunpack.c.l.b16 %v557
    %v2264 = vunpack.c.l.b16 %v558
    %v2265 = vunpack.c.h.b16 %v558
    %v2266 = vunpack.c.l.b16 %v559
    %v2267 = vunpack.c.h.b16 %v559
    %v2268 = vunpack.c.l.b16 %v560
    %v2269 = vunpack.c.h.b16 %v560
    %v2270 = vunpack.c.l.b16 %v561
    %v2271 = vunpack.c.h.b16 %v561
    %v2272 = vunpack.c.l.b16 %v562
    %v2273 = vunpack.c.l.b16 %v563
    %v2274 = vunpack.c.h.b16 %v563
    %v2275 = vunpack.c.l.b16 %v564
    %v2276 = vunpack.c.h.b16 %v564
    %v2277 = vunpack.c.l.b16 %v565
    %v2278 = vunpack.c.h.b16 %v565
    %v2279 = vunpack.c.l.b16 %v566
    %v2280 = vunpack.c.h.b16 %v566
    %v2281 = vunpack.c.l.b16 %v567
    %v2282 = vunpack.c.l.b16 %v568
    %v2283 = vunpack.c.h.b16 %v568
    %v2284 = vunpack.c.l.b16 %v569
    %v2285 = vunpack.c.h.b16 %v569
    %v2286 = vunpack.c.l.b16 %v570
    %v2287 = vunpack.c.h.b16 %v570
    %v2288 = vunpack.c.l.b16 %v571
    %v2289 = vunpack.c.h.b16 %v571
    %v2290 = vunpack.c.l.b16 %v572
    %v2291 = vunpack.c.l.b16 %v573
    %v2292 = vunpack.c.h.b16 %v573
    %v2293 = vunpack.c.l.b16 %v574
    %v2294 = vunpack.c.h.b16 %v574
    %v2295 = vunpack.c.l.b16 %v575
    %v2296 = vunpack.c.h.b16 %v575
    %v2297 = vunpack.c.l.b16 %v576
    %v2298 = vunpack.c.h.b16 %v576
    %v2299 = vunpack.c.l.b16 %v577
    %v2300 = vunpack.c.l.b16 %v578
    %v2301 = vunpack.c.h.b16 %v578
    %v2302 = vunpack.c.l.b16 %v579
    %v2303 = vunpack.c.h.b16 %v579
    %v2304 = vunpack.c.l.b16 %v580
    %v2305 = vunpack.c.h.b16 %v580
    %v2306 = vunpack.c.l.b16 %v581
    %v2307 = vunpack.c.h.b16 %v581
    %v2308 = vunpack.c.l.b16 %v582
    %v2309 = vunpack.c.l.b16 %v583
    %v2310 = vunpack.c.h.b16 %v583
    %v2311 = vunpack.c.l.b16 %v584
    %v2312 = vunpack.c.h.b16 %v584
    %v2313 = vunpack.c.l.b16 %v585
    %v2314 = vunpack.c.h.b16 %v585
    %v2315 = vunpack.c.l.b16 %v586
    %v2316 = vunpack.c.h.b16 %v586
    %v2317 = vunpack.c.l.b16 %v587
    %v2318 = vunpack.c.l.b16 %v588
    %v2319 = vunpack.c.h.b16 %v588
    %v2320 = vunpack.c.l.b16 %v589
    %v2321 = vunpack.c.h.b16 %v589
    %v2322 = vunpack.c.l.b16 %v590
    %v2323 = vunpack.c.h.b16 %v590
    %v2324 = vunpack.c.l.b16 %v591
    %v2325 = vunpack.c.h.b16 %v591
    %v2326 = vunpack.c.l.b16 %v592
    %v2327 = vunpack.c.l.b16 %v593
    %v2328 = vunpack.c.h.b16 %v593
    %v2329 = vunpack.c.l.b16 %v594
    %v2330 = vunpack.c.h.b16 %v594
    %v2331 = vunpack.c.l.b16 %v595
    %v2332 = vunpack.c.h.b16 %v595
    %v2333 = vunpack.c.l.b16 %v596
    %v2334 = vunpack.c.h.b16 %v596
    %v2335 = vunpack.c.l.b16 %v597
    %v2336 = vunpack.c.l.b16 %v598
    %v2337 = vunpack.c.h.b16 %v598
    %v2338 = vunpack.c.l.b16 %v599
    %v2339 = vunpack.c.h.b16 %v599
    %v2340 = vunpack.c.l.b16 %v600
    %v2341 = vunpack.c.h.b16 %v600
    %v2342 = vunpack.c.l.b16 %v601
    %v2343 = vunpack.c.h.b16 %v601
    %v2344 = vunpack.c.l.b16 %v602
    %v2345 = vunpack.c.l.b16 %v603
    %v2346 = vunpack.c.h.b16 %v603
    %v2347 = vunpack.c.l.b16 %v604
    %v2348 = vunpack.c.h.b16 %v604
    %v2349 = vunpack.c.l.b16 %v605
    %v2350 = vunpack.c.h.b16 %v605
    %v2351 = vunpack.c.l.b16 %v606
    %v2352 = vunpack.c.h.b16 %v606
    %v2353 = vunpack.c.l.b16 %v607
    %v2354 = vunpack.c.l.b16 %v608
    %v2355 = vunpack.c.h.b16 %v608
    %v2356 = vunpack.c.l.b16 %v609
    %v2357 = vunpack.c.h.b16 %v609
    %v2358 = vunpack.c.l.b16 %v610
    %v2359 = vunpack.c.h.b16 %v610
    %v2360 = vunpack.c.l.b16 %v611
    %v2361 = vunpack.c.h.b16 %v611
    %v2362 = vunpack.c.l.b16 %v612
    %v2363 = vunpack.c.l.b16 %v613
    %v2364 = vunpack.c.h.b16 %v613
    %v2365 = vunpack.c.l.b16 %v614
    %v2366 = vunpack.c.h.b16 %v614
    %v2367 = vunpack.c.l.b16 %v615
    %v2368 = vunpack.c.h.b16 %v615
    %v2369 = vunpack.c.l.b16 %v616
    %v2370 = vunpack.c.h.b16 %v616
    %v2371 = vunpack.c.l.b16 %v617
    %v2372 = vunpack.c.l.b16 %v618
    %v2373 = vunpack.c.h.b16 %v618
    %v2374 = vunpack.c.l.b16 %v619
    %v2375 = vunpack.c.h.b16 %v619
    %v2376 = vunpack.c.l.b16 %v620
    %v2377 = vunpack.c.h.b16 %v620
    %v2378 = vunpack.c.l.b16 %v621
    %v2379 = vunpack.c.h.b16 %v621
    %v2380 = vunpack.c.l.b16 %v622
    %v2381 = vunpack.c.l.b16 %v623
    %v2382 = vunpack.c.h.b16 %v623
    %v2383 = vunpack.c.l.b16 %v624
    %v2384 = vunpack.c.h.b16 %v624
    %v2385 = vunpack.c.l.b16 %v625
    %v2386 = vunpack.c.h.b16 %v625
    %v2387 = vunpack.c.l.b16 %v626
    %v2388 = vunpack.c.h.b16 %v626
    %v2389 = vunpack.c.l.b16 %v627
    %v2390 = vunpack.c.l.b16 %v628
    %v2391 = vunpack.c.h.b16 %v628
    %v2392 = vunpack.c.l.b16 %v629
    %v2393 = vunpack.c.h.b16 %v629
    %v2394 = vunpack.c.l.b16 %v630
    %v2395 = vunpack.c.h.b16 %v630
    %v2396 = vunpack.c.l.b16 %v631
    %v2397 = vunpack.c.h.b16 %v631
    %v2398 = vunpack.c.l.b16 %v632
    %v2399 = vunpack.c.l.b16 %v633
    %v2400 = vunpack.c.h.b16 %v633
    %v2401 = vunpack.c.l.b16 %v634
    %v2402 = vunpack.c.h.b16 %v634
    %v2403 = vunpack.c.l.b16 %v635
    %v2404 = vunpack.c.h.b16 %v635
    %v2405 = vunpack.c.l.b16 %v636
    %v2406 = vunpack.c.h.b16 %v636
    %v2407 = vunpack.c.l.b16 %v637
    %v2408 = vunpack.c.l.b16 %v638
    %v2409 = vunpack.c.h.b16 %v638
    %v2410 = vunpack.c.l.b16 %v639
    %v2411 = vunpack.c.h.b16 %v639
    %v2412 = vunpack.c.l.b16 %v640
    %v2413 = vunpack.c.h.b16 %v640
    %v2414 = vunpack.c.l.b16 %v641
    %v2415 = vunpack.c.h.b16 %v641
    %v2416 = vunpack.c.l.b16 %v642
    %v2417 = vunpack.c.l.b16 %v643
    %v2418 = vunpack.c.h.b16 %v643
    %v2419 = vunpack.c.l.b16 %v644
    %v2420 = vunpack.c.h.b16 %v644
    %v2421 = vunpack.c.l.b16 %v645
    %v2422 = vunpack.c.h.b16 %v645
    %v2423 = vunpack.c.l.b16 %v646
    %v2424 = vunpack.c.h.b16 %v646
    %v2425 = vunpack.c.l.b16 %v647
    %v2426 = vunpack.c.l.b16 %v648
    %v2427 = vunpack.c.h.b16 %v648
    %v2428 = vunpack.c.l.b16 %v649
    %v2429 = vunpack.c.h.b16 %v649
    %v2430 = vunpack.c.l.b16 %v650
    %v2431 = vunpack.c.h.b16 %v650
    %v2432 = vunpack.c.l.b16 %v651
    %v2433 = vunpack.c.h.b16 %v651
    %v2434 = vunpack.c.l.b16 %v652
    %v2435 = vunpack.c.l.b16 %v653
    %v2436 = vunpack.c.h.b16 %v653
    %v2437 = vunpack.c.l.b16 %v654
    %v2438 = vunpack.c.h.b16 %v654
    %v2439 = vunpack.c.l.b16 %v655
    %v2440 = vunpack.c.h.b16 %v655
    %v2441 = vunpack.c.l.b16 %v656
    %v2442 = vunpack.c.h.b16 %v656
    %v2443 = vunpack.c.l.b16 %v657
    %v2444 = vunpack.c.l.b16 %v658
    %v2445 = vunpack.c.h.b16 %v658
    %v2446 = vunpack.c.l.b16 %v659
    %v2447 = vunpack.c.h.b16 %v659
    %v2448 = vunpack.c.l.b16 %v660
    %v2449 = vunpack.c.h.b16 %v660
    %v2450 = vunpack.c.l.b16 %v661
    %v2451 = vunpack.c.h.b16 %v661
    %v2452 = vunpack.c.l.b16 %v662
    %v2453 = vunpack.c.l.b16 %v663
    %v2454 = vunpack.c.h.b16 %v663
    %v2455 = vunpack.c.l.b16 %v664
    %v2456 = vunpack.c.h.b16 %v664
    %v2457 = vunpack.c.l.b16 %v665
    %v2458 = vunpack.c.h.b16 %v665
    %v2459 = vunpack.c.l.b16 %v666
    %v2460 = vunpack.c.h.b16 %v666
    %v2461 = vunpack.c.l.b16 %v667
    %v2462 = vunpack.c.l.b16 %v668
    %v2463 = vunpack.c.h.b16 %v668
    %v2464 = vunpack.c.l.b16 %v669
    %v2465 = vunpack.c.h.b16 %v669
    %v2466 = vunpack.c.l.b16 %v670
    %v2467 = vunpack.c.h.b16 %v670
    %v2468 = vunpack.c.l.b16 %v671
    %v2469 = vunpack.c.h.b16 %v671
    %v2470 = vunpack.c.l.b16 %v672
    %v2471 = vunpack.c.l.b16 %v673
    %v2472 = vunpack.c.h.b16 %v673
    %v2473 = vunpack.c.l.b16 %v674
    %v2474 = vunpack.c.h.b16 %v674
    %v2475 = vunpack.c.l.b16 %v675
    %v2476 = vunpack.c.h.b16 %v675
    %v2477 = vunpack.c.l.b16 %v676
    %v2478 = vunpack.c.h.b16 %v676
    %v2479 = vunpack.c.l.b16 %v677
    %v2480 = vunpack.c.l.b16 %v678
    %v2481 = vunpack.c.h.b16 %v678
    %v2482 = vunpack.c.l.b16 %v679
    %v2483 = vunpack.c.h.b16 %v679
    %v2484 = vunpack.c.l.b16 %v680
    %v2485 = vunpack.c.h.b16 %v680
    %v2486 = vunpack.c.l.b16 %v681
    %v2487 = vunpack.c.h.b16 %v681
    %v2488 = vunpack.c.l.b16 %v682
    %v2489 = vunpack.c.l.b16 %v683
    %v2490 = vunpack.c.h.b16 %v683
    %v2491 = vunpack.c.l.b16 %v684
    %v2492 = vunpack.c.h.b16 %v684
    %v2493 = vunpack.c.l.b16 %v685
    %v2494 = vunpack.c.h.b16 %v685
    %v2495 = vunpack.c.l.b16 %v686
    %v2496 = vunpack.c.h.b16 %v686
    %v2497 = vunpack.c.l.b16 %v687
    %v2498 = vunpack.c.l.b16 %v688
    %v2499 = vunpack.c.h.b16 %v688
    %v2500 = vunpack.c.l.b16 %v689
    %v2501 = vunpack.c.h.b16 %v689
    %v2502 = vunpack.c.l.b16 %v690
    %v2503 = vunpack.c.h.b16 %v690
    %v2504 = vunpack.c.l.b16 %v691
    %v2505 = vunpack.c.h.b16 %v691
    %v2506 = vunpack.c.l.b16 %v692
    %v2507 = vunpack.c.l.b16 %v693
    %v2508 = vunpack.c.h.b16 %v693
    %v2509 = vunpack.c.l.b16 %v694
    %v2510 = vunpack.c.h.b16 %v694
    %v2511 = vunpack.c.l.b16 %v695
    %v2512 = vunpack.c.h.b16 %v695
    %v2513 = vunpack.c.l.b16 %v696
    %v2514 = vunpack.c.h.b16 %v696
    %v2515 = vunpack.c.l.b16 %v697
    %v2516 = vunpack.c.l.b16 %v698
    %v2517 = vunpack.c.h.b16 %v698
    %v2518 = vunpack.c.l.b16 %v699
    %v2519 = vunpack.c.h.b16 %v699
    %v2520 = vunpack.c.l.b16 %v700
    %v2521 = vunpack.c.h.b16 %v700
    %v2522 = vunpack.c.l.b16 %v701
    %v2523 = vunpack.c.h.b16 %v701
    %v2524 = vunpack.c.l.b16 %v702
    %v2525 = vunpack.c.l.b16 %v703
    %v2526 = vunpack.c.h.b16 %v703
    %v2527 = vunpack.c.l.b16 %v704
    %v2528 = vunpack.c.h.b16 %v704
    %v2529 = vunpack.c.l.b16 %v705
    %v2530 = vunpack.c.h.b16 %v705
    %v2531 = vunpack.c.l.b16 %v706
    %v2532 = vunpack.c.h.b16 %v706
    %v2533 = vunpack.c.l.b16 %v707
    %v2534 = vunpack.c.l.b16 %v708
    %v2535 = vunpack.c.h.b16 %v708
    %v2536 = vunpack.c.l.b16 %v709
    %v2537 = vunpack.c.h.b16 %v709
    %v2538 = vunpack.c.l.b16 %v710
    %v2539 = vunpack.c.h.b16 %v710
    %v2540 = vunpack.c.l.b16 %v711
    %v2541 = vunpack.c.h.b16 %v711
    %v2542 = vunpack.c.l.b16 %v712
    %v2543 = vunpack.c.l.b16 %v713
    %v2544 = vunpack.c.h.b16 %v713
    %v2545 = vunpack.c.l.b16 %v714
    %v2546 = vunpack.c.h.b16 %v714
    %v2547 = vunpack.c.l.b16 %v715
    %v2548 = vunpack.c.h.b16 %v715
    %v2549 = vunpack.c.l.b16 %v716
    %v2550 = vunpack.c.h.b16 %v716
    %v2551 = vunpack.c.l.b16 %v717
    %v2552 = vunpack.c.l.b16 %v718
    %v2553 = vunpack.c.h.b16 %v718
    %v2554 = vunpack.c.l.b16 %v719
    %v2555 = vunpack.c.h.b16 %v719
    %v2556 = vunpack.c.l.b16 %v720
    %v2557 = vunpack.c.h.b16 %v720
    %v2558 = vunpack.c.l.b16 %v721
    %v2559 = vunpack.c.h.b16 %v721
    %v2560 = vunpack.c.l.b16 %v722
    %v2561 = vunpack.c.l.b16 %v723
    %v2562 = vunpack.c.h.b16 %v723
    %v2563 = vunpack.c.l.b16 %v724
    %v2564 = vunpack.c.h.b16 %v724
    %v2565 = vunpack.c.l.b16 %v725
    %v2566 = vunpack.c.h.b16 %v725
    %v2567 = vunpack.c.l.b16 %v726
    %v2568 = vunpack.c.h.b16 %v726
    %v2569 = vunpack.c.l.b16 %v727
    %v2570 = vunpack.c.l.b16 %v728
    %v2571 = vunpack.c.h.b16 %v728
    %v2572 = vunpack.c.l.b16 %v729
    %v2573 = vunpack.c.h.b16 %v729
    %v2574 = vunpack.c.l.b16 %v730
    %v2575 = vunpack.c.h.b16 %v730
    %v2576 = vunpack.c.l.b16 %v731
    %v2577 = vunpack.c.h.b16 %v731
    %v2578 = vunpack.c.l.b16 %v732
    %v2579 = vunpack.c.l.b16 %v733
    %v2580 = vunpack.c.h.b16 %v733
    %v2581 = vunpack.c.l.b16 %v734
    %v2582 = vunpack.c.h.b16 %v734
    %v2583 = vunpack.c.l.b16 %v735
    %v2584 = vunpack.c.h.b16 %v735
    %v2585 = vunpack.c.l.b16 %v736
    %v2586 = vunpack.c.h.b16 %v736
    %v2587 = vunpack.c.l.b16 %v737
    %v2588 = vunpack.c.l.b16 %v738
    %v2589 = vunpack.c.h.b16 %v738
    %v2590 = vunpack.c.l.b16 %v739
    %v2591 = vunpack.c.h.b16 %v739
    %v2592 = vunpack.c.l.b16 %v740
    %v2593 = vunpack.c.h.b16 %v740
    %v2594 = vunpack.c.l.b16 %v741
    %v2595 = vunpack.c.h.b16 %v741
    %v2596 = vunpack.c.l.b16 %v742
    %v2597 = vunpack.c.l.b16 %v743
    %v2598 = vunpack.c.h.b16 %v743
    %v2599 = vunpack.c.l.b16 %v744
    %v2600 = vunpack.c.h.b16 %v744
    %v2601 = vunpack.c.l.b16 %v745
    %v2602 = vunpack.c.h.b16 %v745
    %v2603 = vunpack.c.l.b16 %v746
    %v2604 = vunpack.c.h.b16 %v746
    %v2605 = vunpack.c.l.b16 %v747
    %v2606 = vunpack.c.l.b16 %v748
    %v2607 = vunpack.c.h.b16 %v748
    %v2608 = vunpack.c.l.b16 %v749
    %v2609 = vunpack.c.h.b16 %v749
    %v2610 = vunpack.c.l.b16 %v750
    %v2611 = vunpack.c.h.b16 %v750
    %v2612 = vunpack.c.l.b16 %v751
    %v2613 = vunpack.c.h.b16 %v751
    %v2614 = vunpack.c.l.b16 %v752
    %v2615 = vunpack.c.l.b16 %v753
    %v2616 = vunpack.c.h.b16 %v753
    %v2617 = vunpack.c.l.b16 %v754
    %v2618 = vunpack.c.h.b16 %v754
    %v2619 = vunpack.c.l.b16 %v755
    %v2620 = vunpack.c.h.b16 %v755
    %v2621 = vunpack.c.l.b16 %v756
    %v2622 = vunpack.c.h.b16 %v756
    %v2623 = vunpack.c.l.b16 %v757
    %v2624 = vunpack.c.l.b16 %v758
    %v2625 = vunpack.c.h.b16 %v758
    %v2626 = vunpack.c.l.b16 %v759
    %v2627 = vunpack.c.h.b16 %v759
    %v2628 = vunpack.c.l.b16 %v760
    %v2629 = vunpack.c.h.b16 %v760
    %v2630 = vunpack.c.l.b16 %v761
    %v2631 = vunpack.c.h.b16 %v761
    %v2632 = vunpack.c.l.b16 %v762
    %v2633 = vunpack.c.l.b16 %v763
    %v2634 = vunpack.c.h.b16 %v763
    %v2635 = vunpack.c.l.b16 %v764
    %v2636 = vunpack.c.h.b16 %v764
    %v2637 = vunpack.c.l.b16 %v765
    %v2638 = vunpack.c.h.b16 %v765
    %v2639 = vunpack.c.l.b16 %v766
    %v2640 = vunpack.c.h.b16 %v766
    %v2641 = vunpack.c.l.b16 %v767
    %v2642 = vunpack.c.l.b16 %v768
    %v2643 = vunpack.c.h.b16 %v768
    %v2644 = vunpack.c.l.b16 %v769
    %v2645 = vunpack.c.h.b16 %v769
    %v2646 = vunpack.c.l.b16 %v770
    %v2647 = vunpack.c.h.b16 %v770
    %v2648 = vunpack.c.l.b16 %v771
    %v2649 = vunpack.c.h.b16 %v771
    %v2650 = vunpack.c.l.b16 %v772
    %v2651 = vpack.c.b16 %v1652, %v1643
    %v2652 = vpack.c.b16 %v1653, %v1644
    %v2653 = vpack.c.b16 %v1654, %v1645
    %v2654 = vpack.c.b16 %v1655, %v1646
    %v2655 = vpack.c.b16 %v1656, %v1647
    %v2656 = vpack.c.b16 %v1657, %v1648
    %v2657 = vpack.c.b16 %v1658, %v1649
    %v2658 = vpack.c.b16 %v1659, %v1650
    %v2659 = vpack.c.b16 %v1660, %v1651
    %v2660 = vpack.c.b16 %v1670, %v1661
    %v2661 = vpack.c.b16 %v1671, %v1662
    %v2662 = vpack.c.b16 %v1672, %v1663
    %v2663 = vpack.c.b16 %v1673, %v1664
    %v2664 = vpack.c.b16 %v1674, %v1665
    %v2665 = vpack.c.b16 %v1675, %v1666
    %v2666 = vpack.c.b16 %v1676, %v1667
    %v2667 = vpack.c.b16 %v1677, %v1668
    %v2668 = vpack.c.b16 %v1678, %v1669
    %v2669 = vpack.c.b16 %v1688, %v1679
    %v2670 = vpack.c.b16 %v1689, %v1680
    %v2671 = vpack.c.b16 %v1690, %v1681
    %v2672 = vpack.c.b16 %v1691, %v1682
    %v2673 = vpack.c.b16 %v1692, %v1683
    %v2674 = vpack.c.b16 %v1693, %v1684
    %v2675 = vpack.c.b16 %v1694, %v1685
    %v2676 = vpack.c.b16 %v1695, %v1686
    %v2677 = vpack.c.b16 %v1696, %v1687
    %v2678 = vpack.c.b16 %v1706, %v1697
    %v2679 = vpack.c.b16 %v1707, %v1698
    %v2680 = vpack.c.b16 %v1708, %v1699
    %v2681 = vpack.c.b16 %v1709, %v1700
    %v2682 = vpack.c.b16 %v1710, %v1701
    %v2683 = vpack.c.b16 %v1711, %v1702
    %v2684 = vpack.c.b16 %v1712, %v1703
    %v2685 = vpack.c.b16 %v1713, %v1704
    %v2686 = vpack.c.b16 %v1714, %v1705
    %v2687 = vpack.c.b16 %v1724, %v1715
    %v2688 = vpack.c.b16 %v1725, %v1716
    %v2689 = vpack.c.b16 %v1726, %v1717
    %v2690 = vpack.c.b16 %v1727, %v1718
    %v2691 = vpack.c.b16 %v1728, %v1719
    %v2692 = vpack.c.b16 %v1729, %v1720
    %v2693 = vpack.c.b16 %v1730, %v1721
    %v2694 = vpack.c.b16 %v1731, %v1722
    %v2695 = vpack.c.b16 %v1732, %v1723
    %v2696 = vpack.c.b16 %v1742, %v1733
    %v2697 = vpack.c.b16 %v1743, %v1734
    %v2698 = vpack.c.b16 %v1744, %v1735
    %v2699 = vpack.c.b16 %v1745, %v1736
    %v2700 = vpack.c.b16 %v1746, %v1737
    %v2701 = vpack.c.b16 %v1747, %v1738
    %v2702 = vpack.c.b16 %v1748, %v1739
    %v2703 = vpack.c.b16 %v1749, %v1740
    %v2704 = vpack.c.b16 %v1750, %v1741
    %v2705 = vpack.c.b16 %v1760, %v1751
    %v2706 = vpack.c.b16 %v1761, %v1752
    %v2707 = vpack.c.b16 %v1762, %v1753
    %v2708 = vpack.c.b16 %v1763, %v1754
    %v2709 = vpack.c.b16 %v1764, %v1755
    %v2710 = vpack.c.b16 %v1765, %v1756
    %v2711 = vpack.c.b16 %v1766, %v1757
    %v2712 = vpack.c.b16 %v1767, %v1758
    %v2713 = vpack.c.b16 %v1768, %v1759
    %v2714 = vpack.c.b16 %v1778, %v1769
    %v2715 = vpack.c.b16 %v1779, %v1770
    %v2716 = vpack.c.b16 %v1780, %v1771
    %v2717 = vpack.c.b16 %v1781, %v1772
    %v2718 = vpack.c.b16 %v1782, %v1773
    %v2719 = vpack.c.b16 %v1783, %v1774
    %v2720 = vpack.c.b16 %v1784, %v1775
    %v2721 = vpack.c.b16 %v1785, %v1776
    %v2722 = vpack.c.b16 %v1786, %v1777
    %v2723 = vpack.c.b16 %v1796, %v1787
    %v2724 = vpack.c.b16 %v1797, %v1788
    %v2725 = vpack.c.b16 %v1798, %v1789
    %v2726 = vpack.c.b16 %v1799, %v1790
    %v2727 = vpack.c.b16 %v1800, %v1791
    %v2728 = vpack.c.b16 %v1801, %v1792
    %v2729 = vpack.c.b16 %v1802, %v1793
    %v2730 = vpack.c.b16 %v1803, %v1794
    %v2731 = vpack.c.b16 %v1804, %v1795
    %v2732 = vpack.c.b16 %v1814, %v1805
    %v2733 = vpack.c.b16 %v1815, %v1806
    %v2734 = vpack.c.b16 %v1816, %v1807
    %v2735 = vpack.c.b16 %v1817, %v1808
    %v2736 = vpack.c.b16 %v1818, %v1809
    %v2737 = vpack.c.b16 %v1819, %v1810
    %v2738 = vpack.c.b16 %v1820, %v1811
    %v2739 = vpack.c.b16 %v1821, %v1812
    %v2740 = vpack.c.b16 %v1822, %v1813
    %v2741 = vpack.c.b16 %v1832, %v1823
    %v2742 = vpack.c.b16 %v1833, %v1824
    %v2743 = vpack.c.b16 %v1834, %v1825
    %v2744 = vpack.c.b16 %v1835, %v1826
    %v2745 = vpack.c.b16 %v1836, %v1827
    %v2746 = vpack.c.b16 %v1837, %v1828
    %v2747 = vpack.c.b16 %v1838, %v1829
    %v2748 = vpack.c.b16 %v1839, %v1830
    %v2749 = vpack.c.b16 %v1840, %v1831
    %v2750 = vpack.c.b16 %v1850, %v1841
    %v2751 = vpack.c.b16 %v1851, %v1842
    %v2752 = vpack.c.b16 %v1852, %v1843
    %v2753 = vpack.c.b16 %v1853, %v1844
    %v2754 = vpack.c.b16 %v1854, %v1845
    %v2755 = vpack.c.b16 %v1855, %v1846
    %v2756 = vpack.c.b16 %v1856, %v1847
    %v2757 = vpack.c.b16 %v1857, %v1848
    %v2758 = vpack.c.b16 %v1858, %v1849
    %v2759 = vpack.c.b16 %v1868, %v1859
    %v2760 = vpack.c.b16 %v1869, %v1860
    %v2761 = vpack.c.b16 %v1870, %v1861
    %v2762 = vpack.c.b16 %v1871, %v1862
    %v2763 = vpack.c.b16 %v1872, %v1863
    %v2764 = vpack.c.b16 %v1873, %v1864
    %v2765 = vpack.c.b16 %v1874, %v1865
    %v2766 = vpack.c.b16 %v1875, %v1866
    %v2767 = vpack.c.b16 %v1876, %v1867
    %v2768 = vpack.c.b16 %v1886, %v1877
    %v2769 = vpack.c.b16 %v1887, %v1878
    %v2770 = vpack.c.b16 %v1888, %v1879
    %v2771 = vpack.c.b16 %v1889, %v1880
    %v2772 = vpack.c.b16 %v1890, %v1881
    %v2773 = vpack.c.b16 %v1891, %v1882
    %v2774 = vpack.c.b16 %v1892, %v1883
    %v2775 = vpack.c.b16 %v1893, %v1884
    %v2776 = vpack.c.b16 %v1894, %v1885
    %v2777 = vpack.c.b16 %v1904, %v1895
    %v2778 = vpack.c.b16 %v1905, %v1896
    %v2779 = vpack.c.b16 %v1906, %v1897
    %v2780 = vpack.c.b16 %v1907, %v1898
    %v2781 = vpack.c.b16 %v1908, %v1899
    %v2782 = vpack.c.b16 %v1909, %v1900
    %v2783 = vpack.c.b16 %v1910, %v1901
    %v2784 = vpack.c.b16 %v1911, %v1902
    %v2785 = vpack.c.b16 %v1912, %v1903
    %v2786 = vpack.c.b16 %v1922, %v1913
    %v2787 = vpack.c.b16 %v1923, %v1914
    %v2788 = vpack.c.b16 %v1924, %v1915
    %v2789 = vpack.c.b16 %v1925, %v1916
    %v2790 = vpack.c.b16 %v1926, %v1917
    %v2791 = vpack.c.b16 %v1927, %v1918
    %v2792 = vpack.c.b16 %v1928, %v1919
    %v2793 = vpack.c.b16 %v1929, %v1920
    %v2794 = vpack.c.b16 %v1930, %v1921
    %v2795 = vpack.c.b16 %v1940, %v1931
    %v2796 = vpack.c.b16 %v1941, %v1932
    %v2797 = vpack.c.b16 %v1942, %v1933
    %v2798 = vpack.c.b16 %v1943, %v1934
    %v2799 = vpack.c.b16 %v1944, %v1935
    %v2800 = vpack.c.b16 %v1945, %v1936
    %v2801 = vpack.c.b16 %v1946, %v1937
    %v2802 = vpack.c.b16 %v1947, %v1938
    %v2803 = vpack.c.b16 %v1948, %v1939
    %v2804 = vpack.c.b16 %v1958, %v1949
    %v2805 = vpack.c.b16 %v1959, %v1950
    %v2806 = vpack.c.b16 %v1960, %v1951
    %v2807 = vpack.c.b16 %v1961, %v1952
    %v2808 = vpack.c.b16 %v1962, %v1953
    %v2809 = vpack.c.b16 %v1963, %v1954
    %v2810 = vpack.c.b16 %v1964, %v1955
    %v2811 = vpack.c.b16 %v1965, %v1956
    %v2812 = vpack.c.b16 %v1966, %v1957
    %v2813 = vpack.c.b16 %v1976, %v1967
    %v2814 = vpack.c.b16 %v1977, %v1968
    %v2815 = vpack.c.b16 %v1978, %v1969
    %v2816 = vpack.c.b16 %v1979, %v1970
    %v2817 = vpack.c.b16 %v1980, %v1971
    %v2818 = vpack.c.b16 %v1981, %v1972
    %v2819 = vpack.c.b16 %v1982, %v1973
    %v2820 = vpack.c.b16 %v1983, %v1974
    %v2821 = vpack.c.b16 %v1984, %v1975
    %v2822 = vpack.c.b16 %v1994, %v1985
    %v2823 = vpack.c.b16 %v1995, %v1986
    %v2824 = vpack.c.b16 %v1996, %v1987
    %v2825 = vpack.c.b16 %v1997, %v1988
    %v2826 = vpack.c.b16 %v1998, %v1989
    %v2827 = vpack.c.b16 %v1999, %v1990
    %v2828 = vpack.c.b16 %v2000, %v1991
    %v2829 = vpack.c.b16 %v2001, %v1992
    %v2830 = vpack.c.b16 %v2002, %v1993
    %v2831 = vpack.c.b16 %v2012, %v2003
    %v2832 = vpack.c.b16 %v2013, %v2004
    %v2833 = vpack.c.b16 %v2014, %v2005
    %v2834 = vpack.c.b16 %v2015, %v2006
    %v2835 = vpack.c.b16 %v2016, %v2007
    %v2836 = vpack.c.b16 %v2017, %v2008
    %v2837 = vpack.c.b16 %v2018, %v2009
    %v2838 = vpack.c.b16 %v2019, %v2010
    %v2839 = vpack.c.b16 %v2020, %v2011
    %v2840 = vpack.c.b16 %v2030, %v2021
    %v2841 = vpack.c.b16 %v2031, %v2022
    %v2842 = vpack.c.b16 %v2032, %v2023
    %v2843 = vpack.c.b16 %v2033, %v2024
    %v2844 = vpack.c.b16 %v2034, %v2025
    %v2845 = vpack.c.b16 %v2035, %v2026
    %v2846 = vpack.c.b16 %v2036, %v2027
    %v2847 = vpack.c.b16 %v2037, %v2028
    %v2848 = vpack.c.b16 %v2038, %v2029
    %v2849 = vpack.c.b16 %v2048, %v2039
    %v2850 = vpack.c.b16 %v2049, %v2040
    %v2851 = vpack.c.b16 %v2050, %v2041
    %v2852 = vpack.c.b16 %v2051, %v2042
    %v2853 = vpack.c.b16 %v2052, %v2043
    %v2854 = vpack.c.b16 %v2053, %v2044
    %v2855 = vpack.c.b16 %v2054, %v2045
    %v2856 = vpack.c.b16 %v2055, %v2046
    %v2857 = vpack.c.b16 %v2056, %v2047
    %v2858 = vpack.c.b16 %v2066, %v2057
    %v2859 = vpack.c.b16 %v2067, %v2058
    %v2860 = vpack.c.b16 %v2068, %v2059
    %v2861 = vpack.c.b16 %v2069, %v2060
    %v2862 = vpack.c.b16 %v2070, %v2061
    %v2863 = vpack.c.b16 %v2071, %v2062
    %v2864 = vpack.c.b16 %v2072, %v2063
    %v2865 = vpack.c.b16 %v2073, %v2064
    %v2866 = vpack.c.b16 %v2074, %v2065
    %v2867 = vpack.c.b16 %v2084, %v2075
    %v2868 = vpack.c.b16 %v2085, %v2076
    %v2869 = vpack.c.b16 %v2086, %v2077
    %v2870 = vpack.c.b16 %v2087, %v2078
    %v2871 = vpack.c.b16 %v2088, %v2079
    %v2872 = vpack.c.b16 %v2089, %v2080
    %v2873 = vpack.c.b16 %v2090, %v2081
    %v2874 = vpack.c.b16 %v2091, %v2082
    %v2875 = vpack.c.b16 %v2092, %v2083
    %v2876 = vpack.c.b16 %v2102, %v2093
    %v2877 = vpack.c.b16 %v2103, %v2094
    %v2878 = vpack.c.b16 %v2104, %v2095
    %v2879 = vpack.c.b16 %v2105, %v2096
    %v2880 = vpack.c.b16 %v2106, %v2097
    %v2881 = vpack.c.b16 %v2107, %v2098
    %v2882 = vpack.c.b16 %v2108, %v2099
    %v2883 = vpack.c.b16 %v2109, %v2100
    %v2884 = vpack.c.b16 %v2110, %v2101
    %v2885 = vpack.c.b16 %v2120, %v2111
    %v2886 = vpack.c.b16 %v2121, %v2112
    %v2887 = vpack.c.b16 %v2122, %v2113
    %v2888 = vpack.c.b16 %v2123, %v2114
    %v2889 = vpack.c.b16 %v2124, %v2115
    %v2890 = vpack.c.b16 %v2125, %v2116
    %v2891 = vpack.c.b16 %v2126, %v2117
    %v2892 = vpack.c.b16 %v2127, %v2118
    %v2893 = vpack.c.b16 %v2128, %v2119
    %v2894 = vpack.c.b16 %v2138, %v2129
    %v2895 = vpack.c.b16 %v2139, %v2130
    %v2896 = vpack.c.b16 %v2140, %v2131
    %v2897 = vpack.c.b16 %v2141, %v2132
    %v2898 = vpack.c.b16 %v2142, %v2133
    %v2899 = vpack.c.b16 %v2143, %v2134
    %v2900 = vpack.c.b16 %v2144, %v2135
    %v2901 = vpack.c.b16 %v2145, %v2136
    %v2902 = vpack.c.b16 %v2146, %v2137
    %v2903 = vpack.c.b16 %v2156, %v2147
    %v2904 = vpack.c.b16 %v2157, %v2148
    %v2905 = vpack.c.b16 %v2158, %v2149
    %v2906 = vpack.c.b16 %v2159, %v2150
    %v2907 = vpack.c.b16 %v2160, %v2151
    %v2908 = vpack.c.b16 %v2161, %v2152
    %v2909 = vpack.c.b16 %v2162, %v2153
    %v2910 = vpack.c.b16 %v2163, %v2154
    %v2911 = vpack.c.b16 %v2164, %v2155
    %v2912 = vpack.c.b16 %v2174, %v2165
    %v2913 = vpack.c.b16 %v2175, %v2166
    %v2914 = vpack.c.b16 %v2176, %v2167
    %v2915 = vpack.c.b16 %v2177, %v2168
    %v2916 = vpack.c.b16 %v2178, %v2169
    %v2917 = vpack.c.b16 %v2179, %v2170
    %v2918 = vpack.c.b16 %v2180, %v2171
    %v2919 = vpack.c.b16 %v2181, %v2172
    %v2920 = vpack.c.b16 %v2182, %v2173
    %v2921 = vpack.c.b16 %v2192, %v2183
    %v2922 = vpack.c.b16 %v2193, %v2184
    %v2923 = vpack.c.b16 %v2194, %v2185
    %v2924 = vpack.c.b16 %v2195, %v2186
    %v2925 = vpack.c.b16 %v2196, %v2187
    %v2926 = vpack.c.b16 %v2197, %v2188
    %v2927 = vpack.c.b16 %v2198, %v2189
    %v2928 = vpack.c.b16 %v2199, %v2190
    %v2929 = vpack.c.b16 %v2200, %v2191
    %v2930 = vpack.c.b16 %v2210, %v2201
    %v2931 = vpack.c.b16 %v2211, %v2202
    %v2932 = vpack.c.b16 %v2212, %v2203
    %v2933 = vpack.c.b16 %v2213, %v2204
    %v2934 = vpack.c.b16 %v2214, %v2205
    %v2935 = vpack.c.b16 %v2215, %v2206
    %v2936 = vpack.c.b16 %v2216, %v2207
    %v2937 = vpack.c.b16 %v2217, %v2208
    %v2938 = vpack.c.b16 %v2218, %v2209
    %v2939 = vpack.c.b16 %v2228, %v2219
    %v2940 = vpack.c.b16 %v2229, %v2220
    %v2941 = vpack.c.b16 %v2230, %v2221
    %v2942 = vpack.c.b16 %v2231, %v2222
    %v2943 = vpack.c.b16 %v2232, %v2223
    %v2944 = vpack.c.b16 %v2233, %v2224
    %v2945 = vpack.c.b16 %v2234, %v2225
    %v2946 = vpack.c.b16 %v2235, %v2226
    %v2947 = vpack.c.b16 %v2236, %v2227
    %v2948 = vpack.c.b16 %v2246, %v2237
    %v2949 = vpack.c.b16 %v2247, %v2238
    %v2950 = vpack.c.b16 %v2248, %v2239
    %v2951 = vpack.c.b16 %v2249, %v2240
    %v2952 = vpack.c.b16 %v2250, %v2241
    %v2953 = vpack.c.b16 %v2251, %v2242
    %v2954 = vpack.c.b16 %v2252, %v2243
    %v2955 = vpack.c.b16 %v2253, %v2244
    %v2956 = vpack.c.b16 %v2254, %v2245
    %v2957 = vpack.c.b16 %v2264, %v2255
    %v2958 = vpack.c.b16 %v2265, %v2256
    %v2959 = vpack.c.b16 %v2266, %v2257
    %v2960 = vpack.c.b16 %v2267, %v2258
    %v2961 = vpack.c.b16 %v2268, %v2259
    %v2962 = vpack.c.b16 %v2269, %v2260
    %v2963 = vpack.c.b16 %v2270, %v2261
    %v2964 = vpack.c.b16 %v2271, %v2262
    %v2965 = vpack.c.b16 %v2272, %v2263
    %v2966 = vpack.c.b16 %v2282, %v2273
    %v2967 = vpack.c.b16 %v2283, %v2274
    %v2968 = vpack.c.b16 %v2284, %v2275
    %v2969 = vpack.c.b16 %v2285, %v2276
    %v2970 = vpack.c.b16 %v2286, %v2277
    %v2971 = vpack.c.b16 %v2287, %v2278
    %v2972 = vpack.c.b16 %v2288, %v2279
    %v2973 = vpack.c.b16 %v2289, %v2280
    %v2974 = vpack.c.b16 %v2290, %v2281
    %v2975 = vpack.c.b16 %v2300, %v2291
    %v2976 = vpack.c.b16 %v2301, %v2292
    %v2977 = vpack.c.b16 %v2302, %v2293
    %v2978 = vpack.c.b16 %v2303, %v2294
    %v2979 = vpack.c.b16 %v2304, %v2295
    %v2980 = vpack.c.b16 %v2305, %v2296
    %v2981 = vpack.c.b16 %v2306, %v2297
    %v2982 = vpack.c.b16 %v2307, %v2298
    %v2983 = vpack.c.b16 %v2308, %v2299
    %v2984 = vpack.c.b16 %v2318, %v2309
    %v2985 = vpack.c.b16 %v2319, %v2310
    %v2986 = vpack.c.b16 %v2320, %v2311
    %v2987 = vpack.c.b16 %v2321, %v2312
    %v2988 = vpack.c.b16 %v2322, %v2313
    %v2989 = vpack.c.b16 %v2323, %v2314
    %v2990 = vpack.c.b16 %v2324, %v2315
    %v2991 = vpack.c.b16 %v2325, %v2316
    %v2992 = vpack.c.b16 %v2326, %v2317
    %v2993 = vpack.c.b16 %v2336, %v2327
    %v2994 = vpack.c.b16 %v2337, %v2328
    %v2995 = vpack.c.b16 %v2338, %v2329
    %v2996 = vpack.c.b16 %v2339, %v2330
    %v2997 = vpack.c.b16 %v2340, %v2331
    %v2998 = vpack.c.b16 %v2341, %v2332
    %v2999 = vpack.c.b16 %v2342, %v2333
    %v3000 = vpack.c.b16 %v2343, %v2334
    %v3001 = vpack.c.b16 %v2344, %v2335
    %v3002 = vpack.c.b16 %v2354, %v2345
    %v3003 = vpack.c.b16 %v2355, %v2346
    %v3004 = vpack.c.b16 %v2356, %v2347
    %v3005 = vpack.c.b16 %v2357, %v2348
    %v3006 = vpack.c.b16 %v2358, %v2349
    %v3007 = vpack.c.b16 %v2359, %v2350
    %v3008 = vpack.c.b16 %v2360, %v2351
    %v3009 = vpack.c.b16 %v2361, %v2352
    %v3010 = vpack.c.b16 %v2362, %v2353
    %v3011 = vpack.c.b16 %v2372, %v2363
    %v3012 = vpack.c.b16 %v2373, %v2364
    %v3013 = vpack.c.b16 %v2374, %v2365
    %v3014 = vpack.c.b16 %v2375, %v2366
    %v3015 = vpack.c.b16 %v2376, %v2367
    %v3016 = vpack.c.b16 %v2377, %v2368
    %v3017 = vpack.c.b16 %v2378, %v2369
    %v3018 = vpack.c.b16 %v2379, %v2370
    %v3019 = vpack.c.b16 %v2380, %v2371
    %v3020 = vpack.c.b16 %v2390, %v2381
    %v3021 = vpack.c.b16 %v2391, %v2382
    %v3022 = vpack.c.b16 %v2392, %v2383
    %v3023 = vpack.c.b16 %v2393, %v2384
    %v3024 = vpack.c.b16 %v2394, %v2385
    %v3025 = vpack.c.b16 %v2395, %v2386
    %v3026 = vpack.c.b16 %v2396, %v2387
    %v3027 = vpack.c.b16 %v2397, %v2388
    %v3028 = vpack.c.b16 %v2398, %v2389
    %v3029 = vpack.c.b16 %v2408, %v2399
    %v3030 = vpack.c.b16 %v2409, %v2400
    %v3031 = vpack.c.b16 %v2410, %v2401
    %v3032 = vpack.c.b16 %v2411, %v2402
    %v3033 = vpack.c.b16 %v2412, %v2403
    %v3034 = vpack.c.b16 %v2413, %v2404
    %v3035 = vpack.c.b16 %v2414, %v2405
    %v3036 = vpack.c.b16 %v2415, %v2406
    %v3037 = vpack.c.b16 %v2416, %v2407
    %v3038 = vpack.c.b16 %v2426, %v2417
    %v3039 = vpack.c.b16 %v2427, %v2418
    %v3040 = vpack.c.b16 %v2428, %v2419
    %v3041 = vpack.c.b16 %v2429, %v2420
    %v3042 = vpack.c.b16 %v2430, %v2421
    %v3043 = vpack.c.b16 %v2431, %v2422
    %v3044 = vpack.c.b16 %v2432, %v2423
    %v3045 = vpack.c.b16 %v2433, %v2424
    %v3046 = vpack.c.b16 %v2434, %v2425
    %v3047 = vpack.c.b16 %v2444, %v2435
    %v3048 = vpack.c.b16 %v2445, %v2436
    %v3049 = vpack.c.b16 %v2446, %v2437
    %v3050 = vpack.c.b16 %v2447, %v2438
    %v3051 = vpack.c.b16 %v2448, %v2439
    %v3052 = vpack.c.b16 %v2449, %v2440
    %v3053 = vpack.c.b16 %v2450, %v2441
    %v3054 = vpack.c.b16 %v2451, %v2442
    %v3055 = vpack.c.b16 %v2452, %v2443
    %v3056 = vpack.c.b16 %v2462, %v2453
    %v3057 = vpack.c.b16 %v2463, %v2454
    %v3058 = vpack.c.b16 %v2464, %v2455
    %v3059 = vpack.c.b16 %v2465, %v2456
    %v3060 = vpack.c.b16 %v2466, %v2457
    %v3061 = vpack.c.b16 %v2467, %v2458
    %v3062 = vpack.c.b16 %v2468, %v2459
    %v3063 = vpack.c.b16 %v2469, %v2460
    %v3064 = vpack.c.b16 %v2470, %v2461
    %v3065 = vpack.c.b16 %v2480, %v2471
    %v3066 = vpack.c.b16 %v2481, %v2472
    %v3067 = vpack.c.b16 %v2482, %v2473
    %v3068 = vpack.c.b16 %v2483, %v2474
    %v3069 = vpack.c.b16 %v2484, %v2475
    %v3070 = vpack.c.b16 %v2485, %v2476
    %v3071 = vpack.c.b16 %v2486, %v2477
    %v3072 = vpack.c.b16 %v2487, %v2478
    %v3073 = vpack.c.b16 %v2488, %v2479
    %v3074 = vpack.c.b16 %v2498, %v2489
    %v3075 = vpack.c.b16 %v2499, %v2490
    %v3076 = vpack.c.b16 %v2500, %v2491
    %v3077 = vpack.c.b16 %v2501, %v2492
    %v3078 = vpack.c.b16 %v2502, %v2493
    %v3079 = vpack.c.b16 %v2503, %v2494
    %v3080 = vpack.c.b16 %v2504, %v2495
    %v3081 = vpack.c.b16 %v2505, %v2496
    %v3082 = vpack.c.b16 %v2506, %v2497
    %v3083 = vpack.c.b16 %v2516, %v2507
    %v3084 = vpack.c.b16 %v2517, %v2508
    %v3085 = vpack.c.b16 %v2518, %v2509
    %v3086 = vpack.c.b16 %v2519, %v2510
    %v3087 = vpack.c.b16 %v2520, %v2511
    %v3088 = vpack.c.b16 %v2521, %v2512
    %v3089 = vpack.c.b16 %v2522, %v2513
    %v3090 = vpack.c.b16 %v2523, %v2514
    %v3091 = vpack.c.b16 %v2524, %v2515
    %v3092 = vpack.c.b16 %v2534, %v2525
    %v3093 = vpack.c.b16 %v2535, %v2526
    %v3094 = vpack.c.b16 %v2536, %v2527
    %v3095 = vpack.c.b16 %v2537, %v2528
    %v3096 = vpack.c.b16 %v2538, %v2529
    %v3097 = vpack.c.b16 %v2539, %v2530
    %v3098 = vpack.c.b16 %v2540, %v2531
    %v3099 = vpack.c.b16 %v2541, %v2532
    %v3100 = vpack.c.b16 %v2542, %v2533
    %v3101 = vpack.c.b16 %v2552, %v2543
    %v3102 = vpack.c.b16 %v2553, %v2544
    %v3103 = vpack.c.b16 %v2554, %v2545
    %v3104 = vpack.c.b16 %v2555, %v2546
    %v3105 = vpack.c.b16 %v2556, %v2547
    %v3106 = vpack.c.b16 %v2557, %v2548
    %v3107 = vpack.c.b16 %v2558, %v2549
    %v3108 = vpack.c.b16 %v2559, %v2550
    %v3109 = vpack.c.b16 %v2560, %v2551
    %v3110 = vpack.c.b16 %v2570, %v2561
    %v3111 = vpack.c.b16 %v2571, %v2562
    %v3112 = vpack.c.b16 %v2572, %v2563
    %v3113 = vpack.c.b16 %v2573, %v2564
    %v3114 = vpack.c.b16 %v2574, %v2565
    %v3115 = vpack.c.b16 %v2575, %v2566
    %v3116 = vpack.c.b16 %v2576, %v2567
    %v3117 = vpack.c.b16 %v2577, %v2568
    %v3118 = vpack.c.b16 %v2578, %v2569
    %v3119 = vpack.c.b16 %v2588, %v2579
    %v3120 = vpack.c.b16 %v2589, %v2580
    %v3121 = vpack.c.b16 %v2590, %v2581
    %v3122 = vpack.c.b16 %v2591, %v2582
    %v3123 = vpack.c.b16 %v2592, %v2583
    %v3124 = vpack.c.b16 %v2593, %v2584
    %v3125 = vpack.c.b16 %v2594, %v2585
    %v3126 = vpack.c.b16 %v2595, %v2586
    %v3127 = vpack.c.b16 %v2596, %v2587
    %v3128 = vpack.c.b16 %v2606, %v2597
    %v3129 = vpack.c.b16 %v2607, %v2598
    %v3130 = vpack.c.b16 %v2608, %v2599
    %v3131 = vpack.c.b16 %v2609, %v2600
    %v3132 = vpack.c.b16 %v2610, %v2601
    %v3133 = vpack.c.b16 %v2611, %v2602
    %v3134 = vpack.c.b16 %v2612, %v2603
    %v3135 = vpack.c.b16 %v2613, %v2604
    %v3136 = vpack.c.b16 %v2614, %v2605
    %v3137 = vpack.c.b16 %v2624, %v2615
    %v3138 = vpack.c.b16 %v2625, %v2616
    %v3139 = vpack.c.b16 %v2626, %v2617
    %v3140 = vpack.c.b16 %v2627, %v2618
    %v3141 = vpack.c.b16 %v2628, %v2619
    %v3142 = vpack.c.b16 %v2629, %v2620
    %v3143 = vpack.c.b16 %v2630, %v2621
    %v3144 = vpack.c.b16 %v2631, %v2622
    %v3145 = vpack.c.b16 %v2632, %v2623
    %v3146 = vpack.c.b16 %v2642, %v2633
    %v3147 = vpack.c.b16 %v2643, %v2634
    %v3148 = vpack.c.b16 %v2644, %v2635
    %v3149 = vpack.c.b16 %v2645, %v2636
    %v3150 = vpack.c.b16 %v2646, %v2637
    %v3151 = vpack.c.b16 %v2647, %v2638
    %v3152 = vpack.c.b16 %v2648, %v2639
    %v3153 = vpack.c.b16 %v2649, %v2640
    %v3154 = vpack.c.b16 %v2650, %v2641
    %3659 = vmatpush.bf16.msra.mxu0 %v2714
    %3660 = vmatpush.bf16.msra.mxu0 %v2705
    %3661 = vmatpush.bf16.msra.mxu0 %v2696
    %3662 = vmatpush.bf16.msra.mxu0 %v2687
    %3663 = vmatpush.bf16.msra.mxu0 %v2678
    %3664 = vmatpush.bf16.msra.mxu0 %v2669
    %3665 = vmatpush.bf16.msra.mxu0 %v2660
    %3666 = vmatpush.bf16.msra.mxu0 %v2651
    %3667 = vmatmul.bf16.gmra.mxu0 %v971
    %v3668 = vpop.f32.mrf.mxu0
    %v3669 = vadd.f32 %v777, %v3668
    %v3670 = vpop.f32.mrf.mxu0
    %v3671 = vadd.f32 %v777, %v3670
    %3672 = vmatmul.bf16.gmra.mxu0 %v978
    %v3673 = vpop.f32.mrf.mxu0
    %v3674 = vadd.f32 %v777, %v3673
    %v3675 = vpop.f32.mrf.mxu0
    %v3676 = vadd.f32 %v777, %v3675
    %3677 = vmatmul.bf16.gmra.mxu0 %v985
    %v3678 = vpop.f32.mrf.mxu0
    %v3679 = vadd.f32 %v777, %v3678
    %v3680 = vpop.f32.mrf.mxu0
    %v3681 = vadd.f32 %v777, %v3680
    %3682 = vmatmul.bf16.gmra.mxu0 %v992
    %v3683 = vpop.f32.mrf.mxu0
    %v3684 = vadd.f32 %v777, %v3683
    %v3685 = vpop.f32.mrf.mxu0
    %v3686 = vadd.f32 %v777, %v3685
    %3687 = vmatmul.bf16.gmra.mxu0 %v999
    %v3688 = vpop.f32.mrf.mxu0
    %v3689 = vadd.f32 %v777, %v3688
    %v3690 = vpop.f32.mrf.mxu0
    %v3691 = vadd.f32 %v777, %v3690
    %3692 = vmatmul.bf16.gmra.mxu0 %v1006
    %v3693 = vpop.f32.mrf.mxu0
    %v3694 = vadd.f32 %v777, %v3693
    %v3695 = vpop.f32.mrf.mxu0
    %v3696 = vadd.f32 %v777, %v3695
    %3697 = vmatmul.bf16.gmra.mxu0 %v1013
    %v3698 = vpop.f32.mrf.mxu0
    %v3699 = vadd.f32 %v777, %v3698
    %v3700 = vpop.f32.mrf.mxu0
    %v3701 = vadd.f32 %v777, %v3700
    %3702 = vmatmul.bf16.gmra.mxu0 %v1020
    %v3703 = vpop.f32.mrf.mxu0
    %v3704 = vadd.f32 %v777, %v3703
    %v3705 = vpop.f32.mrf.mxu0
    %v3706 = vadd.f32 %v777, %v3705
    %3707 = vdwg.mxu0
    %3708 = vmatpush.bf16.msra.mxu0 %v2786
    %3709 = vmatpush.bf16.msra.mxu0 %v2777
    %3710 = vmatpush.bf16.msra.mxu0 %v2768
    %3711 = vmatpush.bf16.msra.mxu0 %v2759
    %3712 = vmatpush.bf16.msra.mxu0 %v2750
    %3713 = vmatpush.bf16.msra.mxu0 %v2741
    %3714 = vmatpush.bf16.msra.mxu0 %v2732
    %3715 = vmatpush.bf16.msra.mxu0 %v2723
    %3716 = vmatmul.bf16.gmra.mxu0 %v972
    %v3717 = vpop.f32.mrf.mxu0
    %v3718 = vadd.f32 %v3669, %v3717
    %v3719 = vpop.f32.mrf.mxu0
    %v3720 = vadd.f32 %v3671, %v3719
    %3721 = vmatmul.bf16.gmra.mxu0 %v979
    %v3722 = vpop.f32.mrf.mxu0
    %v3723 = vadd.f32 %v3674, %v3722
    %v3724 = vpop.f32.mrf.mxu0
    %v3725 = vadd.f32 %v3676, %v3724
    %3726 = vmatmul.bf16.gmra.mxu0 %v986
    %v3727 = vpop.f32.mrf.mxu0
    %v3728 = vadd.f32 %v3679, %v3727
    %v3729 = vpop.f32.mrf.mxu0
    %v3730 = vadd.f32 %v3681, %v3729
    %3731 = vmatmul.bf16.gmra.mxu0 %v993
    %v3732 = vpop.f32.mrf.mxu0
    %v3733 = vadd.f32 %v3684, %v3732
    %v3734 = vpop.f32.mrf.mxu0
    %v3735 = vadd.f32 %v3686, %v3734
    %3736 = vmatmul.bf16.gmra.mxu0 %v1000
    %v3737 = vpop.f32.mrf.mxu0
    %v3738 = vadd.f32 %v3689, %v3737
    %v3739 = vpop.f32.mrf.mxu0
    %v3740 = vadd.f32 %v3691, %v3739
    %3741 = vmatmul.bf16.gmra.mxu0 %v1007
    %v3742 = vpop.f32.mrf.mxu0
    %v3743 = vadd.f32 %v3694, %v3742
    %v3744 = vpop.f32.mrf.mxu0
    %v3745 = vadd.f32 %v3696, %v3744
    %3746 = vmatmul.bf16.gmra.mxu0 %v1014
    %v3747 = vpop.f32.mrf.mxu0
    %v3748 = vadd.f32 %v3699, %v3747
    %v3749 = vpop.f32.mrf.mxu0
    %v3750 = vadd.f32 %v3701, %v3749
    %3751 = vmatmul.bf16.gmra.mxu0 %v1021
    %v3752 = vpop.f32.mrf.mxu0
    %v3753 = vadd.f32 %v3704, %v3752
    %v3754 = vpop.f32.mrf.mxu0
    %v3755 = vadd.f32 %v3706, %v3754
    %3756 = vdwg.mxu0
    %3757 = vmatpush.bf16.msra.mxu0 %v2858
    %3758 = vmatpush.bf16.msra.mxu0 %v2849
    %3759 = vmatpush.bf16.msra.mxu0 %v2840
    %3760 = vmatpush.bf16.msra.mxu0 %v2831
    %3761 = vmatpush.bf16.msra.mxu0 %v2822
    %3762 = vmatpush.bf16.msra.mxu0 %v2813
    %3763 = vmatpush.bf16.msra.mxu0 %v2804
    %3764 = vmatpush.bf16.msra.mxu0 %v2795
    %3765 = vmatmul.bf16.gmra.mxu0 %v973
    %v3766 = vpop.f32.mrf.mxu0
    %v3767 = vadd.f32 %v3718, %v3766
    %v3768 = vpop.f32.mrf.mxu0
    %v3769 = vadd.f32 %v3720, %v3768
    %3770 = vmatmul.bf16.gmra.mxu0 %v980
    %v3771 = vpop.f32.mrf.mxu0
    %v3772 = vadd.f32 %v3723, %v3771
    %v3773 = vpop.f32.mrf.mxu0
    %v3774 = vadd.f32 %v3725, %v3773
    %3775 = vmatmul.bf16.gmra.mxu0 %v987
    %v3776 = vpop.f32.mrf.mxu0
    %v3777 = vadd.f32 %v3728, %v3776
    %v3778 = vpop.f32.mrf.mxu0
    %v3779 = vadd.f32 %v3730, %v3778
    %3780 = vmatmul.bf16.gmra.mxu0 %v994
    %v3781 = vpop.f32.mrf.mxu0
    %v3782 = vadd.f32 %v3733, %v3781
    %v3783 = vpop.f32.mrf.mxu0
    %v3784 = vadd.f32 %v3735, %v3783
    %3785 = vmatmul.bf16.gmra.mxu0 %v1001
    %v3786 = vpop.f32.mrf.mxu0
    %v3787 = vadd.f32 %v3738, %v3786
    %v3788 = vpop.f32.mrf.mxu0
    %v3789 = vadd.f32 %v3740, %v3788
    %3790 = vmatmul.bf16.gmra.mxu0 %v1008
    %v3791 = vpop.f32.mrf.mxu0
    %v3792 = vadd.f32 %v3743, %v3791
    %v3793 = vpop.f32.mrf.mxu0
    %v3794 = vadd.f32 %v3745, %v3793
    %3795 = vmatmul.bf16.gmra.mxu0 %v1015
    %v3796 = vpop.f32.mrf.mxu0
    %v3797 = vadd.f32 %v3748, %v3796
    %v3798 = vpop.f32.mrf.mxu0
    %v3799 = vadd.f32 %v3750, %v3798
    %3800 = vmatmul.bf16.gmra.mxu0 %v1022
    %v3801 = vpop.f32.mrf.mxu0
    %v3802 = vadd.f32 %v3753, %v3801
    %v3803 = vpop.f32.mrf.mxu0
    %v3804 = vadd.f32 %v3755, %v3803
    %3805 = vdwg.mxu0
    %3806 = vmatpush.bf16.msra.mxu0 %v2930
    %3807 = vmatpush.bf16.msra.mxu0 %v2921
    %3808 = vmatpush.bf16.msra.mxu0 %v2912
    %3809 = vmatpush.bf16.msra.mxu0 %v2903
    %3810 = vmatpush.bf16.msra.mxu0 %v2894
    %3811 = vmatpush.bf16.msra.mxu0 %v2885
    %3812 = vmatpush.bf16.msra.mxu0 %v2876
    %3813 = vmatpush.bf16.msra.mxu0 %v2867
    %3814 = vmatmul.bf16.gmra.mxu0 %v974
    %v3815 = vpop.f32.mrf.mxu0
    %v3816 = vadd.f32 %v3767, %v3815
    %v3817 = vpop.f32.mrf.mxu0
    %v3818 = vadd.f32 %v3769, %v3817
    %3819 = vmatmul.bf16.gmra.mxu0 %v981
    %v3820 = vpop.f32.mrf.mxu0
    %v3821 = vadd.f32 %v3772, %v3820
    %v3822 = vpop.f32.mrf.mxu0
    %v3823 = vadd.f32 %v3774, %v3822
    %3824 = vmatmul.bf16.gmra.mxu0 %v988
    %v3825 = vpop.f32.mrf.mxu0
    %v3826 = vadd.f32 %v3777, %v3825
    %v3827 = vpop.f32.mrf.mxu0
    %v3828 = vadd.f32 %v3779, %v3827
    %3829 = vmatmul.bf16.gmra.mxu0 %v995
    %v3830 = vpop.f32.mrf.mxu0
    %v3831 = vadd.f32 %v3782, %v3830
    %v3832 = vpop.f32.mrf.mxu0
    %v3833 = vadd.f32 %v3784, %v3832
    %3834 = vmatmul.bf16.gmra.mxu0 %v1002
    %v3835 = vpop.f32.mrf.mxu0
    %v3836 = vadd.f32 %v3787, %v3835
    %v3837 = vpop.f32.mrf.mxu0
    %v3838 = vadd.f32 %v3789, %v3837
    %3839 = vmatmul.bf16.gmra.mxu0 %v1009
    %v3840 = vpop.f32.mrf.mxu0
    %v3841 = vadd.f32 %v3792, %v3840
    %v3842 = vpop.f32.mrf.mxu0
    %v3843 = vadd.f32 %v3794, %v3842
    %3844 = vmatmul.bf16.gmra.mxu0 %v1016
    %v3845 = vpop.f32.mrf.mxu0
    %v3846 = vadd.f32 %v3797, %v3845
    %v3847 = vpop.f32.mrf.mxu0
    %v3848 = vadd.f32 %v3799, %v3847
    %3849 = vmatmul.bf16.gmra.mxu0 %v1023
    %v3850 = vpop.f32.mrf.mxu0
    %v3851 = vadd.f32 %v3802, %v3850
    %v3852 = vpop.f32.mrf.mxu0
    %v3853 = vadd.f32 %v3804, %v3852
    %3854 = vdwg.mxu0
    %3855 = vmatpush.bf16.msra.mxu0 %v3002
    %3856 = vmatpush.bf16.msra.mxu0 %v2993
    %3857 = vmatpush.bf16.msra.mxu0 %v2984
    %3858 = vmatpush.bf16.msra.mxu0 %v2975
    %3859 = vmatpush.bf16.msra.mxu0 %v2966
    %3860 = vmatpush.bf16.msra.mxu0 %v2957
    %3861 = vmatpush.bf16.msra.mxu0 %v2948
    %3862 = vmatpush.bf16.msra.mxu0 %v2939
    %3863 = vmatmul.bf16.gmra.mxu0 %v975
    %v3864 = vpop.f32.mrf.mxu0
    %v3865 = vadd.f32 %v3816, %v3864
    %v3866 = vpop.f32.mrf.mxu0
    %v3867 = vadd.f32 %v3818, %v3866
    %3868 = vmatmul.bf16.gmra.mxu0 %v982
    %v3869 = vpop.f32.mrf.mxu0
    %v3870 = vadd.f32 %v3821, %v3869
    %v3871 = vpop.f32.mrf.mxu0
    %v3872 = vadd.f32 %v3823, %v3871
    %3873 = vmatmul.bf16.gmra.mxu0 %v989
    %v3874 = vpop.f32.mrf.mxu0
    %v3875 = vadd.f32 %v3826, %v3874
    %v3876 = vpop.f32.mrf.mxu0
    %v3877 = vadd.f32 %v3828, %v3876
    %3878 = vmatmul.bf16.gmra.mxu0 %v996
    %v3879 = vpop.f32.mrf.mxu0
    %v3880 = vadd.f32 %v3831, %v3879
    %v3881 = vpop.f32.mrf.mxu0
    %v3882 = vadd.f32 %v3833, %v3881
    %3883 = vmatmul.bf16.gmra.mxu0 %v1003
    %v3884 = vpop.f32.mrf.mxu0
    %v3885 = vadd.f32 %v3836, %v3884
    %v3886 = vpop.f32.mrf.mxu0
    %v3887 = vadd.f32 %v3838, %v3886
    %3888 = vmatmul.bf16.gmra.mxu0 %v1010
    %v3889 = vpop.f32.mrf.mxu0
    %v3890 = vadd.f32 %v3841, %v3889
    %v3891 = vpop.f32.mrf.mxu0
    %v3892 = vadd.f32 %v3843, %v3891
    %3893 = vmatmul.bf16.gmra.mxu0 %v1017
    %v3894 = vpop.f32.mrf.mxu0
    %v3895 = vadd.f32 %v3846, %v3894
    %v3896 = vpop.f32.mrf.mxu0
    %v3897 = vadd.f32 %v3848, %v3896
    %3898 = vmatmul.bf16.gmra.mxu0 %v1024
    %v3899 = vpop.f32.mrf.mxu0
    %v3900 = vadd.f32 %v3851, %v3899
    %v3901 = vpop.f32.mrf.mxu0
    %v3902 = vadd.f32 %v3853, %v3901
    %3903 = vdwg.mxu0
    %3904 = vmatpush.bf16.msra.mxu0 %v3074
    %3905 = vmatpush.bf16.msra.mxu0 %v3065
    %3906 = vmatpush.bf16.msra.mxu0 %v3056
    %3907 = vmatpush.bf16.msra.mxu0 %v3047
    %3908 = vmatpush.bf16.msra.mxu0 %v3038
    %3909 = vmatpush.bf16.msra.mxu0 %v3029
    %3910 = vmatpush.bf16.msra.mxu0 %v3020
    %3911 = vmatpush.bf16.msra.mxu0 %v3011
    %3912 = vmatmul.bf16.gmra.mxu0 %v976
    %v3913 = vpop.f32.mrf.mxu0
    %v3914 = vadd.f32 %v3865, %v3913
    %v3915 = vpop.f32.mrf.mxu0
    %v3916 = vadd.f32 %v3867, %v3915
    %3917 = vmatmul.bf16.gmra.mxu0 %v983
    %v3918 = vpop.f32.mrf.mxu0
    %v3919 = vadd.f32 %v3870, %v3918
    %v3920 = vpop.f32.mrf.mxu0
    %v3921 = vadd.f32 %v3872, %v3920
    %3922 = vmatmul.bf16.gmra.mxu0 %v990
    %v3923 = vpop.f32.mrf.mxu0
    %v3924 = vadd.f32 %v3875, %v3923
    %v3925 = vpop.f32.mrf.mxu0
    %v3926 = vadd.f32 %v3877, %v3925
    %3927 = vmatmul.bf16.gmra.mxu0 %v997
    %v3928 = vpop.f32.mrf.mxu0
    %v3929 = vadd.f32 %v3880, %v3928
    %v3930 = vpop.f32.mrf.mxu0
    %v3931 = vadd.f32 %v3882, %v3930
    %3932 = vmatmul.bf16.gmra.mxu0 %v1004
    %v3933 = vpop.f32.mrf.mxu0
    %v3934 = vadd.f32 %v3885, %v3933
    %v3935 = vpop.f32.mrf.mxu0
    %v3936 = vadd.f32 %v3887, %v3935
    %3937 = vmatmul.bf16.gmra.mxu0 %v1011
    %v3938 = vpop.f32.mrf.mxu0
    %v3939 = vadd.f32 %v3890, %v3938
    %v3940 = vpop.f32.mrf.mxu0
    %v3941 = vadd.f32 %v3892, %v3940
    %3942 = vmatmul.bf16.gmra.mxu0 %v1018
    %v3943 = vpop.f32.mrf.mxu0
    %v3944 = vadd.f32 %v3895, %v3943
    %v3945 = vpop.f32.mrf.mxu0
    %v3946 = vadd.f32 %v3897, %v3945
    %3947 = vmatmul.bf16.gmra.mxu0 %v1025
    %v3948 = vpop.f32.mrf.mxu0
    %v3949 = vadd.f32 %v3900, %v3948
    %v3950 = vpop.f32.mrf.mxu0
    %v3951 = vadd.f32 %v3902, %v3950
    %3952 = vdwg.mxu0
    %3953 = vmatpush.bf16.msra.mxu0 %v3146
    %3954 = vmatpush.bf16.msra.mxu0 %v3137
    %3955 = vmatpush.bf16.msra.mxu0 %v3128
    %3956 = vmatpush.bf16.msra.mxu0 %v3119
    %3957 = vmatpush.bf16.msra.mxu0 %v3110
    %3958 = vmatpush.bf16.msra.mxu0 %v3101
    %3959 = vmatpush.bf16.msra.mxu0 %v3092
    %3960 = vmatpush.bf16.msra.mxu0 %v3083
    %3961 = vmatmul.bf16.gmra.mxu0 %v977
    %v3962 = vpop.f32.mrf.mxu0
    %v3963 = vadd.f32 %v3914, %v3962
    %v3964 = vpop.f32.mrf.mxu0
    %v3965 = vadd.f32 %v3916, %v3964
    %3966 = vmatmul.bf16.gmra.mxu0 %v984
    %v3967 = vpop.f32.mrf.mxu0
    %v3968 = vadd.f32 %v3919, %v3967
    %v3969 = vpop.f32.mrf.mxu0
    %v3970 = vadd.f32 %v3921, %v3969
    %3971 = vmatmul.bf16.gmra.mxu0 %v991
    %v3972 = vpop.f32.mrf.mxu0
    %v3973 = vadd.f32 %v3924, %v3972
    %v3974 = vpop.f32.mrf.mxu0
    %v3975 = vadd.f32 %v3926, %v3974
    %3976 = vmatmul.bf16.gmra.mxu0 %v998
    %v3977 = vpop.f32.mrf.mxu0
    %v3978 = vadd.f32 %v3929, %v3977
    %v3979 = vpop.f32.mrf.mxu0
    %v3980 = vadd.f32 %v3931, %v3979
    %3981 = vmatmul.bf16.gmra.mxu0 %v1005
    %v3982 = vpop.f32.mrf.mxu0
    %v3983 = vadd.f32 %v3934, %v3982
    %v3984 = vpop.f32.mrf.mxu0
    %v3985 = vadd.f32 %v3936, %v3984
    %3986 = vmatmul.bf16.gmra.mxu0 %v1012
    %v3987 = vpop.f32.mrf.mxu0
    %v3988 = vadd.f32 %v3939, %v3987
    %v3989 = vpop.f32.mrf.mxu0
    %v3990 = vadd.f32 %v3941, %v3989
    %3991 = vmatmul.bf16.gmra.mxu0 %v1019
    %v3992 = vpop.f32.mrf.mxu0
    %v3993 = vadd.f32 %v3944, %v3992
    %v3994 = vpop.f32.mrf.mxu0
    %v3995 = vadd.f32 %v3946, %v3994
    %3996 = vmatmul.bf16.gmra.mxu0 %v1026
    %v3997 = vpop.f32.mrf.mxu0
    %v3998 = vadd.f32 %v3949, %v3997
    %v3999 = vpop.f32.mrf.mxu0
    %v4000 = vadd.f32 %v3951, %v3999
    %4001 = vdwg.mxu0
    %4002 = vmatpush.bf16.msra.mxu0 %v2715
    %4003 = vmatpush.bf16.msra.mxu0 %v2706
    %4004 = vmatpush.bf16.msra.mxu0 %v2697
    %4005 = vmatpush.bf16.msra.mxu0 %v2688
    %4006 = vmatpush.bf16.msra.mxu0 %v2679
    %4007 = vmatpush.bf16.msra.mxu0 %v2670
    %4008 = vmatpush.bf16.msra.mxu0 %v2661
    %4009 = vmatpush.bf16.msra.mxu0 %v2652
    %4010 = vmatmul.bf16.gmra.mxu0 %v971
    %v4011 = vpop.f32.mrf.mxu0
    %v4012 = vadd.f32 %v778, %v4011
    %v4013 = vpop.f32.mrf.mxu0
    %v4014 = vadd.f32 %v778, %v4013
    %4015 = vmatmul.bf16.gmra.mxu0 %v978
    %v4016 = vpop.f32.mrf.mxu0
    %v4017 = vadd.f32 %v778, %v4016
    %v4018 = vpop.f32.mrf.mxu0
    %v4019 = vadd.f32 %v778, %v4018
    %4020 = vmatmul.bf16.gmra.mxu0 %v985
    %v4021 = vpop.f32.mrf.mxu0
    %v4022 = vadd.f32 %v778, %v4021
    %v4023 = vpop.f32.mrf.mxu0
    %v4024 = vadd.f32 %v778, %v4023
    %4025 = vmatmul.bf16.gmra.mxu0 %v992
    %v4026 = vpop.f32.mrf.mxu0
    %v4027 = vadd.f32 %v778, %v4026
    %v4028 = vpop.f32.mrf.mxu0
    %v4029 = vadd.f32 %v778, %v4028
    %4030 = vmatmul.bf16.gmra.mxu0 %v999
    %v4031 = vpop.f32.mrf.mxu0
    %v4032 = vadd.f32 %v778, %v4031
    %v4033 = vpop.f32.mrf.mxu0
    %v4034 = vadd.f32 %v778, %v4033
    %4035 = vmatmul.bf16.gmra.mxu0 %v1006
    %v4036 = vpop.f32.mrf.mxu0
    %v4037 = vadd.f32 %v778, %v4036
    %v4038 = vpop.f32.mrf.mxu0
    %v4039 = vadd.f32 %v778, %v4038
    %4040 = vmatmul.bf16.gmra.mxu0 %v1013
    %v4041 = vpop.f32.mrf.mxu0
    %v4042 = vadd.f32 %v778, %v4041
    %v4043 = vpop.f32.mrf.mxu0
    %v4044 = vadd.f32 %v778, %v4043
    %4045 = vmatmul.bf16.gmra.mxu0 %v1020
    %v4046 = vpop.f32.mrf.mxu0
    %v4047 = vadd.f32 %v778, %v4046
    %v4048 = vpop.f32.mrf.mxu0
    %v4049 = vadd.f32 %v778, %v4048
    %4050 = vdwg.mxu0
    %4051 = vmatpush.bf16.msra.mxu0 %v2787
    %4052 = vmatpush.bf16.msra.mxu0 %v2778
    %4053 = vmatpush.bf16.msra.mxu0 %v2769
    %4054 = vmatpush.bf16.msra.mxu0 %v2760
    %4055 = vmatpush.bf16.msra.mxu0 %v2751
    %4056 = vmatpush.bf16.msra.mxu0 %v2742
    %4057 = vmatpush.bf16.msra.mxu0 %v2733
    %4058 = vmatpush.bf16.msra.mxu0 %v2724
    %4059 = vmatmul.bf16.gmra.mxu0 %v972
    %v4060 = vpop.f32.mrf.mxu0
    %v4061 = vadd.f32 %v4012, %v4060
    %v4062 = vpop.f32.mrf.mxu0
    %v4063 = vadd.f32 %v4014, %v4062
    %4064 = vmatmul.bf16.gmra.mxu0 %v979
    %v4065 = vpop.f32.mrf.mxu0
    %v4066 = vadd.f32 %v4017, %v4065
    %v4067 = vpop.f32.mrf.mxu0
    %v4068 = vadd.f32 %v4019, %v4067
    %4069 = vmatmul.bf16.gmra.mxu0 %v986
    %v4070 = vpop.f32.mrf.mxu0
    %v4071 = vadd.f32 %v4022, %v4070
    %v4072 = vpop.f32.mrf.mxu0
    %v4073 = vadd.f32 %v4024, %v4072
    %4074 = vmatmul.bf16.gmra.mxu0 %v993
    %v4075 = vpop.f32.mrf.mxu0
    %v4076 = vadd.f32 %v4027, %v4075
    %v4077 = vpop.f32.mrf.mxu0
    %v4078 = vadd.f32 %v4029, %v4077
    %4079 = vmatmul.bf16.gmra.mxu0 %v1000
    %v4080 = vpop.f32.mrf.mxu0
    %v4081 = vadd.f32 %v4032, %v4080
    %v4082 = vpop.f32.mrf.mxu0
    %v4083 = vadd.f32 %v4034, %v4082
    %4084 = vmatmul.bf16.gmra.mxu0 %v1007
    %v4085 = vpop.f32.mrf.mxu0
    %v4086 = vadd.f32 %v4037, %v4085
    %v4087 = vpop.f32.mrf.mxu0
    %v4088 = vadd.f32 %v4039, %v4087
    %4089 = vmatmul.bf16.gmra.mxu0 %v1014
    %v4090 = vpop.f32.mrf.mxu0
    %v4091 = vadd.f32 %v4042, %v4090
    %v4092 = vpop.f32.mrf.mxu0
    %v4093 = vadd.f32 %v4044, %v4092
    %4094 = vmatmul.bf16.gmra.mxu0 %v1021
    %v4095 = vpop.f32.mrf.mxu0
    %v4096 = vadd.f32 %v4047, %v4095
    %v4097 = vpop.f32.mrf.mxu0
    %v4098 = vadd.f32 %v4049, %v4097
    %4099 = vdwg.mxu0
    %4100 = vmatpush.bf16.msra.mxu0 %v2859
    %4101 = vmatpush.bf16.msra.mxu0 %v2850
    %4102 = vmatpush.bf16.msra.mxu0 %v2841
    %4103 = vmatpush.bf16.msra.mxu0 %v2832
    %4104 = vmatpush.bf16.msra.mxu0 %v2823
    %4105 = vmatpush.bf16.msra.mxu0 %v2814
    %4106 = vmatpush.bf16.msra.mxu0 %v2805
    %4107 = vmatpush.bf16.msra.mxu0 %v2796
    %4108 = vmatmul.bf16.gmra.mxu0 %v973
    %v4109 = vpop.f32.mrf.mxu0
    %v4110 = vadd.f32 %v4061, %v4109
    %v4111 = vpop.f32.mrf.mxu0
    %v4112 = vadd.f32 %v4063, %v4111
    %4113 = vmatmul.bf16.gmra.mxu0 %v980
    %v4114 = vpop.f32.mrf.mxu0
    %v4115 = vadd.f32 %v4066, %v4114
    %v4116 = vpop.f32.mrf.mxu0
    %v4117 = vadd.f32 %v4068, %v4116
    %4118 = vmatmul.bf16.gmra.mxu0 %v987
    %v4119 = vpop.f32.mrf.mxu0
    %v4120 = vadd.f32 %v4071, %v4119
    %v4121 = vpop.f32.mrf.mxu0
    %v4122 = vadd.f32 %v4073, %v4121
    %4123 = vmatmul.bf16.gmra.mxu0 %v994
    %v4124 = vpop.f32.mrf.mxu0
    %v4125 = vadd.f32 %v4076, %v4124
    %v4126 = vpop.f32.mrf.mxu0
    %v4127 = vadd.f32 %v4078, %v4126
    %4128 = vmatmul.bf16.gmra.mxu0 %v1001
    %v4129 = vpop.f32.mrf.mxu0
    %v4130 = vadd.f32 %v4081, %v4129
    %v4131 = vpop.f32.mrf.mxu0
    %v4132 = vadd.f32 %v4083, %v4131
    %4133 = vmatmul.bf16.gmra.mxu0 %v1008
    %v4134 = vpop.f32.mrf.mxu0
    %v4135 = vadd.f32 %v4086, %v4134
    %v4136 = vpop.f32.mrf.mxu0
    %v4137 = vadd.f32 %v4088, %v4136
    %4138 = vmatmul.bf16.gmra.mxu0 %v1015
    %v4139 = vpop.f32.mrf.mxu0
    %v4140 = vadd.f32 %v4091, %v4139
    %v4141 = vpop.f32.mrf.mxu0
    %v4142 = vadd.f32 %v4093, %v4141
    %4143 = vmatmul.bf16.gmra.mxu0 %v1022
    %v4144 = vpop.f32.mrf.mxu0
    %v4145 = vadd.f32 %v4096, %v4144
    %v4146 = vpop.f32.mrf.mxu0
    %v4147 = vadd.f32 %v4098, %v4146
    %4148 = vdwg.mxu0
    %4149 = vmatpush.bf16.msra.mxu0 %v2931
    %4150 = vmatpush.bf16.msra.mxu0 %v2922
    %4151 = vmatpush.bf16.msra.mxu0 %v2913
    %4152 = vmatpush.bf16.msra.mxu0 %v2904
    %4153 = vmatpush.bf16.msra.mxu0 %v2895
    %4154 = vmatpush.bf16.msra.mxu0 %v2886
    %4155 = vmatpush.bf16.msra.mxu0 %v2877
    %4156 = vmatpush.bf16.msra.mxu0 %v2868
    %4157 = vmatmul.bf16.gmra.mxu0 %v974
    %v4158 = vpop.f32.mrf.mxu0
    %v4159 = vadd.f32 %v4110, %v4158
    %v4160 = vpop.f32.mrf.mxu0
    %v4161 = vadd.f32 %v4112, %v4160
    %4162 = vmatmul.bf16.gmra.mxu0 %v981
    %v4163 = vpop.f32.mrf.mxu0
    %v4164 = vadd.f32 %v4115, %v4163
    %v4165 = vpop.f32.mrf.mxu0
    %v4166 = vadd.f32 %v4117, %v4165
    %4167 = vmatmul.bf16.gmra.mxu0 %v988
    %v4168 = vpop.f32.mrf.mxu0
    %v4169 = vadd.f32 %v4120, %v4168
    %v4170 = vpop.f32.mrf.mxu0
    %v4171 = vadd.f32 %v4122, %v4170
    %4172 = vmatmul.bf16.gmra.mxu0 %v995
    %v4173 = vpop.f32.mrf.mxu0
    %v4174 = vadd.f32 %v4125, %v4173
    %v4175 = vpop.f32.mrf.mxu0
    %v4176 = vadd.f32 %v4127, %v4175
    %4177 = vmatmul.bf16.gmra.mxu0 %v1002
    %v4178 = vpop.f32.mrf.mxu0
    %v4179 = vadd.f32 %v4130, %v4178
    %v4180 = vpop.f32.mrf.mxu0
    %v4181 = vadd.f32 %v4132, %v4180
    %4182 = vmatmul.bf16.gmra.mxu0 %v1009
    %v4183 = vpop.f32.mrf.mxu0
    %v4184 = vadd.f32 %v4135, %v4183
    %v4185 = vpop.f32.mrf.mxu0
    %v4186 = vadd.f32 %v4137, %v4185
    %4187 = vmatmul.bf16.gmra.mxu0 %v1016
    %v4188 = vpop.f32.mrf.mxu0
    %v4189 = vadd.f32 %v4140, %v4188
    %v4190 = vpop.f32.mrf.mxu0
    %v4191 = vadd.f32 %v4142, %v4190
    %4192 = vmatmul.bf16.gmra.mxu0 %v1023
    %v4193 = vpop.f32.mrf.mxu0
    %v4194 = vadd.f32 %v4145, %v4193
    %v4195 = vpop.f32.mrf.mxu0
    %v4196 = vadd.f32 %v4147, %v4195
    %4197 = vdwg.mxu0
    %4198 = vmatpush.bf16.msra.mxu0 %v3003
    %4199 = vmatpush.bf16.msra.mxu0 %v2994
    %4200 = vmatpush.bf16.msra.mxu0 %v2985
    %4201 = vmatpush.bf16.msra.mxu0 %v2976
    %4202 = vmatpush.bf16.msra.mxu0 %v2967
    %4203 = vmatpush.bf16.msra.mxu0 %v2958
    %4204 = vmatpush.bf16.msra.mxu0 %v2949
    %4205 = vmatpush.bf16.msra.mxu0 %v2940
    %4206 = vmatmul.bf16.gmra.mxu0 %v975
    %v4207 = vpop.f32.mrf.mxu0
    %v4208 = vadd.f32 %v4159, %v4207
    %v4209 = vpop.f32.mrf.mxu0
    %v4210 = vadd.f32 %v4161, %v4209
    %4211 = vmatmul.bf16.gmra.mxu0 %v982
    %v4212 = vpop.f32.mrf.mxu0
    %v4213 = vadd.f32 %v4164, %v4212
    %v4214 = vpop.f32.mrf.mxu0
    %v4215 = vadd.f32 %v4166, %v4214
    %4216 = vmatmul.bf16.gmra.mxu0 %v989
    %v4217 = vpop.f32.mrf.mxu0
    %v4218 = vadd.f32 %v4169, %v4217
    %v4219 = vpop.f32.mrf.mxu0
    %v4220 = vadd.f32 %v4171, %v4219
    %4221 = vmatmul.bf16.gmra.mxu0 %v996
    %v4222 = vpop.f32.mrf.mxu0
    %v4223 = vadd.f32 %v4174, %v4222
    %v4224 = vpop.f32.mrf.mxu0
    %v4225 = vadd.f32 %v4176, %v4224
    %4226 = vmatmul.bf16.gmra.mxu0 %v1003
    %v4227 = vpop.f32.mrf.mxu0
    %v4228 = vadd.f32 %v4179, %v4227
    %v4229 = vpop.f32.mrf.mxu0
    %v4230 = vadd.f32 %v4181, %v4229
    %4231 = vmatmul.bf16.gmra.mxu0 %v1010
    %v4232 = vpop.f32.mrf.mxu0
    %v4233 = vadd.f32 %v4184, %v4232
    %v4234 = vpop.f32.mrf.mxu0
    %v4235 = vadd.f32 %v4186, %v4234
    %4236 = vmatmul.bf16.gmra.mxu0 %v1017
    %v4237 = vpop.f32.mrf.mxu0
    %v4238 = vadd.f32 %v4189, %v4237
    %v4239 = vpop.f32.mrf.mxu0
    %v4240 = vadd.f32 %v4191, %v4239
    %4241 = vmatmul.bf16.gmra.mxu0 %v1024
    %v4242 = vpop.f32.mrf.mxu0
    %v4243 = vadd.f32 %v4194, %v4242
    %v4244 = vpop.f32.mrf.mxu0
    %v4245 = vadd.f32 %v4196, %v4244
    %4246 = vdwg.mxu0
    %4247 = vmatpush.bf16.msra.mxu0 %v3075
    %4248 = vmatpush.bf16.msra.mxu0 %v3066
    %4249 = vmatpush.bf16.msra.mxu0 %v3057
    %4250 = vmatpush.bf16.msra.mxu0 %v3048
    %4251 = vmatpush.bf16.msra.mxu0 %v3039
    %4252 = vmatpush.bf16.msra.mxu0 %v3030
    %4253 = vmatpush.bf16.msra.mxu0 %v3021
    %4254 = vmatpush.bf16.msra.mxu0 %v3012
    %4255 = vmatmul.bf16.gmra.mxu0 %v976
    %v4256 = vpop.f32.mrf.mxu0
    %v4257 = vadd.f32 %v4208, %v4256
    %v4258 = vpop.f32.mrf.mxu0
    %v4259 = vadd.f32 %v4210, %v4258
    %4260 = vmatmul.bf16.gmra.mxu0 %v983
    %v4261 = vpop.f32.mrf.mxu0
    %v4262 = vadd.f32 %v4213, %v4261
    %v4263 = vpop.f32.mrf.mxu0
    %v4264 = vadd.f32 %v4215, %v4263
    %4265 = vmatmul.bf16.gmra.mxu0 %v990
    %v4266 = vpop.f32.mrf.mxu0
    %v4267 = vadd.f32 %v4218, %v4266
    %v4268 = vpop.f32.mrf.mxu0
    %v4269 = vadd.f32 %v4220, %v4268
    %4270 = vmatmul.bf16.gmra.mxu0 %v997
    %v4271 = vpop.f32.mrf.mxu0
    %v4272 = vadd.f32 %v4223, %v4271
    %v4273 = vpop.f32.mrf.mxu0
    %v4274 = vadd.f32 %v4225, %v4273
    %4275 = vmatmul.bf16.gmra.mxu0 %v1004
    %v4276 = vpop.f32.mrf.mxu0
    %v4277 = vadd.f32 %v4228, %v4276
    %v4278 = vpop.f32.mrf.mxu0
    %v4279 = vadd.f32 %v4230, %v4278
    %4280 = vmatmul.bf16.gmra.mxu0 %v1011
    %v4281 = vpop.f32.mrf.mxu0
    %v4282 = vadd.f32 %v4233, %v4281
    %v4283 = vpop.f32.mrf.mxu0
    %v4284 = vadd.f32 %v4235, %v4283
    %4285 = vmatmul.bf16.gmra.mxu0 %v1018
    %v4286 = vpop.f32.mrf.mxu0
    %v4287 = vadd.f32 %v4238, %v4286
    %v4288 = vpop.f32.mrf.mxu0
    %v4289 = vadd.f32 %v4240, %v4288
    %4290 = vmatmul.bf16.gmra.mxu0 %v1025
    %v4291 = vpop.f32.mrf.mxu0
    %v4292 = vadd.f32 %v4243, %v4291
    %v4293 = vpop.f32.mrf.mxu0
    %v4294 = vadd.f32 %v4245, %v4293
    %4295 = vdwg.mxu0
    %4296 = vmatpush.bf16.msra.mxu0 %v3147
    %4297 = vmatpush.bf16.msra.mxu0 %v3138
    %4298 = vmatpush.bf16.msra.mxu0 %v3129
    %4299 = vmatpush.bf16.msra.mxu0 %v3120
    %4300 = vmatpush.bf16.msra.mxu0 %v3111
    %4301 = vmatpush.bf16.msra.mxu0 %v3102
    %4302 = vmatpush.bf16.msra.mxu0 %v3093
    %4303 = vmatpush.bf16.msra.mxu0 %v3084
    %4304 = vmatmul.bf16.gmra.mxu0 %v977
    %v4305 = vpop.f32.mrf.mxu0
    %v4306 = vadd.f32 %v4257, %v4305
    %v4307 = vpop.f32.mrf.mxu0
    %v4308 = vadd.f32 %v4259, %v4307
    %4309 = vmatmul.bf16.gmra.mxu0 %v984
    %v4310 = vpop.f32.mrf.mxu0
    %v4311 = vadd.f32 %v4262, %v4310
    %v4312 = vpop.f32.mrf.mxu0
    %v4313 = vadd.f32 %v4264, %v4312
    %4314 = vmatmul.bf16.gmra.mxu0 %v991
    %v4315 = vpop.f32.mrf.mxu0
    %v4316 = vadd.f32 %v4267, %v4315
    %v4317 = vpop.f32.mrf.mxu0
    %v4318 = vadd.f32 %v4269, %v4317
    %4319 = vmatmul.bf16.gmra.mxu0 %v998
    %v4320 = vpop.f32.mrf.mxu0
    %v4321 = vadd.f32 %v4272, %v4320
    %v4322 = vpop.f32.mrf.mxu0
    %v4323 = vadd.f32 %v4274, %v4322
    %4324 = vmatmul.bf16.gmra.mxu0 %v1005
    %v4325 = vpop.f32.mrf.mxu0
    %v4326 = vadd.f32 %v4277, %v4325
    %v4327 = vpop.f32.mrf.mxu0
    %v4328 = vadd.f32 %v4279, %v4327
    %4329 = vmatmul.bf16.gmra.mxu0 %v1012
    %v4330 = vpop.f32.mrf.mxu0
    %v4331 = vadd.f32 %v4282, %v4330
    %v4332 = vpop.f32.mrf.mxu0
    %v4333 = vadd.f32 %v4284, %v4332
    %4334 = vmatmul.bf16.gmra.mxu0 %v1019
    %v4335 = vpop.f32.mrf.mxu0
    %v4336 = vadd.f32 %v4287, %v4335
    %v4337 = vpop.f32.mrf.mxu0
    %v4338 = vadd.f32 %v4289, %v4337
    %4339 = vmatmul.bf16.gmra.mxu0 %v1026
    %v4340 = vpop.f32.mrf.mxu0
    %v4341 = vadd.f32 %v4292, %v4340
    %v4342 = vpop.f32.mrf.mxu0
    %v4343 = vadd.f32 %v4294, %v4342
    %4344 = vdwg.mxu0
    %4345 = vmatpush.bf16.msra.mxu0 %v2716
    %4346 = vmatpush.bf16.msra.mxu0 %v2707
    %4347 = vmatpush.bf16.msra.mxu0 %v2698
    %4348 = vmatpush.bf16.msra.mxu0 %v2689
    %4349 = vmatpush.bf16.msra.mxu0 %v2680
    %4350 = vmatpush.bf16.msra.mxu0 %v2671
    %4351 = vmatpush.bf16.msra.mxu0 %v2662
    %4352 = vmatpush.bf16.msra.mxu0 %v2653
    %4353 = vmatmul.bf16.gmra.mxu0 %v971
    %v4354 = vpop.f32.mrf.mxu0
    %v4355 = vadd.f32 %v779, %v4354
    %v4356 = vpop.f32.mrf.mxu0
    %v4357 = vadd.f32 %v779, %v4356
    %4358 = vmatmul.bf16.gmra.mxu0 %v978
    %v4359 = vpop.f32.mrf.mxu0
    %v4360 = vadd.f32 %v779, %v4359
    %v4361 = vpop.f32.mrf.mxu0
    %v4362 = vadd.f32 %v779, %v4361
    %4363 = vmatmul.bf16.gmra.mxu0 %v985
    %v4364 = vpop.f32.mrf.mxu0
    %v4365 = vadd.f32 %v779, %v4364
    %v4366 = vpop.f32.mrf.mxu0
    %v4367 = vadd.f32 %v779, %v4366
    %4368 = vmatmul.bf16.gmra.mxu0 %v992
    %v4369 = vpop.f32.mrf.mxu0
    %v4370 = vadd.f32 %v779, %v4369
    %v4371 = vpop.f32.mrf.mxu0
    %v4372 = vadd.f32 %v779, %v4371
    %4373 = vmatmul.bf16.gmra.mxu0 %v999
    %v4374 = vpop.f32.mrf.mxu0
    %v4375 = vadd.f32 %v779, %v4374
    %v4376 = vpop.f32.mrf.mxu0
    %v4377 = vadd.f32 %v779, %v4376
    %4378 = vmatmul.bf16.gmra.mxu0 %v1006
    %v4379 = vpop.f32.mrf.mxu0
    %v4380 = vadd.f32 %v779, %v4379
    %v4381 = vpop.f32.mrf.mxu0
    %v4382 = vadd.f32 %v779, %v4381
    %4383 = vmatmul.bf16.gmra.mxu0 %v1013
    %v4384 = vpop.f32.mrf.mxu0
    %v4385 = vadd.f32 %v779, %v4384
    %v4386 = vpop.f32.mrf.mxu0
    %v4387 = vadd.f32 %v779, %v4386
    %4388 = vmatmul.bf16.gmra.mxu0 %v1020
    %v4389 = vpop.f32.mrf.mxu0
    %v4390 = vadd.f32 %v779, %v4389
    %v4391 = vpop.f32.mrf.mxu0
    %v4392 = vadd.f32 %v779, %v4391
    %4393 = vdwg.mxu0
    %4394 = vmatpush.bf16.msra.mxu0 %v2788
    %4395 = vmatpush.bf16.msra.mxu0 %v2779
    %4396 = vmatpush.bf16.msra.mxu0 %v2770
    %4397 = vmatpush.bf16.msra.mxu0 %v2761
    %4398 = vmatpush.bf16.msra.mxu0 %v2752
    %4399 = vmatpush.bf16.msra.mxu0 %v2743
    %4400 = vmatpush.bf16.msra.mxu0 %v2734
    %4401 = vmatpush.bf16.msra.mxu0 %v2725
    %4402 = vmatmul.bf16.gmra.mxu0 %v972
    %v4403 = vpop.f32.mrf.mxu0
    %v4404 = vadd.f32 %v4355, %v4403
    %v4405 = vpop.f32.mrf.mxu0
    %v4406 = vadd.f32 %v4357, %v4405
    %4407 = vmatmul.bf16.gmra.mxu0 %v979
    %v4408 = vpop.f32.mrf.mxu0
    %v4409 = vadd.f32 %v4360, %v4408
    %v4410 = vpop.f32.mrf.mxu0
    %v4411 = vadd.f32 %v4362, %v4410
    %4412 = vmatmul.bf16.gmra.mxu0 %v986
    %v4413 = vpop.f32.mrf.mxu0
    %v4414 = vadd.f32 %v4365, %v4413
    %v4415 = vpop.f32.mrf.mxu0
    %v4416 = vadd.f32 %v4367, %v4415
    %4417 = vmatmul.bf16.gmra.mxu0 %v993
    %v4418 = vpop.f32.mrf.mxu0
    %v4419 = vadd.f32 %v4370, %v4418
    %v4420 = vpop.f32.mrf.mxu0
    %v4421 = vadd.f32 %v4372, %v4420
    %4422 = vmatmul.bf16.gmra.mxu0 %v1000
    %v4423 = vpop.f32.mrf.mxu0
    %v4424 = vadd.f32 %v4375, %v4423
    %v4425 = vpop.f32.mrf.mxu0
    %v4426 = vadd.f32 %v4377, %v4425
    %4427 = vmatmul.bf16.gmra.mxu0 %v1007
    %v4428 = vpop.f32.mrf.mxu0
    %v4429 = vadd.f32 %v4380, %v4428
    %v4430 = vpop.f32.mrf.mxu0
    %v4431 = vadd.f32 %v4382, %v4430
    %4432 = vmatmul.bf16.gmra.mxu0 %v1014
    %v4433 = vpop.f32.mrf.mxu0
    %v4434 = vadd.f32 %v4385, %v4433
    %v4435 = vpop.f32.mrf.mxu0
    %v4436 = vadd.f32 %v4387, %v4435
    %4437 = vmatmul.bf16.gmra.mxu0 %v1021
    %v4438 = vpop.f32.mrf.mxu0
    %v4439 = vadd.f32 %v4390, %v4438
    %v4440 = vpop.f32.mrf.mxu0
    %v4441 = vadd.f32 %v4392, %v4440
    %4442 = vdwg.mxu0
    %4443 = vmatpush.bf16.msra.mxu0 %v2860
    %4444 = vmatpush.bf16.msra.mxu0 %v2851
    %4445 = vmatpush.bf16.msra.mxu0 %v2842
    %4446 = vmatpush.bf16.msra.mxu0 %v2833
    %4447 = vmatpush.bf16.msra.mxu0 %v2824
    %4448 = vmatpush.bf16.msra.mxu0 %v2815
    %4449 = vmatpush.bf16.msra.mxu0 %v2806
    %4450 = vmatpush.bf16.msra.mxu0 %v2797
    %4451 = vmatmul.bf16.gmra.mxu0 %v973
    %v4452 = vpop.f32.mrf.mxu0
    %v4453 = vadd.f32 %v4404, %v4452
    %v4454 = vpop.f32.mrf.mxu0
    %v4455 = vadd.f32 %v4406, %v4454
    %4456 = vmatmul.bf16.gmra.mxu0 %v980
    %v4457 = vpop.f32.mrf.mxu0
    %v4458 = vadd.f32 %v4409, %v4457
    %v4459 = vpop.f32.mrf.mxu0
    %v4460 = vadd.f32 %v4411, %v4459
    %4461 = vmatmul.bf16.gmra.mxu0 %v987
    %v4462 = vpop.f32.mrf.mxu0
    %v4463 = vadd.f32 %v4414, %v4462
    %v4464 = vpop.f32.mrf.mxu0
    %v4465 = vadd.f32 %v4416, %v4464
    %4466 = vmatmul.bf16.gmra.mxu0 %v994
    %v4467 = vpop.f32.mrf.mxu0
    %v4468 = vadd.f32 %v4419, %v4467
    %v4469 = vpop.f32.mrf.mxu0
    %v4470 = vadd.f32 %v4421, %v4469
    %4471 = vmatmul.bf16.gmra.mxu0 %v1001
    %v4472 = vpop.f32.mrf.mxu0
    %v4473 = vadd.f32 %v4424, %v4472
    %v4474 = vpop.f32.mrf.mxu0
    %v4475 = vadd.f32 %v4426, %v4474
    %4476 = vmatmul.bf16.gmra.mxu0 %v1008
    %v4477 = vpop.f32.mrf.mxu0
    %v4478 = vadd.f32 %v4429, %v4477
    %v4479 = vpop.f32.mrf.mxu0
    %v4480 = vadd.f32 %v4431, %v4479
    %4481 = vmatmul.bf16.gmra.mxu0 %v1015
    %v4482 = vpop.f32.mrf.mxu0
    %v4483 = vadd.f32 %v4434, %v4482
    %v4484 = vpop.f32.mrf.mxu0
    %v4485 = vadd.f32 %v4436, %v4484
    %4486 = vmatmul.bf16.gmra.mxu0 %v1022
    %v4487 = vpop.f32.mrf.mxu0
    %v4488 = vadd.f32 %v4439, %v4487
    %v4489 = vpop.f32.mrf.mxu0
    %v4490 = vadd.f32 %v4441, %v4489
    %4491 = vdwg.mxu0
    %4492 = vmatpush.bf16.msra.mxu0 %v2932
    %4493 = vmatpush.bf16.msra.mxu0 %v2923
    %4494 = vmatpush.bf16.msra.mxu0 %v2914
    %4495 = vmatpush.bf16.msra.mxu0 %v2905
    %4496 = vmatpush.bf16.msra.mxu0 %v2896
    %4497 = vmatpush.bf16.msra.mxu0 %v2887
    %4498 = vmatpush.bf16.msra.mxu0 %v2878
    %4499 = vmatpush.bf16.msra.mxu0 %v2869
    %4500 = vmatmul.bf16.gmra.mxu0 %v974
    %v4501 = vpop.f32.mrf.mxu0
    %v4502 = vadd.f32 %v4453, %v4501
    %v4503 = vpop.f32.mrf.mxu0
    %v4504 = vadd.f32 %v4455, %v4503
    %4505 = vmatmul.bf16.gmra.mxu0 %v981
    %v4506 = vpop.f32.mrf.mxu0
    %v4507 = vadd.f32 %v4458, %v4506
    %v4508 = vpop.f32.mrf.mxu0
    %v4509 = vadd.f32 %v4460, %v4508
    %4510 = vmatmul.bf16.gmra.mxu0 %v988
    %v4511 = vpop.f32.mrf.mxu0
    %v4512 = vadd.f32 %v4463, %v4511
    %v4513 = vpop.f32.mrf.mxu0
    %v4514 = vadd.f32 %v4465, %v4513
    %4515 = vmatmul.bf16.gmra.mxu0 %v995
    %v4516 = vpop.f32.mrf.mxu0
    %v4517 = vadd.f32 %v4468, %v4516
    %v4518 = vpop.f32.mrf.mxu0
    %v4519 = vadd.f32 %v4470, %v4518
    %4520 = vmatmul.bf16.gmra.mxu0 %v1002
    %v4521 = vpop.f32.mrf.mxu0
    %v4522 = vadd.f32 %v4473, %v4521
    %v4523 = vpop.f32.mrf.mxu0
    %v4524 = vadd.f32 %v4475, %v4523
    %4525 = vmatmul.bf16.gmra.mxu0 %v1009
    %v4526 = vpop.f32.mrf.mxu0
    %v4527 = vadd.f32 %v4478, %v4526
    %v4528 = vpop.f32.mrf.mxu0
    %v4529 = vadd.f32 %v4480, %v4528
    %4530 = vmatmul.bf16.gmra.mxu0 %v1016
    %v4531 = vpop.f32.mrf.mxu0
    %v4532 = vadd.f32 %v4483, %v4531
    %v4533 = vpop.f32.mrf.mxu0
    %v4534 = vadd.f32 %v4485, %v4533
    %4535 = vmatmul.bf16.gmra.mxu0 %v1023
    %v4536 = vpop.f32.mrf.mxu0
    %v4537 = vadd.f32 %v4488, %v4536
    %v4538 = vpop.f32.mrf.mxu0
    %v4539 = vadd.f32 %v4490, %v4538
    %4540 = vdwg.mxu0
    %4541 = vmatpush.bf16.msra.mxu0 %v3004
    %4542 = vmatpush.bf16.msra.mxu0 %v2995
    %4543 = vmatpush.bf16.msra.mxu0 %v2986
    %4544 = vmatpush.bf16.msra.mxu0 %v2977
    %4545 = vmatpush.bf16.msra.mxu0 %v2968
    %4546 = vmatpush.bf16.msra.mxu0 %v2959
    %4547 = vmatpush.bf16.msra.mxu0 %v2950
    %4548 = vmatpush.bf16.msra.mxu0 %v2941
    %4549 = vmatmul.bf16.gmra.mxu0 %v975
    %v4550 = vpop.f32.mrf.mxu0
    %v4551 = vadd.f32 %v4502, %v4550
    %v4552 = vpop.f32.mrf.mxu0
    %v4553 = vadd.f32 %v4504, %v4552
    %4554 = vmatmul.bf16.gmra.mxu0 %v982
    %v4555 = vpop.f32.mrf.mxu0
    %v4556 = vadd.f32 %v4507, %v4555
    %v4557 = vpop.f32.mrf.mxu0
    %v4558 = vadd.f32 %v4509, %v4557
    %4559 = vmatmul.bf16.gmra.mxu0 %v989
    %v4560 = vpop.f32.mrf.mxu0
    %v4561 = vadd.f32 %v4512, %v4560
    %v4562 = vpop.f32.mrf.mxu0
    %v4563 = vadd.f32 %v4514, %v4562
    %4564 = vmatmul.bf16.gmra.mxu0 %v996
    %v4565 = vpop.f32.mrf.mxu0
    %v4566 = vadd.f32 %v4517, %v4565
    %v4567 = vpop.f32.mrf.mxu0
    %v4568 = vadd.f32 %v4519, %v4567
    %4569 = vmatmul.bf16.gmra.mxu0 %v1003
    %v4570 = vpop.f32.mrf.mxu0
    %v4571 = vadd.f32 %v4522, %v4570
    %v4572 = vpop.f32.mrf.mxu0
    %v4573 = vadd.f32 %v4524, %v4572
    %4574 = vmatmul.bf16.gmra.mxu0 %v1010
    %v4575 = vpop.f32.mrf.mxu0
    %v4576 = vadd.f32 %v4527, %v4575
    %v4577 = vpop.f32.mrf.mxu0
    %v4578 = vadd.f32 %v4529, %v4577
    %4579 = vmatmul.bf16.gmra.mxu0 %v1017
    %v4580 = vpop.f32.mrf.mxu0
    %v4581 = vadd.f32 %v4532, %v4580
    %v4582 = vpop.f32.mrf.mxu0
    %v4583 = vadd.f32 %v4534, %v4582
    %4584 = vmatmul.bf16.gmra.mxu0 %v1024
    %v4585 = vpop.f32.mrf.mxu0
    %v4586 = vadd.f32 %v4537, %v4585
    %v4587 = vpop.f32.mrf.mxu0
    %v4588 = vadd.f32 %v4539, %v4587
    %4589 = vdwg.mxu0
    %4590 = vmatpush.bf16.msra.mxu0 %v3076
    %4591 = vmatpush.bf16.msra.mxu0 %v3067
    %4592 = vmatpush.bf16.msra.mxu0 %v3058
    %4593 = vmatpush.bf16.msra.mxu0 %v3049
    %4594 = vmatpush.bf16.msra.mxu0 %v3040
    %4595 = vmatpush.bf16.msra.mxu0 %v3031
    %4596 = vmatpush.bf16.msra.mxu0 %v3022
    %4597 = vmatpush.bf16.msra.mxu0 %v3013
    %4598 = vmatmul.bf16.gmra.mxu0 %v976
    %v4599 = vpop.f32.mrf.mxu0
    %v4600 = vadd.f32 %v4551, %v4599
    %v4601 = vpop.f32.mrf.mxu0
    %v4602 = vadd.f32 %v4553, %v4601
    %4603 = vmatmul.bf16.gmra.mxu0 %v983
    %v4604 = vpop.f32.mrf.mxu0
    %v4605 = vadd.f32 %v4556, %v4604
    %v4606 = vpop.f32.mrf.mxu0
    %v4607 = vadd.f32 %v4558, %v4606
    %4608 = vmatmul.bf16.gmra.mxu0 %v990
    %v4609 = vpop.f32.mrf.mxu0
    %v4610 = vadd.f32 %v4561, %v4609
    %v4611 = vpop.f32.mrf.mxu0
    %v4612 = vadd.f32 %v4563, %v4611
    %4613 = vmatmul.bf16.gmra.mxu0 %v997
    %v4614 = vpop.f32.mrf.mxu0
    %v4615 = vadd.f32 %v4566, %v4614
    %v4616 = vpop.f32.mrf.mxu0
    %v4617 = vadd.f32 %v4568, %v4616
    %4618 = vmatmul.bf16.gmra.mxu0 %v1004
    %v4619 = vpop.f32.mrf.mxu0
    %v4620 = vadd.f32 %v4571, %v4619
    %v4621 = vpop.f32.mrf.mxu0
    %v4622 = vadd.f32 %v4573, %v4621
    %4623 = vmatmul.bf16.gmra.mxu0 %v1011
    %v4624 = vpop.f32.mrf.mxu0
    %v4625 = vadd.f32 %v4576, %v4624
    %v4626 = vpop.f32.mrf.mxu0
    %v4627 = vadd.f32 %v4578, %v4626
    %4628 = vmatmul.bf16.gmra.mxu0 %v1018
    %v4629 = vpop.f32.mrf.mxu0
    %v4630 = vadd.f32 %v4581, %v4629
    %v4631 = vpop.f32.mrf.mxu0
    %v4632 = vadd.f32 %v4583, %v4631
    %4633 = vmatmul.bf16.gmra.mxu0 %v1025
    %v4634 = vpop.f32.mrf.mxu0
    %v4635 = vadd.f32 %v4586, %v4634
    %v4636 = vpop.f32.mrf.mxu0
    %v4637 = vadd.f32 %v4588, %v4636
    %4638 = vdwg.mxu0
    %4639 = vmatpush.bf16.msra.mxu0 %v3148
    %4640 = vmatpush.bf16.msra.mxu0 %v3139
    %4641 = vmatpush.bf16.msra.mxu0 %v3130
    %4642 = vmatpush.bf16.msra.mxu0 %v3121
    %4643 = vmatpush.bf16.msra.mxu0 %v3112
    %4644 = vmatpush.bf16.msra.mxu0 %v3103
    %4645 = vmatpush.bf16.msra.mxu0 %v3094
    %4646 = vmatpush.bf16.msra.mxu0 %v3085
    %4647 = vmatmul.bf16.gmra.mxu0 %v977
    %v4648 = vpop.f32.mrf.mxu0
    %v4649 = vadd.f32 %v4600, %v4648
    %v4650 = vpop.f32.mrf.mxu0
    %v4651 = vadd.f32 %v4602, %v4650
    %4652 = vmatmul.bf16.gmra.mxu0 %v984
    %v4653 = vpop.f32.mrf.mxu0
    %v4654 = vadd.f32 %v4605, %v4653
    %v4655 = vpop.f32.mrf.mxu0
    %v4656 = vadd.f32 %v4607, %v4655
    %4657 = vmatmul.bf16.gmra.mxu0 %v991
    %v4658 = vpop.f32.mrf.mxu0
    %v4659 = vadd.f32 %v4610, %v4658
    %v4660 = vpop.f32.mrf.mxu0
    %v4661 = vadd.f32 %v4612, %v4660
    %4662 = vmatmul.bf16.gmra.mxu0 %v998
    %v4663 = vpop.f32.mrf.mxu0
    %v4664 = vadd.f32 %v4615, %v4663
    %v4665 = vpop.f32.mrf.mxu0
    %v4666 = vadd.f32 %v4617, %v4665
    %4667 = vmatmul.bf16.gmra.mxu0 %v1005
    %v4668 = vpop.f32.mrf.mxu0
    %v4669 = vadd.f32 %v4620, %v4668
    %v4670 = vpop.f32.mrf.mxu0
    %v4671 = vadd.f32 %v4622, %v4670
    %4672 = vmatmul.bf16.gmra.mxu0 %v1012
    %v4673 = vpop.f32.mrf.mxu0
    %v4674 = vadd.f32 %v4625, %v4673
    %v4675 = vpop.f32.mrf.mxu0
    %v4676 = vadd.f32 %v4627, %v4675
    %4677 = vmatmul.bf16.gmra.mxu0 %v1019
    %v4678 = vpop.f32.mrf.mxu0
    %v4679 = vadd.f32 %v4630, %v4678
    %v4680 = vpop.f32.mrf.mxu0
    %v4681 = vadd.f32 %v4632, %v4680
    %4682 = vmatmul.bf16.gmra.mxu0 %v1026
    %v4683 = vpop.f32.mrf.mxu0
    %v4684 = vadd.f32 %v4635, %v4683
    %v4685 = vpop.f32.mrf.mxu0
    %v4686 = vadd.f32 %v4637, %v4685
    %4687 = vdwg.mxu0
    %4688 = vmatpush.bf16.msra.mxu0 %v2717
    %4689 = vmatpush.bf16.msra.mxu0 %v2708
    %4690 = vmatpush.bf16.msra.mxu0 %v2699
    %4691 = vmatpush.bf16.msra.mxu0 %v2690
    %4692 = vmatpush.bf16.msra.mxu0 %v2681
    %4693 = vmatpush.bf16.msra.mxu0 %v2672
    %4694 = vmatpush.bf16.msra.mxu0 %v2663
    %4695 = vmatpush.bf16.msra.mxu0 %v2654
    %4696 = vmatmul.bf16.gmra.mxu0 %v971
    %v4697 = vpop.f32.mrf.mxu0
    %v4698 = vadd.f32 %v780, %v4697
    %v4699 = vpop.f32.mrf.mxu0
    %v4700 = vadd.f32 %v780, %v4699
    %4701 = vmatmul.bf16.gmra.mxu0 %v978
    %v4702 = vpop.f32.mrf.mxu0
    %v4703 = vadd.f32 %v780, %v4702
    %v4704 = vpop.f32.mrf.mxu0
    %v4705 = vadd.f32 %v780, %v4704
    %4706 = vmatmul.bf16.gmra.mxu0 %v985
    %v4707 = vpop.f32.mrf.mxu0
    %v4708 = vadd.f32 %v780, %v4707
    %v4709 = vpop.f32.mrf.mxu0
    %v4710 = vadd.f32 %v780, %v4709
    %4711 = vmatmul.bf16.gmra.mxu0 %v992
    %v4712 = vpop.f32.mrf.mxu0
    %v4713 = vadd.f32 %v780, %v4712
    %v4714 = vpop.f32.mrf.mxu0
    %v4715 = vadd.f32 %v780, %v4714
    %4716 = vmatmul.bf16.gmra.mxu0 %v999
    %v4717 = vpop.f32.mrf.mxu0
    %v4718 = vadd.f32 %v780, %v4717
    %v4719 = vpop.f32.mrf.mxu0
    %v4720 = vadd.f32 %v780, %v4719
    %4721 = vmatmul.bf16.gmra.mxu0 %v1006
    %v4722 = vpop.f32.mrf.mxu0
    %v4723 = vadd.f32 %v780, %v4722
    %v4724 = vpop.f32.mrf.mxu0
    %v4725 = vadd.f32 %v780, %v4724
    %4726 = vmatmul.bf16.gmra.mxu0 %v1013
    %v4727 = vpop.f32.mrf.mxu0
    %v4728 = vadd.f32 %v780, %v4727
    %v4729 = vpop.f32.mrf.mxu0
    %v4730 = vadd.f32 %v780, %v4729
    %4731 = vmatmul.bf16.gmra.mxu0 %v1020
    %v4732 = vpop.f32.mrf.mxu0
    %v4733 = vadd.f32 %v780, %v4732
    %v4734 = vpop.f32.mrf.mxu0
    %v4735 = vadd.f32 %v780, %v4734
    %4736 = vdwg.mxu0
    %4737 = vmatpush.bf16.msra.mxu0 %v2789
    %4738 = vmatpush.bf16.msra.mxu0 %v2780
    %4739 = vmatpush.bf16.msra.mxu0 %v2771
    %4740 = vmatpush.bf16.msra.mxu0 %v2762
    %4741 = vmatpush.bf16.msra.mxu0 %v2753
    %4742 = vmatpush.bf16.msra.mxu0 %v2744
    %4743 = vmatpush.bf16.msra.mxu0 %v2735
    %4744 = vmatpush.bf16.msra.mxu0 %v2726
    %4745 = vmatmul.bf16.gmra.mxu0 %v972
    %v4746 = vpop.f32.mrf.mxu0
    %v4747 = vadd.f32 %v4698, %v4746
    %v4748 = vpop.f32.mrf.mxu0
    %v4749 = vadd.f32 %v4700, %v4748
    %4750 = vmatmul.bf16.gmra.mxu0 %v979
    %v4751 = vpop.f32.mrf.mxu0
    %v4752 = vadd.f32 %v4703, %v4751
    %v4753 = vpop.f32.mrf.mxu0
    %v4754 = vadd.f32 %v4705, %v4753
    %4755 = vmatmul.bf16.gmra.mxu0 %v986
    %v4756 = vpop.f32.mrf.mxu0
    %v4757 = vadd.f32 %v4708, %v4756
    %v4758 = vpop.f32.mrf.mxu0
    %v4759 = vadd.f32 %v4710, %v4758
    %4760 = vmatmul.bf16.gmra.mxu0 %v993
    %v4761 = vpop.f32.mrf.mxu0
    %v4762 = vadd.f32 %v4713, %v4761
    %v4763 = vpop.f32.mrf.mxu0
    %v4764 = vadd.f32 %v4715, %v4763
    %4765 = vmatmul.bf16.gmra.mxu0 %v1000
    %v4766 = vpop.f32.mrf.mxu0
    %v4767 = vadd.f32 %v4718, %v4766
    %v4768 = vpop.f32.mrf.mxu0
    %v4769 = vadd.f32 %v4720, %v4768
    %4770 = vmatmul.bf16.gmra.mxu0 %v1007
    %v4771 = vpop.f32.mrf.mxu0
    %v4772 = vadd.f32 %v4723, %v4771
    %v4773 = vpop.f32.mrf.mxu0
    %v4774 = vadd.f32 %v4725, %v4773
    %4775 = vmatmul.bf16.gmra.mxu0 %v1014
    %v4776 = vpop.f32.mrf.mxu0
    %v4777 = vadd.f32 %v4728, %v4776
    %v4778 = vpop.f32.mrf.mxu0
    %v4779 = vadd.f32 %v4730, %v4778
    %4780 = vmatmul.bf16.gmra.mxu0 %v1021
    %v4781 = vpop.f32.mrf.mxu0
    %v4782 = vadd.f32 %v4733, %v4781
    %v4783 = vpop.f32.mrf.mxu0
    %v4784 = vadd.f32 %v4735, %v4783
    %4785 = vdwg.mxu0
    %4786 = vmatpush.bf16.msra.mxu0 %v2861
    %4787 = vmatpush.bf16.msra.mxu0 %v2852
    %4788 = vmatpush.bf16.msra.mxu0 %v2843
    %4789 = vmatpush.bf16.msra.mxu0 %v2834
    %4790 = vmatpush.bf16.msra.mxu0 %v2825
    %4791 = vmatpush.bf16.msra.mxu0 %v2816
    %4792 = vmatpush.bf16.msra.mxu0 %v2807
    %4793 = vmatpush.bf16.msra.mxu0 %v2798
    %4794 = vmatmul.bf16.gmra.mxu0 %v973
    %v4795 = vpop.f32.mrf.mxu0
    %v4796 = vadd.f32 %v4747, %v4795
    %v4797 = vpop.f32.mrf.mxu0
    %v4798 = vadd.f32 %v4749, %v4797
    %4799 = vmatmul.bf16.gmra.mxu0 %v980
    %v4800 = vpop.f32.mrf.mxu0
    %v4801 = vadd.f32 %v4752, %v4800
    %v4802 = vpop.f32.mrf.mxu0
    %v4803 = vadd.f32 %v4754, %v4802
    %4804 = vmatmul.bf16.gmra.mxu0 %v987
    %v4805 = vpop.f32.mrf.mxu0
    %v4806 = vadd.f32 %v4757, %v4805
    %v4807 = vpop.f32.mrf.mxu0
    %v4808 = vadd.f32 %v4759, %v4807
    %4809 = vmatmul.bf16.gmra.mxu0 %v994
    %v4810 = vpop.f32.mrf.mxu0
    %v4811 = vadd.f32 %v4762, %v4810
    %v4812 = vpop.f32.mrf.mxu0
    %v4813 = vadd.f32 %v4764, %v4812
    %4814 = vmatmul.bf16.gmra.mxu0 %v1001
    %v4815 = vpop.f32.mrf.mxu0
    %v4816 = vadd.f32 %v4767, %v4815
    %v4817 = vpop.f32.mrf.mxu0
    %v4818 = vadd.f32 %v4769, %v4817
    %4819 = vmatmul.bf16.gmra.mxu0 %v1008
    %v4820 = vpop.f32.mrf.mxu0
    %v4821 = vadd.f32 %v4772, %v4820
    %v4822 = vpop.f32.mrf.mxu0
    %v4823 = vadd.f32 %v4774, %v4822
    %4824 = vmatmul.bf16.gmra.mxu0 %v1015
    %v4825 = vpop.f32.mrf.mxu0
    %v4826 = vadd.f32 %v4777, %v4825
    %v4827 = vpop.f32.mrf.mxu0
    %v4828 = vadd.f32 %v4779, %v4827
    %4829 = vmatmul.bf16.gmra.mxu0 %v1022
    %v4830 = vpop.f32.mrf.mxu0
    %v4831 = vadd.f32 %v4782, %v4830
    %v4832 = vpop.f32.mrf.mxu0
    %v4833 = vadd.f32 %v4784, %v4832
    %4834 = vdwg.mxu0
    %4835 = vmatpush.bf16.msra.mxu0 %v2933
    %4836 = vmatpush.bf16.msra.mxu0 %v2924
    %4837 = vmatpush.bf16.msra.mxu0 %v2915
    %4838 = vmatpush.bf16.msra.mxu0 %v2906
    %4839 = vmatpush.bf16.msra.mxu0 %v2897
    %4840 = vmatpush.bf16.msra.mxu0 %v2888
    %4841 = vmatpush.bf16.msra.mxu0 %v2879
    %4842 = vmatpush.bf16.msra.mxu0 %v2870
    %4843 = vmatmul.bf16.gmra.mxu0 %v974
    %v4844 = vpop.f32.mrf.mxu0
    %v4845 = vadd.f32 %v4796, %v4844
    %v4846 = vpop.f32.mrf.mxu0
    %v4847 = vadd.f32 %v4798, %v4846
    %4848 = vmatmul.bf16.gmra.mxu0 %v981
    %v4849 = vpop.f32.mrf.mxu0
    %v4850 = vadd.f32 %v4801, %v4849
    %v4851 = vpop.f32.mrf.mxu0
    %v4852 = vadd.f32 %v4803, %v4851
    %4853 = vmatmul.bf16.gmra.mxu0 %v988
    %v4854 = vpop.f32.mrf.mxu0
    %v4855 = vadd.f32 %v4806, %v4854
    %v4856 = vpop.f32.mrf.mxu0
    %v4857 = vadd.f32 %v4808, %v4856
    %4858 = vmatmul.bf16.gmra.mxu0 %v995
    %v4859 = vpop.f32.mrf.mxu0
    %v4860 = vadd.f32 %v4811, %v4859
    %v4861 = vpop.f32.mrf.mxu0
    %v4862 = vadd.f32 %v4813, %v4861
    %4863 = vmatmul.bf16.gmra.mxu0 %v1002
    %v4864 = vpop.f32.mrf.mxu0
    %v4865 = vadd.f32 %v4816, %v4864
    %v4866 = vpop.f32.mrf.mxu0
    %v4867 = vadd.f32 %v4818, %v4866
    %4868 = vmatmul.bf16.gmra.mxu0 %v1009
    %v4869 = vpop.f32.mrf.mxu0
    %v4870 = vadd.f32 %v4821, %v4869
    %v4871 = vpop.f32.mrf.mxu0
    %v4872 = vadd.f32 %v4823, %v4871
    %4873 = vmatmul.bf16.gmra.mxu0 %v1016
    %v4874 = vpop.f32.mrf.mxu0
    %v4875 = vadd.f32 %v4826, %v4874
    %v4876 = vpop.f32.mrf.mxu0
    %v4877 = vadd.f32 %v4828, %v4876
    %4878 = vmatmul.bf16.gmra.mxu0 %v1023
    %v4879 = vpop.f32.mrf.mxu0
    %v4880 = vadd.f32 %v4831, %v4879
    %v4881 = vpop.f32.mrf.mxu0
    %v4882 = vadd.f32 %v4833, %v4881
    %4883 = vdwg.mxu0
    %4884 = vmatpush.bf16.msra.mxu0 %v3005
    %4885 = vmatpush.bf16.msra.mxu0 %v2996
    %4886 = vmatpush.bf16.msra.mxu0 %v2987
    %4887 = vmatpush.bf16.msra.mxu0 %v2978
    %4888 = vmatpush.bf16.msra.mxu0 %v2969
    %4889 = vmatpush.bf16.msra.mxu0 %v2960
    %4890 = vmatpush.bf16.msra.mxu0 %v2951
    %4891 = vmatpush.bf16.msra.mxu0 %v2942
    %4892 = vmatmul.bf16.gmra.mxu0 %v975
    %v4893 = vpop.f32.mrf.mxu0
    %v4894 = vadd.f32 %v4845, %v4893
    %v4895 = vpop.f32.mrf.mxu0
    %v4896 = vadd.f32 %v4847, %v4895
    %4897 = vmatmul.bf16.gmra.mxu0 %v982
    %v4898 = vpop.f32.mrf.mxu0
    %v4899 = vadd.f32 %v4850, %v4898
    %v4900 = vpop.f32.mrf.mxu0
    %v4901 = vadd.f32 %v4852, %v4900
    %4902 = vmatmul.bf16.gmra.mxu0 %v989
    %v4903 = vpop.f32.mrf.mxu0
    %v4904 = vadd.f32 %v4855, %v4903
    %v4905 = vpop.f32.mrf.mxu0
    %v4906 = vadd.f32 %v4857, %v4905
    %4907 = vmatmul.bf16.gmra.mxu0 %v996
    %v4908 = vpop.f32.mrf.mxu0
    %v4909 = vadd.f32 %v4860, %v4908
    %v4910 = vpop.f32.mrf.mxu0
    %v4911 = vadd.f32 %v4862, %v4910
    %4912 = vmatmul.bf16.gmra.mxu0 %v1003
    %v4913 = vpop.f32.mrf.mxu0
    %v4914 = vadd.f32 %v4865, %v4913
    %v4915 = vpop.f32.mrf.mxu0
    %v4916 = vadd.f32 %v4867, %v4915
    %4917 = vmatmul.bf16.gmra.mxu0 %v1010
    %v4918 = vpop.f32.mrf.mxu0
    %v4919 = vadd.f32 %v4870, %v4918
    %v4920 = vpop.f32.mrf.mxu0
    %v4921 = vadd.f32 %v4872, %v4920
    %4922 = vmatmul.bf16.gmra.mxu0 %v1017
    %v4923 = vpop.f32.mrf.mxu0
    %v4924 = vadd.f32 %v4875, %v4923
    %v4925 = vpop.f32.mrf.mxu0
    %v4926 = vadd.f32 %v4877, %v4925
    %4927 = vmatmul.bf16.gmra.mxu0 %v1024
    %v4928 = vpop.f32.mrf.mxu0
    %v4929 = vadd.f32 %v4880, %v4928
    %v4930 = vpop.f32.mrf.mxu0
    %v4931 = vadd.f32 %v4882, %v4930
    %4932 = vdwg.mxu0
    %4933 = vmatpush.bf16.msra.mxu0 %v3077
    %4934 = vmatpush.bf16.msra.mxu0 %v3068
    %4935 = vmatpush.bf16.msra.mxu0 %v3059
    %4936 = vmatpush.bf16.msra.mxu0 %v3050
    %4937 = vmatpush.bf16.msra.mxu0 %v3041
    %4938 = vmatpush.bf16.msra.mxu0 %v3032
    %4939 = vmatpush.bf16.msra.mxu0 %v3023
    %4940 = vmatpush.bf16.msra.mxu0 %v3014
    %4941 = vmatmul.bf16.gmra.mxu0 %v976
    %v4942 = vpop.f32.mrf.mxu0
    %v4943 = vadd.f32 %v4894, %v4942
    %v4944 = vpop.f32.mrf.mxu0
    %v4945 = vadd.f32 %v4896, %v4944
    %4946 = vmatmul.bf16.gmra.mxu0 %v983
    %v4947 = vpop.f32.mrf.mxu0
    %v4948 = vadd.f32 %v4899, %v4947
    %v4949 = vpop.f32.mrf.mxu0
    %v4950 = vadd.f32 %v4901, %v4949
    %4951 = vmatmul.bf16.gmra.mxu0 %v990
    %v4952 = vpop.f32.mrf.mxu0
    %v4953 = vadd.f32 %v4904, %v4952
    %v4954 = vpop.f32.mrf.mxu0
    %v4955 = vadd.f32 %v4906, %v4954
    %4956 = vmatmul.bf16.gmra.mxu0 %v997
    %v4957 = vpop.f32.mrf.mxu0
    %v4958 = vadd.f32 %v4909, %v4957
    %v4959 = vpop.f32.mrf.mxu0
    %v4960 = vadd.f32 %v4911, %v4959
    %4961 = vmatmul.bf16.gmra.mxu0 %v1004
    %v4962 = vpop.f32.mrf.mxu0
    %v4963 = vadd.f32 %v4914, %v4962
    %v4964 = vpop.f32.mrf.mxu0
    %v4965 = vadd.f32 %v4916, %v4964
    %4966 = vmatmul.bf16.gmra.mxu0 %v1011
    %v4967 = vpop.f32.mrf.mxu0
    %v4968 = vadd.f32 %v4919, %v4967
    %v4969 = vpop.f32.mrf.mxu0
    %v4970 = vadd.f32 %v4921, %v4969
    %4971 = vmatmul.bf16.gmra.mxu0 %v1018
    %v4972 = vpop.f32.mrf.mxu0
    %v4973 = vadd.f32 %v4924, %v4972
    %v4974 = vpop.f32.mrf.mxu0
    %v4975 = vadd.f32 %v4926, %v4974
    %4976 = vmatmul.bf16.gmra.mxu0 %v1025
    %v4977 = vpop.f32.mrf.mxu0
    %v4978 = vadd.f32 %v4929, %v4977
    %v4979 = vpop.f32.mrf.mxu0
    %v4980 = vadd.f32 %v4931, %v4979
    %4981 = vdwg.mxu0
    %4982 = vmatpush.bf16.msra.mxu0 %v3149
    %4983 = vmatpush.bf16.msra.mxu0 %v3140
    %4984 = vmatpush.bf16.msra.mxu0 %v3131
    %4985 = vmatpush.bf16.msra.mxu0 %v3122
    %4986 = vmatpush.bf16.msra.mxu0 %v3113
    %4987 = vmatpush.bf16.msra.mxu0 %v3104
    %4988 = vmatpush.bf16.msra.mxu0 %v3095
    %4989 = vmatpush.bf16.msra.mxu0 %v3086
    %4990 = vmatmul.bf16.gmra.mxu0 %v977
    %v4991 = vpop.f32.mrf.mxu0
    %v4992 = vadd.f32 %v4943, %v4991
    %v4993 = vpop.f32.mrf.mxu0
    %v4994 = vadd.f32 %v4945, %v4993
    %4995 = vmatmul.bf16.gmra.mxu0 %v984
    %v4996 = vpop.f32.mrf.mxu0
    %v4997 = vadd.f32 %v4948, %v4996
    %v4998 = vpop.f32.mrf.mxu0
    %v4999 = vadd.f32 %v4950, %v4998
    %5000 = vmatmul.bf16.gmra.mxu0 %v991
    %v5001 = vpop.f32.mrf.mxu0
    %v5002 = vadd.f32 %v4953, %v5001
    %v5003 = vpop.f32.mrf.mxu0
    %v5004 = vadd.f32 %v4955, %v5003
    %5005 = vmatmul.bf16.gmra.mxu0 %v998
    %v5006 = vpop.f32.mrf.mxu0
    %v5007 = vadd.f32 %v4958, %v5006
    %v5008 = vpop.f32.mrf.mxu0
    %v5009 = vadd.f32 %v4960, %v5008
    %5010 = vmatmul.bf16.gmra.mxu0 %v1005
    %v5011 = vpop.f32.mrf.mxu0
    %v5012 = vadd.f32 %v4963, %v5011
    %v5013 = vpop.f32.mrf.mxu0
    %v5014 = vadd.f32 %v4965, %v5013
    %5015 = vmatmul.bf16.gmra.mxu0 %v1012
    %v5016 = vpop.f32.mrf.mxu0
    %v5017 = vadd.f32 %v4968, %v5016
    %v5018 = vpop.f32.mrf.mxu0
    %v5019 = vadd.f32 %v4970, %v5018
    %5020 = vmatmul.bf16.gmra.mxu0 %v1019
    %v5021 = vpop.f32.mrf.mxu0
    %v5022 = vadd.f32 %v4973, %v5021
    %v5023 = vpop.f32.mrf.mxu0
    %v5024 = vadd.f32 %v4975, %v5023
    %5025 = vmatmul.bf16.gmra.mxu0 %v1026
    %v5026 = vpop.f32.mrf.mxu0
    %v5027 = vadd.f32 %v4978, %v5026
    %v5028 = vpop.f32.mrf.mxu0
    %v5029 = vadd.f32 %v4980, %v5028
    %5030 = vdwg.mxu0
    %5031 = vmatpush.bf16.msra.mxu0 %v2718
    %5032 = vmatpush.bf16.msra.mxu0 %v2709
    %5033 = vmatpush.bf16.msra.mxu0 %v2700
    %5034 = vmatpush.bf16.msra.mxu0 %v2691
    %5035 = vmatpush.bf16.msra.mxu0 %v2682
    %5036 = vmatpush.bf16.msra.mxu0 %v2673
    %5037 = vmatpush.bf16.msra.mxu0 %v2664
    %5038 = vmatpush.bf16.msra.mxu0 %v2655
    %5039 = vmatmul.bf16.gmra.mxu0 %v971
    %v5040 = vpop.f32.mrf.mxu0
    %v5041 = vadd.f32 %v781, %v5040
    %v5042 = vpop.f32.mrf.mxu0
    %v5043 = vadd.f32 %v781, %v5042
    %5044 = vmatmul.bf16.gmra.mxu0 %v978
    %v5045 = vpop.f32.mrf.mxu0
    %v5046 = vadd.f32 %v781, %v5045
    %v5047 = vpop.f32.mrf.mxu0
    %v5048 = vadd.f32 %v781, %v5047
    %5049 = vmatmul.bf16.gmra.mxu0 %v985
    %v5050 = vpop.f32.mrf.mxu0
    %v5051 = vadd.f32 %v781, %v5050
    %v5052 = vpop.f32.mrf.mxu0
    %v5053 = vadd.f32 %v781, %v5052
    %5054 = vmatmul.bf16.gmra.mxu0 %v992
    %v5055 = vpop.f32.mrf.mxu0
    %v5056 = vadd.f32 %v781, %v5055
    %v5057 = vpop.f32.mrf.mxu0
    %v5058 = vadd.f32 %v781, %v5057
    %5059 = vmatmul.bf16.gmra.mxu0 %v999
    %v5060 = vpop.f32.mrf.mxu0
    %v5061 = vadd.f32 %v781, %v5060
    %v5062 = vpop.f32.mrf.mxu0
    %v5063 = vadd.f32 %v781, %v5062
    %5064 = vmatmul.bf16.gmra.mxu0 %v1006
    %v5065 = vpop.f32.mrf.mxu0
    %v5066 = vadd.f32 %v781, %v5065
    %v5067 = vpop.f32.mrf.mxu0
    %v5068 = vadd.f32 %v781, %v5067
    %5069 = vmatmul.bf16.gmra.mxu0 %v1013
    %v5070 = vpop.f32.mrf.mxu0
    %v5071 = vadd.f32 %v781, %v5070
    %v5072 = vpop.f32.mrf.mxu0
    %v5073 = vadd.f32 %v781, %v5072
    %5074 = vmatmul.bf16.gmra.mxu0 %v1020
    %v5075 = vpop.f32.mrf.mxu0
    %v5076 = vadd.f32 %v781, %v5075
    %v5077 = vpop.f32.mrf.mxu0
    %v5078 = vadd.f32 %v781, %v5077
    %5079 = vdwg.mxu0
    %5080 = vmatpush.bf16.msra.mxu0 %v2790
    %5081 = vmatpush.bf16.msra.mxu0 %v2781
    %5082 = vmatpush.bf16.msra.mxu0 %v2772
    %5083 = vmatpush.bf16.msra.mxu0 %v2763
    %5084 = vmatpush.bf16.msra.mxu0 %v2754
    %5085 = vmatpush.bf16.msra.mxu0 %v2745
    %5086 = vmatpush.bf16.msra.mxu0 %v2736
    %5087 = vmatpush.bf16.msra.mxu0 %v2727
    %5088 = vmatmul.bf16.gmra.mxu0 %v972
    %v5089 = vpop.f32.mrf.mxu0
    %v5090 = vadd.f32 %v5041, %v5089
    %v5091 = vpop.f32.mrf.mxu0
    %v5092 = vadd.f32 %v5043, %v5091
    %5093 = vmatmul.bf16.gmra.mxu0 %v979
    %v5094 = vpop.f32.mrf.mxu0
    %v5095 = vadd.f32 %v5046, %v5094
    %v5096 = vpop.f32.mrf.mxu0
    %v5097 = vadd.f32 %v5048, %v5096
    %5098 = vmatmul.bf16.gmra.mxu0 %v986
    %v5099 = vpop.f32.mrf.mxu0
    %v5100 = vadd.f32 %v5051, %v5099
    %v5101 = vpop.f32.mrf.mxu0
    %v5102 = vadd.f32 %v5053, %v5101
    %5103 = vmatmul.bf16.gmra.mxu0 %v993
    %v5104 = vpop.f32.mrf.mxu0
    %v5105 = vadd.f32 %v5056, %v5104
    %v5106 = vpop.f32.mrf.mxu0
    %v5107 = vadd.f32 %v5058, %v5106
    %5108 = vmatmul.bf16.gmra.mxu0 %v1000
    %v5109 = vpop.f32.mrf.mxu0
    %v5110 = vadd.f32 %v5061, %v5109
    %v5111 = vpop.f32.mrf.mxu0
    %v5112 = vadd.f32 %v5063, %v5111
    %5113 = vmatmul.bf16.gmra.mxu0 %v1007
    %v5114 = vpop.f32.mrf.mxu0
    %v5115 = vadd.f32 %v5066, %v5114
    %v5116 = vpop.f32.mrf.mxu0
    %v5117 = vadd.f32 %v5068, %v5116
    %5118 = vmatmul.bf16.gmra.mxu0 %v1014
    %v5119 = vpop.f32.mrf.mxu0
    %v5120 = vadd.f32 %v5071, %v5119
    %v5121 = vpop.f32.mrf.mxu0
    %v5122 = vadd.f32 %v5073, %v5121
    %5123 = vmatmul.bf16.gmra.mxu0 %v1021
    %v5124 = vpop.f32.mrf.mxu0
    %v5125 = vadd.f32 %v5076, %v5124
    %v5126 = vpop.f32.mrf.mxu0
    %v5127 = vadd.f32 %v5078, %v5126
    %5128 = vdwg.mxu0
    %5129 = vmatpush.bf16.msra.mxu0 %v2862
    %5130 = vmatpush.bf16.msra.mxu0 %v2853
    %5131 = vmatpush.bf16.msra.mxu0 %v2844
    %5132 = vmatpush.bf16.msra.mxu0 %v2835
    %5133 = vmatpush.bf16.msra.mxu0 %v2826
    %5134 = vmatpush.bf16.msra.mxu0 %v2817
    %5135 = vmatpush.bf16.msra.mxu0 %v2808
    %5136 = vmatpush.bf16.msra.mxu0 %v2799
    %5137 = vmatmul.bf16.gmra.mxu0 %v973
    %v5138 = vpop.f32.mrf.mxu0
    %v5139 = vadd.f32 %v5090, %v5138
    %v5140 = vpop.f32.mrf.mxu0
    %v5141 = vadd.f32 %v5092, %v5140
    %5142 = vmatmul.bf16.gmra.mxu0 %v980
    %v5143 = vpop.f32.mrf.mxu0
    %v5144 = vadd.f32 %v5095, %v5143
    %v5145 = vpop.f32.mrf.mxu0
    %v5146 = vadd.f32 %v5097, %v5145
    %5147 = vmatmul.bf16.gmra.mxu0 %v987
    %v5148 = vpop.f32.mrf.mxu0
    %v5149 = vadd.f32 %v5100, %v5148
    %v5150 = vpop.f32.mrf.mxu0
    %v5151 = vadd.f32 %v5102, %v5150
    %5152 = vmatmul.bf16.gmra.mxu0 %v994
    %v5153 = vpop.f32.mrf.mxu0
    %v5154 = vadd.f32 %v5105, %v5153
    %v5155 = vpop.f32.mrf.mxu0
    %v5156 = vadd.f32 %v5107, %v5155
    %5157 = vmatmul.bf16.gmra.mxu0 %v1001
    %v5158 = vpop.f32.mrf.mxu0
    %v5159 = vadd.f32 %v5110, %v5158
    %v5160 = vpop.f32.mrf.mxu0
    %v5161 = vadd.f32 %v5112, %v5160
    %5162 = vmatmul.bf16.gmra.mxu0 %v1008
    %v5163 = vpop.f32.mrf.mxu0
    %v5164 = vadd.f32 %v5115, %v5163
    %v5165 = vpop.f32.mrf.mxu0
    %v5166 = vadd.f32 %v5117, %v5165
    %5167 = vmatmul.bf16.gmra.mxu0 %v1015
    %v5168 = vpop.f32.mrf.mxu0
    %v5169 = vadd.f32 %v5120, %v5168
    %v5170 = vpop.f32.mrf.mxu0
    %v5171 = vadd.f32 %v5122, %v5170
    %5172 = vmatmul.bf16.gmra.mxu0 %v1022
    %v5173 = vpop.f32.mrf.mxu0
    %v5174 = vadd.f32 %v5125, %v5173
    %v5175 = vpop.f32.mrf.mxu0
    %v5176 = vadd.f32 %v5127, %v5175
    %5177 = vdwg.mxu0
    %5178 = vmatpush.bf16.msra.mxu0 %v2934
    %5179 = vmatpush.bf16.msra.mxu0 %v2925
    %5180 = vmatpush.bf16.msra.mxu0 %v2916
    %5181 = vmatpush.bf16.msra.mxu0 %v2907
    %5182 = vmatpush.bf16.msra.mxu0 %v2898
    %5183 = vmatpush.bf16.msra.mxu0 %v2889
    %5184 = vmatpush.bf16.msra.mxu0 %v2880
    %5185 = vmatpush.bf16.msra.mxu0 %v2871
    %5186 = vmatmul.bf16.gmra.mxu0 %v974
    %v5187 = vpop.f32.mrf.mxu0
    %v5188 = vadd.f32 %v5139, %v5187
    %v5189 = vpop.f32.mrf.mxu0
    %v5190 = vadd.f32 %v5141, %v5189
    %5191 = vmatmul.bf16.gmra.mxu0 %v981
    %v5192 = vpop.f32.mrf.mxu0
    %v5193 = vadd.f32 %v5144, %v5192
    %v5194 = vpop.f32.mrf.mxu0
    %v5195 = vadd.f32 %v5146, %v5194
    %5196 = vmatmul.bf16.gmra.mxu0 %v988
    %v5197 = vpop.f32.mrf.mxu0
    %v5198 = vadd.f32 %v5149, %v5197
    %v5199 = vpop.f32.mrf.mxu0
    %v5200 = vadd.f32 %v5151, %v5199
    %5201 = vmatmul.bf16.gmra.mxu0 %v995
    %v5202 = vpop.f32.mrf.mxu0
    %v5203 = vadd.f32 %v5154, %v5202
    %v5204 = vpop.f32.mrf.mxu0
    %v5205 = vadd.f32 %v5156, %v5204
    %5206 = vmatmul.bf16.gmra.mxu0 %v1002
    %v5207 = vpop.f32.mrf.mxu0
    %v5208 = vadd.f32 %v5159, %v5207
    %v5209 = vpop.f32.mrf.mxu0
    %v5210 = vadd.f32 %v5161, %v5209
    %5211 = vmatmul.bf16.gmra.mxu0 %v1009
    %v5212 = vpop.f32.mrf.mxu0
    %v5213 = vadd.f32 %v5164, %v5212
    %v5214 = vpop.f32.mrf.mxu0
    %v5215 = vadd.f32 %v5166, %v5214
    %5216 = vmatmul.bf16.gmra.mxu0 %v1016
    %v5217 = vpop.f32.mrf.mxu0
    %v5218 = vadd.f32 %v5169, %v5217
    %v5219 = vpop.f32.mrf.mxu0
    %v5220 = vadd.f32 %v5171, %v5219
    %5221 = vmatmul.bf16.gmra.mxu0 %v1023
    %v5222 = vpop.f32.mrf.mxu0
    %v5223 = vadd.f32 %v5174, %v5222
    %v5224 = vpop.f32.mrf.mxu0
    %v5225 = vadd.f32 %v5176, %v5224
    %5226 = vdwg.mxu0
    %5227 = vmatpush.bf16.msra.mxu0 %v3006
    %5228 = vmatpush.bf16.msra.mxu0 %v2997
    %5229 = vmatpush.bf16.msra.mxu0 %v2988
    %5230 = vmatpush.bf16.msra.mxu0 %v2979
    %5231 = vmatpush.bf16.msra.mxu0 %v2970
    %5232 = vmatpush.bf16.msra.mxu0 %v2961
    %5233 = vmatpush.bf16.msra.mxu0 %v2952
    %5234 = vmatpush.bf16.msra.mxu0 %v2943
    %5235 = vmatmul.bf16.gmra.mxu0 %v975
    %v5236 = vpop.f32.mrf.mxu0
    %v5237 = vadd.f32 %v5188, %v5236
    %v5238 = vpop.f32.mrf.mxu0
    %v5239 = vadd.f32 %v5190, %v5238
    %5240 = vmatmul.bf16.gmra.mxu0 %v982
    %v5241 = vpop.f32.mrf.mxu0
    %v5242 = vadd.f32 %v5193, %v5241
    %v5243 = vpop.f32.mrf.mxu0
    %v5244 = vadd.f32 %v5195, %v5243
    %5245 = vmatmul.bf16.gmra.mxu0 %v989
    %v5246 = vpop.f32.mrf.mxu0
    %v5247 = vadd.f32 %v5198, %v5246
    %v5248 = vpop.f32.mrf.mxu0
    %v5249 = vadd.f32 %v5200, %v5248
    %5250 = vmatmul.bf16.gmra.mxu0 %v996
    %v5251 = vpop.f32.mrf.mxu0
    %v5252 = vadd.f32 %v5203, %v5251
    %v5253 = vpop.f32.mrf.mxu0
    %v5254 = vadd.f32 %v5205, %v5253
    %5255 = vmatmul.bf16.gmra.mxu0 %v1003
    %v5256 = vpop.f32.mrf.mxu0
    %v5257 = vadd.f32 %v5208, %v5256
    %v5258 = vpop.f32.mrf.mxu0
    %v5259 = vadd.f32 %v5210, %v5258
    %5260 = vmatmul.bf16.gmra.mxu0 %v1010
    %v5261 = vpop.f32.mrf.mxu0
    %v5262 = vadd.f32 %v5213, %v5261
    %v5263 = vpop.f32.mrf.mxu0
    %v5264 = vadd.f32 %v5215, %v5263
    %5265 = vmatmul.bf16.gmra.mxu0 %v1017
    %v5266 = vpop.f32.mrf.mxu0
    %v5267 = vadd.f32 %v5218, %v5266
    %v5268 = vpop.f32.mrf.mxu0
    %v5269 = vadd.f32 %v5220, %v5268
    %5270 = vmatmul.bf16.gmra.mxu0 %v1024
    %v5271 = vpop.f32.mrf.mxu0
    %v5272 = vadd.f32 %v5223, %v5271
    %v5273 = vpop.f32.mrf.mxu0
    %v5274 = vadd.f32 %v5225, %v5273
    %5275 = vdwg.mxu0
    %5276 = vmatpush.bf16.msra.mxu0 %v3078
    %5277 = vmatpush.bf16.msra.mxu0 %v3069
    %5278 = vmatpush.bf16.msra.mxu0 %v3060
    %5279 = vmatpush.bf16.msra.mxu0 %v3051
    %5280 = vmatpush.bf16.msra.mxu0 %v3042
    %5281 = vmatpush.bf16.msra.mxu0 %v3033
    %5282 = vmatpush.bf16.msra.mxu0 %v3024
    %5283 = vmatpush.bf16.msra.mxu0 %v3015
    %5284 = vmatmul.bf16.gmra.mxu0 %v976
    %v5285 = vpop.f32.mrf.mxu0
    %v5286 = vadd.f32 %v5237, %v5285
    %v5287 = vpop.f32.mrf.mxu0
    %v5288 = vadd.f32 %v5239, %v5287
    %5289 = vmatmul.bf16.gmra.mxu0 %v983
    %v5290 = vpop.f32.mrf.mxu0
    %v5291 = vadd.f32 %v5242, %v5290
    %v5292 = vpop.f32.mrf.mxu0
    %v5293 = vadd.f32 %v5244, %v5292
    %5294 = vmatmul.bf16.gmra.mxu0 %v990
    %v5295 = vpop.f32.mrf.mxu0
    %v5296 = vadd.f32 %v5247, %v5295
    %v5297 = vpop.f32.mrf.mxu0
    %v5298 = vadd.f32 %v5249, %v5297
    %5299 = vmatmul.bf16.gmra.mxu0 %v997
    %v5300 = vpop.f32.mrf.mxu0
    %v5301 = vadd.f32 %v5252, %v5300
    %v5302 = vpop.f32.mrf.mxu0
    %v5303 = vadd.f32 %v5254, %v5302
    %5304 = vmatmul.bf16.gmra.mxu0 %v1004
    %v5305 = vpop.f32.mrf.mxu0
    %v5306 = vadd.f32 %v5257, %v5305
    %v5307 = vpop.f32.mrf.mxu0
    %v5308 = vadd.f32 %v5259, %v5307
    %5309 = vmatmul.bf16.gmra.mxu0 %v1011
    %v5310 = vpop.f32.mrf.mxu0
    %v5311 = vadd.f32 %v5262, %v5310
    %v5312 = vpop.f32.mrf.mxu0
    %v5313 = vadd.f32 %v5264, %v5312
    %5314 = vmatmul.bf16.gmra.mxu0 %v1018
    %v5315 = vpop.f32.mrf.mxu0
    %v5316 = vadd.f32 %v5267, %v5315
    %v5317 = vpop.f32.mrf.mxu0
    %v5318 = vadd.f32 %v5269, %v5317
    %5319 = vmatmul.bf16.gmra.mxu0 %v1025
    %v5320 = vpop.f32.mrf.mxu0
    %v5321 = vadd.f32 %v5272, %v5320
    %v5322 = vpop.f32.mrf.mxu0
    %v5323 = vadd.f32 %v5274, %v5322
    %5324 = vdwg.mxu0
    %5325 = vmatpush.bf16.msra.mxu0 %v3150
    %5326 = vmatpush.bf16.msra.mxu0 %v3141
    %5327 = vmatpush.bf16.msra.mxu0 %v3132
    %5328 = vmatpush.bf16.msra.mxu0 %v3123
    %5329 = vmatpush.bf16.msra.mxu0 %v3114
    %5330 = vmatpush.bf16.msra.mxu0 %v3105
    %5331 = vmatpush.bf16.msra.mxu0 %v3096
    %5332 = vmatpush.bf16.msra.mxu0 %v3087
    %5333 = vmatmul.bf16.gmra.mxu0 %v977
    %v5334 = vpop.f32.mrf.mxu0
    %v5335 = vadd.f32 %v5286, %v5334
    %v5336 = vpop.f32.mrf.mxu0
    %v5337 = vadd.f32 %v5288, %v5336
    %5338 = vmatmul.bf16.gmra.mxu0 %v984
    %v5339 = vpop.f32.mrf.mxu0
    %v5340 = vadd.f32 %v5291, %v5339
    %v5341 = vpop.f32.mrf.mxu0
    %v5342 = vadd.f32 %v5293, %v5341
    %5343 = vmatmul.bf16.gmra.mxu0 %v991
    %v5344 = vpop.f32.mrf.mxu0
    %v5345 = vadd.f32 %v5296, %v5344
    %v5346 = vpop.f32.mrf.mxu0
    %v5347 = vadd.f32 %v5298, %v5346
    %5348 = vmatmul.bf16.gmra.mxu0 %v998
    %v5349 = vpop.f32.mrf.mxu0
    %v5350 = vadd.f32 %v5301, %v5349
    %v5351 = vpop.f32.mrf.mxu0
    %v5352 = vadd.f32 %v5303, %v5351
    %5353 = vmatmul.bf16.gmra.mxu0 %v1005
    %v5354 = vpop.f32.mrf.mxu0
    %v5355 = vadd.f32 %v5306, %v5354
    %v5356 = vpop.f32.mrf.mxu0
    %v5357 = vadd.f32 %v5308, %v5356
    %5358 = vmatmul.bf16.gmra.mxu0 %v1012
    %v5359 = vpop.f32.mrf.mxu0
    %v5360 = vadd.f32 %v5311, %v5359
    %v5361 = vpop.f32.mrf.mxu0
    %v5362 = vadd.f32 %v5313, %v5361
    %5363 = vmatmul.bf16.gmra.mxu0 %v1019
    %v5364 = vpop.f32.mrf.mxu0
    %v5365 = vadd.f32 %v5316, %v5364
    %v5366 = vpop.f32.mrf.mxu0
    %v5367 = vadd.f32 %v5318, %v5366
    %5368 = vmatmul.bf16.gmra.mxu0 %v1026
    %v5369 = vpop.f32.mrf.mxu0
    %v5370 = vadd.f32 %v5321, %v5369
    %v5371 = vpop.f32.mrf.mxu0
    %v5372 = vadd.f32 %v5323, %v5371
    %5373 = vdwg.mxu0
    %5374 = vmatpush.bf16.msra.mxu0 %v2719
    %5375 = vmatpush.bf16.msra.mxu0 %v2710
    %5376 = vmatpush.bf16.msra.mxu0 %v2701
    %5377 = vmatpush.bf16.msra.mxu0 %v2692
    %5378 = vmatpush.bf16.msra.mxu0 %v2683
    %5379 = vmatpush.bf16.msra.mxu0 %v2674
    %5380 = vmatpush.bf16.msra.mxu0 %v2665
    %5381 = vmatpush.bf16.msra.mxu0 %v2656
    %5382 = vmatmul.bf16.gmra.mxu0 %v971
    %v5383 = vpop.f32.mrf.mxu0
    %v5384 = vadd.f32 %v782, %v5383
    %v5385 = vpop.f32.mrf.mxu0
    %v5386 = vadd.f32 %v782, %v5385
    %5387 = vmatmul.bf16.gmra.mxu0 %v978
    %v5388 = vpop.f32.mrf.mxu0
    %v5389 = vadd.f32 %v782, %v5388
    %v5390 = vpop.f32.mrf.mxu0
    %v5391 = vadd.f32 %v782, %v5390
    %5392 = vmatmul.bf16.gmra.mxu0 %v985
    %v5393 = vpop.f32.mrf.mxu0
    %v5394 = vadd.f32 %v782, %v5393
    %v5395 = vpop.f32.mrf.mxu0
    %v5396 = vadd.f32 %v782, %v5395
    %5397 = vmatmul.bf16.gmra.mxu0 %v992
    %v5398 = vpop.f32.mrf.mxu0
    %v5399 = vadd.f32 %v782, %v5398
    %v5400 = vpop.f32.mrf.mxu0
    %v5401 = vadd.f32 %v782, %v5400
    %5402 = vmatmul.bf16.gmra.mxu0 %v999
    %v5403 = vpop.f32.mrf.mxu0
    %v5404 = vadd.f32 %v782, %v5403
    %v5405 = vpop.f32.mrf.mxu0
    %v5406 = vadd.f32 %v782, %v5405
    %5407 = vmatmul.bf16.gmra.mxu0 %v1006
    %v5408 = vpop.f32.mrf.mxu0
    %v5409 = vadd.f32 %v782, %v5408
    %v5410 = vpop.f32.mrf.mxu0
    %v5411 = vadd.f32 %v782, %v5410
    %5412 = vmatmul.bf16.gmra.mxu0 %v1013
    %v5413 = vpop.f32.mrf.mxu0
    %v5414 = vadd.f32 %v782, %v5413
    %v5415 = vpop.f32.mrf.mxu0
    %v5416 = vadd.f32 %v782, %v5415
    %5417 = vmatmul.bf16.gmra.mxu0 %v1020
    %v5418 = vpop.f32.mrf.mxu0
    %v5419 = vadd.f32 %v782, %v5418
    %v5420 = vpop.f32.mrf.mxu0
    %v5421 = vadd.f32 %v782, %v5420
    %5422 = vdwg.mxu0
    %5423 = vmatpush.bf16.msra.mxu0 %v2791
    %5424 = vmatpush.bf16.msra.mxu0 %v2782
    %5425 = vmatpush.bf16.msra.mxu0 %v2773
    %5426 = vmatpush.bf16.msra.mxu0 %v2764
    %5427 = vmatpush.bf16.msra.mxu0 %v2755
    %5428 = vmatpush.bf16.msra.mxu0 %v2746
    %5429 = vmatpush.bf16.msra.mxu0 %v2737
    %5430 = vmatpush.bf16.msra.mxu0 %v2728
    %5431 = vmatmul.bf16.gmra.mxu0 %v972
    %v5432 = vpop.f32.mrf.mxu0
    %v5433 = vadd.f32 %v5384, %v5432
    %v5434 = vpop.f32.mrf.mxu0
    %v5435 = vadd.f32 %v5386, %v5434
    %5436 = vmatmul.bf16.gmra.mxu0 %v979
    %v5437 = vpop.f32.mrf.mxu0
    %v5438 = vadd.f32 %v5389, %v5437
    %v5439 = vpop.f32.mrf.mxu0
    %v5440 = vadd.f32 %v5391, %v5439
    %5441 = vmatmul.bf16.gmra.mxu0 %v986
    %v5442 = vpop.f32.mrf.mxu0
    %v5443 = vadd.f32 %v5394, %v5442
    %v5444 = vpop.f32.mrf.mxu0
    %v5445 = vadd.f32 %v5396, %v5444
    %5446 = vmatmul.bf16.gmra.mxu0 %v993
    %v5447 = vpop.f32.mrf.mxu0
    %v5448 = vadd.f32 %v5399, %v5447
    %v5449 = vpop.f32.mrf.mxu0
    %v5450 = vadd.f32 %v5401, %v5449
    %5451 = vmatmul.bf16.gmra.mxu0 %v1000
    %v5452 = vpop.f32.mrf.mxu0
    %v5453 = vadd.f32 %v5404, %v5452
    %v5454 = vpop.f32.mrf.mxu0
    %v5455 = vadd.f32 %v5406, %v5454
    %5456 = vmatmul.bf16.gmra.mxu0 %v1007
    %v5457 = vpop.f32.mrf.mxu0
    %v5458 = vadd.f32 %v5409, %v5457
    %v5459 = vpop.f32.mrf.mxu0
    %v5460 = vadd.f32 %v5411, %v5459
    %5461 = vmatmul.bf16.gmra.mxu0 %v1014
    %v5462 = vpop.f32.mrf.mxu0
    %v5463 = vadd.f32 %v5414, %v5462
    %v5464 = vpop.f32.mrf.mxu0
    %v5465 = vadd.f32 %v5416, %v5464
    %5466 = vmatmul.bf16.gmra.mxu0 %v1021
    %v5467 = vpop.f32.mrf.mxu0
    %v5468 = vadd.f32 %v5419, %v5467
    %v5469 = vpop.f32.mrf.mxu0
    %v5470 = vadd.f32 %v5421, %v5469
    %5471 = vdwg.mxu0
    %5472 = vmatpush.bf16.msra.mxu0 %v2863
    %5473 = vmatpush.bf16.msra.mxu0 %v2854
    %5474 = vmatpush.bf16.msra.mxu0 %v2845
    %5475 = vmatpush.bf16.msra.mxu0 %v2836
    %5476 = vmatpush.bf16.msra.mxu0 %v2827
    %5477 = vmatpush.bf16.msra.mxu0 %v2818
    %5478 = vmatpush.bf16.msra.mxu0 %v2809
    %5479 = vmatpush.bf16.msra.mxu0 %v2800
    %5480 = vmatmul.bf16.gmra.mxu0 %v973
    %v5481 = vpop.f32.mrf.mxu0
    %v5482 = vadd.f32 %v5433, %v5481
    %v5483 = vpop.f32.mrf.mxu0
    %v5484 = vadd.f32 %v5435, %v5483
    %5485 = vmatmul.bf16.gmra.mxu0 %v980
    %v5486 = vpop.f32.mrf.mxu0
    %v5487 = vadd.f32 %v5438, %v5486
    %v5488 = vpop.f32.mrf.mxu0
    %v5489 = vadd.f32 %v5440, %v5488
    %5490 = vmatmul.bf16.gmra.mxu0 %v987
    %v5491 = vpop.f32.mrf.mxu0
    %v5492 = vadd.f32 %v5443, %v5491
    %v5493 = vpop.f32.mrf.mxu0
    %v5494 = vadd.f32 %v5445, %v5493
    %5495 = vmatmul.bf16.gmra.mxu0 %v994
    %v5496 = vpop.f32.mrf.mxu0
    %v5497 = vadd.f32 %v5448, %v5496
    %v5498 = vpop.f32.mrf.mxu0
    %v5499 = vadd.f32 %v5450, %v5498
    %5500 = vmatmul.bf16.gmra.mxu0 %v1001
    %v5501 = vpop.f32.mrf.mxu0
    %v5502 = vadd.f32 %v5453, %v5501
    %v5503 = vpop.f32.mrf.mxu0
    %v5504 = vadd.f32 %v5455, %v5503
    %5505 = vmatmul.bf16.gmra.mxu0 %v1008
    %v5506 = vpop.f32.mrf.mxu0
    %v5507 = vadd.f32 %v5458, %v5506
    %v5508 = vpop.f32.mrf.mxu0
    %v5509 = vadd.f32 %v5460, %v5508
    %5510 = vmatmul.bf16.gmra.mxu0 %v1015
    %v5511 = vpop.f32.mrf.mxu0
    %v5512 = vadd.f32 %v5463, %v5511
    %v5513 = vpop.f32.mrf.mxu0
    %v5514 = vadd.f32 %v5465, %v5513
    %5515 = vmatmul.bf16.gmra.mxu0 %v1022
    %v5516 = vpop.f32.mrf.mxu0
    %v5517 = vadd.f32 %v5468, %v5516
    %v5518 = vpop.f32.mrf.mxu0
    %v5519 = vadd.f32 %v5470, %v5518
    %5520 = vdwg.mxu0
    %5521 = vmatpush.bf16.msra.mxu0 %v2935
    %5522 = vmatpush.bf16.msra.mxu0 %v2926
    %5523 = vmatpush.bf16.msra.mxu0 %v2917
    %5524 = vmatpush.bf16.msra.mxu0 %v2908
    %5525 = vmatpush.bf16.msra.mxu0 %v2899
    %5526 = vmatpush.bf16.msra.mxu0 %v2890
    %5527 = vmatpush.bf16.msra.mxu0 %v2881
    %5528 = vmatpush.bf16.msra.mxu0 %v2872
    %5529 = vmatmul.bf16.gmra.mxu0 %v974
    %v5530 = vpop.f32.mrf.mxu0
    %v5531 = vadd.f32 %v5482, %v5530
    %v5532 = vpop.f32.mrf.mxu0
    %v5533 = vadd.f32 %v5484, %v5532
    %5534 = vmatmul.bf16.gmra.mxu0 %v981
    %v5535 = vpop.f32.mrf.mxu0
    %v5536 = vadd.f32 %v5487, %v5535
    %v5537 = vpop.f32.mrf.mxu0
    %v5538 = vadd.f32 %v5489, %v5537
    %5539 = vmatmul.bf16.gmra.mxu0 %v988
    %v5540 = vpop.f32.mrf.mxu0
    %v5541 = vadd.f32 %v5492, %v5540
    %v5542 = vpop.f32.mrf.mxu0
    %v5543 = vadd.f32 %v5494, %v5542
    %5544 = vmatmul.bf16.gmra.mxu0 %v995
    %v5545 = vpop.f32.mrf.mxu0
    %v5546 = vadd.f32 %v5497, %v5545
    %v5547 = vpop.f32.mrf.mxu0
    %v5548 = vadd.f32 %v5499, %v5547
    %5549 = vmatmul.bf16.gmra.mxu0 %v1002
    %v5550 = vpop.f32.mrf.mxu0
    %v5551 = vadd.f32 %v5502, %v5550
    %v5552 = vpop.f32.mrf.mxu0
    %v5553 = vadd.f32 %v5504, %v5552
    %5554 = vmatmul.bf16.gmra.mxu0 %v1009
    %v5555 = vpop.f32.mrf.mxu0
    %v5556 = vadd.f32 %v5507, %v5555
    %v5557 = vpop.f32.mrf.mxu0
    %v5558 = vadd.f32 %v5509, %v5557
    %5559 = vmatmul.bf16.gmra.mxu0 %v1016
    %v5560 = vpop.f32.mrf.mxu0
    %v5561 = vadd.f32 %v5512, %v5560
    %v5562 = vpop.f32.mrf.mxu0
    %v5563 = vadd.f32 %v5514, %v5562
    %5564 = vmatmul.bf16.gmra.mxu0 %v1023
    %v5565 = vpop.f32.mrf.mxu0
    %v5566 = vadd.f32 %v5517, %v5565
    %v5567 = vpop.f32.mrf.mxu0
    %v5568 = vadd.f32 %v5519, %v5567
    %5569 = vdwg.mxu0
    %5570 = vmatpush.bf16.msra.mxu0 %v3007
    %5571 = vmatpush.bf16.msra.mxu0 %v2998
    %5572 = vmatpush.bf16.msra.mxu0 %v2989
    %5573 = vmatpush.bf16.msra.mxu0 %v2980
    %5574 = vmatpush.bf16.msra.mxu0 %v2971
    %5575 = vmatpush.bf16.msra.mxu0 %v2962
    %5576 = vmatpush.bf16.msra.mxu0 %v2953
    %5577 = vmatpush.bf16.msra.mxu0 %v2944
    %5578 = vmatmul.bf16.gmra.mxu0 %v975
    %v5579 = vpop.f32.mrf.mxu0
    %v5580 = vadd.f32 %v5531, %v5579
    %v5581 = vpop.f32.mrf.mxu0
    %v5582 = vadd.f32 %v5533, %v5581
    %5583 = vmatmul.bf16.gmra.mxu0 %v982
    %v5584 = vpop.f32.mrf.mxu0
    %v5585 = vadd.f32 %v5536, %v5584
    %v5586 = vpop.f32.mrf.mxu0
    %v5587 = vadd.f32 %v5538, %v5586
    %5588 = vmatmul.bf16.gmra.mxu0 %v989
    %v5589 = vpop.f32.mrf.mxu0
    %v5590 = vadd.f32 %v5541, %v5589
    %v5591 = vpop.f32.mrf.mxu0
    %v5592 = vadd.f32 %v5543, %v5591
    %5593 = vmatmul.bf16.gmra.mxu0 %v996
    %v5594 = vpop.f32.mrf.mxu0
    %v5595 = vadd.f32 %v5546, %v5594
    %v5596 = vpop.f32.mrf.mxu0
    %v5597 = vadd.f32 %v5548, %v5596
    %5598 = vmatmul.bf16.gmra.mxu0 %v1003
    %v5599 = vpop.f32.mrf.mxu0
    %v5600 = vadd.f32 %v5551, %v5599
    %v5601 = vpop.f32.mrf.mxu0
    %v5602 = vadd.f32 %v5553, %v5601
    %5603 = vmatmul.bf16.gmra.mxu0 %v1010
    %v5604 = vpop.f32.mrf.mxu0
    %v5605 = vadd.f32 %v5556, %v5604
    %v5606 = vpop.f32.mrf.mxu0
    %v5607 = vadd.f32 %v5558, %v5606
    %5608 = vmatmul.bf16.gmra.mxu0 %v1017
    %v5609 = vpop.f32.mrf.mxu0
    %v5610 = vadd.f32 %v5561, %v5609
    %v5611 = vpop.f32.mrf.mxu0
    %v5612 = vadd.f32 %v5563, %v5611
    %5613 = vmatmul.bf16.gmra.mxu0 %v1024
    %v5614 = vpop.f32.mrf.mxu0
    %v5615 = vadd.f32 %v5566, %v5614
    %v5616 = vpop.f32.mrf.mxu0
    %v5617 = vadd.f32 %v5568, %v5616
    %5618 = vdwg.mxu0
    %5619 = vmatpush.bf16.msra.mxu0 %v3079
    %5620 = vmatpush.bf16.msra.mxu0 %v3070
    %5621 = vmatpush.bf16.msra.mxu0 %v3061
    %5622 = vmatpush.bf16.msra.mxu0 %v3052
    %5623 = vmatpush.bf16.msra.mxu0 %v3043
    %5624 = vmatpush.bf16.msra.mxu0 %v3034
    %5625 = vmatpush.bf16.msra.mxu0 %v3025
    %5626 = vmatpush.bf16.msra.mxu0 %v3016
    %5627 = vmatmul.bf16.gmra.mxu0 %v976
    %v5628 = vpop.f32.mrf.mxu0
    %v5629 = vadd.f32 %v5580, %v5628
    %v5630 = vpop.f32.mrf.mxu0
    %v5631 = vadd.f32 %v5582, %v5630
    %5632 = vmatmul.bf16.gmra.mxu0 %v983
    %v5633 = vpop.f32.mrf.mxu0
    %v5634 = vadd.f32 %v5585, %v5633
    %v5635 = vpop.f32.mrf.mxu0
    %v5636 = vadd.f32 %v5587, %v5635
    %5637 = vmatmul.bf16.gmra.mxu0 %v990
    %v5638 = vpop.f32.mrf.mxu0
    %v5639 = vadd.f32 %v5590, %v5638
    %v5640 = vpop.f32.mrf.mxu0
    %v5641 = vadd.f32 %v5592, %v5640
    %5642 = vmatmul.bf16.gmra.mxu0 %v997
    %v5643 = vpop.f32.mrf.mxu0
    %v5644 = vadd.f32 %v5595, %v5643
    %v5645 = vpop.f32.mrf.mxu0
    %v5646 = vadd.f32 %v5597, %v5645
    %5647 = vmatmul.bf16.gmra.mxu0 %v1004
    %v5648 = vpop.f32.mrf.mxu0
    %v5649 = vadd.f32 %v5600, %v5648
    %v5650 = vpop.f32.mrf.mxu0
    %v5651 = vadd.f32 %v5602, %v5650
    %5652 = vmatmul.bf16.gmra.mxu0 %v1011
    %v5653 = vpop.f32.mrf.mxu0
    %v5654 = vadd.f32 %v5605, %v5653
    %v5655 = vpop.f32.mrf.mxu0
    %v5656 = vadd.f32 %v5607, %v5655
    %5657 = vmatmul.bf16.gmra.mxu0 %v1018
    %v5658 = vpop.f32.mrf.mxu0
    %v5659 = vadd.f32 %v5610, %v5658
    %v5660 = vpop.f32.mrf.mxu0
    %v5661 = vadd.f32 %v5612, %v5660
    %5662 = vmatmul.bf16.gmra.mxu0 %v1025
    %v5663 = vpop.f32.mrf.mxu0
    %v5664 = vadd.f32 %v5615, %v5663
    %v5665 = vpop.f32.mrf.mxu0
    %v5666 = vadd.f32 %v5617, %v5665
    %5667 = vdwg.mxu0
    %5668 = vmatpush.bf16.msra.mxu0 %v3151
    %5669 = vmatpush.bf16.msra.mxu0 %v3142
    %5670 = vmatpush.bf16.msra.mxu0 %v3133
    %5671 = vmatpush.bf16.msra.mxu0 %v3124
    %5672 = vmatpush.bf16.msra.mxu0 %v3115
    %5673 = vmatpush.bf16.msra.mxu0 %v3106
    %5674 = vmatpush.bf16.msra.mxu0 %v3097
    %5675 = vmatpush.bf16.msra.mxu0 %v3088
    %5676 = vmatmul.bf16.gmra.mxu0 %v977
    %v5677 = vpop.f32.mrf.mxu0
    %v5678 = vadd.f32 %v5629, %v5677
    %v5679 = vpop.f32.mrf.mxu0
    %v5680 = vadd.f32 %v5631, %v5679
    %5681 = vmatmul.bf16.gmra.mxu0 %v984
    %v5682 = vpop.f32.mrf.mxu0
    %v5683 = vadd.f32 %v5634, %v5682
    %v5684 = vpop.f32.mrf.mxu0
    %v5685 = vadd.f32 %v5636, %v5684
    %5686 = vmatmul.bf16.gmra.mxu0 %v991
    %v5687 = vpop.f32.mrf.mxu0
    %v5688 = vadd.f32 %v5639, %v5687
    %v5689 = vpop.f32.mrf.mxu0
    %v5690 = vadd.f32 %v5641, %v5689
    %5691 = vmatmul.bf16.gmra.mxu0 %v998
    %v5692 = vpop.f32.mrf.mxu0
    %v5693 = vadd.f32 %v5644, %v5692
    %v5694 = vpop.f32.mrf.mxu0
    %v5695 = vadd.f32 %v5646, %v5694
    %5696 = vmatmul.bf16.gmra.mxu0 %v1005
    %v5697 = vpop.f32.mrf.mxu0
    %v5698 = vadd.f32 %v5649, %v5697
    %v5699 = vpop.f32.mrf.mxu0
    %v5700 = vadd.f32 %v5651, %v5699
    %5701 = vmatmul.bf16.gmra.mxu0 %v1012
    %v5702 = vpop.f32.mrf.mxu0
    %v5703 = vadd.f32 %v5654, %v5702
    %v5704 = vpop.f32.mrf.mxu0
    %v5705 = vadd.f32 %v5656, %v5704
    %5706 = vmatmul.bf16.gmra.mxu0 %v1019
    %v5707 = vpop.f32.mrf.mxu0
    %v5708 = vadd.f32 %v5659, %v5707
    %v5709 = vpop.f32.mrf.mxu0
    %v5710 = vadd.f32 %v5661, %v5709
    %5711 = vmatmul.bf16.gmra.mxu0 %v1026
    %v5712 = vpop.f32.mrf.mxu0
    %v5713 = vadd.f32 %v5664, %v5712
    %v5714 = vpop.f32.mrf.mxu0
    %v5715 = vadd.f32 %v5666, %v5714
    %5716 = vdwg.mxu0
    %5717 = vmatpush.bf16.msra.mxu0 %v2720
    %5718 = vmatpush.bf16.msra.mxu0 %v2711
    %5719 = vmatpush.bf16.msra.mxu0 %v2702
    %5720 = vmatpush.bf16.msra.mxu0 %v2693
    %5721 = vmatpush.bf16.msra.mxu0 %v2684
    %5722 = vmatpush.bf16.msra.mxu0 %v2675
    %5723 = vmatpush.bf16.msra.mxu0 %v2666
    %5724 = vmatpush.bf16.msra.mxu0 %v2657
    %5725 = vmatmul.bf16.gmra.mxu0 %v971
    %v5726 = vpop.f32.mrf.mxu0
    %v5727 = vadd.f32 %v783, %v5726
    %v5728 = vpop.f32.mrf.mxu0
    %v5729 = vadd.f32 %v783, %v5728
    %5730 = vmatmul.bf16.gmra.mxu0 %v978
    %v5731 = vpop.f32.mrf.mxu0
    %v5732 = vadd.f32 %v783, %v5731
    %v5733 = vpop.f32.mrf.mxu0
    %v5734 = vadd.f32 %v783, %v5733
    %5735 = vmatmul.bf16.gmra.mxu0 %v985
    %v5736 = vpop.f32.mrf.mxu0
    %v5737 = vadd.f32 %v783, %v5736
    %v5738 = vpop.f32.mrf.mxu0
    %v5739 = vadd.f32 %v783, %v5738
    %5740 = vmatmul.bf16.gmra.mxu0 %v992
    %v5741 = vpop.f32.mrf.mxu0
    %v5742 = vadd.f32 %v783, %v5741
    %v5743 = vpop.f32.mrf.mxu0
    %v5744 = vadd.f32 %v783, %v5743
    %5745 = vmatmul.bf16.gmra.mxu0 %v999
    %v5746 = vpop.f32.mrf.mxu0
    %v5747 = vadd.f32 %v783, %v5746
    %v5748 = vpop.f32.mrf.mxu0
    %v5749 = vadd.f32 %v783, %v5748
    %5750 = vmatmul.bf16.gmra.mxu0 %v1006
    %v5751 = vpop.f32.mrf.mxu0
    %v5752 = vadd.f32 %v783, %v5751
    %v5753 = vpop.f32.mrf.mxu0
    %v5754 = vadd.f32 %v783, %v5753
    %5755 = vmatmul.bf16.gmra.mxu0 %v1013
    %v5756 = vpop.f32.mrf.mxu0
    %v5757 = vadd.f32 %v783, %v5756
    %v5758 = vpop.f32.mrf.mxu0
    %v5759 = vadd.f32 %v783, %v5758
    %5760 = vmatmul.bf16.gmra.mxu0 %v1020
    %v5761 = vpop.f32.mrf.mxu0
    %v5762 = vadd.f32 %v783, %v5761
    %v5763 = vpop.f32.mrf.mxu0
    %v5764 = vadd.f32 %v783, %v5763
    %5765 = vdwg.mxu0
    %5766 = vmatpush.bf16.msra.mxu0 %v2792
    %5767 = vmatpush.bf16.msra.mxu0 %v2783
    %5768 = vmatpush.bf16.msra.mxu0 %v2774
    %5769 = vmatpush.bf16.msra.mxu0 %v2765
    %5770 = vmatpush.bf16.msra.mxu0 %v2756
    %5771 = vmatpush.bf16.msra.mxu0 %v2747
    %5772 = vmatpush.bf16.msra.mxu0 %v2738
    %5773 = vmatpush.bf16.msra.mxu0 %v2729
    %5774 = vmatmul.bf16.gmra.mxu0 %v972
    %v5775 = vpop.f32.mrf.mxu0
    %v5776 = vadd.f32 %v5727, %v5775
    %v5777 = vpop.f32.mrf.mxu0
    %v5778 = vadd.f32 %v5729, %v5777
    %5779 = vmatmul.bf16.gmra.mxu0 %v979
    %v5780 = vpop.f32.mrf.mxu0
    %v5781 = vadd.f32 %v5732, %v5780
    %v5782 = vpop.f32.mrf.mxu0
    %v5783 = vadd.f32 %v5734, %v5782
    %5784 = vmatmul.bf16.gmra.mxu0 %v986
    %v5785 = vpop.f32.mrf.mxu0
    %v5786 = vadd.f32 %v5737, %v5785
    %v5787 = vpop.f32.mrf.mxu0
    %v5788 = vadd.f32 %v5739, %v5787
    %5789 = vmatmul.bf16.gmra.mxu0 %v993
    %v5790 = vpop.f32.mrf.mxu0
    %v5791 = vadd.f32 %v5742, %v5790
    %v5792 = vpop.f32.mrf.mxu0
    %v5793 = vadd.f32 %v5744, %v5792
    %5794 = vmatmul.bf16.gmra.mxu0 %v1000
    %v5795 = vpop.f32.mrf.mxu0
    %v5796 = vadd.f32 %v5747, %v5795
    %v5797 = vpop.f32.mrf.mxu0
    %v5798 = vadd.f32 %v5749, %v5797
    %5799 = vmatmul.bf16.gmra.mxu0 %v1007
    %v5800 = vpop.f32.mrf.mxu0
    %v5801 = vadd.f32 %v5752, %v5800
    %v5802 = vpop.f32.mrf.mxu0
    %v5803 = vadd.f32 %v5754, %v5802
    %5804 = vmatmul.bf16.gmra.mxu0 %v1014
    %v5805 = vpop.f32.mrf.mxu0
    %v5806 = vadd.f32 %v5757, %v5805
    %v5807 = vpop.f32.mrf.mxu0
    %v5808 = vadd.f32 %v5759, %v5807
    %5809 = vmatmul.bf16.gmra.mxu0 %v1021
    %v5810 = vpop.f32.mrf.mxu0
    %v5811 = vadd.f32 %v5762, %v5810
    %v5812 = vpop.f32.mrf.mxu0
    %v5813 = vadd.f32 %v5764, %v5812
    %5814 = vdwg.mxu0
    %5815 = vmatpush.bf16.msra.mxu0 %v2864
    %5816 = vmatpush.bf16.msra.mxu0 %v2855
    %5817 = vmatpush.bf16.msra.mxu0 %v2846
    %5818 = vmatpush.bf16.msra.mxu0 %v2837
    %5819 = vmatpush.bf16.msra.mxu0 %v2828
    %5820 = vmatpush.bf16.msra.mxu0 %v2819
    %5821 = vmatpush.bf16.msra.mxu0 %v2810
    %5822 = vmatpush.bf16.msra.mxu0 %v2801
    %5823 = vmatmul.bf16.gmra.mxu0 %v973
    %v5824 = vpop.f32.mrf.mxu0
    %v5825 = vadd.f32 %v5776, %v5824
    %v5826 = vpop.f32.mrf.mxu0
    %v5827 = vadd.f32 %v5778, %v5826
    %5828 = vmatmul.bf16.gmra.mxu0 %v980
    %v5829 = vpop.f32.mrf.mxu0
    %v5830 = vadd.f32 %v5781, %v5829
    %v5831 = vpop.f32.mrf.mxu0
    %v5832 = vadd.f32 %v5783, %v5831
    %5833 = vmatmul.bf16.gmra.mxu0 %v987
    %v5834 = vpop.f32.mrf.mxu0
    %v5835 = vadd.f32 %v5786, %v5834
    %v5836 = vpop.f32.mrf.mxu0
    %v5837 = vadd.f32 %v5788, %v5836
    %5838 = vmatmul.bf16.gmra.mxu0 %v994
    %v5839 = vpop.f32.mrf.mxu0
    %v5840 = vadd.f32 %v5791, %v5839
    %v5841 = vpop.f32.mrf.mxu0
    %v5842 = vadd.f32 %v5793, %v5841
    %5843 = vmatmul.bf16.gmra.mxu0 %v1001
    %v5844 = vpop.f32.mrf.mxu0
    %v5845 = vadd.f32 %v5796, %v5844
    %v5846 = vpop.f32.mrf.mxu0
    %v5847 = vadd.f32 %v5798, %v5846
    %5848 = vmatmul.bf16.gmra.mxu0 %v1008
    %v5849 = vpop.f32.mrf.mxu0
    %v5850 = vadd.f32 %v5801, %v5849
    %v5851 = vpop.f32.mrf.mxu0
    %v5852 = vadd.f32 %v5803, %v5851
    %5853 = vmatmul.bf16.gmra.mxu0 %v1015
    %v5854 = vpop.f32.mrf.mxu0
    %v5855 = vadd.f32 %v5806, %v5854
    %v5856 = vpop.f32.mrf.mxu0
    %v5857 = vadd.f32 %v5808, %v5856
    %5858 = vmatmul.bf16.gmra.mxu0 %v1022
    %v5859 = vpop.f32.mrf.mxu0
    %v5860 = vadd.f32 %v5811, %v5859
    %v5861 = vpop.f32.mrf.mxu0
    %v5862 = vadd.f32 %v5813, %v5861
    %5863 = vdwg.mxu0
    %5864 = vmatpush.bf16.msra.mxu0 %v2936
    %5865 = vmatpush.bf16.msra.mxu0 %v2927
    %5866 = vmatpush.bf16.msra.mxu0 %v2918
    %5867 = vmatpush.bf16.msra.mxu0 %v2909
    %5868 = vmatpush.bf16.msra.mxu0 %v2900
    %5869 = vmatpush.bf16.msra.mxu0 %v2891
    %5870 = vmatpush.bf16.msra.mxu0 %v2882
    %5871 = vmatpush.bf16.msra.mxu0 %v2873
    %5872 = vmatmul.bf16.gmra.mxu0 %v974
    %v5873 = vpop.f32.mrf.mxu0
    %v5874 = vadd.f32 %v5825, %v5873
    %v5875 = vpop.f32.mrf.mxu0
    %v5876 = vadd.f32 %v5827, %v5875
    %5877 = vmatmul.bf16.gmra.mxu0 %v981
    %v5878 = vpop.f32.mrf.mxu0
    %v5879 = vadd.f32 %v5830, %v5878
    %v5880 = vpop.f32.mrf.mxu0
    %v5881 = vadd.f32 %v5832, %v5880
    %5882 = vmatmul.bf16.gmra.mxu0 %v988
    %v5883 = vpop.f32.mrf.mxu0
    %v5884 = vadd.f32 %v5835, %v5883
    %v5885 = vpop.f32.mrf.mxu0
    %v5886 = vadd.f32 %v5837, %v5885
    %5887 = vmatmul.bf16.gmra.mxu0 %v995
    %v5888 = vpop.f32.mrf.mxu0
    %v5889 = vadd.f32 %v5840, %v5888
    %v5890 = vpop.f32.mrf.mxu0
    %v5891 = vadd.f32 %v5842, %v5890
    %5892 = vmatmul.bf16.gmra.mxu0 %v1002
    %v5893 = vpop.f32.mrf.mxu0
    %v5894 = vadd.f32 %v5845, %v5893
    %v5895 = vpop.f32.mrf.mxu0
    %v5896 = vadd.f32 %v5847, %v5895
    %5897 = vmatmul.bf16.gmra.mxu0 %v1009
    %v5898 = vpop.f32.mrf.mxu0
    %v5899 = vadd.f32 %v5850, %v5898
    %v5900 = vpop.f32.mrf.mxu0
    %v5901 = vadd.f32 %v5852, %v5900
    %5902 = vmatmul.bf16.gmra.mxu0 %v1016
    %v5903 = vpop.f32.mrf.mxu0
    %v5904 = vadd.f32 %v5855, %v5903
    %v5905 = vpop.f32.mrf.mxu0
    %v5906 = vadd.f32 %v5857, %v5905
    %5907 = vmatmul.bf16.gmra.mxu0 %v1023
    %v5908 = vpop.f32.mrf.mxu0
    %v5909 = vadd.f32 %v5860, %v5908
    %v5910 = vpop.f32.mrf.mxu0
    %v5911 = vadd.f32 %v5862, %v5910
    %5912 = vdwg.mxu0
    %5913 = vmatpush.bf16.msra.mxu0 %v3008
    %5914 = vmatpush.bf16.msra.mxu0 %v2999
    %5915 = vmatpush.bf16.msra.mxu0 %v2990
    %5916 = vmatpush.bf16.msra.mxu0 %v2981
    %5917 = vmatpush.bf16.msra.mxu0 %v2972
    %5918 = vmatpush.bf16.msra.mxu0 %v2963
    %5919 = vmatpush.bf16.msra.mxu0 %v2954
    %5920 = vmatpush.bf16.msra.mxu0 %v2945
    %5921 = vmatmul.bf16.gmra.mxu0 %v975
    %v5922 = vpop.f32.mrf.mxu0
    %v5923 = vadd.f32 %v5874, %v5922
    %v5924 = vpop.f32.mrf.mxu0
    %v5925 = vadd.f32 %v5876, %v5924
    %5926 = vmatmul.bf16.gmra.mxu0 %v982
    %v5927 = vpop.f32.mrf.mxu0
    %v5928 = vadd.f32 %v5879, %v5927
    %v5929 = vpop.f32.mrf.mxu0
    %v5930 = vadd.f32 %v5881, %v5929
    %5931 = vmatmul.bf16.gmra.mxu0 %v989
    %v5932 = vpop.f32.mrf.mxu0
    %v5933 = vadd.f32 %v5884, %v5932
    %v5934 = vpop.f32.mrf.mxu0
    %v5935 = vadd.f32 %v5886, %v5934
    %5936 = vmatmul.bf16.gmra.mxu0 %v996
    %v5937 = vpop.f32.mrf.mxu0
    %v5938 = vadd.f32 %v5889, %v5937
    %v5939 = vpop.f32.mrf.mxu0
    %v5940 = vadd.f32 %v5891, %v5939
    %5941 = vmatmul.bf16.gmra.mxu0 %v1003
    %v5942 = vpop.f32.mrf.mxu0
    %v5943 = vadd.f32 %v5894, %v5942
    %v5944 = vpop.f32.mrf.mxu0
    %v5945 = vadd.f32 %v5896, %v5944
    %5946 = vmatmul.bf16.gmra.mxu0 %v1010
    %v5947 = vpop.f32.mrf.mxu0
    %v5948 = vadd.f32 %v5899, %v5947
    %v5949 = vpop.f32.mrf.mxu0
    %v5950 = vadd.f32 %v5901, %v5949
    %5951 = vmatmul.bf16.gmra.mxu0 %v1017
    %v5952 = vpop.f32.mrf.mxu0
    %v5953 = vadd.f32 %v5904, %v5952
    %v5954 = vpop.f32.mrf.mxu0
    %v5955 = vadd.f32 %v5906, %v5954
    %5956 = vmatmul.bf16.gmra.mxu0 %v1024
    %v5957 = vpop.f32.mrf.mxu0
    %v5958 = vadd.f32 %v5909, %v5957
    %v5959 = vpop.f32.mrf.mxu0
    %v5960 = vadd.f32 %v5911, %v5959
    %5961 = vdwg.mxu0
    %5962 = vmatpush.bf16.msra.mxu0 %v3080
    %5963 = vmatpush.bf16.msra.mxu0 %v3071
    %5964 = vmatpush.bf16.msra.mxu0 %v3062
    %5965 = vmatpush.bf16.msra.mxu0 %v3053
    %5966 = vmatpush.bf16.msra.mxu0 %v3044
    %5967 = vmatpush.bf16.msra.mxu0 %v3035
    %5968 = vmatpush.bf16.msra.mxu0 %v3026
    %5969 = vmatpush.bf16.msra.mxu0 %v3017
    %5970 = vmatmul.bf16.gmra.mxu0 %v976
    %v5971 = vpop.f32.mrf.mxu0
    %v5972 = vadd.f32 %v5923, %v5971
    %v5973 = vpop.f32.mrf.mxu0
    %v5974 = vadd.f32 %v5925, %v5973
    %5975 = vmatmul.bf16.gmra.mxu0 %v983
    %v5976 = vpop.f32.mrf.mxu0
    %v5977 = vadd.f32 %v5928, %v5976
    %v5978 = vpop.f32.mrf.mxu0
    %v5979 = vadd.f32 %v5930, %v5978
    %5980 = vmatmul.bf16.gmra.mxu0 %v990
    %v5981 = vpop.f32.mrf.mxu0
    %v5982 = vadd.f32 %v5933, %v5981
    %v5983 = vpop.f32.mrf.mxu0
    %v5984 = vadd.f32 %v5935, %v5983
    %5985 = vmatmul.bf16.gmra.mxu0 %v997
    %v5986 = vpop.f32.mrf.mxu0
    %v5987 = vadd.f32 %v5938, %v5986
    %v5988 = vpop.f32.mrf.mxu0
    %v5989 = vadd.f32 %v5940, %v5988
    %5990 = vmatmul.bf16.gmra.mxu0 %v1004
    %v5991 = vpop.f32.mrf.mxu0
    %v5992 = vadd.f32 %v5943, %v5991
    %v5993 = vpop.f32.mrf.mxu0
    %v5994 = vadd.f32 %v5945, %v5993
    %5995 = vmatmul.bf16.gmra.mxu0 %v1011
    %v5996 = vpop.f32.mrf.mxu0
    %v5997 = vadd.f32 %v5948, %v5996
    %v5998 = vpop.f32.mrf.mxu0
    %v5999 = vadd.f32 %v5950, %v5998
    %6000 = vmatmul.bf16.gmra.mxu0 %v1018
    %v6001 = vpop.f32.mrf.mxu0
    %v6002 = vadd.f32 %v5953, %v6001
    %v6003 = vpop.f32.mrf.mxu0
    %v6004 = vadd.f32 %v5955, %v6003
    %6005 = vmatmul.bf16.gmra.mxu0 %v1025
    %v6006 = vpop.f32.mrf.mxu0
    %v6007 = vadd.f32 %v5958, %v6006
    %v6008 = vpop.f32.mrf.mxu0
    %v6009 = vadd.f32 %v5960, %v6008
    %6010 = vdwg.mxu0
    %6011 = vmatpush.bf16.msra.mxu0 %v3152
    %6012 = vmatpush.bf16.msra.mxu0 %v3143
    %6013 = vmatpush.bf16.msra.mxu0 %v3134
    %6014 = vmatpush.bf16.msra.mxu0 %v3125
    %6015 = vmatpush.bf16.msra.mxu0 %v3116
    %6016 = vmatpush.bf16.msra.mxu0 %v3107
    %6017 = vmatpush.bf16.msra.mxu0 %v3098
    %6018 = vmatpush.bf16.msra.mxu0 %v3089
    %6019 = vmatmul.bf16.gmra.mxu0 %v977
    %v6020 = vpop.f32.mrf.mxu0
    %v6021 = vadd.f32 %v5972, %v6020
    %v6022 = vpop.f32.mrf.mxu0
    %v6023 = vadd.f32 %v5974, %v6022
    %6024 = vmatmul.bf16.gmra.mxu0 %v984
    %v6025 = vpop.f32.mrf.mxu0
    %v6026 = vadd.f32 %v5977, %v6025
    %v6027 = vpop.f32.mrf.mxu0
    %v6028 = vadd.f32 %v5979, %v6027
    %6029 = vmatmul.bf16.gmra.mxu0 %v991
    %v6030 = vpop.f32.mrf.mxu0
    %v6031 = vadd.f32 %v5982, %v6030
    %v6032 = vpop.f32.mrf.mxu0
    %v6033 = vadd.f32 %v5984, %v6032
    %6034 = vmatmul.bf16.gmra.mxu0 %v998
    %v6035 = vpop.f32.mrf.mxu0
    %v6036 = vadd.f32 %v5987, %v6035
    %v6037 = vpop.f32.mrf.mxu0
    %v6038 = vadd.f32 %v5989, %v6037
    %6039 = vmatmul.bf16.gmra.mxu0 %v1005
    %v6040 = vpop.f32.mrf.mxu0
    %v6041 = vadd.f32 %v5992, %v6040
    %v6042 = vpop.f32.mrf.mxu0
    %v6043 = vadd.f32 %v5994, %v6042
    %6044 = vmatmul.bf16.gmra.mxu0 %v1012
    %v6045 = vpop.f32.mrf.mxu0
    %v6046 = vadd.f32 %v5997, %v6045
    %v6047 = vpop.f32.mrf.mxu0
    %v6048 = vadd.f32 %v5999, %v6047
    %6049 = vmatmul.bf16.gmra.mxu0 %v1019
    %v6050 = vpop.f32.mrf.mxu0
    %v6051 = vadd.f32 %v6002, %v6050
    %v6052 = vpop.f32.mrf.mxu0
    %v6053 = vadd.f32 %v6004, %v6052
    %6054 = vmatmul.bf16.gmra.mxu0 %v1026
    %v6055 = vpop.f32.mrf.mxu0
    %v6056 = vadd.f32 %v6007, %v6055
    %v6057 = vpop.f32.mrf.mxu0
    %v6058 = vadd.f32 %v6009, %v6057
    %6059 = vdwg.mxu0
    %6060 = vmatpush.bf16.msra.mxu0 %v2721
    %6061 = vmatpush.bf16.msra.mxu0 %v2712
    %6062 = vmatpush.bf16.msra.mxu0 %v2703
    %6063 = vmatpush.bf16.msra.mxu0 %v2694
    %6064 = vmatpush.bf16.msra.mxu0 %v2685
    %6065 = vmatpush.bf16.msra.mxu0 %v2676
    %6066 = vmatpush.bf16.msra.mxu0 %v2667
    %6067 = vmatpush.bf16.msra.mxu0 %v2658
    %6068 = vmatmul.bf16.gmra.mxu0 %v971
    %v6069 = vpop.f32.mrf.mxu0
    %v6070 = vadd.f32 %v784, %v6069
    %v6071 = vpop.f32.mrf.mxu0
    %v6072 = vadd.f32 %v784, %v6071
    %6073 = vmatmul.bf16.gmra.mxu0 %v978
    %v6074 = vpop.f32.mrf.mxu0
    %v6075 = vadd.f32 %v784, %v6074
    %v6076 = vpop.f32.mrf.mxu0
    %v6077 = vadd.f32 %v784, %v6076
    %6078 = vmatmul.bf16.gmra.mxu0 %v985
    %v6079 = vpop.f32.mrf.mxu0
    %v6080 = vadd.f32 %v784, %v6079
    %v6081 = vpop.f32.mrf.mxu0
    %v6082 = vadd.f32 %v784, %v6081
    %6083 = vmatmul.bf16.gmra.mxu0 %v992
    %v6084 = vpop.f32.mrf.mxu0
    %v6085 = vadd.f32 %v784, %v6084
    %v6086 = vpop.f32.mrf.mxu0
    %v6087 = vadd.f32 %v784, %v6086
    %6088 = vmatmul.bf16.gmra.mxu0 %v999
    %v6089 = vpop.f32.mrf.mxu0
    %v6090 = vadd.f32 %v784, %v6089
    %v6091 = vpop.f32.mrf.mxu0
    %v6092 = vadd.f32 %v784, %v6091
    %6093 = vmatmul.bf16.gmra.mxu0 %v1006
    %v6094 = vpop.f32.mrf.mxu0
    %v6095 = vadd.f32 %v784, %v6094
    %v6096 = vpop.f32.mrf.mxu0
    %v6097 = vadd.f32 %v784, %v6096
    %6098 = vmatmul.bf16.gmra.mxu0 %v1013
    %v6099 = vpop.f32.mrf.mxu0
    %v6100 = vadd.f32 %v784, %v6099
    %v6101 = vpop.f32.mrf.mxu0
    %v6102 = vadd.f32 %v784, %v6101
    %6103 = vmatmul.bf16.gmra.mxu0 %v1020
    %v6104 = vpop.f32.mrf.mxu0
    %v6105 = vadd.f32 %v784, %v6104
    %v6106 = vpop.f32.mrf.mxu0
    %v6107 = vadd.f32 %v784, %v6106
    %6108 = vdwg.mxu0
    %6109 = vmatpush.bf16.msra.mxu0 %v2793
    %6110 = vmatpush.bf16.msra.mxu0 %v2784
    %6111 = vmatpush.bf16.msra.mxu0 %v2775
    %6112 = vmatpush.bf16.msra.mxu0 %v2766
    %6113 = vmatpush.bf16.msra.mxu0 %v2757
    %6114 = vmatpush.bf16.msra.mxu0 %v2748
    %6115 = vmatpush.bf16.msra.mxu0 %v2739
    %6116 = vmatpush.bf16.msra.mxu0 %v2730
    %6117 = vmatmul.bf16.gmra.mxu0 %v972
    %v6118 = vpop.f32.mrf.mxu0
    %v6119 = vadd.f32 %v6070, %v6118
    %v6120 = vpop.f32.mrf.mxu0
    %v6121 = vadd.f32 %v6072, %v6120
    %6122 = vmatmul.bf16.gmra.mxu0 %v979
    %v6123 = vpop.f32.mrf.mxu0
    %v6124 = vadd.f32 %v6075, %v6123
    %v6125 = vpop.f32.mrf.mxu0
    %v6126 = vadd.f32 %v6077, %v6125
    %6127 = vmatmul.bf16.gmra.mxu0 %v986
    %v6128 = vpop.f32.mrf.mxu0
    %v6129 = vadd.f32 %v6080, %v6128
    %v6130 = vpop.f32.mrf.mxu0
    %v6131 = vadd.f32 %v6082, %v6130
    %6132 = vmatmul.bf16.gmra.mxu0 %v993
    %v6133 = vpop.f32.mrf.mxu0
    %v6134 = vadd.f32 %v6085, %v6133
    %v6135 = vpop.f32.mrf.mxu0
    %v6136 = vadd.f32 %v6087, %v6135
    %6137 = vmatmul.bf16.gmra.mxu0 %v1000
    %v6138 = vpop.f32.mrf.mxu0
    %v6139 = vadd.f32 %v6090, %v6138
    %v6140 = vpop.f32.mrf.mxu0
    %v6141 = vadd.f32 %v6092, %v6140
    %6142 = vmatmul.bf16.gmra.mxu0 %v1007
    %v6143 = vpop.f32.mrf.mxu0
    %v6144 = vadd.f32 %v6095, %v6143
    %v6145 = vpop.f32.mrf.mxu0
    %v6146 = vadd.f32 %v6097, %v6145
    %6147 = vmatmul.bf16.gmra.mxu0 %v1014
    %v6148 = vpop.f32.mrf.mxu0
    %v6149 = vadd.f32 %v6100, %v6148
    %v6150 = vpop.f32.mrf.mxu0
    %v6151 = vadd.f32 %v6102, %v6150
    %6152 = vmatmul.bf16.gmra.mxu0 %v1021
    %v6153 = vpop.f32.mrf.mxu0
    %v6154 = vadd.f32 %v6105, %v6153
    %v6155 = vpop.f32.mrf.mxu0
    %v6156 = vadd.f32 %v6107, %v6155
    %6157 = vdwg.mxu0
    %6158 = vmatpush.bf16.msra.mxu0 %v2865
    %6159 = vmatpush.bf16.msra.mxu0 %v2856
    %6160 = vmatpush.bf16.msra.mxu0 %v2847
    %6161 = vmatpush.bf16.msra.mxu0 %v2838
    %6162 = vmatpush.bf16.msra.mxu0 %v2829
    %6163 = vmatpush.bf16.msra.mxu0 %v2820
    %6164 = vmatpush.bf16.msra.mxu0 %v2811
    %6165 = vmatpush.bf16.msra.mxu0 %v2802
    %6166 = vmatmul.bf16.gmra.mxu0 %v973
    %v6167 = vpop.f32.mrf.mxu0
    %v6168 = vadd.f32 %v6119, %v6167
    %v6169 = vpop.f32.mrf.mxu0
    %v6170 = vadd.f32 %v6121, %v6169
    %6171 = vmatmul.bf16.gmra.mxu0 %v980
    %v6172 = vpop.f32.mrf.mxu0
    %v6173 = vadd.f32 %v6124, %v6172
    %v6174 = vpop.f32.mrf.mxu0
    %v6175 = vadd.f32 %v6126, %v6174
    %6176 = vmatmul.bf16.gmra.mxu0 %v987
    %v6177 = vpop.f32.mrf.mxu0
    %v6178 = vadd.f32 %v6129, %v6177
    %v6179 = vpop.f32.mrf.mxu0
    %v6180 = vadd.f32 %v6131, %v6179
    %6181 = vmatmul.bf16.gmra.mxu0 %v994
    %v6182 = vpop.f32.mrf.mxu0
    %v6183 = vadd.f32 %v6134, %v6182
    %v6184 = vpop.f32.mrf.mxu0
    %v6185 = vadd.f32 %v6136, %v6184
    %6186 = vmatmul.bf16.gmra.mxu0 %v1001
    %v6187 = vpop.f32.mrf.mxu0
    %v6188 = vadd.f32 %v6139, %v6187
    %v6189 = vpop.f32.mrf.mxu0
    %v6190 = vadd.f32 %v6141, %v6189
    %6191 = vmatmul.bf16.gmra.mxu0 %v1008
    %v6192 = vpop.f32.mrf.mxu0
    %v6193 = vadd.f32 %v6144, %v6192
    %v6194 = vpop.f32.mrf.mxu0
    %v6195 = vadd.f32 %v6146, %v6194
    %6196 = vmatmul.bf16.gmra.mxu0 %v1015
    %v6197 = vpop.f32.mrf.mxu0
    %v6198 = vadd.f32 %v6149, %v6197
    %v6199 = vpop.f32.mrf.mxu0
    %v6200 = vadd.f32 %v6151, %v6199
    %6201 = vmatmul.bf16.gmra.mxu0 %v1022
    %v6202 = vpop.f32.mrf.mxu0
    %v6203 = vadd.f32 %v6154, %v6202
    %v6204 = vpop.f32.mrf.mxu0
    %v6205 = vadd.f32 %v6156, %v6204
    %6206 = vdwg.mxu0
    %6207 = vmatpush.bf16.msra.mxu0 %v2937
    %6208 = vmatpush.bf16.msra.mxu0 %v2928
    %6209 = vmatpush.bf16.msra.mxu0 %v2919
    %6210 = vmatpush.bf16.msra.mxu0 %v2910
    %6211 = vmatpush.bf16.msra.mxu0 %v2901
    %6212 = vmatpush.bf16.msra.mxu0 %v2892
    %6213 = vmatpush.bf16.msra.mxu0 %v2883
    %6214 = vmatpush.bf16.msra.mxu0 %v2874
    %6215 = vmatmul.bf16.gmra.mxu0 %v974
    %v6216 = vpop.f32.mrf.mxu0
    %v6217 = vadd.f32 %v6168, %v6216
    %v6218 = vpop.f32.mrf.mxu0
    %v6219 = vadd.f32 %v6170, %v6218
    %6220 = vmatmul.bf16.gmra.mxu0 %v981
    %v6221 = vpop.f32.mrf.mxu0
    %v6222 = vadd.f32 %v6173, %v6221
    %v6223 = vpop.f32.mrf.mxu0
    %v6224 = vadd.f32 %v6175, %v6223
    %6225 = vmatmul.bf16.gmra.mxu0 %v988
    %v6226 = vpop.f32.mrf.mxu0
    %v6227 = vadd.f32 %v6178, %v6226
    %v6228 = vpop.f32.mrf.mxu0
    %v6229 = vadd.f32 %v6180, %v6228
    %6230 = vmatmul.bf16.gmra.mxu0 %v995
    %v6231 = vpop.f32.mrf.mxu0
    %v6232 = vadd.f32 %v6183, %v6231
    %v6233 = vpop.f32.mrf.mxu0
    %v6234 = vadd.f32 %v6185, %v6233
    %6235 = vmatmul.bf16.gmra.mxu0 %v1002
    %v6236 = vpop.f32.mrf.mxu0
    %v6237 = vadd.f32 %v6188, %v6236
    %v6238 = vpop.f32.mrf.mxu0
    %v6239 = vadd.f32 %v6190, %v6238
    %6240 = vmatmul.bf16.gmra.mxu0 %v1009
    %v6241 = vpop.f32.mrf.mxu0
    %v6242 = vadd.f32 %v6193, %v6241
    %v6243 = vpop.f32.mrf.mxu0
    %v6244 = vadd.f32 %v6195, %v6243
    %6245 = vmatmul.bf16.gmra.mxu0 %v1016
    %v6246 = vpop.f32.mrf.mxu0
    %v6247 = vadd.f32 %v6198, %v6246
    %v6248 = vpop.f32.mrf.mxu0
    %v6249 = vadd.f32 %v6200, %v6248
    %6250 = vmatmul.bf16.gmra.mxu0 %v1023
    %v6251 = vpop.f32.mrf.mxu0
    %v6252 = vadd.f32 %v6203, %v6251
    %v6253 = vpop.f32.mrf.mxu0
    %v6254 = vadd.f32 %v6205, %v6253
    %6255 = vdwg.mxu0
    %6256 = vmatpush.bf16.msra.mxu0 %v3009
    %6257 = vmatpush.bf16.msra.mxu0 %v3000
    %6258 = vmatpush.bf16.msra.mxu0 %v2991
    %6259 = vmatpush.bf16.msra.mxu0 %v2982
    %6260 = vmatpush.bf16.msra.mxu0 %v2973
    %6261 = vmatpush.bf16.msra.mxu0 %v2964
    %6262 = vmatpush.bf16.msra.mxu0 %v2955
    %6263 = vmatpush.bf16.msra.mxu0 %v2946
    %6264 = vmatmul.bf16.gmra.mxu0 %v975
    %v6265 = vpop.f32.mrf.mxu0
    %v6266 = vadd.f32 %v6217, %v6265
    %v6267 = vpop.f32.mrf.mxu0
    %v6268 = vadd.f32 %v6219, %v6267
    %6269 = vmatmul.bf16.gmra.mxu0 %v982
    %v6270 = vpop.f32.mrf.mxu0
    %v6271 = vadd.f32 %v6222, %v6270
    %v6272 = vpop.f32.mrf.mxu0
    %v6273 = vadd.f32 %v6224, %v6272
    %6274 = vmatmul.bf16.gmra.mxu0 %v989
    %v6275 = vpop.f32.mrf.mxu0
    %v6276 = vadd.f32 %v6227, %v6275
    %v6277 = vpop.f32.mrf.mxu0
    %v6278 = vadd.f32 %v6229, %v6277
    %6279 = vmatmul.bf16.gmra.mxu0 %v996
    %v6280 = vpop.f32.mrf.mxu0
    %v6281 = vadd.f32 %v6232, %v6280
    %v6282 = vpop.f32.mrf.mxu0
    %v6283 = vadd.f32 %v6234, %v6282
    %6284 = vmatmul.bf16.gmra.mxu0 %v1003
    %v6285 = vpop.f32.mrf.mxu0
    %v6286 = vadd.f32 %v6237, %v6285
    %v6287 = vpop.f32.mrf.mxu0
    %v6288 = vadd.f32 %v6239, %v6287
    %6289 = vmatmul.bf16.gmra.mxu0 %v1010
    %v6290 = vpop.f32.mrf.mxu0
    %v6291 = vadd.f32 %v6242, %v6290
    %v6292 = vpop.f32.mrf.mxu0
    %v6293 = vadd.f32 %v6244, %v6292
    %6294 = vmatmul.bf16.gmra.mxu0 %v1017
    %v6295 = vpop.f32.mrf.mxu0
    %v6296 = vadd.f32 %v6247, %v6295
    %v6297 = vpop.f32.mrf.mxu0
    %v6298 = vadd.f32 %v6249, %v6297
    %6299 = vmatmul.bf16.gmra.mxu0 %v1024
    %v6300 = vpop.f32.mrf.mxu0
    %v6301 = vadd.f32 %v6252, %v6300
    %v6302 = vpop.f32.mrf.mxu0
    %v6303 = vadd.f32 %v6254, %v6302
    %6304 = vdwg.mxu0
    %6305 = vmatpush.bf16.msra.mxu0 %v3081
    %6306 = vmatpush.bf16.msra.mxu0 %v3072
    %6307 = vmatpush.bf16.msra.mxu0 %v3063
    %6308 = vmatpush.bf16.msra.mxu0 %v3054
    %6309 = vmatpush.bf16.msra.mxu0 %v3045
    %6310 = vmatpush.bf16.msra.mxu0 %v3036
    %6311 = vmatpush.bf16.msra.mxu0 %v3027
    %6312 = vmatpush.bf16.msra.mxu0 %v3018
    %6313 = vmatmul.bf16.gmra.mxu0 %v976
    %v6314 = vpop.f32.mrf.mxu0
    %v6315 = vadd.f32 %v6266, %v6314
    %v6316 = vpop.f32.mrf.mxu0
    %v6317 = vadd.f32 %v6268, %v6316
    %6318 = vmatmul.bf16.gmra.mxu0 %v983
    %v6319 = vpop.f32.mrf.mxu0
    %v6320 = vadd.f32 %v6271, %v6319
    %v6321 = vpop.f32.mrf.mxu0
    %v6322 = vadd.f32 %v6273, %v6321
    %6323 = vmatmul.bf16.gmra.mxu0 %v990
    %v6324 = vpop.f32.mrf.mxu0
    %v6325 = vadd.f32 %v6276, %v6324
    %v6326 = vpop.f32.mrf.mxu0
    %v6327 = vadd.f32 %v6278, %v6326
    %6328 = vmatmul.bf16.gmra.mxu0 %v997
    %v6329 = vpop.f32.mrf.mxu0
    %v6330 = vadd.f32 %v6281, %v6329
    %v6331 = vpop.f32.mrf.mxu0
    %v6332 = vadd.f32 %v6283, %v6331
    %6333 = vmatmul.bf16.gmra.mxu0 %v1004
    %v6334 = vpop.f32.mrf.mxu0
    %v6335 = vadd.f32 %v6286, %v6334
    %v6336 = vpop.f32.mrf.mxu0
    %v6337 = vadd.f32 %v6288, %v6336
    %6338 = vmatmul.bf16.gmra.mxu0 %v1011
    %v6339 = vpop.f32.mrf.mxu0
    %v6340 = vadd.f32 %v6291, %v6339
    %v6341 = vpop.f32.mrf.mxu0
    %v6342 = vadd.f32 %v6293, %v6341
    %6343 = vmatmul.bf16.gmra.mxu0 %v1018
    %v6344 = vpop.f32.mrf.mxu0
    %v6345 = vadd.f32 %v6296, %v6344
    %v6346 = vpop.f32.mrf.mxu0
    %v6347 = vadd.f32 %v6298, %v6346
    %6348 = vmatmul.bf16.gmra.mxu0 %v1025
    %v6349 = vpop.f32.mrf.mxu0
    %v6350 = vadd.f32 %v6301, %v6349
    %v6351 = vpop.f32.mrf.mxu0
    %v6352 = vadd.f32 %v6303, %v6351
    %6353 = vdwg.mxu0
    %6354 = vmatpush.bf16.msra.mxu0 %v3153
    %6355 = vmatpush.bf16.msra.mxu0 %v3144
    %6356 = vmatpush.bf16.msra.mxu0 %v3135
    %6357 = vmatpush.bf16.msra.mxu0 %v3126
    %6358 = vmatpush.bf16.msra.mxu0 %v3117
    %6359 = vmatpush.bf16.msra.mxu0 %v3108
    %6360 = vmatpush.bf16.msra.mxu0 %v3099
    %6361 = vmatpush.bf16.msra.mxu0 %v3090
    %6362 = vmatmul.bf16.gmra.mxu0 %v977
    %v6363 = vpop.f32.mrf.mxu0
    %v6364 = vadd.f32 %v6315, %v6363
    %v6365 = vpop.f32.mrf.mxu0
    %v6366 = vadd.f32 %v6317, %v6365
    %6367 = vmatmul.bf16.gmra.mxu0 %v984
    %v6368 = vpop.f32.mrf.mxu0
    %v6369 = vadd.f32 %v6320, %v6368
    %v6370 = vpop.f32.mrf.mxu0
    %v6371 = vadd.f32 %v6322, %v6370
    %6372 = vmatmul.bf16.gmra.mxu0 %v991
    %v6373 = vpop.f32.mrf.mxu0
    %v6374 = vadd.f32 %v6325, %v6373
    %v6375 = vpop.f32.mrf.mxu0
    %v6376 = vadd.f32 %v6327, %v6375
    %6377 = vmatmul.bf16.gmra.mxu0 %v998
    %v6378 = vpop.f32.mrf.mxu0
    %v6379 = vadd.f32 %v6330, %v6378
    %v6380 = vpop.f32.mrf.mxu0
    %v6381 = vadd.f32 %v6332, %v6380
    %6382 = vmatmul.bf16.gmra.mxu0 %v1005
    %v6383 = vpop.f32.mrf.mxu0
    %v6384 = vadd.f32 %v6335, %v6383
    %v6385 = vpop.f32.mrf.mxu0
    %v6386 = vadd.f32 %v6337, %v6385
    %6387 = vmatmul.bf16.gmra.mxu0 %v1012
    %v6388 = vpop.f32.mrf.mxu0
    %v6389 = vadd.f32 %v6340, %v6388
    %v6390 = vpop.f32.mrf.mxu0
    %v6391 = vadd.f32 %v6342, %v6390
    %6392 = vmatmul.bf16.gmra.mxu0 %v1019
    %v6393 = vpop.f32.mrf.mxu0
    %v6394 = vadd.f32 %v6345, %v6393
    %v6395 = vpop.f32.mrf.mxu0
    %v6396 = vadd.f32 %v6347, %v6395
    %6397 = vmatmul.bf16.gmra.mxu0 %v1026
    %v6398 = vpop.f32.mrf.mxu0
    %v6399 = vadd.f32 %v6350, %v6398
    %v6400 = vpop.f32.mrf.mxu0
    %v6401 = vadd.f32 %v6352, %v6400
    %6402 = vdwg.mxu0
    %6403 = vmatpush.bf16.msra.mxu0 %v2722
    %6404 = vmatpush.bf16.msra.mxu0 %v2713
    %6405 = vmatpush.bf16.msra.mxu0 %v2704
    %6406 = vmatpush.bf16.msra.mxu0 %v2695
    %6407 = vmatpush.bf16.msra.mxu0 %v2686
    %6408 = vmatpush.bf16.msra.mxu0 %v2677
    %6409 = vmatpush.bf16.msra.mxu0 %v2668
    %6410 = vmatpush.bf16.msra.mxu0 %v2659
    %6411 = vmatmul.bf16.gmra.mxu0 %v971
    %v6412 = vpop.f32.mrf.mxu0
    %v6413 = vadd.f32 %v785, %v6412
    %v6414 = vpop.f32.mrf.mxu0
    %v6415 = vadd.f32 %v785, %v6414
    %6416 = vmatmul.bf16.gmra.mxu0 %v978
    %v6417 = vpop.f32.mrf.mxu0
    %v6418 = vadd.f32 %v785, %v6417
    %v6419 = vpop.f32.mrf.mxu0
    %v6420 = vadd.f32 %v785, %v6419
    %6421 = vmatmul.bf16.gmra.mxu0 %v985
    %v6422 = vpop.f32.mrf.mxu0
    %v6423 = vadd.f32 %v785, %v6422
    %v6424 = vpop.f32.mrf.mxu0
    %v6425 = vadd.f32 %v785, %v6424
    %6426 = vmatmul.bf16.gmra.mxu0 %v992
    %v6427 = vpop.f32.mrf.mxu0
    %v6428 = vadd.f32 %v785, %v6427
    %v6429 = vpop.f32.mrf.mxu0
    %v6430 = vadd.f32 %v785, %v6429
    %6431 = vmatmul.bf16.gmra.mxu0 %v999
    %v6432 = vpop.f32.mrf.mxu0
    %v6433 = vadd.f32 %v785, %v6432
    %v6434 = vpop.f32.mrf.mxu0
    %v6435 = vadd.f32 %v785, %v6434
    %6436 = vmatmul.bf16.gmra.mxu0 %v1006
    %v6437 = vpop.f32.mrf.mxu0
    %v6438 = vadd.f32 %v785, %v6437
    %v6439 = vpop.f32.mrf.mxu0
    %v6440 = vadd.f32 %v785, %v6439
    %6441 = vmatmul.bf16.gmra.mxu0 %v1013
    %v6442 = vpop.f32.mrf.mxu0
    %v6443 = vadd.f32 %v785, %v6442
    %v6444 = vpop.f32.mrf.mxu0
    %v6445 = vadd.f32 %v785, %v6444
    %6446 = vmatmul.bf16.gmra.mxu0 %v1020
    %v6447 = vpop.f32.mrf.mxu0
    %v6448 = vadd.f32 %v785, %v6447
    %v6449 = vpop.f32.mrf.mxu0
    %v6450 = vadd.f32 %v785, %v6449
    %6451 = vdwg.mxu0
    %6452 = vmatpush.bf16.msra.mxu0 %v2794
    %6453 = vmatpush.bf16.msra.mxu0 %v2785
    %6454 = vmatpush.bf16.msra.mxu0 %v2776
    %6455 = vmatpush.bf16.msra.mxu0 %v2767
    %6456 = vmatpush.bf16.msra.mxu0 %v2758
    %6457 = vmatpush.bf16.msra.mxu0 %v2749
    %6458 = vmatpush.bf16.msra.mxu0 %v2740
    %6459 = vmatpush.bf16.msra.mxu0 %v2731
    %6460 = vmatmul.bf16.gmra.mxu0 %v972
    %v6461 = vpop.f32.mrf.mxu0
    %v6462 = vadd.f32 %v6413, %v6461
    %v6463 = vpop.f32.mrf.mxu0
    %v6464 = vadd.f32 %v6415, %v6463
    %6465 = vmatmul.bf16.gmra.mxu0 %v979
    %v6466 = vpop.f32.mrf.mxu0
    %v6467 = vadd.f32 %v6418, %v6466
    %v6468 = vpop.f32.mrf.mxu0
    %v6469 = vadd.f32 %v6420, %v6468
    %6470 = vmatmul.bf16.gmra.mxu0 %v986
    %v6471 = vpop.f32.mrf.mxu0
    %v6472 = vadd.f32 %v6423, %v6471
    %v6473 = vpop.f32.mrf.mxu0
    %v6474 = vadd.f32 %v6425, %v6473
    %6475 = vmatmul.bf16.gmra.mxu0 %v993
    %v6476 = vpop.f32.mrf.mxu0
    %v6477 = vadd.f32 %v6428, %v6476
    %v6478 = vpop.f32.mrf.mxu0
    %v6479 = vadd.f32 %v6430, %v6478
    %6480 = vmatmul.bf16.gmra.mxu0 %v1000
    %v6481 = vpop.f32.mrf.mxu0
    %v6482 = vadd.f32 %v6433, %v6481
    %v6483 = vpop.f32.mrf.mxu0
    %v6484 = vadd.f32 %v6435, %v6483
    %6485 = vmatmul.bf16.gmra.mxu0 %v1007
    %v6486 = vpop.f32.mrf.mxu0
    %v6487 = vadd.f32 %v6438, %v6486
    %v6488 = vpop.f32.mrf.mxu0
    %v6489 = vadd.f32 %v6440, %v6488
    %6490 = vmatmul.bf16.gmra.mxu0 %v1014
    %v6491 = vpop.f32.mrf.mxu0
    %v6492 = vadd.f32 %v6443, %v6491
    %v6493 = vpop.f32.mrf.mxu0
    %v6494 = vadd.f32 %v6445, %v6493
    %6495 = vmatmul.bf16.gmra.mxu0 %v1021
    %v6496 = vpop.f32.mrf.mxu0
    %v6497 = vadd.f32 %v6448, %v6496
    %v6498 = vpop.f32.mrf.mxu0
    %v6499 = vadd.f32 %v6450, %v6498
    %6500 = vdwg.mxu0
    %6501 = vmatpush.bf16.msra.mxu0 %v2866
    %6502 = vmatpush.bf16.msra.mxu0 %v2857
    %6503 = vmatpush.bf16.msra.mxu0 %v2848
    %6504 = vmatpush.bf16.msra.mxu0 %v2839
    %6505 = vmatpush.bf16.msra.mxu0 %v2830
    %6506 = vmatpush.bf16.msra.mxu0 %v2821
    %6507 = vmatpush.bf16.msra.mxu0 %v2812
    %6508 = vmatpush.bf16.msra.mxu0 %v2803
    %6509 = vmatmul.bf16.gmra.mxu0 %v973
    %v6510 = vpop.f32.mrf.mxu0
    %v6511 = vadd.f32 %v6462, %v6510
    %v6512 = vpop.f32.mrf.mxu0
    %v6513 = vadd.f32 %v6464, %v6512
    %6514 = vmatmul.bf16.gmra.mxu0 %v980
    %v6515 = vpop.f32.mrf.mxu0
    %v6516 = vadd.f32 %v6467, %v6515
    %v6517 = vpop.f32.mrf.mxu0
    %v6518 = vadd.f32 %v6469, %v6517
    %6519 = vmatmul.bf16.gmra.mxu0 %v987
    %v6520 = vpop.f32.mrf.mxu0
    %v6521 = vadd.f32 %v6472, %v6520
    %v6522 = vpop.f32.mrf.mxu0
    %v6523 = vadd.f32 %v6474, %v6522
    %6524 = vmatmul.bf16.gmra.mxu0 %v994
    %v6525 = vpop.f32.mrf.mxu0
    %v6526 = vadd.f32 %v6477, %v6525
    %v6527 = vpop.f32.mrf.mxu0
    %v6528 = vadd.f32 %v6479, %v6527
    %6529 = vmatmul.bf16.gmra.mxu0 %v1001
    %v6530 = vpop.f32.mrf.mxu0
    %v6531 = vadd.f32 %v6482, %v6530
    %v6532 = vpop.f32.mrf.mxu0
    %v6533 = vadd.f32 %v6484, %v6532
    %6534 = vmatmul.bf16.gmra.mxu0 %v1008
    %v6535 = vpop.f32.mrf.mxu0
    %v6536 = vadd.f32 %v6487, %v6535
    %v6537 = vpop.f32.mrf.mxu0
    %v6538 = vadd.f32 %v6489, %v6537
    %6539 = vmatmul.bf16.gmra.mxu0 %v1015
    %v6540 = vpop.f32.mrf.mxu0
    %v6541 = vadd.f32 %v6492, %v6540
    %v6542 = vpop.f32.mrf.mxu0
    %v6543 = vadd.f32 %v6494, %v6542
    %6544 = vmatmul.bf16.gmra.mxu0 %v1022
    %v6545 = vpop.f32.mrf.mxu0
    %v6546 = vadd.f32 %v6497, %v6545
    %v6547 = vpop.f32.mrf.mxu0
    %v6548 = vadd.f32 %v6499, %v6547
    %6549 = vdwg.mxu0
    %6550 = vmatpush.bf16.msra.mxu0 %v2938
    %6551 = vmatpush.bf16.msra.mxu0 %v2929
    %6552 = vmatpush.bf16.msra.mxu0 %v2920
    %6553 = vmatpush.bf16.msra.mxu0 %v2911
    %6554 = vmatpush.bf16.msra.mxu0 %v2902
    %6555 = vmatpush.bf16.msra.mxu0 %v2893
    %6556 = vmatpush.bf16.msra.mxu0 %v2884
    %6557 = vmatpush.bf16.msra.mxu0 %v2875
    %6558 = vmatmul.bf16.gmra.mxu0 %v974
    %v6559 = vpop.f32.mrf.mxu0
    %v6560 = vadd.f32 %v6511, %v6559
    %v6561 = vpop.f32.mrf.mxu0
    %v6562 = vadd.f32 %v6513, %v6561
    %6563 = vmatmul.bf16.gmra.mxu0 %v981
    %v6564 = vpop.f32.mrf.mxu0
    %v6565 = vadd.f32 %v6516, %v6564
    %v6566 = vpop.f32.mrf.mxu0
    %v6567 = vadd.f32 %v6518, %v6566
    %6568 = vmatmul.bf16.gmra.mxu0 %v988
    %v6569 = vpop.f32.mrf.mxu0
    %v6570 = vadd.f32 %v6521, %v6569
    %v6571 = vpop.f32.mrf.mxu0
    %v6572 = vadd.f32 %v6523, %v6571
    %6573 = vmatmul.bf16.gmra.mxu0 %v995
    %v6574 = vpop.f32.mrf.mxu0
    %v6575 = vadd.f32 %v6526, %v6574
    %v6576 = vpop.f32.mrf.mxu0
    %v6577 = vadd.f32 %v6528, %v6576
    %6578 = vmatmul.bf16.gmra.mxu0 %v1002
    %v6579 = vpop.f32.mrf.mxu0
    %v6580 = vadd.f32 %v6531, %v6579
    %v6581 = vpop.f32.mrf.mxu0
    %v6582 = vadd.f32 %v6533, %v6581
    %6583 = vmatmul.bf16.gmra.mxu0 %v1009
    %v6584 = vpop.f32.mrf.mxu0
    %v6585 = vadd.f32 %v6536, %v6584
    %v6586 = vpop.f32.mrf.mxu0
    %v6587 = vadd.f32 %v6538, %v6586
    %6588 = vmatmul.bf16.gmra.mxu0 %v1016
    %v6589 = vpop.f32.mrf.mxu0
    %v6590 = vadd.f32 %v6541, %v6589
    %v6591 = vpop.f32.mrf.mxu0
    %v6592 = vadd.f32 %v6543, %v6591
    %6593 = vmatmul.bf16.gmra.mxu0 %v1023
    %v6594 = vpop.f32.mrf.mxu0
    %v6595 = vadd.f32 %v6546, %v6594
    %v6596 = vpop.f32.mrf.mxu0
    %v6597 = vadd.f32 %v6548, %v6596
    %6598 = vdwg.mxu0
    %6599 = vmatpush.bf16.msra.mxu0 %v3010
    %6600 = vmatpush.bf16.msra.mxu0 %v3001
    %6601 = vmatpush.bf16.msra.mxu0 %v2992
    %6602 = vmatpush.bf16.msra.mxu0 %v2983
    %6603 = vmatpush.bf16.msra.mxu0 %v2974
    %6604 = vmatpush.bf16.msra.mxu0 %v2965
    %6605 = vmatpush.bf16.msra.mxu0 %v2956
    %6606 = vmatpush.bf16.msra.mxu0 %v2947
    %6607 = vmatmul.bf16.gmra.mxu0 %v975
    %v6608 = vpop.f32.mrf.mxu0
    %v6609 = vadd.f32 %v6560, %v6608
    %v6610 = vpop.f32.mrf.mxu0
    %v6611 = vadd.f32 %v6562, %v6610
    %6612 = vmatmul.bf16.gmra.mxu0 %v982
    %v6613 = vpop.f32.mrf.mxu0
    %v6614 = vadd.f32 %v6565, %v6613
    %v6615 = vpop.f32.mrf.mxu0
    %v6616 = vadd.f32 %v6567, %v6615
    %6617 = vmatmul.bf16.gmra.mxu0 %v989
    %v6618 = vpop.f32.mrf.mxu0
    %v6619 = vadd.f32 %v6570, %v6618
    %v6620 = vpop.f32.mrf.mxu0
    %v6621 = vadd.f32 %v6572, %v6620
    %6622 = vmatmul.bf16.gmra.mxu0 %v996
    %v6623 = vpop.f32.mrf.mxu0
    %v6624 = vadd.f32 %v6575, %v6623
    %v6625 = vpop.f32.mrf.mxu0
    %v6626 = vadd.f32 %v6577, %v6625
    %6627 = vmatmul.bf16.gmra.mxu0 %v1003
    %v6628 = vpop.f32.mrf.mxu0
    %v6629 = vadd.f32 %v6580, %v6628
    %v6630 = vpop.f32.mrf.mxu0
    %v6631 = vadd.f32 %v6582, %v6630
    %6632 = vmatmul.bf16.gmra.mxu0 %v1010
    %v6633 = vpop.f32.mrf.mxu0
    %v6634 = vadd.f32 %v6585, %v6633
    %v6635 = vpop.f32.mrf.mxu0
    %v6636 = vadd.f32 %v6587, %v6635
    %6637 = vmatmul.bf16.gmra.mxu0 %v1017
    %v6638 = vpop.f32.mrf.mxu0
    %v6639 = vadd.f32 %v6590, %v6638
    %v6640 = vpop.f32.mrf.mxu0
    %v6641 = vadd.f32 %v6592, %v6640
    %6642 = vmatmul.bf16.gmra.mxu0 %v1024
    %v6643 = vpop.f32.mrf.mxu0
    %v6644 = vadd.f32 %v6595, %v6643
    %v6645 = vpop.f32.mrf.mxu0
    %v6646 = vadd.f32 %v6597, %v6645
    %6647 = vdwg.mxu0
    %6648 = vmatpush.bf16.msra.mxu0 %v3082
    %6649 = vmatpush.bf16.msra.mxu0 %v3073
    %6650 = vmatpush.bf16.msra.mxu0 %v3064
    %6651 = vmatpush.bf16.msra.mxu0 %v3055
    %6652 = vmatpush.bf16.msra.mxu0 %v3046
    %6653 = vmatpush.bf16.msra.mxu0 %v3037
    %6654 = vmatpush.bf16.msra.mxu0 %v3028
    %6655 = vmatpush.bf16.msra.mxu0 %v3019
    %6656 = vmatmul.bf16.gmra.mxu0 %v976
    %v6657 = vpop.f32.mrf.mxu0
    %v6658 = vadd.f32 %v6609, %v6657
    %v6659 = vpop.f32.mrf.mxu0
    %v6660 = vadd.f32 %v6611, %v6659
    %6661 = vmatmul.bf16.gmra.mxu0 %v983
    %v6662 = vpop.f32.mrf.mxu0
    %v6663 = vadd.f32 %v6614, %v6662
    %v6664 = vpop.f32.mrf.mxu0
    %v6665 = vadd.f32 %v6616, %v6664
    %6666 = vmatmul.bf16.gmra.mxu0 %v990
    %v6667 = vpop.f32.mrf.mxu0
    %v6668 = vadd.f32 %v6619, %v6667
    %v6669 = vpop.f32.mrf.mxu0
    %v6670 = vadd.f32 %v6621, %v6669
    %6671 = vmatmul.bf16.gmra.mxu0 %v997
    %v6672 = vpop.f32.mrf.mxu0
    %v6673 = vadd.f32 %v6624, %v6672
    %v6674 = vpop.f32.mrf.mxu0
    %v6675 = vadd.f32 %v6626, %v6674
    %6676 = vmatmul.bf16.gmra.mxu0 %v1004
    %v6677 = vpop.f32.mrf.mxu0
    %v6678 = vadd.f32 %v6629, %v6677
    %v6679 = vpop.f32.mrf.mxu0
    %v6680 = vadd.f32 %v6631, %v6679
    %6681 = vmatmul.bf16.gmra.mxu0 %v1011
    %v6682 = vpop.f32.mrf.mxu0
    %v6683 = vadd.f32 %v6634, %v6682
    %v6684 = vpop.f32.mrf.mxu0
    %v6685 = vadd.f32 %v6636, %v6684
    %6686 = vmatmul.bf16.gmra.mxu0 %v1018
    %v6687 = vpop.f32.mrf.mxu0
    %v6688 = vadd.f32 %v6639, %v6687
    %v6689 = vpop.f32.mrf.mxu0
    %v6690 = vadd.f32 %v6641, %v6689
    %6691 = vmatmul.bf16.gmra.mxu0 %v1025
    %v6692 = vpop.f32.mrf.mxu0
    %v6693 = vadd.f32 %v6644, %v6692
    %v6694 = vpop.f32.mrf.mxu0
    %v6695 = vadd.f32 %v6646, %v6694
    %6696 = vdwg.mxu0
    %6697 = vmatpush.bf16.msra.mxu0 %v3154
    %6698 = vmatpush.bf16.msra.mxu0 %v3145
    %6699 = vmatpush.bf16.msra.mxu0 %v3136
    %6700 = vmatpush.bf16.msra.mxu0 %v3127
    %6701 = vmatpush.bf16.msra.mxu0 %v3118
    %6702 = vmatpush.bf16.msra.mxu0 %v3109
    %6703 = vmatpush.bf16.msra.mxu0 %v3100
    %6704 = vmatpush.bf16.msra.mxu0 %v3091
    %6705 = vmatmul.bf16.gmra.mxu0 %v977
    %v6706 = vpop.f32.mrf.mxu0
    %v6707 = vadd.f32 %v6658, %v6706
    %v6708 = vpop.f32.mrf.mxu0
    %v6709 = vadd.f32 %v6660, %v6708
    %6710 = vmatmul.bf16.gmra.mxu0 %v984
    %v6711 = vpop.f32.mrf.mxu0
    %v6712 = vadd.f32 %v6663, %v6711
    %v6713 = vpop.f32.mrf.mxu0
    %v6714 = vadd.f32 %v6665, %v6713
    %6715 = vmatmul.bf16.gmra.mxu0 %v991
    %v6716 = vpop.f32.mrf.mxu0
    %v6717 = vadd.f32 %v6668, %v6716
    %v6718 = vpop.f32.mrf.mxu0
    %v6719 = vadd.f32 %v6670, %v6718
    %6720 = vmatmul.bf16.gmra.mxu0 %v998
    %v6721 = vpop.f32.mrf.mxu0
    %v6722 = vadd.f32 %v6673, %v6721
    %v6723 = vpop.f32.mrf.mxu0
    %v6724 = vadd.f32 %v6675, %v6723
    %6725 = vmatmul.bf16.gmra.mxu0 %v1005
    %v6726 = vpop.f32.mrf.mxu0
    %v6727 = vadd.f32 %v6678, %v6726
    %v6728 = vpop.f32.mrf.mxu0
    %v6729 = vadd.f32 %v6680, %v6728
    %6730 = vmatmul.bf16.gmra.mxu0 %v1012
    %v6731 = vpop.f32.mrf.mxu0
    %v6732 = vadd.f32 %v6683, %v6731
    %v6733 = vpop.f32.mrf.mxu0
    %v6734 = vadd.f32 %v6685, %v6733
    %6735 = vmatmul.bf16.gmra.mxu0 %v1019
    %v6736 = vpop.f32.mrf.mxu0
    %v6737 = vadd.f32 %v6688, %v6736
    %v6738 = vpop.f32.mrf.mxu0
    %v6739 = vadd.f32 %v6690, %v6738
    %6740 = vmatmul.bf16.gmra.mxu0 %v1026
    %v6741 = vpop.f32.mrf.mxu0
    %v6742 = vadd.f32 %v6693, %v6741
    %v6743 = vpop.f32.mrf.mxu0
    %v6744 = vadd.f32 %v6695, %v6743
    %6745 = vdwg.mxu0
    %v6746 = vmax.f32 %v3963, 0.0
    %v6747 = vmax.f32 %v4306, 0.0
    %v6748 = vmax.f32 %v4649, 0.0
    %v6749 = vmax.f32 %v4992, 0.0
    %v6750 = vmax.f32 %v5335, 0.0
    %v6751 = vmax.f32 %v5678, 0.0
    %v6752 = vmax.f32 %v6021, 0.0
    %v6753 = vmax.f32 %v6364, 0.0
    %v6754 = vmax.f32 %v6707, 0.0
    %v6755 = vmax.f32 %v3965, 0.0
    %v6756 = vmax.f32 %v4308, 0.0
    %v6757 = vmax.f32 %v4651, 0.0
    %v6758 = vmax.f32 %v4994, 0.0
    %v6759 = vmax.f32 %v5337, 0.0
    %v6760 = vmax.f32 %v5680, 0.0
    %v6761 = vmax.f32 %v6023, 0.0
    %v6762 = vmax.f32 %v6366, 0.0
    %v6763 = vmax.f32 %v6709, 0.0
    %v6764 = vmax.f32 %v3968, 0.0
    %v6765 = vmax.f32 %v4311, 0.0
    %v6766 = vmax.f32 %v4654, 0.0
    %v6767 = vmax.f32 %v4997, 0.0
    %v6768 = vmax.f32 %v5340, 0.0
    %v6769 = vmax.f32 %v5683, 0.0
    %v6770 = vmax.f32 %v6026, 0.0
    %v6771 = vmax.f32 %v6369, 0.0
    %v6772 = vmax.f32 %v6712, 0.0
    %v6773 = vmax.f32 %v3970, 0.0
    %v6774 = vmax.f32 %v4313, 0.0
    %v6775 = vmax.f32 %v4656, 0.0
    %v6776 = vmax.f32 %v4999, 0.0
    %v6777 = vmax.f32 %v5342, 0.0
    %v6778 = vmax.f32 %v5685, 0.0
    %v6779 = vmax.f32 %v6028, 0.0
    %v6780 = vmax.f32 %v6371, 0.0
    %v6781 = vmax.f32 %v6714, 0.0
    %v6782 = vmax.f32 %v3973, 0.0
    %v6783 = vmax.f32 %v4316, 0.0
    %v6784 = vmax.f32 %v4659, 0.0
    %v6785 = vmax.f32 %v5002, 0.0
    %v6786 = vmax.f32 %v5345, 0.0
    %v6787 = vmax.f32 %v5688, 0.0
    %v6788 = vmax.f32 %v6031, 0.0
    %v6789 = vmax.f32 %v6374, 0.0
    %v6790 = vmax.f32 %v6717, 0.0
    %v6791 = vmax.f32 %v3975, 0.0
    %v6792 = vmax.f32 %v4318, 0.0
    %v6793 = vmax.f32 %v4661, 0.0
    %v6794 = vmax.f32 %v5004, 0.0
    %v6795 = vmax.f32 %v5347, 0.0
    %v6796 = vmax.f32 %v5690, 0.0
    %v6797 = vmax.f32 %v6033, 0.0
    %v6798 = vmax.f32 %v6376, 0.0
    %v6799 = vmax.f32 %v6719, 0.0
    %v6800 = vmax.f32 %v3978, 0.0
    %v6801 = vmax.f32 %v4321, 0.0
    %v6802 = vmax.f32 %v4664, 0.0
    %v6803 = vmax.f32 %v5007, 0.0
    %v6804 = vmax.f32 %v5350, 0.0
    %v6805 = vmax.f32 %v5693, 0.0
    %v6806 = vmax.f32 %v6036, 0.0
    %v6807 = vmax.f32 %v6379, 0.0
    %v6808 = vmax.f32 %v6722, 0.0
    %v6809 = vmax.f32 %v3980, 0.0
    %v6810 = vmax.f32 %v4323, 0.0
    %v6811 = vmax.f32 %v4666, 0.0
    %v6812 = vmax.f32 %v5009, 0.0
    %v6813 = vmax.f32 %v5352, 0.0
    %v6814 = vmax.f32 %v5695, 0.0
    %v6815 = vmax.f32 %v6038, 0.0
    %v6816 = vmax.f32 %v6381, 0.0
    %v6817 = vmax.f32 %v6724, 0.0
    %v6818 = vmax.f32 %v3983, 0.0
    %v6819 = vmax.f32 %v4326, 0.0
    %v6820 = vmax.f32 %v4669, 0.0
    %v6821 = vmax.f32 %v5012, 0.0
    %v6822 = vmax.f32 %v5355, 0.0
    %v6823 = vmax.f32 %v5698, 0.0
    %v6824 = vmax.f32 %v6041, 0.0
    %v6825 = vmax.f32 %v6384, 0.0
    %v6826 = vmax.f32 %v6727, 0.0
    %v6827 = vmax.f32 %v3985, 0.0
    %v6828 = vmax.f32 %v4328, 0.0
    %v6829 = vmax.f32 %v4671, 0.0
    %v6830 = vmax.f32 %v5014, 0.0
    %v6831 = vmax.f32 %v5357, 0.0
    %v6832 = vmax.f32 %v5700, 0.0
    %v6833 = vmax.f32 %v6043, 0.0
    %v6834 = vmax.f32 %v6386, 0.0
    %v6835 = vmax.f32 %v6729, 0.0
    %v6836 = vmax.f32 %v3988, 0.0
    %v6837 = vmax.f32 %v4331, 0.0
    %v6838 = vmax.f32 %v4674, 0.0
    %v6839 = vmax.f32 %v5017, 0.0
    %v6840 = vmax.f32 %v5360, 0.0
    %v6841 = vmax.f32 %v5703, 0.0
    %v6842 = vmax.f32 %v6046, 0.0
    %v6843 = vmax.f32 %v6389, 0.0
    %v6844 = vmax.f32 %v6732, 0.0
    %v6845 = vmax.f32 %v3990, 0.0
    %v6846 = vmax.f32 %v4333, 0.0
    %v6847 = vmax.f32 %v4676, 0.0
    %v6848 = vmax.f32 %v5019, 0.0
    %v6849 = vmax.f32 %v5362, 0.0
    %v6850 = vmax.f32 %v5705, 0.0
    %v6851 = vmax.f32 %v6048, 0.0
    %v6852 = vmax.f32 %v6391, 0.0
    %v6853 = vmax.f32 %v6734, 0.0
    %v6854 = vmax.f32 %v3993, 0.0
    %v6855 = vmax.f32 %v4336, 0.0
    %v6856 = vmax.f32 %v4679, 0.0
    %v6857 = vmax.f32 %v5022, 0.0
    %v6858 = vmax.f32 %v5365, 0.0
    %v6859 = vmax.f32 %v5708, 0.0
    %v6860 = vmax.f32 %v6051, 0.0
    %v6861 = vmax.f32 %v6394, 0.0
    %v6862 = vmax.f32 %v6737, 0.0
    %v6863 = vmax.f32 %v3995, 0.0
    %v6864 = vmax.f32 %v4338, 0.0
    %v6865 = vmax.f32 %v4681, 0.0
    %v6866 = vmax.f32 %v5024, 0.0
    %v6867 = vmax.f32 %v5367, 0.0
    %v6868 = vmax.f32 %v5710, 0.0
    %v6869 = vmax.f32 %v6053, 0.0
    %v6870 = vmax.f32 %v6396, 0.0
    %v6871 = vmax.f32 %v6739, 0.0
    %v6872 = vmax.f32 %v3998, 0.0
    %v6873 = vmax.f32 %v4341, 0.0
    %v6874 = vmax.f32 %v4684, 0.0
    %v6875 = vmax.f32 %v5027, 0.0
    %v6876 = vmax.f32 %v5370, 0.0
    %v6877 = vmax.f32 %v5713, 0.0
    %v6878 = vmax.f32 %v6056, 0.0
    %v6879 = vmax.f32 %v6399, 0.0
    %v6880 = vmax.f32 %v6742, 0.0
    %v6881 = vmax.f32 %v4000, 0.0
    %v6882 = vmax.f32 %v4343, 0.0
    %v6883 = vmax.f32 %v4686, 0.0
    %v6884 = vmax.f32 %v5029, 0.0
    %v6885 = vmax.f32 %v5372, 0.0
    %v6886 = vmax.f32 %v5715, 0.0
    %v6887 = vmax.f32 %v6058, 0.0
    %v6888 = vmax.f32 %v6401, 0.0
    %v6889 = vmax.f32 %v6744, 0.0
    %v6890 = vpack.c.bf16 %v6755, %v6746
    %v6891 = vpack.c.bf16 %v6756, %v6747
    %v6892 = vpack.c.bf16 %v6757, %v6748
    %v6893 = vpack.c.bf16 %v6758, %v6749
    %v6894 = vpack.c.bf16 %v6759, %v6750
    %v6895 = vpack.c.bf16 %v6760, %v6751
    %v6896 = vpack.c.bf16 %v6761, %v6752
    %v6897 = vpack.c.bf16 %v6762, %v6753
    %v6898 = vpack.c.bf16 %v6763, %v6754
    %v6899 = vpack.c.bf16 %v6773, %v6764
    %v6900 = vpack.c.bf16 %v6774, %v6765
    %v6901 = vpack.c.bf16 %v6775, %v6766
    %v6902 = vpack.c.bf16 %v6776, %v6767
    %v6903 = vpack.c.bf16 %v6777, %v6768
    %v6904 = vpack.c.bf16 %v6778, %v6769
    %v6905 = vpack.c.bf16 %v6779, %v6770
    %v6906 = vpack.c.bf16 %v6780, %v6771
    %v6907 = vpack.c.bf16 %v6781, %v6772
    %v6908 = vpack.c.bf16 %v6791, %v6782
    %v6909 = vpack.c.bf16 %v6792, %v6783
    %v6910 = vpack.c.bf16 %v6793, %v6784
    %v6911 = vpack.c.bf16 %v6794, %v6785
    %v6912 = vpack.c.bf16 %v6795, %v6786
    %v6913 = vpack.c.bf16 %v6796, %v6787
    %v6914 = vpack.c.bf16 %v6797, %v6788
    %v6915 = vpack.c.bf16 %v6798, %v6789
    %v6916 = vpack.c.bf16 %v6799, %v6790
    %v6917 = vpack.c.bf16 %v6809, %v6800
    %v6918 = vpack.c.bf16 %v6810, %v6801
    %v6919 = vpack.c.bf16 %v6811, %v6802
    %v6920 = vpack.c.bf16 %v6812, %v6803
    %v6921 = vpack.c.bf16 %v6813, %v6804
    %v6922 = vpack.c.bf16 %v6814, %v6805
    %v6923 = vpack.c.bf16 %v6815, %v6806
    %v6924 = vpack.c.bf16 %v6816, %v6807
    %v6925 = vpack.c.bf16 %v6817, %v6808
    %v6926 = vpack.c.bf16 %v6827, %v6818
    %v6927 = vpack.c.bf16 %v6828, %v6819
    %v6928 = vpack.c.bf16 %v6829, %v6820
    %v6929 = vpack.c.bf16 %v6830, %v6821
    %v6930 = vpack.c.bf16 %v6831, %v6822
    %v6931 = vpack.c.bf16 %v6832, %v6823
    %v6932 = vpack.c.bf16 %v6833, %v6824
    %v6933 = vpack.c.bf16 %v6834, %v6825
    %v6934 = vpack.c.bf16 %v6835, %v6826
    %v6935 = vpack.c.bf16 %v6845, %v6836
    %v6936 = vpack.c.bf16 %v6846, %v6837
    %v6937 = vpack.c.bf16 %v6847, %v6838
    %v6938 = vpack.c.bf16 %v6848, %v6839
    %v6939 = vpack.c.bf16 %v6849, %v6840
    %v6940 = vpack.c.bf16 %v6850, %v6841
    %v6941 = vpack.c.bf16 %v6851, %v6842
    %v6942 = vpack.c.bf16 %v6852, %v6843
    %v6943 = vpack.c.bf16 %v6853, %v6844
    %v6944 = vpack.c.bf16 %v6863, %v6854
    %v6945 = vpack.c.bf16 %v6864, %v6855
    %v6946 = vpack.c.bf16 %v6865, %v6856
    %v6947 = vpack.c.bf16 %v6866, %v6857
    %v6948 = vpack.c.bf16 %v6867, %v6858
    %v6949 = vpack.c.bf16 %v6868, %v6859
    %v6950 = vpack.c.bf16 %v6869, %v6860
    %v6951 = vpack.c.bf16 %v6870, %v6861
    %v6952 = vpack.c.bf16 %v6871, %v6862
    %v6953 = vpack.c.bf16 %v6881, %v6872
    %v6954 = vpack.c.bf16 %v6882, %v6873
    %v6955 = vpack.c.bf16 %v6883, %v6874
    %v6956 = vpack.c.bf16 %v6884, %v6875
    %v6957 = vpack.c.bf16 %v6885, %v6876
    %v6958 = vpack.c.bf16 %v6886, %v6877
    %v6959 = vpack.c.bf16 %v6887, %v6878
    %v6960 = vpack.c.bf16 %v6888, %v6879
    %v6961 = vpack.c.bf16 %v6889, %v6880
    %v6962 = vld [vmem:[#allocation6] sm:$0xff]
    %v6963 = vld [vmem:[#allocation6 + $0x8] sm:$0xff]
    %v6964 = vld [vmem:[#allocation6 + $0x10] sm:$0xff]
    %v6965 = vld [vmem:[#allocation6 + $0x18] sm:$0xff]
    %v6966 = vld [vmem:[#allocation6 + $0x20] sm:$0xff]
    %v6967 = vld [vmem:[#allocation6 + $0x28] sm:$0xff]
    %v6968 = vld [vmem:[#allocation6 + $0x30] sm:$0xff]
    %v6969 = vld [vmem:[#allocation6 + $0x38] sm:$0xff]
    %v6970 = vld [vmem:[#allocation6 + $0x40] sm:$0xff]
    %v6971 = vld [vmem:[#allocation6 + $0x48] sm:$0xff]
    %v6972 = vld [vmem:[#allocation6 + $0x50] sm:$0xff]
    %v6973 = vld [vmem:[#allocation6 + $0x58] sm:$0xff]
    %v6974 = vld [vmem:[#allocation6 + $0x60] sm:$0xff]
    %v6975 = vld [vmem:[#allocation6 + $0x68] sm:$0xff]
    %v6976 = vld [vmem:[#allocation6 + $0x70] sm:$0xff]
    %v6977 = vld [vmem:[#allocation6 + $0x78] sm:$0xff]
    %v6978 = vld [vmem:[#allocation6 + $0x80] sm:$0xff]
    %v6979 = vld [vmem:[#allocation6 + $0x88] sm:$0xff]
    %v6980 = vld [vmem:[#allocation6 + $0x90] sm:$0xff]
    %v6981 = vld [vmem:[#allocation6 + $0x98] sm:$0xff]
    %v6982 = vld [vmem:[#allocation6 + $0xa0] sm:$0xff]
    %v6983 = vld [vmem:[#allocation6 + $0xa8] sm:$0xff]
    %v6984 = vld [vmem:[#allocation6 + $0xb0] sm:$0xff]
    %v6985 = vld [vmem:[#allocation6 + $0xb8] sm:$0xff]
    %v6986 = vld [vmem:[#allocation6 + $0xc0] sm:$0xff]
    %v6987 = vld [vmem:[#allocation6 + $0xc8] sm:$0xff]
    %v6988 = vld [vmem:[#allocation6 + $0xd0] sm:$0xff]
    %v6989 = vld [vmem:[#allocation6 + $0xd8] sm:$0xff]
    %v6990 = vld [vmem:[#allocation6 + $0xe0] sm:$0xff]
    %v6991 = vld [vmem:[#allocation6 + $0xe8] sm:$0xff]
    %v6992 = vld [vmem:[#allocation6 + $0xf0] sm:$0xff]
    %v6993 = vld [vmem:[#allocation6 + $0xf8] sm:$0xff]
    %v6994 = vld [vmem:[#allocation6 + $0x100] sm:$0xff]
    %v6995 = vld [vmem:[#allocation6 + $0x108] sm:$0xff]
    %v6996 = vld [vmem:[#allocation6 + $0x110] sm:$0xff]
    %v6997 = vld [vmem:[#allocation6 + $0x118] sm:$0xff]
    %v6998 = vld [vmem:[#allocation6 + $0x120] sm:$0xff]
    %v6999 = vld [vmem:[#allocation6 + $0x128] sm:$0xff]
    %v7000 = vld [vmem:[#allocation6 + $0x130] sm:$0xff]
    %v7001 = vld [vmem:[#allocation6 + $0x138] sm:$0xff]
    %v7002 = vld [vmem:[#allocation6 + $0x140] sm:$0xff]
    %v7003 = vld [vmem:[#allocation6 + $0x148] sm:$0xff]
    %v7004 = vld [vmem:[#allocation6 + $0x150] sm:$0xff]
    %v7005 = vld [vmem:[#allocation6 + $0x158] sm:$0xff]
    %v7006 = vld [vmem:[#allocation6 + $0x160] sm:$0xff]
    %v7007 = vld [vmem:[#allocation6 + $0x168] sm:$0xff]
    %v7008 = vld [vmem:[#allocation6 + $0x170] sm:$0xff]
    %v7009 = vld [vmem:[#allocation6 + $0x178] sm:$0xff]
    %v7010 = vld [vmem:[#allocation6 + $0x180] sm:$0xff]
    %v7011 = vld [vmem:[#allocation6 + $0x188] sm:$0xff]
    %v7012 = vld [vmem:[#allocation6 + $0x190] sm:$0xff]
    %v7013 = vld [vmem:[#allocation6 + $0x198] sm:$0xff]
    %v7014 = vld [vmem:[#allocation6 + $0x1a0] sm:$0xff]
    %v7015 = vld [vmem:[#allocation6 + $0x1a8] sm:$0xff]
    %v7016 = vld [vmem:[#allocation6 + $0x1b0] sm:$0xff]
    %v7017 = vld [vmem:[#allocation6 + $0x1b8] sm:$0xff]
    %v7018 = vld [vmem:[#allocation6 + $0x1c0] sm:$0xff]
    %v7019 = vld [vmem:[#allocation6 + $0x1c8] sm:$0xff]
    %v7020 = vld [vmem:[#allocation6 + $0x1d0] sm:$0xff]
    %v7021 = vld [vmem:[#allocation6 + $0x1d8] sm:$0xff]
    %v7022 = vld [vmem:[#allocation6 + $0x1e0] sm:$0xff]
    %v7023 = vld [vmem:[#allocation6 + $0x1e8] sm:$0xff]
    %v7024 = vld [vmem:[#allocation6 + $0x1f0] sm:$0xff]
    %v7025 = vld [vmem:[#allocation6 + $0x1f8] sm:$0xff]
    %v7026 = vld [vmem:[#allocation6 + $0x200] sm:$0xff]
    %v7027 = vld [vmem:[#allocation6 + $0x208] sm:$0xff]
    %v7028 = vld [vmem:[#allocation6 + $0x210] sm:$0xff]
    %v7029 = vld [vmem:[#allocation6 + $0x218] sm:$0xff]
    %v7030 = vld [vmem:[#allocation6 + $0x220] sm:$0xff]
    %v7031 = vld [vmem:[#allocation6 + $0x228] sm:$0xff]
    %v7032 = vld [vmem:[#allocation6 + $0x230] sm:$0xff]
    %v7033 = vld [vmem:[#allocation6 + $0x238] sm:$0xff]
    %v7034 = vld [vmem:[#allocation6 + $0x240] sm:$0xff]
    %v7035 = vld [vmem:[#allocation6 + $0x248] sm:$0xff]
    %v7036 = vld [vmem:[#allocation6 + $0x250] sm:$0xff]
    %v7037 = vld [vmem:[#allocation6 + $0x258] sm:$0xff]
    %v7038 = vld [vmem:[#allocation6 + $0x260] sm:$0xff]
    %v7039 = vld [vmem:[#allocation6 + $0x268] sm:$0xff]
    %v7040 = vld [vmem:[#allocation6 + $0x270] sm:$0xff]
    %v7041 = vld [vmem:[#allocation6 + $0x278] sm:$0xff]
    %v7042 = vld [vmem:[#allocation6 + $0x280] sm:$0xff]
    %v7043 = vld [vmem:[#allocation6 + $0x288] sm:$0xff]
    %v7044 = vld [vmem:[#allocation6 + $0x290] sm:$0xff]
    %v7045 = vld [vmem:[#allocation6 + $0x298] sm:$0xff]
    %v7046 = vld [vmem:[#allocation6 + $0x2a0] sm:$0xff]
    %v7047 = vld [vmem:[#allocation6 + $0x2a8] sm:$0xff]
    %v7048 = vld [vmem:[#allocation6 + $0x2b0] sm:$0xff]
    %v7049 = vld [vmem:[#allocation6 + $0x2b8] sm:$0xff]
    %v7050 = vld [vmem:[#allocation6 + $0x2c0] sm:$0xff]
    %v7051 = vld [vmem:[#allocation6 + $0x2c8] sm:$0xff]
    %v7052 = vld [vmem:[#allocation6 + $0x2d0] sm:$0xff]
    %v7053 = vld [vmem:[#allocation6 + $0x2d8] sm:$0xff]
    %v7054 = vld [vmem:[#allocation6 + $0x2e0] sm:$0xff]
    %v7055 = vld [vmem:[#allocation6 + $0x2e8] sm:$0xff]
    %v7056 = vld [vmem:[#allocation6 + $0x2f0] sm:$0xff]
    %v7057 = vld [vmem:[#allocation6 + $0x2f8] sm:$0xff]
    %v7058 = vld [vmem:[#allocation6 + $0x300] sm:$0xff]
    %v7059 = vld [vmem:[#allocation6 + $0x308] sm:$0xff]
    %v7060 = vld [vmem:[#allocation6 + $0x310] sm:$0xff]
    %v7061 = vld [vmem:[#allocation6 + $0x318] sm:$0xff]
    %v7062 = vld [vmem:[#allocation6 + $0x320] sm:$0xff]
    %v7063 = vld [vmem:[#allocation6 + $0x328] sm:$0xff]
    %v7064 = vld [vmem:[#allocation6 + $0x330] sm:$0xff]
    %v7065 = vld [vmem:[#allocation6 + $0x338] sm:$0xff]
    %v7066 = vld [vmem:[#allocation6 + $0x340] sm:$0xff]
    %v7067 = vld [vmem:[#allocation6 + $0x348] sm:$0xff]
    %v7068 = vld [vmem:[#allocation6 + $0x350] sm:$0xff]
    %v7069 = vld [vmem:[#allocation6 + $0x358] sm:$0xff]
    %v7070 = vld [vmem:[#allocation6 + $0x360] sm:$0xff]
    %v7071 = vld [vmem:[#allocation6 + $0x368] sm:$0xff]
    %v7072 = vld [vmem:[#allocation6 + $0x370] sm:$0xff]
    %v7073 = vld [vmem:[#allocation6 + $0x378] sm:$0xff]
    %v7074 = vld [vmem:[#allocation6 + $0x380] sm:$0xff]
    %v7075 = vld [vmem:[#allocation6 + $0x388] sm:$0xff]
    %v7076 = vld [vmem:[#allocation6 + $0x390] sm:$0xff]
    %v7077 = vld [vmem:[#allocation6 + $0x398] sm:$0xff]
    %v7078 = vld [vmem:[#allocation6 + $0x3a0] sm:$0xff]
    %v7079 = vld [vmem:[#allocation6 + $0x3a8] sm:$0xff]
    %v7080 = vld [vmem:[#allocation6 + $0x3b0] sm:$0xff]
    %v7081 = vld [vmem:[#allocation6 + $0x3b8] sm:$0xff]
    %v7082 = vld [vmem:[#allocation6 + $0x3c0] sm:$0xff]
    %v7083 = vld [vmem:[#allocation6 + $0x3c8] sm:$0xff]
    %v7084 = vld [vmem:[#allocation6 + $0x3d0] sm:$0xff]
    %v7085 = vld [vmem:[#allocation6 + $0x3d8] sm:$0xff]
    %v7086 = vld [vmem:[#allocation6 + $0x3e0] sm:$0xff]
    %v7087 = vld [vmem:[#allocation6 + $0x3e8] sm:$0xff]
    %v7088 = vld [vmem:[#allocation6 + $0x3f0] sm:$0xff]
    %v7089 = vld [vmem:[#allocation6 + $0x3f8] sm:$0xff]
    %v7090 = vld [vmem:[#allocation6 + $0x400] sm:$0xff]
    %v7091 = vld [vmem:[#allocation6 + $0x408] sm:$0xff]
    %v7092 = vld [vmem:[#allocation6 + $0x410] sm:$0xff]
    %v7093 = vld [vmem:[#allocation6 + $0x418] sm:$0xff]
    %v7094 = vld [vmem:[#allocation6 + $0x420] sm:$0xff]
    %v7095 = vld [vmem:[#allocation6 + $0x428] sm:$0xff]
    %v7096 = vld [vmem:[#allocation6 + $0x430] sm:$0xff]
    %v7097 = vld [vmem:[#allocation6 + $0x438] sm:$0xff]
    %v7098 = vld [vmem:[#allocation6 + $0x440] sm:$0xff]
    %v7099 = vld [vmem:[#allocation6 + $0x448] sm:$0xff]
    %v7100 = vld [vmem:[#allocation6 + $0x450] sm:$0xff]
    %v7101 = vld [vmem:[#allocation6 + $0x458] sm:$0xff]
    %v7102 = vld [vmem:[#allocation6 + $0x460] sm:$0xff]
    %v7103 = vld [vmem:[#allocation6 + $0x468] sm:$0xff]
    %v7104 = vld [vmem:[#allocation6 + $0x470] sm:$0xff]
    %v7105 = vld [vmem:[#allocation6 + $0x478] sm:$0xff]
    %v7106 = vld [vmem:[#allocation6 + $0x480] sm:$0xff]
    %v7107 = vld [vmem:[#allocation6 + $0x488] sm:$0xff]
    %v7108 = vld [vmem:[#allocation6 + $0x490] sm:$0xff]
    %v7109 = vld [vmem:[#allocation6 + $0x498] sm:$0xff]
    %v7110 = vld [vmem:[#allocation6 + $0x4a0] sm:$0xff]
    %v7111 = vld [vmem:[#allocation6 + $0x4a8] sm:$0xff]
    %v7112 = vld [vmem:[#allocation6 + $0x4b0] sm:$0xff]
    %v7113 = vld [vmem:[#allocation6 + $0x4b8] sm:$0xff]
    %v7114 = vld [vmem:[#allocation6 + $0x4c0] sm:$0xff]
    %v7115 = vld [vmem:[#allocation6 + $0x4c8] sm:$0xff]
    %v7116 = vld [vmem:[#allocation6 + $0x4d0] sm:$0xff]
    %v7117 = vld [vmem:[#allocation6 + $0x4d8] sm:$0xff]
    %v7118 = vld [vmem:[#allocation6 + $0x4e0] sm:$0xff]
    %v7119 = vld [vmem:[#allocation6 + $0x4e8] sm:$0xff]
    %v7120 = vld [vmem:[#allocation6 + $0x4f0] sm:$0xff]
    %v7121 = vld [vmem:[#allocation6 + $0x4f8] sm:$0xff]
    %v7122 = vld [vmem:[#allocation6 + $0x500] sm:$0xff]
    %v7123 = vld [vmem:[#allocation6 + $0x508] sm:$0xff]
    %v7124 = vld [vmem:[#allocation6 + $0x510] sm:$0xff]
    %v7125 = vld [vmem:[#allocation6 + $0x518] sm:$0xff]
    %v7126 = vld [vmem:[#allocation6 + $0x520] sm:$0xff]
    %v7127 = vld [vmem:[#allocation6 + $0x528] sm:$0xff]
    %v7128 = vld [vmem:[#allocation6 + $0x530] sm:$0xff]
    %v7129 = vld [vmem:[#allocation6 + $0x538] sm:$0xff]
    %v7130 = vld [vmem:[#allocation6 + $0x540] sm:$0xff]
    %v7131 = vld [vmem:[#allocation6 + $0x548] sm:$0xff]
    %v7132 = vld [vmem:[#allocation6 + $0x550] sm:$0xff]
    %v7133 = vld [vmem:[#allocation6 + $0x558] sm:$0xff]
    %v7134 = vld [vmem:[#allocation6 + $0x560] sm:$0xff]
    %v7135 = vld [vmem:[#allocation6 + $0x568] sm:$0xff]
    %v7136 = vld [vmem:[#allocation6 + $0x570] sm:$0xff]
    %v7137 = vld [vmem:[#allocation6 + $0x578] sm:$0xff]
    %v7138 = vld [vmem:[#allocation6 + $0x580] sm:$0xff]
    %v7139 = vld [vmem:[#allocation6 + $0x588] sm:$0xff]
    %v7140 = vld [vmem:[#allocation6 + $0x590] sm:$0xff]
    %v7141 = vld [vmem:[#allocation6 + $0x598] sm:$0xff]
    %v7142 = vld [vmem:[#allocation6 + $0x5a0] sm:$0xff]
    %v7143 = vld [vmem:[#allocation6 + $0x5a8] sm:$0xff]
    %v7144 = vld [vmem:[#allocation6 + $0x5b0] sm:$0xff]
    %v7145 = vld [vmem:[#allocation6 + $0x5b8] sm:$0xff]
    %v7146 = vld [vmem:[#allocation6 + $0x5c0] sm:$0xff]
    %v7147 = vld [vmem:[#allocation6 + $0x5c8] sm:$0xff]
    %v7148 = vld [vmem:[#allocation6 + $0x5d0] sm:$0xff]
    %v7149 = vld [vmem:[#allocation6 + $0x5d8] sm:$0xff]
    %v7150 = vld [vmem:[#allocation6 + $0x5e0] sm:$0xff]
    %v7151 = vld [vmem:[#allocation6 + $0x5e8] sm:$0xff]
    %v7152 = vld [vmem:[#allocation6 + $0x5f0] sm:$0xff]
    %v7153 = vld [vmem:[#allocation6 + $0x5f8] sm:$0xff]
    %v7154 = vld [vmem:[#allocation6 + $0x600] sm:$0xff]
    %v7155 = vld [vmem:[#allocation6 + $0x608] sm:$0xff]
    %v7156 = vld [vmem:[#allocation6 + $0x610] sm:$0xff]
    %v7157 = vld [vmem:[#allocation6 + $0x618] sm:$0xff]
    %v7158 = vld [vmem:[#allocation6 + $0x620] sm:$0xff]
    %v7159 = vld [vmem:[#allocation6 + $0x628] sm:$0xff]
    %v7160 = vld [vmem:[#allocation6 + $0x630] sm:$0xff]
    %v7161 = vld [vmem:[#allocation6 + $0x638] sm:$0xff]
    %v7162 = vld [vmem:[#allocation6 + $0x640] sm:$0xff]
    %v7163 = vld [vmem:[#allocation6 + $0x648] sm:$0xff]
    %v7164 = vld [vmem:[#allocation6 + $0x650] sm:$0xff]
    %v7165 = vld [vmem:[#allocation6 + $0x658] sm:$0xff]
    %v7166 = vld [vmem:[#allocation6 + $0x660] sm:$0xff]
    %v7167 = vld [vmem:[#allocation6 + $0x668] sm:$0xff]
    %v7168 = vld [vmem:[#allocation6 + $0x670] sm:$0xff]
    %v7169 = vld [vmem:[#allocation6 + $0x678] sm:$0xff]
    %v7170 = vld [vmem:[#allocation6 + $0x680] sm:$0xff]
    %v7171 = vld [vmem:[#allocation6 + $0x688] sm:$0xff]
    %v7172 = vld [vmem:[#allocation6 + $0x690] sm:$0xff]
    %v7173 = vld [vmem:[#allocation6 + $0x698] sm:$0xff]
    %v7174 = vld [vmem:[#allocation6 + $0x6a0] sm:$0xff]
    %v7175 = vld [vmem:[#allocation6 + $0x6a8] sm:$0xff]
    %v7176 = vld [vmem:[#allocation6 + $0x6b0] sm:$0xff]
    %v7177 = vld [vmem:[#allocation6 + $0x6b8] sm:$0xff]
    %v7178 = vld [vmem:[#allocation6 + $0x6c0] sm:$0xff]
    %v7179 = vld [vmem:[#allocation6 + $0x6c8] sm:$0xff]
    %v7180 = vld [vmem:[#allocation6 + $0x6d0] sm:$0xff]
    %v7181 = vld [vmem:[#allocation6 + $0x6d8] sm:$0xff]
    %v7182 = vld [vmem:[#allocation6 + $0x6e0] sm:$0xff]
    %v7183 = vld [vmem:[#allocation6 + $0x6e8] sm:$0xff]
    %v7184 = vld [vmem:[#allocation6 + $0x6f0] sm:$0xff]
    %v7185 = vld [vmem:[#allocation6 + $0x6f8] sm:$0xff]
    %v7186 = vld [vmem:[#allocation6 + $0x700] sm:$0xff]
    %v7187 = vld [vmem:[#allocation6 + $0x708] sm:$0xff]
    %v7188 = vld [vmem:[#allocation6 + $0x710] sm:$0xff]
    %v7189 = vld [vmem:[#allocation6 + $0x718] sm:$0xff]
    %v7190 = vld [vmem:[#allocation6 + $0x720] sm:$0xff]
    %v7191 = vld [vmem:[#allocation6 + $0x728] sm:$0xff]
    %v7192 = vld [vmem:[#allocation6 + $0x730] sm:$0xff]
    %v7193 = vld [vmem:[#allocation6 + $0x738] sm:$0xff]
    %v7194 = vld [vmem:[#allocation6 + $0x740] sm:$0xff]
    %v7195 = vld [vmem:[#allocation6 + $0x748] sm:$0xff]
    %v7196 = vld [vmem:[#allocation6 + $0x750] sm:$0xff]
    %v7197 = vld [vmem:[#allocation6 + $0x758] sm:$0xff]
    %v7198 = vld [vmem:[#allocation6 + $0x760] sm:$0xff]
    %v7199 = vld [vmem:[#allocation6 + $0x768] sm:$0xff]
    %v7200 = vld [vmem:[#allocation6 + $0x770] sm:$0xff]
    %v7201 = vld [vmem:[#allocation6 + $0x778] sm:$0xff]
    %v7202 = vld [vmem:[#allocation6 + $0x780] sm:$0xff]
    %v7203 = vld [vmem:[#allocation6 + $0x788] sm:$0xff]
    %v7204 = vld [vmem:[#allocation6 + $0x790] sm:$0xff]
    %v7205 = vld [vmem:[#allocation6 + $0x798] sm:$0xff]
    %v7206 = vld [vmem:[#allocation6 + $0x7a0] sm:$0xff]
    %v7207 = vld [vmem:[#allocation6 + $0x7a8] sm:$0xff]
    %v7208 = vld [vmem:[#allocation6 + $0x7b0] sm:$0xff]
    %v7209 = vld [vmem:[#allocation6 + $0x7b8] sm:$0xff]
    %v7210 = vld [vmem:[#allocation6 + $0x7c0] sm:$0xff]
    %v7211 = vld [vmem:[#allocation6 + $0x7c8] sm:$0xff]
    %v7212 = vld [vmem:[#allocation6 + $0x7d0] sm:$0xff]
    %v7213 = vld [vmem:[#allocation6 + $0x7d8] sm:$0xff]
    %v7214 = vld [vmem:[#allocation6 + $0x7e0] sm:$0xff]
    %v7215 = vld [vmem:[#allocation6 + $0x7e8] sm:$0xff]
    %v7216 = vld [vmem:[#allocation6 + $0x7f0] sm:$0xff]
    %v7217 = vld [vmem:[#allocation6 + $0x7f8] sm:$0xff]
    %v7218 = vld [vmem:[#allocation6 + $0x800] sm:$0xff]
    %v7219 = vld [vmem:[#allocation6 + $0x808] sm:$0xff]
    %v7220 = vld [vmem:[#allocation6 + $0x810] sm:$0xff]
    %v7221 = vld [vmem:[#allocation6 + $0x818] sm:$0xff]
    %v7222 = vld [vmem:[#allocation6 + $0x820] sm:$0xff]
    %v7223 = vld [vmem:[#allocation6 + $0x828] sm:$0xff]
    %v7224 = vld [vmem:[#allocation6 + $0x830] sm:$0xff]
    %v7225 = vld [vmem:[#allocation6 + $0x838] sm:$0xff]
    %v7226 = vld [vmem:[#allocation6 + $0x840] sm:$0xff]
    %v7227 = vld [vmem:[#allocation6 + $0x848] sm:$0xff]
    %v7228 = vld [vmem:[#allocation6 + $0x850] sm:$0xff]
    %v7229 = vld [vmem:[#allocation6 + $0x858] sm:$0xff]
    %v7230 = vld [vmem:[#allocation6 + $0x860] sm:$0xff]
    %v7231 = vld [vmem:[#allocation6 + $0x868] sm:$0xff]
    %v7232 = vld [vmem:[#allocation6 + $0x870] sm:$0xff]
    %v7233 = vld [vmem:[#allocation6 + $0x878] sm:$0xff]
    %v7234 = vld [vmem:[#allocation6 + $0x880] sm:$0xff]
    %v7235 = vld [vmem:[#allocation6 + $0x888] sm:$0xff]
    %v7236 = vld [vmem:[#allocation6 + $0x890] sm:$0xff]
    %v7237 = vld [vmem:[#allocation6 + $0x898] sm:$0xff]
    %v7238 = vld [vmem:[#allocation6 + $0x8a0] sm:$0xff]
    %v7239 = vld [vmem:[#allocation6 + $0x8a8] sm:$0xff]
    %v7240 = vld [vmem:[#allocation6 + $0x8b0] sm:$0xff]
    %v7241 = vld [vmem:[#allocation6 + $0x8b8] sm:$0xff]
    %v7242 = vld [vmem:[#allocation6 + $0x8c0] sm:$0xff]
    %v7243 = vld [vmem:[#allocation6 + $0x8c8] sm:$0xff]
    %v7244 = vld [vmem:[#allocation6 + $0x8d0] sm:$0xff]
    %v7245 = vld [vmem:[#allocation6 + $0x8d8] sm:$0xff]
    %v7246 = vld [vmem:[#allocation6 + $0x8e0] sm:$0xff]
    %v7247 = vld [vmem:[#allocation6 + $0x8e8] sm:$0xff]
    %v7248 = vld [vmem:[#allocation6 + $0x8f0] sm:$0xff]
    %v7249 = vld [vmem:[#allocation6 + $0x8f8] sm:$0xff]
    %v7250 = vld [vmem:[#allocation7] sm:$0xf]
    %v7252 = vperm.slane %v7250, 0
    %v7253 = vperm.slane %v7250, 1
    %v7254 = vperm.slane %v7250, 2
    %v7255 = vperm.slane %v7250, 3
    %v7548 = vunpack.c.l.b16 %v6962
    %v7549 = vunpack.c.h.b16 %v6962
    %v7550 = vunpack.c.l.b16 %v6963
    %v7551 = vunpack.c.h.b16 %v6963
    %v7552 = vunpack.c.l.b16 %v6964
    %v7553 = vunpack.c.h.b16 %v6964
    %v7554 = vunpack.c.l.b16 %v6965
    %v7555 = vunpack.c.h.b16 %v6965
    %v7556 = vunpack.c.l.b16 %v6966
    %v7557 = vunpack.c.h.b16 %v6966
    %v7558 = vunpack.c.l.b16 %v6967
    %v7559 = vunpack.c.h.b16 %v6967
    %v7560 = vunpack.c.l.b16 %v6968
    %v7561 = vunpack.c.h.b16 %v6968
    %v7562 = vunpack.c.l.b16 %v6969
    %v7563 = vunpack.c.h.b16 %v6969
    %v7564 = vunpack.c.l.b16 %v6970
    %v7565 = vunpack.c.h.b16 %v6970
    %v7566 = vunpack.c.l.b16 %v6971
    %v7567 = vunpack.c.h.b16 %v6971
    %v7568 = vunpack.c.l.b16 %v6972
    %v7569 = vunpack.c.h.b16 %v6972
    %v7570 = vunpack.c.l.b16 %v6973
    %v7571 = vunpack.c.h.b16 %v6973
    %v7572 = vunpack.c.l.b16 %v6974
    %v7573 = vunpack.c.h.b16 %v6974
    %v7574 = vunpack.c.l.b16 %v6975
    %v7575 = vunpack.c.h.b16 %v6975
    %v7576 = vunpack.c.l.b16 %v6976
    %v7577 = vunpack.c.h.b16 %v6976
    %v7578 = vunpack.c.l.b16 %v6977
    %v7579 = vunpack.c.h.b16 %v6977
    %v7580 = vunpack.c.l.b16 %v6978
    %v7581 = vunpack.c.h.b16 %v6978
    %v7582 = vunpack.c.l.b16 %v6979
    %v7583 = vunpack.c.h.b16 %v6979
    %v7584 = vunpack.c.l.b16 %v6980
    %v7585 = vunpack.c.h.b16 %v6980
    %v7586 = vunpack.c.l.b16 %v6981
    %v7587 = vunpack.c.h.b16 %v6981
    %v7588 = vunpack.c.l.b16 %v6982
    %v7589 = vunpack.c.h.b16 %v6982
    %v7590 = vunpack.c.l.b16 %v6983
    %v7591 = vunpack.c.h.b16 %v6983
    %v7592 = vunpack.c.l.b16 %v6984
    %v7593 = vunpack.c.h.b16 %v6984
    %v7594 = vunpack.c.l.b16 %v6985
    %v7595 = vunpack.c.h.b16 %v6985
    %v7596 = vunpack.c.l.b16 %v6986
    %v7597 = vunpack.c.h.b16 %v6986
    %v7598 = vunpack.c.l.b16 %v6987
    %v7599 = vunpack.c.h.b16 %v6987
    %v7600 = vunpack.c.l.b16 %v6988
    %v7601 = vunpack.c.h.b16 %v6988
    %v7602 = vunpack.c.l.b16 %v6989
    %v7603 = vunpack.c.h.b16 %v6989
    %v7604 = vunpack.c.l.b16 %v6990
    %v7605 = vunpack.c.h.b16 %v6990
    %v7606 = vunpack.c.l.b16 %v6991
    %v7607 = vunpack.c.h.b16 %v6991
    %v7608 = vunpack.c.l.b16 %v6992
    %v7609 = vunpack.c.h.b16 %v6992
    %v7610 = vunpack.c.l.b16 %v6993
    %v7611 = vunpack.c.h.b16 %v6993
    %v7612 = vunpack.c.l.b16 %v6994
    %v7613 = vunpack.c.h.b16 %v6994
    %v7614 = vunpack.c.l.b16 %v6995
    %v7615 = vunpack.c.h.b16 %v6995
    %v7616 = vunpack.c.l.b16 %v6996
    %v7617 = vunpack.c.h.b16 %v6996
    %v7618 = vunpack.c.l.b16 %v6997
    %v7619 = vunpack.c.h.b16 %v6997
    %v7620 = vunpack.c.l.b16 %v6998
    %v7621 = vunpack.c.h.b16 %v6998
    %v7622 = vunpack.c.l.b16 %v6999
    %v7623 = vunpack.c.h.b16 %v6999
    %v7624 = vunpack.c.l.b16 %v7000
    %v7625 = vunpack.c.h.b16 %v7000
    %v7626 = vunpack.c.l.b16 %v7001
    %v7627 = vunpack.c.h.b16 %v7001
    %v7628 = vunpack.c.l.b16 %v7002
    %v7629 = vunpack.c.h.b16 %v7002
    %v7630 = vunpack.c.l.b16 %v7003
    %v7631 = vunpack.c.h.b16 %v7003
    %v7632 = vunpack.c.l.b16 %v7004
    %v7633 = vunpack.c.h.b16 %v7004
    %v7634 = vunpack.c.l.b16 %v7005
    %v7635 = vunpack.c.h.b16 %v7005
    %v7636 = vunpack.c.l.b16 %v7006
    %v7637 = vunpack.c.h.b16 %v7006
    %v7638 = vunpack.c.l.b16 %v7007
    %v7639 = vunpack.c.h.b16 %v7007
    %v7640 = vunpack.c.l.b16 %v7008
    %v7641 = vunpack.c.h.b16 %v7008
    %v7642 = vunpack.c.l.b16 %v7009
    %v7643 = vunpack.c.h.b16 %v7009
    %v7644 = vunpack.c.l.b16 %v7010
    %v7645 = vunpack.c.h.b16 %v7010
    %v7646 = vunpack.c.l.b16 %v7011
    %v7647 = vunpack.c.h.b16 %v7011
    %v7648 = vunpack.c.l.b16 %v7012
    %v7649 = vunpack.c.h.b16 %v7012
    %v7650 = vunpack.c.l.b16 %v7013
    %v7651 = vunpack.c.h.b16 %v7013
    %v7652 = vunpack.c.l.b16 %v7014
    %v7653 = vunpack.c.h.b16 %v7014
    %v7654 = vunpack.c.l.b16 %v7015
    %v7655 = vunpack.c.h.b16 %v7015
    %v7656 = vunpack.c.l.b16 %v7016
    %v7657 = vunpack.c.h.b16 %v7016
    %v7658 = vunpack.c.l.b16 %v7017
    %v7659 = vunpack.c.h.b16 %v7017
    %v7660 = vunpack.c.l.b16 %v7018
    %v7661 = vunpack.c.h.b16 %v7018
    %v7662 = vunpack.c.l.b16 %v7019
    %v7663 = vunpack.c.h.b16 %v7019
    %v7664 = vunpack.c.l.b16 %v7020
    %v7665 = vunpack.c.h.b16 %v7020
    %v7666 = vunpack.c.l.b16 %v7021
    %v7667 = vunpack.c.h.b16 %v7021
    %v7668 = vunpack.c.l.b16 %v7022
    %v7669 = vunpack.c.h.b16 %v7022
    %v7670 = vunpack.c.l.b16 %v7023
    %v7671 = vunpack.c.h.b16 %v7023
    %v7672 = vunpack.c.l.b16 %v7024
    %v7673 = vunpack.c.h.b16 %v7024
    %v7674 = vunpack.c.l.b16 %v7025
    %v7675 = vunpack.c.h.b16 %v7025
    %v7676 = vunpack.c.l.b16 %v7026
    %v7677 = vunpack.c.h.b16 %v7026
    %v7678 = vunpack.c.l.b16 %v7027
    %v7679 = vunpack.c.h.b16 %v7027
    %v7680 = vunpack.c.l.b16 %v7028
    %v7681 = vunpack.c.h.b16 %v7028
    %v7682 = vunpack.c.l.b16 %v7029
    %v7683 = vunpack.c.h.b16 %v7029
    %v7684 = vunpack.c.l.b16 %v7030
    %v7685 = vunpack.c.h.b16 %v7030
    %v7686 = vunpack.c.l.b16 %v7031
    %v7687 = vunpack.c.h.b16 %v7031
    %v7688 = vunpack.c.l.b16 %v7032
    %v7689 = vunpack.c.h.b16 %v7032
    %v7690 = vunpack.c.l.b16 %v7033
    %v7691 = vunpack.c.h.b16 %v7033
    %v7692 = vunpack.c.l.b16 %v7034
    %v7693 = vunpack.c.h.b16 %v7034
    %v7694 = vunpack.c.l.b16 %v7035
    %v7695 = vunpack.c.h.b16 %v7035
    %v7696 = vunpack.c.l.b16 %v7036
    %v7697 = vunpack.c.h.b16 %v7036
    %v7698 = vunpack.c.l.b16 %v7037
    %v7699 = vunpack.c.h.b16 %v7037
    %v7700 = vunpack.c.l.b16 %v7038
    %v7701 = vunpack.c.h.b16 %v7038
    %v7702 = vunpack.c.l.b16 %v7039
    %v7703 = vunpack.c.h.b16 %v7039
    %v7704 = vunpack.c.l.b16 %v7040
    %v7705 = vunpack.c.h.b16 %v7040
    %v7706 = vunpack.c.l.b16 %v7041
    %v7707 = vunpack.c.h.b16 %v7041
    %v7708 = vunpack.c.l.b16 %v7042
    %v7709 = vunpack.c.h.b16 %v7042
    %v7710 = vunpack.c.l.b16 %v7043
    %v7711 = vunpack.c.h.b16 %v7043
    %v7712 = vunpack.c.l.b16 %v7044
    %v7713 = vunpack.c.h.b16 %v7044
    %v7714 = vunpack.c.l.b16 %v7045
    %v7715 = vunpack.c.h.b16 %v7045
    %v7716 = vunpack.c.l.b16 %v7046
    %v7717 = vunpack.c.h.b16 %v7046
    %v7718 = vunpack.c.l.b16 %v7047
    %v7719 = vunpack.c.h.b16 %v7047
    %v7720 = vunpack.c.l.b16 %v7048
    %v7721 = vunpack.c.h.b16 %v7048
    %v7722 = vunpack.c.l.b16 %v7049
    %v7723 = vunpack.c.h.b16 %v7049
    %v7724 = vunpack.c.l.b16 %v7050
    %v7725 = vunpack.c.h.b16 %v7050
    %v7726 = vunpack.c.l.b16 %v7051
    %v7727 = vunpack.c.h.b16 %v7051
    %v7728 = vunpack.c.l.b16 %v7052
    %v7729 = vunpack.c.h.b16 %v7052
    %v7730 = vunpack.c.l.b16 %v7053
    %v7731 = vunpack.c.h.b16 %v7053
    %v7732 = vunpack.c.l.b16 %v7054
    %v7733 = vunpack.c.h.b16 %v7054
    %v7734 = vunpack.c.l.b16 %v7055
    %v7735 = vunpack.c.h.b16 %v7055
    %v7736 = vunpack.c.l.b16 %v7056
    %v7737 = vunpack.c.h.b16 %v7056
    %v7738 = vunpack.c.l.b16 %v7057
    %v7739 = vunpack.c.h.b16 %v7057
    %v7740 = vunpack.c.l.b16 %v7058
    %v7741 = vunpack.c.h.b16 %v7058
    %v7742 = vunpack.c.l.b16 %v7059
    %v7743 = vunpack.c.h.b16 %v7059
    %v7744 = vunpack.c.l.b16 %v7060
    %v7745 = vunpack.c.h.b16 %v7060
    %v7746 = vunpack.c.l.b16 %v7061
    %v7747 = vunpack.c.h.b16 %v7061
    %v7748 = vunpack.c.l.b16 %v7062
    %v7749 = vunpack.c.h.b16 %v7062
    %v7750 = vunpack.c.l.b16 %v7063
    %v7751 = vunpack.c.h.b16 %v7063
    %v7752 = vunpack.c.l.b16 %v7064
    %v7753 = vunpack.c.h.b16 %v7064
    %v7754 = vunpack.c.l.b16 %v7065
    %v7755 = vunpack.c.h.b16 %v7065
    %v7756 = vunpack.c.l.b16 %v7066
    %v7757 = vunpack.c.h.b16 %v7066
    %v7758 = vunpack.c.l.b16 %v7067
    %v7759 = vunpack.c.h.b16 %v7067
    %v7760 = vunpack.c.l.b16 %v7068
    %v7761 = vunpack.c.h.b16 %v7068
    %v7762 = vunpack.c.l.b16 %v7069
    %v7763 = vunpack.c.h.b16 %v7069
    %v7764 = vunpack.c.l.b16 %v7070
    %v7765 = vunpack.c.h.b16 %v7070
    %v7766 = vunpack.c.l.b16 %v7071
    %v7767 = vunpack.c.h.b16 %v7071
    %v7768 = vunpack.c.l.b16 %v7072
    %v7769 = vunpack.c.h.b16 %v7072
    %v7770 = vunpack.c.l.b16 %v7073
    %v7771 = vunpack.c.h.b16 %v7073
    %v7772 = vunpack.c.l.b16 %v7074
    %v7773 = vunpack.c.h.b16 %v7074
    %v7774 = vunpack.c.l.b16 %v7075
    %v7775 = vunpack.c.h.b16 %v7075
    %v7776 = vunpack.c.l.b16 %v7076
    %v7777 = vunpack.c.h.b16 %v7076
    %v7778 = vunpack.c.l.b16 %v7077
    %v7779 = vunpack.c.h.b16 %v7077
    %v7780 = vunpack.c.l.b16 %v7078
    %v7781 = vunpack.c.h.b16 %v7078
    %v7782 = vunpack.c.l.b16 %v7079
    %v7783 = vunpack.c.h.b16 %v7079
    %v7784 = vunpack.c.l.b16 %v7080
    %v7785 = vunpack.c.h.b16 %v7080
    %v7786 = vunpack.c.l.b16 %v7081
    %v7787 = vunpack.c.h.b16 %v7081
    %v7788 = vunpack.c.l.b16 %v7082
    %v7789 = vunpack.c.h.b16 %v7082
    %v7790 = vunpack.c.l.b16 %v7083
    %v7791 = vunpack.c.h.b16 %v7083
    %v7792 = vunpack.c.l.b16 %v7084
    %v7793 = vunpack.c.h.b16 %v7084
    %v7794 = vunpack.c.l.b16 %v7085
    %v7795 = vunpack.c.h.b16 %v7085
    %v7796 = vunpack.c.l.b16 %v7086
    %v7797 = vunpack.c.h.b16 %v7086
    %v7798 = vunpack.c.l.b16 %v7087
    %v7799 = vunpack.c.h.b16 %v7087
    %v7800 = vunpack.c.l.b16 %v7088
    %v7801 = vunpack.c.h.b16 %v7088
    %v7802 = vunpack.c.l.b16 %v7089
    %v7803 = vunpack.c.h.b16 %v7089
    %v7804 = vunpack.c.l.b16 %v7090
    %v7805 = vunpack.c.h.b16 %v7090
    %v7806 = vunpack.c.l.b16 %v7091
    %v7807 = vunpack.c.h.b16 %v7091
    %v7808 = vunpack.c.l.b16 %v7092
    %v7809 = vunpack.c.h.b16 %v7092
    %v7810 = vunpack.c.l.b16 %v7093
    %v7811 = vunpack.c.h.b16 %v7093
    %v7812 = vunpack.c.l.b16 %v7094
    %v7813 = vunpack.c.h.b16 %v7094
    %v7814 = vunpack.c.l.b16 %v7095
    %v7815 = vunpack.c.h.b16 %v7095
    %v7816 = vunpack.c.l.b16 %v7096
    %v7817 = vunpack.c.h.b16 %v7096
    %v7818 = vunpack.c.l.b16 %v7097
    %v7819 = vunpack.c.h.b16 %v7097
    %v7820 = vunpack.c.l.b16 %v7098
    %v7821 = vunpack.c.h.b16 %v7098
    %v7822 = vunpack.c.l.b16 %v7099
    %v7823 = vunpack.c.h.b16 %v7099
    %v7824 = vunpack.c.l.b16 %v7100
    %v7825 = vunpack.c.h.b16 %v7100
    %v7826 = vunpack.c.l.b16 %v7101
    %v7827 = vunpack.c.h.b16 %v7101
    %v7828 = vunpack.c.l.b16 %v7102
    %v7829 = vunpack.c.h.b16 %v7102
    %v7830 = vunpack.c.l.b16 %v7103
    %v7831 = vunpack.c.h.b16 %v7103
    %v7832 = vunpack.c.l.b16 %v7104
    %v7833 = vunpack.c.h.b16 %v7104
    %v7834 = vunpack.c.l.b16 %v7105
    %v7835 = vunpack.c.h.b16 %v7105
    %v7836 = vunpack.c.l.b16 %v7106
    %v7837 = vunpack.c.h.b16 %v7106
    %v7838 = vunpack.c.l.b16 %v7107
    %v7839 = vunpack.c.h.b16 %v7107
    %v7840 = vunpack.c.l.b16 %v7108
    %v7841 = vunpack.c.h.b16 %v7108
    %v7842 = vunpack.c.l.b16 %v7109
    %v7843 = vunpack.c.h.b16 %v7109
    %v7844 = vunpack.c.l.b16 %v7110
    %v7845 = vunpack.c.h.b16 %v7110
    %v7846 = vunpack.c.l.b16 %v7111
    %v7847 = vunpack.c.h.b16 %v7111
    %v7848 = vunpack.c.l.b16 %v7112
    %v7849 = vunpack.c.h.b16 %v7112
    %v7850 = vunpack.c.l.b16 %v7113
    %v7851 = vunpack.c.h.b16 %v7113
    %v7852 = vunpack.c.l.b16 %v7114
    %v7853 = vunpack.c.h.b16 %v7114
    %v7854 = vunpack.c.l.b16 %v7115
    %v7855 = vunpack.c.h.b16 %v7115
    %v7856 = vunpack.c.l.b16 %v7116
    %v7857 = vunpack.c.h.b16 %v7116
    %v7858 = vunpack.c.l.b16 %v7117
    %v7859 = vunpack.c.h.b16 %v7117
    %v7860 = vunpack.c.l.b16 %v7118
    %v7861 = vunpack.c.h.b16 %v7118
    %v7862 = vunpack.c.l.b16 %v7119
    %v7863 = vunpack.c.h.b16 %v7119
    %v7864 = vunpack.c.l.b16 %v7120
    %v7865 = vunpack.c.h.b16 %v7120
    %v7866 = vunpack.c.l.b16 %v7121
    %v7867 = vunpack.c.h.b16 %v7121
    %v7868 = vunpack.c.l.b16 %v7122
    %v7869 = vunpack.c.h.b16 %v7122
    %v7870 = vunpack.c.l.b16 %v7123
    %v7871 = vunpack.c.h.b16 %v7123
    %v7872 = vunpack.c.l.b16 %v7124
    %v7873 = vunpack.c.h.b16 %v7124
    %v7874 = vunpack.c.l.b16 %v7125
    %v7875 = vunpack.c.h.b16 %v7125
    %v7876 = vunpack.c.l.b16 %v7126
    %v7877 = vunpack.c.h.b16 %v7126
    %v7878 = vunpack.c.l.b16 %v7127
    %v7879 = vunpack.c.h.b16 %v7127
    %v7880 = vunpack.c.l.b16 %v7128
    %v7881 = vunpack.c.h.b16 %v7128
    %v7882 = vunpack.c.l.b16 %v7129
    %v7883 = vunpack.c.h.b16 %v7129
    %v7884 = vunpack.c.l.b16 %v7130
    %v7885 = vunpack.c.h.b16 %v7130
    %v7886 = vunpack.c.l.b16 %v7131
    %v7887 = vunpack.c.h.b16 %v7131
    %v7888 = vunpack.c.l.b16 %v7132
    %v7889 = vunpack.c.h.b16 %v7132
    %v7890 = vunpack.c.l.b16 %v7133
    %v7891 = vunpack.c.h.b16 %v7133
    %v7892 = vunpack.c.l.b16 %v7134
    %v7893 = vunpack.c.h.b16 %v7134
    %v7894 = vunpack.c.l.b16 %v7135
    %v7895 = vunpack.c.h.b16 %v7135
    %v7896 = vunpack.c.l.b16 %v7136
    %v7897 = vunpack.c.h.b16 %v7136
    %v7898 = vunpack.c.l.b16 %v7137
    %v7899 = vunpack.c.h.b16 %v7137
    %v7900 = vunpack.c.l.b16 %v7138
    %v7901 = vunpack.c.h.b16 %v7138
    %v7902 = vunpack.c.l.b16 %v7139
    %v7903 = vunpack.c.h.b16 %v7139
    %v7904 = vunpack.c.l.b16 %v7140
    %v7905 = vunpack.c.h.b16 %v7140
    %v7906 = vunpack.c.l.b16 %v7141
    %v7907 = vunpack.c.h.b16 %v7141
    %v7908 = vunpack.c.l.b16 %v7142
    %v7909 = vunpack.c.h.b16 %v7142
    %v7910 = vunpack.c.l.b16 %v7143
    %v7911 = vunpack.c.h.b16 %v7143
    %v7912 = vunpack.c.l.b16 %v7144
    %v7913 = vunpack.c.h.b16 %v7144
    %v7914 = vunpack.c.l.b16 %v7145
    %v7915 = vunpack.c.h.b16 %v7145
    %v7916 = vunpack.c.l.b16 %v7146
    %v7917 = vunpack.c.h.b16 %v7146
    %v7918 = vunpack.c.l.b16 %v7147
    %v7919 = vunpack.c.h.b16 %v7147
    %v7920 = vunpack.c.l.b16 %v7148
    %v7921 = vunpack.c.h.b16 %v7148
    %v7922 = vunpack.c.l.b16 %v7149
    %v7923 = vunpack.c.h.b16 %v7149
    %v7924 = vunpack.c.l.b16 %v7150
    %v7925 = vunpack.c.h.b16 %v7150
    %v7926 = vunpack.c.l.b16 %v7151
    %v7927 = vunpack.c.h.b16 %v7151
    %v7928 = vunpack.c.l.b16 %v7152
    %v7929 = vunpack.c.h.b16 %v7152
    %v7930 = vunpack.c.l.b16 %v7153
    %v7931 = vunpack.c.h.b16 %v7153
    %v7932 = vunpack.c.l.b16 %v7154
    %v7933 = vunpack.c.h.b16 %v7154
    %v7934 = vunpack.c.l.b16 %v7155
    %v7935 = vunpack.c.h.b16 %v7155
    %v7936 = vunpack.c.l.b16 %v7156
    %v7937 = vunpack.c.h.b16 %v7156
    %v7938 = vunpack.c.l.b16 %v7157
    %v7939 = vunpack.c.h.b16 %v7157
    %v7940 = vunpack.c.l.b16 %v7158
    %v7941 = vunpack.c.h.b16 %v7158
    %v7942 = vunpack.c.l.b16 %v7159
    %v7943 = vunpack.c.h.b16 %v7159
    %v7944 = vunpack.c.l.b16 %v7160
    %v7945 = vunpack.c.h.b16 %v7160
    %v7946 = vunpack.c.l.b16 %v7161
    %v7947 = vunpack.c.h.b16 %v7161
    %v7948 = vunpack.c.l.b16 %v7162
    %v7949 = vunpack.c.h.b16 %v7162
    %v7950 = vunpack.c.l.b16 %v7163
    %v7951 = vunpack.c.h.b16 %v7163
    %v7952 = vunpack.c.l.b16 %v7164
    %v7953 = vunpack.c.h.b16 %v7164
    %v7954 = vunpack.c.l.b16 %v7165
    %v7955 = vunpack.c.h.b16 %v7165
    %v7956 = vunpack.c.l.b16 %v7166
    %v7957 = vunpack.c.h.b16 %v7166
    %v7958 = vunpack.c.l.b16 %v7167
    %v7959 = vunpack.c.h.b16 %v7167
    %v7960 = vunpack.c.l.b16 %v7168
    %v7961 = vunpack.c.h.b16 %v7168
    %v7962 = vunpack.c.l.b16 %v7169
    %v7963 = vunpack.c.h.b16 %v7169
    %v7964 = vunpack.c.l.b16 %v7170
    %v7965 = vunpack.c.h.b16 %v7170
    %v7966 = vunpack.c.l.b16 %v7171
    %v7967 = vunpack.c.h.b16 %v7171
    %v7968 = vunpack.c.l.b16 %v7172
    %v7969 = vunpack.c.h.b16 %v7172
    %v7970 = vunpack.c.l.b16 %v7173
    %v7971 = vunpack.c.h.b16 %v7173
    %v7972 = vunpack.c.l.b16 %v7174
    %v7973 = vunpack.c.h.b16 %v7174
    %v7974 = vunpack.c.l.b16 %v7175
    %v7975 = vunpack.c.h.b16 %v7175
    %v7976 = vunpack.c.l.b16 %v7176
    %v7977 = vunpack.c.h.b16 %v7176
    %v7978 = vunpack.c.l.b16 %v7177
    %v7979 = vunpack.c.h.b16 %v7177
    %v7980 = vunpack.c.l.b16 %v7178
    %v7981 = vunpack.c.h.b16 %v7178
    %v7982 = vunpack.c.l.b16 %v7179
    %v7983 = vunpack.c.h.b16 %v7179
    %v7984 = vunpack.c.l.b16 %v7180
    %v7985 = vunpack.c.h.b16 %v7180
    %v7986 = vunpack.c.l.b16 %v7181
    %v7987 = vunpack.c.h.b16 %v7181
    %v7988 = vunpack.c.l.b16 %v7182
    %v7989 = vunpack.c.h.b16 %v7182
    %v7990 = vunpack.c.l.b16 %v7183
    %v7991 = vunpack.c.h.b16 %v7183
    %v7992 = vunpack.c.l.b16 %v7184
    %v7993 = vunpack.c.h.b16 %v7184
    %v7994 = vunpack.c.l.b16 %v7185
    %v7995 = vunpack.c.h.b16 %v7185
    %v7996 = vunpack.c.l.b16 %v7186
    %v7997 = vunpack.c.h.b16 %v7186
    %v7998 = vunpack.c.l.b16 %v7187
    %v7999 = vunpack.c.h.b16 %v7187
    %v8000 = vunpack.c.l.b16 %v7188
    %v8001 = vunpack.c.h.b16 %v7188
    %v8002 = vunpack.c.l.b16 %v7189
    %v8003 = vunpack.c.h.b16 %v7189
    %v8004 = vunpack.c.l.b16 %v7190
    %v8005 = vunpack.c.h.b16 %v7190
    %v8006 = vunpack.c.l.b16 %v7191
    %v8007 = vunpack.c.h.b16 %v7191
    %v8008 = vunpack.c.l.b16 %v7192
    %v8009 = vunpack.c.h.b16 %v7192
    %v8010 = vunpack.c.l.b16 %v7193
    %v8011 = vunpack.c.h.b16 %v7193
    %v8012 = vunpack.c.l.b16 %v7194
    %v8013 = vunpack.c.h.b16 %v7194
    %v8014 = vunpack.c.l.b16 %v7195
    %v8015 = vunpack.c.h.b16 %v7195
    %v8016 = vunpack.c.l.b16 %v7196
    %v8017 = vunpack.c.h.b16 %v7196
    %v8018 = vunpack.c.l.b16 %v7197
    %v8019 = vunpack.c.h.b16 %v7197
    %v8020 = vunpack.c.l.b16 %v7198
    %v8021 = vunpack.c.h.b16 %v7198
    %v8022 = vunpack.c.l.b16 %v7199
    %v8023 = vunpack.c.h.b16 %v7199
    %v8024 = vunpack.c.l.b16 %v7200
    %v8025 = vunpack.c.h.b16 %v7200
    %v8026 = vunpack.c.l.b16 %v7201
    %v8027 = vunpack.c.h.b16 %v7201
    %v8028 = vunpack.c.l.b16 %v7202
    %v8029 = vunpack.c.h.b16 %v7202
    %v8030 = vunpack.c.l.b16 %v7203
    %v8031 = vunpack.c.h.b16 %v7203
    %v8032 = vunpack.c.l.b16 %v7204
    %v8033 = vunpack.c.h.b16 %v7204
    %v8034 = vunpack.c.l.b16 %v7205
    %v8035 = vunpack.c.h.b16 %v7205
    %v8036 = vunpack.c.l.b16 %v7206
    %v8037 = vunpack.c.h.b16 %v7206
    %v8038 = vunpack.c.l.b16 %v7207
    %v8039 = vunpack.c.h.b16 %v7207
    %v8040 = vunpack.c.l.b16 %v7208
    %v8041 = vunpack.c.h.b16 %v7208
    %v8042 = vunpack.c.l.b16 %v7209
    %v8043 = vunpack.c.h.b16 %v7209
    %v8044 = vunpack.c.l.b16 %v7210
    %v8045 = vunpack.c.h.b16 %v7210
    %v8046 = vunpack.c.l.b16 %v7211
    %v8047 = vunpack.c.h.b16 %v7211
    %v8048 = vunpack.c.l.b16 %v7212
    %v8049 = vunpack.c.h.b16 %v7212
    %v8050 = vunpack.c.l.b16 %v7213
    %v8051 = vunpack.c.h.b16 %v7213
    %v8052 = vunpack.c.l.b16 %v7214
    %v8053 = vunpack.c.h.b16 %v7214
    %v8054 = vunpack.c.l.b16 %v7215
    %v8055 = vunpack.c.h.b16 %v7215
    %v8056 = vunpack.c.l.b16 %v7216
    %v8057 = vunpack.c.h.b16 %v7216
    %v8058 = vunpack.c.l.b16 %v7217
    %v8059 = vunpack.c.h.b16 %v7217
    %v8060 = vunpack.c.l.b16 %v7218
    %v8061 = vunpack.c.h.b16 %v7218
    %v8062 = vunpack.c.l.b16 %v7219
    %v8063 = vunpack.c.h.b16 %v7219
    %v8064 = vunpack.c.l.b16 %v7220
    %v8065 = vunpack.c.h.b16 %v7220
    %v8066 = vunpack.c.l.b16 %v7221
    %v8067 = vunpack.c.h.b16 %v7221
    %v8068 = vunpack.c.l.b16 %v7222
    %v8069 = vunpack.c.h.b16 %v7222
    %v8070 = vunpack.c.l.b16 %v7223
    %v8071 = vunpack.c.h.b16 %v7223
    %v8072 = vunpack.c.l.b16 %v7224
    %v8073 = vunpack.c.h.b16 %v7224
    %v8074 = vunpack.c.l.b16 %v7225
    %v8075 = vunpack.c.h.b16 %v7225
    %v8076 = vunpack.c.l.b16 %v7226
    %v8077 = vunpack.c.h.b16 %v7226
    %v8078 = vunpack.c.l.b16 %v7227
    %v8079 = vunpack.c.h.b16 %v7227
    %v8080 = vunpack.c.l.b16 %v7228
    %v8081 = vunpack.c.h.b16 %v7228
    %v8082 = vunpack.c.l.b16 %v7229
    %v8083 = vunpack.c.h.b16 %v7229
    %v8084 = vunpack.c.l.b16 %v7230
    %v8085 = vunpack.c.h.b16 %v7230
    %v8086 = vunpack.c.l.b16 %v7231
    %v8087 = vunpack.c.h.b16 %v7231
    %v8088 = vunpack.c.l.b16 %v7232
    %v8089 = vunpack.c.h.b16 %v7232
    %v8090 = vunpack.c.l.b16 %v7233
    %v8091 = vunpack.c.h.b16 %v7233
    %v8092 = vunpack.c.l.b16 %v7234
    %v8093 = vunpack.c.h.b16 %v7234
    %v8094 = vunpack.c.l.b16 %v7235
    %v8095 = vunpack.c.h.b16 %v7235
    %v8096 = vunpack.c.l.b16 %v7236
    %v8097 = vunpack.c.h.b16 %v7236
    %v8098 = vunpack.c.l.b16 %v7237
    %v8099 = vunpack.c.h.b16 %v7237
    %v8100 = vunpack.c.l.b16 %v7238
    %v8101 = vunpack.c.h.b16 %v7238
    %v8102 = vunpack.c.l.b16 %v7239
    %v8103 = vunpack.c.h.b16 %v7239
    %v8104 = vunpack.c.l.b16 %v7240
    %v8105 = vunpack.c.h.b16 %v7240
    %v8106 = vunpack.c.l.b16 %v7241
    %v8107 = vunpack.c.h.b16 %v7241
    %v8108 = vunpack.c.l.b16 %v7242
    %v8109 = vunpack.c.h.b16 %v7242
    %v8110 = vunpack.c.l.b16 %v7243
    %v8111 = vunpack.c.h.b16 %v7243
    %v8112 = vunpack.c.l.b16 %v7244
    %v8113 = vunpack.c.h.b16 %v7244
    %v8114 = vunpack.c.l.b16 %v7245
    %v8115 = vunpack.c.h.b16 %v7245
    %v8116 = vunpack.c.l.b16 %v7246
    %v8117 = vunpack.c.h.b16 %v7246
    %v8118 = vunpack.c.l.b16 %v7247
    %v8119 = vunpack.c.h.b16 %v7247
    %v8120 = vunpack.c.l.b16 %v7248
    %v8121 = vunpack.c.h.b16 %v7248
    %v8122 = vunpack.c.l.b16 %v7249
    %v8123 = vunpack.c.h.b16 %v7249
    %v8124 = vpack.c.b16 %v7552, %v7548
    %v8125 = vpack.c.b16 %v7553, %v7549
    %v8126 = vpack.c.b16 %v7554, %v7550
    %v8127 = vpack.c.b16 %v7555, %v7551
    %v8128 = vpack.c.b16 %v7560, %v7556
    %v8129 = vpack.c.b16 %v7561, %v7557
    %v8130 = vpack.c.b16 %v7562, %v7558
    %v8131 = vpack.c.b16 %v7563, %v7559
    %v8132 = vpack.c.b16 %v7568, %v7564
    %v8133 = vpack.c.b16 %v7569, %v7565
    %v8134 = vpack.c.b16 %v7570, %v7566
    %v8135 = vpack.c.b16 %v7571, %v7567
    %v8136 = vpack.c.b16 %v7576, %v7572
    %v8137 = vpack.c.b16 %v7577, %v7573
    %v8138 = vpack.c.b16 %v7578, %v7574
    %v8139 = vpack.c.b16 %v7579, %v7575
    %v8140 = vpack.c.b16 %v7584, %v7580
    %v8141 = vpack.c.b16 %v7585, %v7581
    %v8142 = vpack.c.b16 %v7586, %v7582
    %v8143 = vpack.c.b16 %v7587, %v7583
    %v8144 = vpack.c.b16 %v7592, %v7588
    %v8145 = vpack.c.b16 %v7593, %v7589
    %v8146 = vpack.c.b16 %v7594, %v7590
    %v8147 = vpack.c.b16 %v7595, %v7591
    %v8148 = vpack.c.b16 %v7600, %v7596
    %v8149 = vpack.c.b16 %v7601, %v7597
    %v8150 = vpack.c.b16 %v7602, %v7598
    %v8151 = vpack.c.b16 %v7603, %v7599
    %v8152 = vpack.c.b16 %v7608, %v7604
    %v8153 = vpack.c.b16 %v7609, %v7605
    %v8154 = vpack.c.b16 %v7610, %v7606
    %v8155 = vpack.c.b16 %v7611, %v7607
    %v8156 = vpack.c.b16 %v7616, %v7612
    %v8157 = vpack.c.b16 %v7617, %v7613
    %v8158 = vpack.c.b16 %v7618, %v7614
    %v8159 = vpack.c.b16 %v7619, %v7615
    %v8160 = vpack.c.b16 %v7624, %v7620
    %v8161 = vpack.c.b16 %v7625, %v7621
    %v8162 = vpack.c.b16 %v7626, %v7622
    %v8163 = vpack.c.b16 %v7627, %v7623
    %v8164 = vpack.c.b16 %v7632, %v7628
    %v8165 = vpack.c.b16 %v7633, %v7629
    %v8166 = vpack.c.b16 %v7634, %v7630
    %v8167 = vpack.c.b16 %v7635, %v7631
    %v8168 = vpack.c.b16 %v7640, %v7636
    %v8169 = vpack.c.b16 %v7641, %v7637
    %v8170 = vpack.c.b16 %v7642, %v7638
    %v8171 = vpack.c.b16 %v7643, %v7639
    %v8172 = vpack.c.b16 %v7648, %v7644
    %v8173 = vpack.c.b16 %v7649, %v7645
    %v8174 = vpack.c.b16 %v7650, %v7646
    %v8175 = vpack.c.b16 %v7651, %v7647
    %v8176 = vpack.c.b16 %v7656, %v7652
    %v8177 = vpack.c.b16 %v7657, %v7653
    %v8178 = vpack.c.b16 %v7658, %v7654
    %v8179 = vpack.c.b16 %v7659, %v7655
    %v8180 = vpack.c.b16 %v7664, %v7660
    %v8181 = vpack.c.b16 %v7665, %v7661
    %v8182 = vpack.c.b16 %v7666, %v7662
    %v8183 = vpack.c.b16 %v7667, %v7663
    %v8184 = vpack.c.b16 %v7672, %v7668
    %v8185 = vpack.c.b16 %v7673, %v7669
    %v8186 = vpack.c.b16 %v7674, %v7670
    %v8187 = vpack.c.b16 %v7675, %v7671
    %v8188 = vpack.c.b16 %v7680, %v7676
    %v8189 = vpack.c.b16 %v7681, %v7677
    %v8190 = vpack.c.b16 %v7682, %v7678
    %v8191 = vpack.c.b16 %v7683, %v7679
    %v8192 = vpack.c.b16 %v7688, %v7684
    %v8193 = vpack.c.b16 %v7689, %v7685
    %v8194 = vpack.c.b16 %v7690, %v7686
    %v8195 = vpack.c.b16 %v7691, %v7687
    %v8196 = vpack.c.b16 %v7696, %v7692
    %v8197 = vpack.c.b16 %v7697, %v7693
    %v8198 = vpack.c.b16 %v7698, %v7694
    %v8199 = vpack.c.b16 %v7699, %v7695
    %v8200 = vpack.c.b16 %v7704, %v7700
    %v8201 = vpack.c.b16 %v7705, %v7701
    %v8202 = vpack.c.b16 %v7706, %v7702
    %v8203 = vpack.c.b16 %v7707, %v7703
    %v8204 = vpack.c.b16 %v7712, %v7708
    %v8205 = vpack.c.b16 %v7713, %v7709
    %v8206 = vpack.c.b16 %v7714, %v7710
    %v8207 = vpack.c.b16 %v7715, %v7711
    %v8208 = vpack.c.b16 %v7720, %v7716
    %v8209 = vpack.c.b16 %v7721, %v7717
    %v8210 = vpack.c.b16 %v7722, %v7718
    %v8211 = vpack.c.b16 %v7723, %v7719
    %v8212 = vpack.c.b16 %v7728, %v7724
    %v8213 = vpack.c.b16 %v7729, %v7725
    %v8214 = vpack.c.b16 %v7730, %v7726
    %v8215 = vpack.c.b16 %v7731, %v7727
    %v8216 = vpack.c.b16 %v7736, %v7732
    %v8217 = vpack.c.b16 %v7737, %v7733
    %v8218 = vpack.c.b16 %v7738, %v7734
    %v8219 = vpack.c.b16 %v7739, %v7735
    %v8220 = vpack.c.b16 %v7744, %v7740
    %v8221 = vpack.c.b16 %v7745, %v7741
    %v8222 = vpack.c.b16 %v7746, %v7742
    %v8223 = vpack.c.b16 %v7747, %v7743
    %v8224 = vpack.c.b16 %v7752, %v7748
    %v8225 = vpack.c.b16 %v7753, %v7749
    %v8226 = vpack.c.b16 %v7754, %v7750
    %v8227 = vpack.c.b16 %v7755, %v7751
    %v8228 = vpack.c.b16 %v7760, %v7756
    %v8229 = vpack.c.b16 %v7761, %v7757
    %v8230 = vpack.c.b16 %v7762, %v7758
    %v8231 = vpack.c.b16 %v7763, %v7759
    %v8232 = vpack.c.b16 %v7768, %v7764
    %v8233 = vpack.c.b16 %v7769, %v7765
    %v8234 = vpack.c.b16 %v7770, %v7766
    %v8235 = vpack.c.b16 %v7771, %v7767
    %v8236 = vpack.c.b16 %v7776, %v7772
    %v8237 = vpack.c.b16 %v7777, %v7773
    %v8238 = vpack.c.b16 %v7778, %v7774
    %v8239 = vpack.c.b16 %v7779, %v7775
    %v8240 = vpack.c.b16 %v7784, %v7780
    %v8241 = vpack.c.b16 %v7785, %v7781
    %v8242 = vpack.c.b16 %v7786, %v7782
    %v8243 = vpack.c.b16 %v7787, %v7783
    %v8244 = vpack.c.b16 %v7792, %v7788
    %v8245 = vpack.c.b16 %v7793, %v7789
    %v8246 = vpack.c.b16 %v7794, %v7790
    %v8247 = vpack.c.b16 %v7795, %v7791
    %v8248 = vpack.c.b16 %v7800, %v7796
    %v8249 = vpack.c.b16 %v7801, %v7797
    %v8250 = vpack.c.b16 %v7802, %v7798
    %v8251 = vpack.c.b16 %v7803, %v7799
    %v8252 = vpack.c.b16 %v7808, %v7804
    %v8253 = vpack.c.b16 %v7809, %v7805
    %v8254 = vpack.c.b16 %v7810, %v7806
    %v8255 = vpack.c.b16 %v7811, %v7807
    %v8256 = vpack.c.b16 %v7816, %v7812
    %v8257 = vpack.c.b16 %v7817, %v7813
    %v8258 = vpack.c.b16 %v7818, %v7814
    %v8259 = vpack.c.b16 %v7819, %v7815
    %v8260 = vpack.c.b16 %v7824, %v7820
    %v8261 = vpack.c.b16 %v7825, %v7821
    %v8262 = vpack.c.b16 %v7826, %v7822
    %v8263 = vpack.c.b16 %v7827, %v7823
    %v8264 = vpack.c.b16 %v7832, %v7828
    %v8265 = vpack.c.b16 %v7833, %v7829
    %v8266 = vpack.c.b16 %v7834, %v7830
    %v8267 = vpack.c.b16 %v7835, %v7831
    %v8268 = vpack.c.b16 %v7840, %v7836
    %v8269 = vpack.c.b16 %v7841, %v7837
    %v8270 = vpack.c.b16 %v7842, %v7838
    %v8271 = vpack.c.b16 %v7843, %v7839
    %v8272 = vpack.c.b16 %v7848, %v7844
    %v8273 = vpack.c.b16 %v7849, %v7845
    %v8274 = vpack.c.b16 %v7850, %v7846
    %v8275 = vpack.c.b16 %v7851, %v7847
    %v8276 = vpack.c.b16 %v7856, %v7852
    %v8277 = vpack.c.b16 %v7857, %v7853
    %v8278 = vpack.c.b16 %v7858, %v7854
    %v8279 = vpack.c.b16 %v7859, %v7855
    %v8280 = vpack.c.b16 %v7864, %v7860
    %v8281 = vpack.c.b16 %v7865, %v7861
    %v8282 = vpack.c.b16 %v7866, %v7862
    %v8283 = vpack.c.b16 %v7867, %v7863
    %v8284 = vpack.c.b16 %v7872, %v7868
    %v8285 = vpack.c.b16 %v7873, %v7869
    %v8286 = vpack.c.b16 %v7874, %v7870
    %v8287 = vpack.c.b16 %v7875, %v7871
    %v8288 = vpack.c.b16 %v7880, %v7876
    %v8289 = vpack.c.b16 %v7881, %v7877
    %v8290 = vpack.c.b16 %v7882, %v7878
    %v8291 = vpack.c.b16 %v7883, %v7879
    %v8292 = vpack.c.b16 %v7888, %v7884
    %v8293 = vpack.c.b16 %v7889, %v7885
    %v8294 = vpack.c.b16 %v7890, %v7886
    %v8295 = vpack.c.b16 %v7891, %v7887
    %v8296 = vpack.c.b16 %v7896, %v7892
    %v8297 = vpack.c.b16 %v7897, %v7893
    %v8298 = vpack.c.b16 %v7898, %v7894
    %v8299 = vpack.c.b16 %v7899, %v7895
    %v8300 = vpack.c.b16 %v7904, %v7900
    %v8301 = vpack.c.b16 %v7905, %v7901
    %v8302 = vpack.c.b16 %v7906, %v7902
    %v8303 = vpack.c.b16 %v7907, %v7903
    %v8304 = vpack.c.b16 %v7912, %v7908
    %v8305 = vpack.c.b16 %v7913, %v7909
    %v8306 = vpack.c.b16 %v7914, %v7910
    %v8307 = vpack.c.b16 %v7915, %v7911
    %v8308 = vpack.c.b16 %v7920, %v7916
    %v8309 = vpack.c.b16 %v7921, %v7917
    %v8310 = vpack.c.b16 %v7922, %v7918
    %v8311 = vpack.c.b16 %v7923, %v7919
    %v8312 = vpack.c.b16 %v7928, %v7924
    %v8313 = vpack.c.b16 %v7929, %v7925
    %v8314 = vpack.c.b16 %v7930, %v7926
    %v8315 = vpack.c.b16 %v7931, %v7927
    %v8316 = vpack.c.b16 %v7936, %v7932
    %v8317 = vpack.c.b16 %v7937, %v7933
    %v8318 = vpack.c.b16 %v7938, %v7934
    %v8319 = vpack.c.b16 %v7939, %v7935
    %v8320 = vpack.c.b16 %v7944, %v7940
    %v8321 = vpack.c.b16 %v7945, %v7941
    %v8322 = vpack.c.b16 %v7946, %v7942
    %v8323 = vpack.c.b16 %v7947, %v7943
    %v8324 = vpack.c.b16 %v7952, %v7948
    %v8325 = vpack.c.b16 %v7953, %v7949
    %v8326 = vpack.c.b16 %v7954, %v7950
    %v8327 = vpack.c.b16 %v7955, %v7951
    %v8328 = vpack.c.b16 %v7960, %v7956
    %v8329 = vpack.c.b16 %v7961, %v7957
    %v8330 = vpack.c.b16 %v7962, %v7958
    %v8331 = vpack.c.b16 %v7963, %v7959
    %v8332 = vpack.c.b16 %v7968, %v7964
    %v8333 = vpack.c.b16 %v7969, %v7965
    %v8334 = vpack.c.b16 %v7970, %v7966
    %v8335 = vpack.c.b16 %v7971, %v7967
    %v8336 = vpack.c.b16 %v7976, %v7972
    %v8337 = vpack.c.b16 %v7977, %v7973
    %v8338 = vpack.c.b16 %v7978, %v7974
    %v8339 = vpack.c.b16 %v7979, %v7975
    %v8340 = vpack.c.b16 %v7984, %v7980
    %v8341 = vpack.c.b16 %v7985, %v7981
    %v8342 = vpack.c.b16 %v7986, %v7982
    %v8343 = vpack.c.b16 %v7987, %v7983
    %v8344 = vpack.c.b16 %v7992, %v7988
    %v8345 = vpack.c.b16 %v7993, %v7989
    %v8346 = vpack.c.b16 %v7994, %v7990
    %v8347 = vpack.c.b16 %v7995, %v7991
    %v8348 = vpack.c.b16 %v8000, %v7996
    %v8349 = vpack.c.b16 %v8001, %v7997
    %v8350 = vpack.c.b16 %v8002, %v7998
    %v8351 = vpack.c.b16 %v8003, %v7999
    %v8352 = vpack.c.b16 %v8008, %v8004
    %v8353 = vpack.c.b16 %v8009, %v8005
    %v8354 = vpack.c.b16 %v8010, %v8006
    %v8355 = vpack.c.b16 %v8011, %v8007
    %v8356 = vpack.c.b16 %v8016, %v8012
    %v8357 = vpack.c.b16 %v8017, %v8013
    %v8358 = vpack.c.b16 %v8018, %v8014
    %v8359 = vpack.c.b16 %v8019, %v8015
    %v8360 = vpack.c.b16 %v8024, %v8020
    %v8361 = vpack.c.b16 %v8025, %v8021
    %v8362 = vpack.c.b16 %v8026, %v8022
    %v8363 = vpack.c.b16 %v8027, %v8023
    %v8364 = vpack.c.b16 %v8032, %v8028
    %v8365 = vpack.c.b16 %v8033, %v8029
    %v8366 = vpack.c.b16 %v8034, %v8030
    %v8367 = vpack.c.b16 %v8035, %v8031
    %v8368 = vpack.c.b16 %v8040, %v8036
    %v8369 = vpack.c.b16 %v8041, %v8037
    %v8370 = vpack.c.b16 %v8042, %v8038
    %v8371 = vpack.c.b16 %v8043, %v8039
    %v8372 = vpack.c.b16 %v8048, %v8044
    %v8373 = vpack.c.b16 %v8049, %v8045
    %v8374 = vpack.c.b16 %v8050, %v8046
    %v8375 = vpack.c.b16 %v8051, %v8047
    %v8376 = vpack.c.b16 %v8056, %v8052
    %v8377 = vpack.c.b16 %v8057, %v8053
    %v8378 = vpack.c.b16 %v8058, %v8054
    %v8379 = vpack.c.b16 %v8059, %v8055
    %v8380 = vpack.c.b16 %v8064, %v8060
    %v8381 = vpack.c.b16 %v8065, %v8061
    %v8382 = vpack.c.b16 %v8066, %v8062
    %v8383 = vpack.c.b16 %v8067, %v8063
    %v8384 = vpack.c.b16 %v8072, %v8068
    %v8385 = vpack.c.b16 %v8073, %v8069
    %v8386 = vpack.c.b16 %v8074, %v8070
    %v8387 = vpack.c.b16 %v8075, %v8071
    %v8388 = vpack.c.b16 %v8080, %v8076
    %v8389 = vpack.c.b16 %v8081, %v8077
    %v8390 = vpack.c.b16 %v8082, %v8078
    %v8391 = vpack.c.b16 %v8083, %v8079
    %v8392 = vpack.c.b16 %v8088, %v8084
    %v8393 = vpack.c.b16 %v8089, %v8085
    %v8394 = vpack.c.b16 %v8090, %v8086
    %v8395 = vpack.c.b16 %v8091, %v8087
    %v8396 = vpack.c.b16 %v8096, %v8092
    %v8397 = vpack.c.b16 %v8097, %v8093
    %v8398 = vpack.c.b16 %v8098, %v8094
    %v8399 = vpack.c.b16 %v8099, %v8095
    %v8400 = vpack.c.b16 %v8104, %v8100
    %v8401 = vpack.c.b16 %v8105, %v8101
    %v8402 = vpack.c.b16 %v8106, %v8102
    %v8403 = vpack.c.b16 %v8107, %v8103
    %v8404 = vpack.c.b16 %v8112, %v8108
    %v8405 = vpack.c.b16 %v8113, %v8109
    %v8406 = vpack.c.b16 %v8114, %v8110
    %v8407 = vpack.c.b16 %v8115, %v8111
    %v8408 = vpack.c.b16 %v8120, %v8116
    %v8409 = vpack.c.b16 %v8121, %v8117
    %v8410 = vpack.c.b16 %v8122, %v8118
    %v8411 = vpack.c.b16 %v8123, %v8119
    %8700 = vmatpush.bf16.msra.mxu0 %v8152
    %8701 = vmatpush.bf16.msra.mxu0 %v8148
    %8702 = vmatpush.bf16.msra.mxu0 %v8144
    %8703 = vmatpush.bf16.msra.mxu0 %v8140
    %8704 = vmatpush.bf16.msra.mxu0 %v8136
    %8705 = vmatpush.bf16.msra.mxu0 %v8132
    %8706 = vmatpush.bf16.msra.mxu0 %v8128
    %8707 = vmatpush.bf16.msra.mxu0 %v8124
    %8708 = vmatmul.bf16.gmra.mxu0 %v6890
    %v8709 = vpop.f32.mrf.mxu0
    %v8710 = vadd.f32 %v7252, %v8709
    %v8711 = vpop.f32.mrf.mxu0
    %v8712 = vadd.f32 %v7252, %v8711
    %8713 = vmatmul.bf16.gmra.mxu0 %v6899
    %v8714 = vpop.f32.mrf.mxu0
    %v8715 = vadd.f32 %v7252, %v8714
    %v8716 = vpop.f32.mrf.mxu0
    %v8717 = vadd.f32 %v7252, %v8716
    %8718 = vmatmul.bf16.gmra.mxu0 %v6908
    %v8719 = vpop.f32.mrf.mxu0
    %v8720 = vadd.f32 %v7252, %v8719
    %v8721 = vpop.f32.mrf.mxu0
    %v8722 = vadd.f32 %v7252, %v8721
    %8723 = vmatmul.bf16.gmra.mxu0 %v6917
    %v8724 = vpop.f32.mrf.mxu0
    %v8725 = vadd.f32 %v7252, %v8724
    %v8726 = vpop.f32.mrf.mxu0
    %v8727 = vadd.f32 %v7252, %v8726
    %8728 = vmatmul.bf16.gmra.mxu0 %v6926
    %v8729 = vpop.f32.mrf.mxu0
    %v8730 = vadd.f32 %v7252, %v8729
    %v8731 = vpop.f32.mrf.mxu0
    %v8732 = vadd.f32 %v7252, %v8731
    %8733 = vmatmul.bf16.gmra.mxu0 %v6935
    %v8734 = vpop.f32.mrf.mxu0
    %v8735 = vadd.f32 %v7252, %v8734
    %v8736 = vpop.f32.mrf.mxu0
    %v8737 = vadd.f32 %v7252, %v8736
    %8738 = vmatmul.bf16.gmra.mxu0 %v6944
    %v8739 = vpop.f32.mrf.mxu0
    %v8740 = vadd.f32 %v7252, %v8739
    %v8741 = vpop.f32.mrf.mxu0
    %v8742 = vadd.f32 %v7252, %v8741
    %8743 = vmatmul.bf16.gmra.mxu0 %v6953
    %v8744 = vpop.f32.mrf.mxu0
    %v8745 = vadd.f32 %v7252, %v8744
    %v8746 = vpop.f32.mrf.mxu0
    %v8747 = vadd.f32 %v7252, %v8746
    %8748 = vdwg.mxu0
    %8749 = vmatpush.bf16.msra.mxu0 %v8184
    %8750 = vmatpush.bf16.msra.mxu0 %v8180
    %8751 = vmatpush.bf16.msra.mxu0 %v8176
    %8752 = vmatpush.bf16.msra.mxu0 %v8172
    %8753 = vmatpush.bf16.msra.mxu0 %v8168
    %8754 = vmatpush.bf16.msra.mxu0 %v8164
    %8755 = vmatpush.bf16.msra.mxu0 %v8160
    %8756 = vmatpush.bf16.msra.mxu0 %v8156
    %8757 = vmatmul.bf16.gmra.mxu0 %v6891
    %v8758 = vpop.f32.mrf.mxu0
    %v8759 = vadd.f32 %v8710, %v8758
    %v8760 = vpop.f32.mrf.mxu0
    %v8761 = vadd.f32 %v8712, %v8760
    %8762 = vmatmul.bf16.gmra.mxu0 %v6900
    %v8763 = vpop.f32.mrf.mxu0
    %v8764 = vadd.f32 %v8715, %v8763
    %v8765 = vpop.f32.mrf.mxu0
    %v8766 = vadd.f32 %v8717, %v8765
    %8767 = vmatmul.bf16.gmra.mxu0 %v6909
    %v8768 = vpop.f32.mrf.mxu0
    %v8769 = vadd.f32 %v8720, %v8768
    %v8770 = vpop.f32.mrf.mxu0
    %v8771 = vadd.f32 %v8722, %v8770
    %8772 = vmatmul.bf16.gmra.mxu0 %v6918
    %v8773 = vpop.f32.mrf.mxu0
    %v8774 = vadd.f32 %v8725, %v8773
    %v8775 = vpop.f32.mrf.mxu0
    %v8776 = vadd.f32 %v8727, %v8775
    %8777 = vmatmul.bf16.gmra.mxu0 %v6927
    %v8778 = vpop.f32.mrf.mxu0
    %v8779 = vadd.f32 %v8730, %v8778
    %v8780 = vpop.f32.mrf.mxu0
    %v8781 = vadd.f32 %v8732, %v8780
    %8782 = vmatmul.bf16.gmra.mxu0 %v6936
    %v8783 = vpop.f32.mrf.mxu0
    %v8784 = vadd.f32 %v8735, %v8783
    %v8785 = vpop.f32.mrf.mxu0
    %v8786 = vadd.f32 %v8737, %v8785
    %8787 = vmatmul.bf16.gmra.mxu0 %v6945
    %v8788 = vpop.f32.mrf.mxu0
    %v8789 = vadd.f32 %v8740, %v8788
    %v8790 = vpop.f32.mrf.mxu0
    %v8791 = vadd.f32 %v8742, %v8790
    %8792 = vmatmul.bf16.gmra.mxu0 %v6954
    %v8793 = vpop.f32.mrf.mxu0
    %v8794 = vadd.f32 %v8745, %v8793
    %v8795 = vpop.f32.mrf.mxu0
    %v8796 = vadd.f32 %v8747, %v8795
    %8797 = vdwg.mxu0
    %8798 = vmatpush.bf16.msra.mxu0 %v8216
    %8799 = vmatpush.bf16.msra.mxu0 %v8212
    %8800 = vmatpush.bf16.msra.mxu0 %v8208
    %8801 = vmatpush.bf16.msra.mxu0 %v8204
    %8802 = vmatpush.bf16.msra.mxu0 %v8200
    %8803 = vmatpush.bf16.msra.mxu0 %v8196
    %8804 = vmatpush.bf16.msra.mxu0 %v8192
    %8805 = vmatpush.bf16.msra.mxu0 %v8188
    %8806 = vmatmul.bf16.gmra.mxu0 %v6892
    %v8807 = vpop.f32.mrf.mxu0
    %v8808 = vadd.f32 %v8759, %v8807
    %v8809 = vpop.f32.mrf.mxu0
    %v8810 = vadd.f32 %v8761, %v8809
    %8811 = vmatmul.bf16.gmra.mxu0 %v6901
    %v8812 = vpop.f32.mrf.mxu0
    %v8813 = vadd.f32 %v8764, %v8812
    %v8814 = vpop.f32.mrf.mxu0
    %v8815 = vadd.f32 %v8766, %v8814
    %8816 = vmatmul.bf16.gmra.mxu0 %v6910
    %v8817 = vpop.f32.mrf.mxu0
    %v8818 = vadd.f32 %v8769, %v8817
    %v8819 = vpop.f32.mrf.mxu0
    %v8820 = vadd.f32 %v8771, %v8819
    %8821 = vmatmul.bf16.gmra.mxu0 %v6919
    %v8822 = vpop.f32.mrf.mxu0
    %v8823 = vadd.f32 %v8774, %v8822
    %v8824 = vpop.f32.mrf.mxu0
    %v8825 = vadd.f32 %v8776, %v8824
    %8826 = vmatmul.bf16.gmra.mxu0 %v6928
    %v8827 = vpop.f32.mrf.mxu0
    %v8828 = vadd.f32 %v8779, %v8827
    %v8829 = vpop.f32.mrf.mxu0
    %v8830 = vadd.f32 %v8781, %v8829
    %8831 = vmatmul.bf16.gmra.mxu0 %v6937
    %v8832 = vpop.f32.mrf.mxu0
    %v8833 = vadd.f32 %v8784, %v8832
    %v8834 = vpop.f32.mrf.mxu0
    %v8835 = vadd.f32 %v8786, %v8834
    %8836 = vmatmul.bf16.gmra.mxu0 %v6946
    %v8837 = vpop.f32.mrf.mxu0
    %v8838 = vadd.f32 %v8789, %v8837
    %v8839 = vpop.f32.mrf.mxu0
    %v8840 = vadd.f32 %v8791, %v8839
    %8841 = vmatmul.bf16.gmra.mxu0 %v6955
    %v8842 = vpop.f32.mrf.mxu0
    %v8843 = vadd.f32 %v8794, %v8842
    %v8844 = vpop.f32.mrf.mxu0
    %v8845 = vadd.f32 %v8796, %v8844
    %8846 = vdwg.mxu0
    %8847 = vmatpush.bf16.msra.mxu0 %v8248
    %8848 = vmatpush.bf16.msra.mxu0 %v8244
    %8849 = vmatpush.bf16.msra.mxu0 %v8240
    %8850 = vmatpush.bf16.msra.mxu0 %v8236
    %8851 = vmatpush.bf16.msra.mxu0 %v8232
    %8852 = vmatpush.bf16.msra.mxu0 %v8228
    %8853 = vmatpush.bf16.msra.mxu0 %v8224
    %8854 = vmatpush.bf16.msra.mxu0 %v8220
    %8855 = vmatmul.bf16.gmra.mxu0 %v6893
    %v8856 = vpop.f32.mrf.mxu0
    %v8857 = vadd.f32 %v8808, %v8856
    %v8858 = vpop.f32.mrf.mxu0
    %v8859 = vadd.f32 %v8810, %v8858
    %8860 = vmatmul.bf16.gmra.mxu0 %v6902
    %v8861 = vpop.f32.mrf.mxu0
    %v8862 = vadd.f32 %v8813, %v8861
    %v8863 = vpop.f32.mrf.mxu0
    %v8864 = vadd.f32 %v8815, %v8863
    %8865 = vmatmul.bf16.gmra.mxu0 %v6911
    %v8866 = vpop.f32.mrf.mxu0
    %v8867 = vadd.f32 %v8818, %v8866
    %v8868 = vpop.f32.mrf.mxu0
    %v8869 = vadd.f32 %v8820, %v8868
    %8870 = vmatmul.bf16.gmra.mxu0 %v6920
    %v8871 = vpop.f32.mrf.mxu0
    %v8872 = vadd.f32 %v8823, %v8871
    %v8873 = vpop.f32.mrf.mxu0
    %v8874 = vadd.f32 %v8825, %v8873
    %8875 = vmatmul.bf16.gmra.mxu0 %v6929
    %v8876 = vpop.f32.mrf.mxu0
    %v8877 = vadd.f32 %v8828, %v8876
    %v8878 = vpop.f32.mrf.mxu0
    %v8879 = vadd.f32 %v8830, %v8878
    %8880 = vmatmul.bf16.gmra.mxu0 %v6938
    %v8881 = vpop.f32.mrf.mxu0
    %v8882 = vadd.f32 %v8833, %v8881
    %v8883 = vpop.f32.mrf.mxu0
    %v8884 = vadd.f32 %v8835, %v8883
    %8885 = vmatmul.bf16.gmra.mxu0 %v6947
    %v8886 = vpop.f32.mrf.mxu0
    %v8887 = vadd.f32 %v8838, %v8886
    %v8888 = vpop.f32.mrf.mxu0
    %v8889 = vadd.f32 %v8840, %v8888
    %8890 = vmatmul.bf16.gmra.mxu0 %v6956
    %v8891 = vpop.f32.mrf.mxu0
    %v8892 = vadd.f32 %v8843, %v8891
    %v8893 = vpop.f32.mrf.mxu0
    %v8894 = vadd.f32 %v8845, %v8893
    %8895 = vdwg.mxu0
    %8896 = vmatpush.bf16.msra.mxu0 %v8280
    %8897 = vmatpush.bf16.msra.mxu0 %v8276
    %8898 = vmatpush.bf16.msra.mxu0 %v8272
    %8899 = vmatpush.bf16.msra.mxu0 %v8268
    %8900 = vmatpush.bf16.msra.mxu0 %v8264
    %8901 = vmatpush.bf16.msra.mxu0 %v8260
    %8902 = vmatpush.bf16.msra.mxu0 %v8256
    %8903 = vmatpush.bf16.msra.mxu0 %v8252
    %8904 = vmatmul.bf16.gmra.mxu0 %v6894
    %v8905 = vpop.f32.mrf.mxu0
    %v8906 = vadd.f32 %v8857, %v8905
    %v8907 = vpop.f32.mrf.mxu0
    %v8908 = vadd.f32 %v8859, %v8907
    %8909 = vmatmul.bf16.gmra.mxu0 %v6903
    %v8910 = vpop.f32.mrf.mxu0
    %v8911 = vadd.f32 %v8862, %v8910
    %v8912 = vpop.f32.mrf.mxu0
    %v8913 = vadd.f32 %v8864, %v8912
    %8914 = vmatmul.bf16.gmra.mxu0 %v6912
    %v8915 = vpop.f32.mrf.mxu0
    %v8916 = vadd.f32 %v8867, %v8915
    %v8917 = vpop.f32.mrf.mxu0
    %v8918 = vadd.f32 %v8869, %v8917
    %8919 = vmatmul.bf16.gmra.mxu0 %v6921
    %v8920 = vpop.f32.mrf.mxu0
    %v8921 = vadd.f32 %v8872, %v8920
    %v8922 = vpop.f32.mrf.mxu0
    %v8923 = vadd.f32 %v8874, %v8922
    %8924 = vmatmul.bf16.gmra.mxu0 %v6930
    %v8925 = vpop.f32.mrf.mxu0
    %v8926 = vadd.f32 %v8877, %v8925
    %v8927 = vpop.f32.mrf.mxu0
    %v8928 = vadd.f32 %v8879, %v8927
    %8929 = vmatmul.bf16.gmra.mxu0 %v6939
    %v8930 = vpop.f32.mrf.mxu0
    %v8931 = vadd.f32 %v8882, %v8930
    %v8932 = vpop.f32.mrf.mxu0
    %v8933 = vadd.f32 %v8884, %v8932
    %8934 = vmatmul.bf16.gmra.mxu0 %v6948
    %v8935 = vpop.f32.mrf.mxu0
    %v8936 = vadd.f32 %v8887, %v8935
    %v8937 = vpop.f32.mrf.mxu0
    %v8938 = vadd.f32 %v8889, %v8937
    %8939 = vmatmul.bf16.gmra.mxu0 %v6957
    %v8940 = vpop.f32.mrf.mxu0
    %v8941 = vadd.f32 %v8892, %v8940
    %v8942 = vpop.f32.mrf.mxu0
    %v8943 = vadd.f32 %v8894, %v8942
    %8944 = vdwg.mxu0
    %8945 = vmatpush.bf16.msra.mxu0 %v8312
    %8946 = vmatpush.bf16.msra.mxu0 %v8308
    %8947 = vmatpush.bf16.msra.mxu0 %v8304
    %8948 = vmatpush.bf16.msra.mxu0 %v8300
    %8949 = vmatpush.bf16.msra.mxu0 %v8296
    %8950 = vmatpush.bf16.msra.mxu0 %v8292
    %8951 = vmatpush.bf16.msra.mxu0 %v8288
    %8952 = vmatpush.bf16.msra.mxu0 %v8284
    %8953 = vmatmul.bf16.gmra.mxu0 %v6895
    %v8954 = vpop.f32.mrf.mxu0
    %v8955 = vadd.f32 %v8906, %v8954
    %v8956 = vpop.f32.mrf.mxu0
    %v8957 = vadd.f32 %v8908, %v8956
    %8958 = vmatmul.bf16.gmra.mxu0 %v6904
    %v8959 = vpop.f32.mrf.mxu0
    %v8960 = vadd.f32 %v8911, %v8959
    %v8961 = vpop.f32.mrf.mxu0
    %v8962 = vadd.f32 %v8913, %v8961
    %8963 = vmatmul.bf16.gmra.mxu0 %v6913
    %v8964 = vpop.f32.mrf.mxu0
    %v8965 = vadd.f32 %v8916, %v8964
    %v8966 = vpop.f32.mrf.mxu0
    %v8967 = vadd.f32 %v8918, %v8966
    %8968 = vmatmul.bf16.gmra.mxu0 %v6922
    %v8969 = vpop.f32.mrf.mxu0
    %v8970 = vadd.f32 %v8921, %v8969
    %v8971 = vpop.f32.mrf.mxu0
    %v8972 = vadd.f32 %v8923, %v8971
    %8973 = vmatmul.bf16.gmra.mxu0 %v6931
    %v8974 = vpop.f32.mrf.mxu0
    %v8975 = vadd.f32 %v8926, %v8974
    %v8976 = vpop.f32.mrf.mxu0
    %v8977 = vadd.f32 %v8928, %v8976
    %8978 = vmatmul.bf16.gmra.mxu0 %v6940
    %v8979 = vpop.f32.mrf.mxu0
    %v8980 = vadd.f32 %v8931, %v8979
    %v8981 = vpop.f32.mrf.mxu0
    %v8982 = vadd.f32 %v8933, %v8981
    %8983 = vmatmul.bf16.gmra.mxu0 %v6949
    %v8984 = vpop.f32.mrf.mxu0
    %v8985 = vadd.f32 %v8936, %v8984
    %v8986 = vpop.f32.mrf.mxu0
    %v8987 = vadd.f32 %v8938, %v8986
    %8988 = vmatmul.bf16.gmra.mxu0 %v6958
    %v8989 = vpop.f32.mrf.mxu0
    %v8990 = vadd.f32 %v8941, %v8989
    %v8991 = vpop.f32.mrf.mxu0
    %v8992 = vadd.f32 %v8943, %v8991
    %8993 = vdwg.mxu0
    %8994 = vmatpush.bf16.msra.mxu0 %v8344
    %8995 = vmatpush.bf16.msra.mxu0 %v8340
    %8996 = vmatpush.bf16.msra.mxu0 %v8336
    %8997 = vmatpush.bf16.msra.mxu0 %v8332
    %8998 = vmatpush.bf16.msra.mxu0 %v8328
    %8999 = vmatpush.bf16.msra.mxu0 %v8324
    %9000 = vmatpush.bf16.msra.mxu0 %v8320
    %9001 = vmatpush.bf16.msra.mxu0 %v8316
    %9002 = vmatmul.bf16.gmra.mxu0 %v6896
    %v9003 = vpop.f32.mrf.mxu0
    %v9004 = vadd.f32 %v8955, %v9003
    %v9005 = vpop.f32.mrf.mxu0
    %v9006 = vadd.f32 %v8957, %v9005
    %9007 = vmatmul.bf16.gmra.mxu0 %v6905
    %v9008 = vpop.f32.mrf.mxu0
    %v9009 = vadd.f32 %v8960, %v9008
    %v9010 = vpop.f32.mrf.mxu0
    %v9011 = vadd.f32 %v8962, %v9010
    %9012 = vmatmul.bf16.gmra.mxu0 %v6914
    %v9013 = vpop.f32.mrf.mxu0
    %v9014 = vadd.f32 %v8965, %v9013
    %v9015 = vpop.f32.mrf.mxu0
    %v9016 = vadd.f32 %v8967, %v9015
    %9017 = vmatmul.bf16.gmra.mxu0 %v6923
    %v9018 = vpop.f32.mrf.mxu0
    %v9019 = vadd.f32 %v8970, %v9018
    %v9020 = vpop.f32.mrf.mxu0
    %v9021 = vadd.f32 %v8972, %v9020
    %9022 = vmatmul.bf16.gmra.mxu0 %v6932
    %v9023 = vpop.f32.mrf.mxu0
    %v9024 = vadd.f32 %v8975, %v9023
    %v9025 = vpop.f32.mrf.mxu0
    %v9026 = vadd.f32 %v8977, %v9025
    %9027 = vmatmul.bf16.gmra.mxu0 %v6941
    %v9028 = vpop.f32.mrf.mxu0
    %v9029 = vadd.f32 %v8980, %v9028
    %v9030 = vpop.f32.mrf.mxu0
    %v9031 = vadd.f32 %v8982, %v9030
    %9032 = vmatmul.bf16.gmra.mxu0 %v6950
    %v9033 = vpop.f32.mrf.mxu0
    %v9034 = vadd.f32 %v8985, %v9033
    %v9035 = vpop.f32.mrf.mxu0
    %v9036 = vadd.f32 %v8987, %v9035
    %9037 = vmatmul.bf16.gmra.mxu0 %v6959
    %v9038 = vpop.f32.mrf.mxu0
    %v9039 = vadd.f32 %v8990, %v9038
    %v9040 = vpop.f32.mrf.mxu0
    %v9041 = vadd.f32 %v8992, %v9040
    %9042 = vdwg.mxu0
    %9043 = vmatpush.bf16.msra.mxu0 %v8376
    %9044 = vmatpush.bf16.msra.mxu0 %v8372
    %9045 = vmatpush.bf16.msra.mxu0 %v8368
    %9046 = vmatpush.bf16.msra.mxu0 %v8364
    %9047 = vmatpush.bf16.msra.mxu0 %v8360
    %9048 = vmatpush.bf16.msra.mxu0 %v8356
    %9049 = vmatpush.bf16.msra.mxu0 %v8352
    %9050 = vmatpush.bf16.msra.mxu0 %v8348
    %9051 = vmatmul.bf16.gmra.mxu0 %v6897
    %v9052 = vpop.f32.mrf.mxu0
    %v9053 = vadd.f32 %v9004, %v9052
    %v9054 = vpop.f32.mrf.mxu0
    %v9055 = vadd.f32 %v9006, %v9054
    %9056 = vmatmul.bf16.gmra.mxu0 %v6906
    %v9057 = vpop.f32.mrf.mxu0
    %v9058 = vadd.f32 %v9009, %v9057
    %v9059 = vpop.f32.mrf.mxu0
    %v9060 = vadd.f32 %v9011, %v9059
    %9061 = vmatmul.bf16.gmra.mxu0 %v6915
    %v9062 = vpop.f32.mrf.mxu0
    %v9063 = vadd.f32 %v9014, %v9062
    %v9064 = vpop.f32.mrf.mxu0
    %v9065 = vadd.f32 %v9016, %v9064
    %9066 = vmatmul.bf16.gmra.mxu0 %v6924
    %v9067 = vpop.f32.mrf.mxu0
    %v9068 = vadd.f32 %v9019, %v9067
    %v9069 = vpop.f32.mrf.mxu0
    %v9070 = vadd.f32 %v9021, %v9069
    %9071 = vmatmul.bf16.gmra.mxu0 %v6933
    %v9072 = vpop.f32.mrf.mxu0
    %v9073 = vadd.f32 %v9024, %v9072
    %v9074 = vpop.f32.mrf.mxu0
    %v9075 = vadd.f32 %v9026, %v9074
    %9076 = vmatmul.bf16.gmra.mxu0 %v6942
    %v9077 = vpop.f32.mrf.mxu0
    %v9078 = vadd.f32 %v9029, %v9077
    %v9079 = vpop.f32.mrf.mxu0
    %v9080 = vadd.f32 %v9031, %v9079
    %9081 = vmatmul.bf16.gmra.mxu0 %v6951
    %v9082 = vpop.f32.mrf.mxu0
    %v9083 = vadd.f32 %v9034, %v9082
    %v9084 = vpop.f32.mrf.mxu0
    %v9085 = vadd.f32 %v9036, %v9084
    %9086 = vmatmul.bf16.gmra.mxu0 %v6960
    %v9087 = vpop.f32.mrf.mxu0
    %v9088 = vadd.f32 %v9039, %v9087
    %v9089 = vpop.f32.mrf.mxu0
    %v9090 = vadd.f32 %v9041, %v9089
    %9091 = vdwg.mxu0
    %9092 = vmatpush.bf16.msra.mxu0 %v8408
    %9093 = vmatpush.bf16.msra.mxu0 %v8404
    %9094 = vmatpush.bf16.msra.mxu0 %v8400
    %9095 = vmatpush.bf16.msra.mxu0 %v8396
    %9096 = vmatpush.bf16.msra.mxu0 %v8392
    %9097 = vmatpush.bf16.msra.mxu0 %v8388
    %9098 = vmatpush.bf16.msra.mxu0 %v8384
    %9099 = vmatpush.bf16.msra.mxu0 %v8380
    %9100 = vmatmul.bf16.gmra.mxu0 %v6898
    %v9101 = vpop.f32.mrf.mxu0
    %v9102 = vadd.f32 %v9053, %v9101
    %v9103 = vpop.f32.mrf.mxu0
    %v9104 = vadd.f32 %v9055, %v9103
    %9105 = vmatmul.bf16.gmra.mxu0 %v6907
    %v9106 = vpop.f32.mrf.mxu0
    %v9107 = vadd.f32 %v9058, %v9106
    %v9108 = vpop.f32.mrf.mxu0
    %v9109 = vadd.f32 %v9060, %v9108
    %9110 = vmatmul.bf16.gmra.mxu0 %v6916
    %v9111 = vpop.f32.mrf.mxu0
    %v9112 = vadd.f32 %v9063, %v9111
    %v9113 = vpop.f32.mrf.mxu0
    %v9114 = vadd.f32 %v9065, %v9113
    %9115 = vmatmul.bf16.gmra.mxu0 %v6925
    %v9116 = vpop.f32.mrf.mxu0
    %v9117 = vadd.f32 %v9068, %v9116
    %v9118 = vpop.f32.mrf.mxu0
    %v9119 = vadd.f32 %v9070, %v9118
    %9120 = vmatmul.bf16.gmra.mxu0 %v6934
    %v9121 = vpop.f32.mrf.mxu0
    %v9122 = vadd.f32 %v9073, %v9121
    %v9123 = vpop.f32.mrf.mxu0
    %v9124 = vadd.f32 %v9075, %v9123
    %9125 = vmatmul.bf16.gmra.mxu0 %v6943
    %v9126 = vpop.f32.mrf.mxu0
    %v9127 = vadd.f32 %v9078, %v9126
    %v9128 = vpop.f32.mrf.mxu0
    %v9129 = vadd.f32 %v9080, %v9128
    %9130 = vmatmul.bf16.gmra.mxu0 %v6952
    %v9131 = vpop.f32.mrf.mxu0
    %v9132 = vadd.f32 %v9083, %v9131
    %v9133 = vpop.f32.mrf.mxu0
    %v9134 = vadd.f32 %v9085, %v9133
    %9135 = vmatmul.bf16.gmra.mxu0 %v6961
    %v9136 = vpop.f32.mrf.mxu0
    %v9137 = vadd.f32 %v9088, %v9136
    %v9138 = vpop.f32.mrf.mxu0
    %v9139 = vadd.f32 %v9090, %v9138
    %9140 = vdwg.mxu0
    %9141 = vmatpush.bf16.msra.mxu0 %v8153
    %9142 = vmatpush.bf16.msra.mxu0 %v8149
    %9143 = vmatpush.bf16.msra.mxu0 %v8145
    %9144 = vmatpush.bf16.msra.mxu0 %v8141
    %9145 = vmatpush.bf16.msra.mxu0 %v8137
    %9146 = vmatpush.bf16.msra.mxu0 %v8133
    %9147 = vmatpush.bf16.msra.mxu0 %v8129
    %9148 = vmatpush.bf16.msra.mxu0 %v8125
    %9149 = vmatmul.bf16.gmra.mxu0 %v6890
    %v9150 = vpop.f32.mrf.mxu0
    %v9151 = vadd.f32 %v7253, %v9150
    %v9152 = vpop.f32.mrf.mxu0
    %v9153 = vadd.f32 %v7253, %v9152
    %9154 = vmatmul.bf16.gmra.mxu0 %v6899
    %v9155 = vpop.f32.mrf.mxu0
    %v9156 = vadd.f32 %v7253, %v9155
    %v9157 = vpop.f32.mrf.mxu0
    %v9158 = vadd.f32 %v7253, %v9157
    %9159 = vmatmul.bf16.gmra.mxu0 %v6908
    %v9160 = vpop.f32.mrf.mxu0
    %v9161 = vadd.f32 %v7253, %v9160
    %v9162 = vpop.f32.mrf.mxu0
    %v9163 = vadd.f32 %v7253, %v9162
    %9164 = vmatmul.bf16.gmra.mxu0 %v6917
    %v9165 = vpop.f32.mrf.mxu0
    %v9166 = vadd.f32 %v7253, %v9165
    %v9167 = vpop.f32.mrf.mxu0
    %v9168 = vadd.f32 %v7253, %v9167
    %9169 = vmatmul.bf16.gmra.mxu0 %v6926
    %v9170 = vpop.f32.mrf.mxu0
    %v9171 = vadd.f32 %v7253, %v9170
    %v9172 = vpop.f32.mrf.mxu0
    %v9173 = vadd.f32 %v7253, %v9172
    %9174 = vmatmul.bf16.gmra.mxu0 %v6935
    %v9175 = vpop.f32.mrf.mxu0
    %v9176 = vadd.f32 %v7253, %v9175
    %v9177 = vpop.f32.mrf.mxu0
    %v9178 = vadd.f32 %v7253, %v9177
    %9179 = vmatmul.bf16.gmra.mxu0 %v6944
    %v9180 = vpop.f32.mrf.mxu0
    %v9181 = vadd.f32 %v7253, %v9180
    %v9182 = vpop.f32.mrf.mxu0
    %v9183 = vadd.f32 %v7253, %v9182
    %9184 = vmatmul.bf16.gmra.mxu0 %v6953
    %v9185 = vpop.f32.mrf.mxu0
    %v9186 = vadd.f32 %v7253, %v9185
    %v9187 = vpop.f32.mrf.mxu0
    %v9188 = vadd.f32 %v7253, %v9187
    %9189 = vdwg.mxu0
    %9190 = vmatpush.bf16.msra.mxu0 %v8185
    %9191 = vmatpush.bf16.msra.mxu0 %v8181
    %9192 = vmatpush.bf16.msra.mxu0 %v8177
    %9193 = vmatpush.bf16.msra.mxu0 %v8173
    %9194 = vmatpush.bf16.msra.mxu0 %v8169
    %9195 = vmatpush.bf16.msra.mxu0 %v8165
    %9196 = vmatpush.bf16.msra.mxu0 %v8161
    %9197 = vmatpush.bf16.msra.mxu0 %v8157
    %9198 = vmatmul.bf16.gmra.mxu0 %v6891
    %v9199 = vpop.f32.mrf.mxu0
    %v9200 = vadd.f32 %v9151, %v9199
    %v9201 = vpop.f32.mrf.mxu0
    %v9202 = vadd.f32 %v9153, %v9201
    %9203 = vmatmul.bf16.gmra.mxu0 %v6900
    %v9204 = vpop.f32.mrf.mxu0
    %v9205 = vadd.f32 %v9156, %v9204
    %v9206 = vpop.f32.mrf.mxu0
    %v9207 = vadd.f32 %v9158, %v9206
    %9208 = vmatmul.bf16.gmra.mxu0 %v6909
    %v9209 = vpop.f32.mrf.mxu0
    %v9210 = vadd.f32 %v9161, %v9209
    %v9211 = vpop.f32.mrf.mxu0
    %v9212 = vadd.f32 %v9163, %v9211
    %9213 = vmatmul.bf16.gmra.mxu0 %v6918
    %v9214 = vpop.f32.mrf.mxu0
    %v9215 = vadd.f32 %v9166, %v9214
    %v9216 = vpop.f32.mrf.mxu0
    %v9217 = vadd.f32 %v9168, %v9216
    %9218 = vmatmul.bf16.gmra.mxu0 %v6927
    %v9219 = vpop.f32.mrf.mxu0
    %v9220 = vadd.f32 %v9171, %v9219
    %v9221 = vpop.f32.mrf.mxu0
    %v9222 = vadd.f32 %v9173, %v9221
    %9223 = vmatmul.bf16.gmra.mxu0 %v6936
    %v9224 = vpop.f32.mrf.mxu0
    %v9225 = vadd.f32 %v9176, %v9224
    %v9226 = vpop.f32.mrf.mxu0
    %v9227 = vadd.f32 %v9178, %v9226
    %9228 = vmatmul.bf16.gmra.mxu0 %v6945
    %v9229 = vpop.f32.mrf.mxu0
    %v9230 = vadd.f32 %v9181, %v9229
    %v9231 = vpop.f32.mrf.mxu0
    %v9232 = vadd.f32 %v9183, %v9231
    %9233 = vmatmul.bf16.gmra.mxu0 %v6954
    %v9234 = vpop.f32.mrf.mxu0
    %v9235 = vadd.f32 %v9186, %v9234
    %v9236 = vpop.f32.mrf.mxu0
    %v9237 = vadd.f32 %v9188, %v9236
    %9238 = vdwg.mxu0
    %9239 = vmatpush.bf16.msra.mxu0 %v8217
    %9240 = vmatpush.bf16.msra.mxu0 %v8213
    %9241 = vmatpush.bf16.msra.mxu0 %v8209
    %9242 = vmatpush.bf16.msra.mxu0 %v8205
    %9243 = vmatpush.bf16.msra.mxu0 %v8201
    %9244 = vmatpush.bf16.msra.mxu0 %v8197
    %9245 = vmatpush.bf16.msra.mxu0 %v8193
    %9246 = vmatpush.bf16.msra.mxu0 %v8189
    %9247 = vmatmul.bf16.gmra.mxu0 %v6892
    %v9248 = vpop.f32.mrf.mxu0
    %v9249 = vadd.f32 %v9200, %v9248
    %v9250 = vpop.f32.mrf.mxu0
    %v9251 = vadd.f32 %v9202, %v9250
    %9252 = vmatmul.bf16.gmra.mxu0 %v6901
    %v9253 = vpop.f32.mrf.mxu0
    %v9254 = vadd.f32 %v9205, %v9253
    %v9255 = vpop.f32.mrf.mxu0
    %v9256 = vadd.f32 %v9207, %v9255
    %9257 = vmatmul.bf16.gmra.mxu0 %v6910
    %v9258 = vpop.f32.mrf.mxu0
    %v9259 = vadd.f32 %v9210, %v9258
    %v9260 = vpop.f32.mrf.mxu0
    %v9261 = vadd.f32 %v9212, %v9260
    %9262 = vmatmul.bf16.gmra.mxu0 %v6919
    %v9263 = vpop.f32.mrf.mxu0
    %v9264 = vadd.f32 %v9215, %v9263
    %v9265 = vpop.f32.mrf.mxu0
    %v9266 = vadd.f32 %v9217, %v9265
    %9267 = vmatmul.bf16.gmra.mxu0 %v6928
    %v9268 = vpop.f32.mrf.mxu0
    %v9269 = vadd.f32 %v9220, %v9268
    %v9270 = vpop.f32.mrf.mxu0
    %v9271 = vadd.f32 %v9222, %v9270
    %9272 = vmatmul.bf16.gmra.mxu0 %v6937
    %v9273 = vpop.f32.mrf.mxu0
    %v9274 = vadd.f32 %v9225, %v9273
    %v9275 = vpop.f32.mrf.mxu0
    %v9276 = vadd.f32 %v9227, %v9275
    %9277 = vmatmul.bf16.gmra.mxu0 %v6946
    %v9278 = vpop.f32.mrf.mxu0
    %v9279 = vadd.f32 %v9230, %v9278
    %v9280 = vpop.f32.mrf.mxu0
    %v9281 = vadd.f32 %v9232, %v9280
    %9282 = vmatmul.bf16.gmra.mxu0 %v6955
    %v9283 = vpop.f32.mrf.mxu0
    %v9284 = vadd.f32 %v9235, %v9283
    %v9285 = vpop.f32.mrf.mxu0
    %v9286 = vadd.f32 %v9237, %v9285
    %9287 = vdwg.mxu0
    %9288 = vmatpush.bf16.msra.mxu0 %v8249
    %9289 = vmatpush.bf16.msra.mxu0 %v8245
    %9290 = vmatpush.bf16.msra.mxu0 %v8241
    %9291 = vmatpush.bf16.msra.mxu0 %v8237
    %9292 = vmatpush.bf16.msra.mxu0 %v8233
    %9293 = vmatpush.bf16.msra.mxu0 %v8229
    %9294 = vmatpush.bf16.msra.mxu0 %v8225
    %9295 = vmatpush.bf16.msra.mxu0 %v8221
    %9296 = vmatmul.bf16.gmra.mxu0 %v6893
    %v9297 = vpop.f32.mrf.mxu0
    %v9298 = vadd.f32 %v9249, %v9297
    %v9299 = vpop.f32.mrf.mxu0
    %v9300 = vadd.f32 %v9251, %v9299
    %9301 = vmatmul.bf16.gmra.mxu0 %v6902
    %v9302 = vpop.f32.mrf.mxu0
    %v9303 = vadd.f32 %v9254, %v9302
    %v9304 = vpop.f32.mrf.mxu0
    %v9305 = vadd.f32 %v9256, %v9304
    %9306 = vmatmul.bf16.gmra.mxu0 %v6911
    %v9307 = vpop.f32.mrf.mxu0
    %v9308 = vadd.f32 %v9259, %v9307
    %v9309 = vpop.f32.mrf.mxu0
    %v9310 = vadd.f32 %v9261, %v9309
    %9311 = vmatmul.bf16.gmra.mxu0 %v6920
    %v9312 = vpop.f32.mrf.mxu0
    %v9313 = vadd.f32 %v9264, %v9312
    %v9314 = vpop.f32.mrf.mxu0
    %v9315 = vadd.f32 %v9266, %v9314
    %9316 = vmatmul.bf16.gmra.mxu0 %v6929
    %v9317 = vpop.f32.mrf.mxu0
    %v9318 = vadd.f32 %v9269, %v9317
    %v9319 = vpop.f32.mrf.mxu0
    %v9320 = vadd.f32 %v9271, %v9319
    %9321 = vmatmul.bf16.gmra.mxu0 %v6938
    %v9322 = vpop.f32.mrf.mxu0
    %v9323 = vadd.f32 %v9274, %v9322
    %v9324 = vpop.f32.mrf.mxu0
    %v9325 = vadd.f32 %v9276, %v9324
    %9326 = vmatmul.bf16.gmra.mxu0 %v6947
    %v9327 = vpop.f32.mrf.mxu0
    %v9328 = vadd.f32 %v9279, %v9327
    %v9329 = vpop.f32.mrf.mxu0
    %v9330 = vadd.f32 %v9281, %v9329
    %9331 = vmatmul.bf16.gmra.mxu0 %v6956
    %v9332 = vpop.f32.mrf.mxu0
    %v9333 = vadd.f32 %v9284, %v9332
    %v9334 = vpop.f32.mrf.mxu0
    %v9335 = vadd.f32 %v9286, %v9334
    %9336 = vdwg.mxu0
    %9337 = vmatpush.bf16.msra.mxu0 %v8281
    %9338 = vmatpush.bf16.msra.mxu0 %v8277
    %9339 = vmatpush.bf16.msra.mxu0 %v8273
    %9340 = vmatpush.bf16.msra.mxu0 %v8269
    %9341 = vmatpush.bf16.msra.mxu0 %v8265
    %9342 = vmatpush.bf16.msra.mxu0 %v8261
    %9343 = vmatpush.bf16.msra.mxu0 %v8257
    %9344 = vmatpush.bf16.msra.mxu0 %v8253
    %9345 = vmatmul.bf16.gmra.mxu0 %v6894
    %v9346 = vpop.f32.mrf.mxu0
    %v9347 = vadd.f32 %v9298, %v9346
    %v9348 = vpop.f32.mrf.mxu0
    %v9349 = vadd.f32 %v9300, %v9348
    %9350 = vmatmul.bf16.gmra.mxu0 %v6903
    %v9351 = vpop.f32.mrf.mxu0
    %v9352 = vadd.f32 %v9303, %v9351
    %v9353 = vpop.f32.mrf.mxu0
    %v9354 = vadd.f32 %v9305, %v9353
    %9355 = vmatmul.bf16.gmra.mxu0 %v6912
    %v9356 = vpop.f32.mrf.mxu0
    %v9357 = vadd.f32 %v9308, %v9356
    %v9358 = vpop.f32.mrf.mxu0
    %v9359 = vadd.f32 %v9310, %v9358
    %9360 = vmatmul.bf16.gmra.mxu0 %v6921
    %v9361 = vpop.f32.mrf.mxu0
    %v9362 = vadd.f32 %v9313, %v9361
    %v9363 = vpop.f32.mrf.mxu0
    %v9364 = vadd.f32 %v9315, %v9363
    %9365 = vmatmul.bf16.gmra.mxu0 %v6930
    %v9366 = vpop.f32.mrf.mxu0
    %v9367 = vadd.f32 %v9318, %v9366
    %v9368 = vpop.f32.mrf.mxu0
    %v9369 = vadd.f32 %v9320, %v9368
    %9370 = vmatmul.bf16.gmra.mxu0 %v6939
    %v9371 = vpop.f32.mrf.mxu0
    %v9372 = vadd.f32 %v9323, %v9371
    %v9373 = vpop.f32.mrf.mxu0
    %v9374 = vadd.f32 %v9325, %v9373
    %9375 = vmatmul.bf16.gmra.mxu0 %v6948
    %v9376 = vpop.f32.mrf.mxu0
    %v9377 = vadd.f32 %v9328, %v9376
    %v9378 = vpop.f32.mrf.mxu0
    %v9379 = vadd.f32 %v9330, %v9378
    %9380 = vmatmul.bf16.gmra.mxu0 %v6957
    %v9381 = vpop.f32.mrf.mxu0
    %v9382 = vadd.f32 %v9333, %v9381
    %v9383 = vpop.f32.mrf.mxu0
    %v9384 = vadd.f32 %v9335, %v9383
    %9385 = vdwg.mxu0
    %9386 = vmatpush.bf16.msra.mxu0 %v8313
    %9387 = vmatpush.bf16.msra.mxu0 %v8309
    %9388 = vmatpush.bf16.msra.mxu0 %v8305
    %9389 = vmatpush.bf16.msra.mxu0 %v8301
    %9390 = vmatpush.bf16.msra.mxu0 %v8297
    %9391 = vmatpush.bf16.msra.mxu0 %v8293
    %9392 = vmatpush.bf16.msra.mxu0 %v8289
    %9393 = vmatpush.bf16.msra.mxu0 %v8285
    %9394 = vmatmul.bf16.gmra.mxu0 %v6895
    %v9395 = vpop.f32.mrf.mxu0
    %v9396 = vadd.f32 %v9347, %v9395
    %v9397 = vpop.f32.mrf.mxu0
    %v9398 = vadd.f32 %v9349, %v9397
    %9399 = vmatmul.bf16.gmra.mxu0 %v6904
    %v9400 = vpop.f32.mrf.mxu0
    %v9401 = vadd.f32 %v9352, %v9400
    %v9402 = vpop.f32.mrf.mxu0
    %v9403 = vadd.f32 %v9354, %v9402
    %9404 = vmatmul.bf16.gmra.mxu0 %v6913
    %v9405 = vpop.f32.mrf.mxu0
    %v9406 = vadd.f32 %v9357, %v9405
    %v9407 = vpop.f32.mrf.mxu0
    %v9408 = vadd.f32 %v9359, %v9407
    %9409 = vmatmul.bf16.gmra.mxu0 %v6922
    %v9410 = vpop.f32.mrf.mxu0
    %v9411 = vadd.f32 %v9362, %v9410
    %v9412 = vpop.f32.mrf.mxu0
    %v9413 = vadd.f32 %v9364, %v9412
    %9414 = vmatmul.bf16.gmra.mxu0 %v6931
    %v9415 = vpop.f32.mrf.mxu0
    %v9416 = vadd.f32 %v9367, %v9415
    %v9417 = vpop.f32.mrf.mxu0
    %v9418 = vadd.f32 %v9369, %v9417
    %9419 = vmatmul.bf16.gmra.mxu0 %v6940
    %v9420 = vpop.f32.mrf.mxu0
    %v9421 = vadd.f32 %v9372, %v9420
    %v9422 = vpop.f32.mrf.mxu0
    %v9423 = vadd.f32 %v9374, %v9422
    %9424 = vmatmul.bf16.gmra.mxu0 %v6949
    %v9425 = vpop.f32.mrf.mxu0
    %v9426 = vadd.f32 %v9377, %v9425
    %v9427 = vpop.f32.mrf.mxu0
    %v9428 = vadd.f32 %v9379, %v9427
    %9429 = vmatmul.bf16.gmra.mxu0 %v6958
    %v9430 = vpop.f32.mrf.mxu0
    %v9431 = vadd.f32 %v9382, %v9430
    %v9432 = vpop.f32.mrf.mxu0
    %v9433 = vadd.f32 %v9384, %v9432
    %9434 = vdwg.mxu0
    %9435 = vmatpush.bf16.msra.mxu0 %v8345
    %9436 = vmatpush.bf16.msra.mxu0 %v8341
    %9437 = vmatpush.bf16.msra.mxu0 %v8337
    %9438 = vmatpush.bf16.msra.mxu0 %v8333
    %9439 = vmatpush.bf16.msra.mxu0 %v8329
    %9440 = vmatpush.bf16.msra.mxu0 %v8325
    %9441 = vmatpush.bf16.msra.mxu0 %v8321
    %9442 = vmatpush.bf16.msra.mxu0 %v8317
    %9443 = vmatmul.bf16.gmra.mxu0 %v6896
    %v9444 = vpop.f32.mrf.mxu0
    %v9445 = vadd.f32 %v9396, %v9444
    %v9446 = vpop.f32.mrf.mxu0
    %v9447 = vadd.f32 %v9398, %v9446
    %9448 = vmatmul.bf16.gmra.mxu0 %v6905
    %v9449 = vpop.f32.mrf.mxu0
    %v9450 = vadd.f32 %v9401, %v9449
    %v9451 = vpop.f32.mrf.mxu0
    %v9452 = vadd.f32 %v9403, %v9451
    %9453 = vmatmul.bf16.gmra.mxu0 %v6914
    %v9454 = vpop.f32.mrf.mxu0
    %v9455 = vadd.f32 %v9406, %v9454
    %v9456 = vpop.f32.mrf.mxu0
    %v9457 = vadd.f32 %v9408, %v9456
    %9458 = vmatmul.bf16.gmra.mxu0 %v6923
    %v9459 = vpop.f32.mrf.mxu0
    %v9460 = vadd.f32 %v9411, %v9459
    %v9461 = vpop.f32.mrf.mxu0
    %v9462 = vadd.f32 %v9413, %v9461
    %9463 = vmatmul.bf16.gmra.mxu0 %v6932
    %v9464 = vpop.f32.mrf.mxu0
    %v9465 = vadd.f32 %v9416, %v9464
    %v9466 = vpop.f32.mrf.mxu0
    %v9467 = vadd.f32 %v9418, %v9466
    %9468 = vmatmul.bf16.gmra.mxu0 %v6941
    %v9469 = vpop.f32.mrf.mxu0
    %v9470 = vadd.f32 %v9421, %v9469
    %v9471 = vpop.f32.mrf.mxu0
    %v9472 = vadd.f32 %v9423, %v9471
    %9473 = vmatmul.bf16.gmra.mxu0 %v6950
    %v9474 = vpop.f32.mrf.mxu0
    %v9475 = vadd.f32 %v9426, %v9474
    %v9476 = vpop.f32.mrf.mxu0
    %v9477 = vadd.f32 %v9428, %v9476
    %9478 = vmatmul.bf16.gmra.mxu0 %v6959
    %v9479 = vpop.f32.mrf.mxu0
    %v9480 = vadd.f32 %v9431, %v9479
    %v9481 = vpop.f32.mrf.mxu0
    %v9482 = vadd.f32 %v9433, %v9481
    %9483 = vdwg.mxu0
    %9484 = vmatpush.bf16.msra.mxu0 %v8377
    %9485 = vmatpush.bf16.msra.mxu0 %v8373
    %9486 = vmatpush.bf16.msra.mxu0 %v8369
    %9487 = vmatpush.bf16.msra.mxu0 %v8365
    %9488 = vmatpush.bf16.msra.mxu0 %v8361
    %9489 = vmatpush.bf16.msra.mxu0 %v8357
    %9490 = vmatpush.bf16.msra.mxu0 %v8353
    %9491 = vmatpush.bf16.msra.mxu0 %v8349
    %9492 = vmatmul.bf16.gmra.mxu0 %v6897
    %v9493 = vpop.f32.mrf.mxu0
    %v9494 = vadd.f32 %v9445, %v9493
    %v9495 = vpop.f32.mrf.mxu0
    %v9496 = vadd.f32 %v9447, %v9495
    %9497 = vmatmul.bf16.gmra.mxu0 %v6906
    %v9498 = vpop.f32.mrf.mxu0
    %v9499 = vadd.f32 %v9450, %v9498
    %v9500 = vpop.f32.mrf.mxu0
    %v9501 = vadd.f32 %v9452, %v9500
    %9502 = vmatmul.bf16.gmra.mxu0 %v6915
    %v9503 = vpop.f32.mrf.mxu0
    %v9504 = vadd.f32 %v9455, %v9503
    %v9505 = vpop.f32.mrf.mxu0
    %v9506 = vadd.f32 %v9457, %v9505
    %9507 = vmatmul.bf16.gmra.mxu0 %v6924
    %v9508 = vpop.f32.mrf.mxu0
    %v9509 = vadd.f32 %v9460, %v9508
    %v9510 = vpop.f32.mrf.mxu0
    %v9511 = vadd.f32 %v9462, %v9510
    %9512 = vmatmul.bf16.gmra.mxu0 %v6933
    %v9513 = vpop.f32.mrf.mxu0
    %v9514 = vadd.f32 %v9465, %v9513
    %v9515 = vpop.f32.mrf.mxu0
    %v9516 = vadd.f32 %v9467, %v9515
    %9517 = vmatmul.bf16.gmra.mxu0 %v6942
    %v9518 = vpop.f32.mrf.mxu0
    %v9519 = vadd.f32 %v9470, %v9518
    %v9520 = vpop.f32.mrf.mxu0
    %v9521 = vadd.f32 %v9472, %v9520
    %9522 = vmatmul.bf16.gmra.mxu0 %v6951
    %v9523 = vpop.f32.mrf.mxu0
    %v9524 = vadd.f32 %v9475, %v9523
    %v9525 = vpop.f32.mrf.mxu0
    %v9526 = vadd.f32 %v9477, %v9525
    %9527 = vmatmul.bf16.gmra.mxu0 %v6960
    %v9528 = vpop.f32.mrf.mxu0
    %v9529 = vadd.f32 %v9480, %v9528
    %v9530 = vpop.f32.mrf.mxu0
    %v9531 = vadd.f32 %v9482, %v9530
    %9532 = vdwg.mxu0
    %9533 = vmatpush.bf16.msra.mxu0 %v8409
    %9534 = vmatpush.bf16.msra.mxu0 %v8405
    %9535 = vmatpush.bf16.msra.mxu0 %v8401
    %9536 = vmatpush.bf16.msra.mxu0 %v8397
    %9537 = vmatpush.bf16.msra.mxu0 %v8393
    %9538 = vmatpush.bf16.msra.mxu0 %v8389
    %9539 = vmatpush.bf16.msra.mxu0 %v8385
    %9540 = vmatpush.bf16.msra.mxu0 %v8381
    %9541 = vmatmul.bf16.gmra.mxu0 %v6898
    %v9542 = vpop.f32.mrf.mxu0
    %v9543 = vadd.f32 %v9494, %v9542
    %v9544 = vpop.f32.mrf.mxu0
    %v9545 = vadd.f32 %v9496, %v9544
    %9546 = vmatmul.bf16.gmra.mxu0 %v6907
    %v9547 = vpop.f32.mrf.mxu0
    %v9548 = vadd.f32 %v9499, %v9547
    %v9549 = vpop.f32.mrf.mxu0
    %v9550 = vadd.f32 %v9501, %v9549
    %9551 = vmatmul.bf16.gmra.mxu0 %v6916
    %v9552 = vpop.f32.mrf.mxu0
    %v9553 = vadd.f32 %v9504, %v9552
    %v9554 = vpop.f32.mrf.mxu0
    %v9555 = vadd.f32 %v9506, %v9554
    %9556 = vmatmul.bf16.gmra.mxu0 %v6925
    %v9557 = vpop.f32.mrf.mxu0
    %v9558 = vadd.f32 %v9509, %v9557
    %v9559 = vpop.f32.mrf.mxu0
    %v9560 = vadd.f32 %v9511, %v9559
    %9561 = vmatmul.bf16.gmra.mxu0 %v6934
    %v9562 = vpop.f32.mrf.mxu0
    %v9563 = vadd.f32 %v9514, %v9562
    %v9564 = vpop.f32.mrf.mxu0
    %v9565 = vadd.f32 %v9516, %v9564
    %9566 = vmatmul.bf16.gmra.mxu0 %v6943
    %v9567 = vpop.f32.mrf.mxu0
    %v9568 = vadd.f32 %v9519, %v9567
    %v9569 = vpop.f32.mrf.mxu0
    %v9570 = vadd.f32 %v9521, %v9569
    %9571 = vmatmul.bf16.gmra.mxu0 %v6952
    %v9572 = vpop.f32.mrf.mxu0
    %v9573 = vadd.f32 %v9524, %v9572
    %v9574 = vpop.f32.mrf.mxu0
    %v9575 = vadd.f32 %v9526, %v9574
    %9576 = vmatmul.bf16.gmra.mxu0 %v6961
    %v9577 = vpop.f32.mrf.mxu0
    %v9578 = vadd.f32 %v9529, %v9577
    %v9579 = vpop.f32.mrf.mxu0
    %v9580 = vadd.f32 %v9531, %v9579
    %9581 = vdwg.mxu0
    %9582 = vmatpush.bf16.msra.mxu0 %v8154
    %9583 = vmatpush.bf16.msra.mxu0 %v8150
    %9584 = vmatpush.bf16.msra.mxu0 %v8146
    %9585 = vmatpush.bf16.msra.mxu0 %v8142
    %9586 = vmatpush.bf16.msra.mxu0 %v8138
    %9587 = vmatpush.bf16.msra.mxu0 %v8134
    %9588 = vmatpush.bf16.msra.mxu0 %v8130
    %9589 = vmatpush.bf16.msra.mxu0 %v8126
    %9590 = vmatmul.bf16.gmra.mxu0 %v6890
    %v9591 = vpop.f32.mrf.mxu0
    %v9592 = vadd.f32 %v7254, %v9591
    %v9593 = vpop.f32.mrf.mxu0
    %v9594 = vadd.f32 %v7254, %v9593
    %9595 = vmatmul.bf16.gmra.mxu0 %v6899
    %v9596 = vpop.f32.mrf.mxu0
    %v9597 = vadd.f32 %v7254, %v9596
    %v9598 = vpop.f32.mrf.mxu0
    %v9599 = vadd.f32 %v7254, %v9598
    %9600 = vmatmul.bf16.gmra.mxu0 %v6908
    %v9601 = vpop.f32.mrf.mxu0
    %v9602 = vadd.f32 %v7254, %v9601
    %v9603 = vpop.f32.mrf.mxu0
    %v9604 = vadd.f32 %v7254, %v9603
    %9605 = vmatmul.bf16.gmra.mxu0 %v6917
    %v9606 = vpop.f32.mrf.mxu0
    %v9607 = vadd.f32 %v7254, %v9606
    %v9608 = vpop.f32.mrf.mxu0
    %v9609 = vadd.f32 %v7254, %v9608
    %9610 = vmatmul.bf16.gmra.mxu0 %v6926
    %v9611 = vpop.f32.mrf.mxu0
    %v9612 = vadd.f32 %v7254, %v9611
    %v9613 = vpop.f32.mrf.mxu0
    %v9614 = vadd.f32 %v7254, %v9613
    %9615 = vmatmul.bf16.gmra.mxu0 %v6935
    %v9616 = vpop.f32.mrf.mxu0
    %v9617 = vadd.f32 %v7254, %v9616
    %v9618 = vpop.f32.mrf.mxu0
    %v9619 = vadd.f32 %v7254, %v9618
    %9620 = vmatmul.bf16.gmra.mxu0 %v6944
    %v9621 = vpop.f32.mrf.mxu0
    %v9622 = vadd.f32 %v7254, %v9621
    %v9623 = vpop.f32.mrf.mxu0
    %v9624 = vadd.f32 %v7254, %v9623
    %9625 = vmatmul.bf16.gmra.mxu0 %v6953
    %v9626 = vpop.f32.mrf.mxu0
    %v9627 = vadd.f32 %v7254, %v9626
    %v9628 = vpop.f32.mrf.mxu0
    %v9629 = vadd.f32 %v7254, %v9628
    %9630 = vdwg.mxu0
    %9631 = vmatpush.bf16.msra.mxu0 %v8186
    %9632 = vmatpush.bf16.msra.mxu0 %v8182
    %9633 = vmatpush.bf16.msra.mxu0 %v8178
    %9634 = vmatpush.bf16.msra.mxu0 %v8174
    %9635 = vmatpush.bf16.msra.mxu0 %v8170
    %9636 = vmatpush.bf16.msra.mxu0 %v8166
    %9637 = vmatpush.bf16.msra.mxu0 %v8162
    %9638 = vmatpush.bf16.msra.mxu0 %v8158
    %9639 = vmatmul.bf16.gmra.mxu0 %v6891
    %v9640 = vpop.f32.mrf.mxu0
    %v9641 = vadd.f32 %v9592, %v9640
    %v9642 = vpop.f32.mrf.mxu0
    %v9643 = vadd.f32 %v9594, %v9642
    %9644 = vmatmul.bf16.gmra.mxu0 %v6900
    %v9645 = vpop.f32.mrf.mxu0
    %v9646 = vadd.f32 %v9597, %v9645
    %v9647 = vpop.f32.mrf.mxu0
    %v9648 = vadd.f32 %v9599, %v9647
    %9649 = vmatmul.bf16.gmra.mxu0 %v6909
    %v9650 = vpop.f32.mrf.mxu0
    %v9651 = vadd.f32 %v9602, %v9650
    %v9652 = vpop.f32.mrf.mxu0
    %v9653 = vadd.f32 %v9604, %v9652
    %9654 = vmatmul.bf16.gmra.mxu0 %v6918
    %v9655 = vpop.f32.mrf.mxu0
    %v9656 = vadd.f32 %v9607, %v9655
    %v9657 = vpop.f32.mrf.mxu0
    %v9658 = vadd.f32 %v9609, %v9657
    %9659 = vmatmul.bf16.gmra.mxu0 %v6927
    %v9660 = vpop.f32.mrf.mxu0
    %v9661 = vadd.f32 %v9612, %v9660
    %v9662 = vpop.f32.mrf.mxu0
    %v9663 = vadd.f32 %v9614, %v9662
    %9664 = vmatmul.bf16.gmra.mxu0 %v6936
    %v9665 = vpop.f32.mrf.mxu0
    %v9666 = vadd.f32 %v9617, %v9665
    %v9667 = vpop.f32.mrf.mxu0
    %v9668 = vadd.f32 %v9619, %v9667
    %9669 = vmatmul.bf16.gmra.mxu0 %v6945
    %v9670 = vpop.f32.mrf.mxu0
    %v9671 = vadd.f32 %v9622, %v9670
    %v9672 = vpop.f32.mrf.mxu0
    %v9673 = vadd.f32 %v9624, %v9672
    %9674 = vmatmul.bf16.gmra.mxu0 %v6954
    %v9675 = vpop.f32.mrf.mxu0
    %v9676 = vadd.f32 %v9627, %v9675
    %v9677 = vpop.f32.mrf.mxu0
    %v9678 = vadd.f32 %v9629, %v9677
    %9679 = vdwg.mxu0
    %9680 = vmatpush.bf16.msra.mxu0 %v8218
    %9681 = vmatpush.bf16.msra.mxu0 %v8214
    %9682 = vmatpush.bf16.msra.mxu0 %v8210
    %9683 = vmatpush.bf16.msra.mxu0 %v8206
    %9684 = vmatpush.bf16.msra.mxu0 %v8202
    %9685 = vmatpush.bf16.msra.mxu0 %v8198
    %9686 = vmatpush.bf16.msra.mxu0 %v8194
    %9687 = vmatpush.bf16.msra.mxu0 %v8190
    %9688 = vmatmul.bf16.gmra.mxu0 %v6892
    %v9689 = vpop.f32.mrf.mxu0
    %v9690 = vadd.f32 %v9641, %v9689
    %v9691 = vpop.f32.mrf.mxu0
    %v9692 = vadd.f32 %v9643, %v9691
    %9693 = vmatmul.bf16.gmra.mxu0 %v6901
    %v9694 = vpop.f32.mrf.mxu0
    %v9695 = vadd.f32 %v9646, %v9694
    %v9696 = vpop.f32.mrf.mxu0
    %v9697 = vadd.f32 %v9648, %v9696
    %9698 = vmatmul.bf16.gmra.mxu0 %v6910
    %v9699 = vpop.f32.mrf.mxu0
    %v9700 = vadd.f32 %v9651, %v9699
    %v9701 = vpop.f32.mrf.mxu0
    %v9702 = vadd.f32 %v9653, %v9701
    %9703 = vmatmul.bf16.gmra.mxu0 %v6919
    %v9704 = vpop.f32.mrf.mxu0
    %v9705 = vadd.f32 %v9656, %v9704
    %v9706 = vpop.f32.mrf.mxu0
    %v9707 = vadd.f32 %v9658, %v9706
    %9708 = vmatmul.bf16.gmra.mxu0 %v6928
    %v9709 = vpop.f32.mrf.mxu0
    %v9710 = vadd.f32 %v9661, %v9709
    %v9711 = vpop.f32.mrf.mxu0
    %v9712 = vadd.f32 %v9663, %v9711
    %9713 = vmatmul.bf16.gmra.mxu0 %v6937
    %v9714 = vpop.f32.mrf.mxu0
    %v9715 = vadd.f32 %v9666, %v9714
    %v9716 = vpop.f32.mrf.mxu0
    %v9717 = vadd.f32 %v9668, %v9716
    %9718 = vmatmul.bf16.gmra.mxu0 %v6946
    %v9719 = vpop.f32.mrf.mxu0
    %v9720 = vadd.f32 %v9671, %v9719
    %v9721 = vpop.f32.mrf.mxu0
    %v9722 = vadd.f32 %v9673, %v9721
    %9723 = vmatmul.bf16.gmra.mxu0 %v6955
    %v9724 = vpop.f32.mrf.mxu0
    %v9725 = vadd.f32 %v9676, %v9724
    %v9726 = vpop.f32.mrf.mxu0
    %v9727 = vadd.f32 %v9678, %v9726
    %9728 = vdwg.mxu0
    %9729 = vmatpush.bf16.msra.mxu0 %v8250
    %9730 = vmatpush.bf16.msra.mxu0 %v8246
    %9731 = vmatpush.bf16.msra.mxu0 %v8242
    %9732 = vmatpush.bf16.msra.mxu0 %v8238
    %9733 = vmatpush.bf16.msra.mxu0 %v8234
    %9734 = vmatpush.bf16.msra.mxu0 %v8230
    %9735 = vmatpush.bf16.msra.mxu0 %v8226
    %9736 = vmatpush.bf16.msra.mxu0 %v8222
    %9737 = vmatmul.bf16.gmra.mxu0 %v6893
    %v9738 = vpop.f32.mrf.mxu0
    %v9739 = vadd.f32 %v9690, %v9738
    %v9740 = vpop.f32.mrf.mxu0
    %v9741 = vadd.f32 %v9692, %v9740
    %9742 = vmatmul.bf16.gmra.mxu0 %v6902
    %v9743 = vpop.f32.mrf.mxu0
    %v9744 = vadd.f32 %v9695, %v9743
    %v9745 = vpop.f32.mrf.mxu0
    %v9746 = vadd.f32 %v9697, %v9745
    %9747 = vmatmul.bf16.gmra.mxu0 %v6911
    %v9748 = vpop.f32.mrf.mxu0
    %v9749 = vadd.f32 %v9700, %v9748
    %v9750 = vpop.f32.mrf.mxu0
    %v9751 = vadd.f32 %v9702, %v9750
    %9752 = vmatmul.bf16.gmra.mxu0 %v6920
    %v9753 = vpop.f32.mrf.mxu0
    %v9754 = vadd.f32 %v9705, %v9753
    %v9755 = vpop.f32.mrf.mxu0
    %v9756 = vadd.f32 %v9707, %v9755
    %9757 = vmatmul.bf16.gmra.mxu0 %v6929
    %v9758 = vpop.f32.mrf.mxu0
    %v9759 = vadd.f32 %v9710, %v9758
    %v9760 = vpop.f32.mrf.mxu0
    %v9761 = vadd.f32 %v9712, %v9760
    %9762 = vmatmul.bf16.gmra.mxu0 %v6938
    %v9763 = vpop.f32.mrf.mxu0
    %v9764 = vadd.f32 %v9715, %v9763
    %v9765 = vpop.f32.mrf.mxu0
    %v9766 = vadd.f32 %v9717, %v9765
    %9767 = vmatmul.bf16.gmra.mxu0 %v6947
    %v9768 = vpop.f32.mrf.mxu0
    %v9769 = vadd.f32 %v9720, %v9768
    %v9770 = vpop.f32.mrf.mxu0
    %v9771 = vadd.f32 %v9722, %v9770
    %9772 = vmatmul.bf16.gmra.mxu0 %v6956
    %v9773 = vpop.f32.mrf.mxu0
    %v9774 = vadd.f32 %v9725, %v9773
    %v9775 = vpop.f32.mrf.mxu0
    %v9776 = vadd.f32 %v9727, %v9775
    %9777 = vdwg.mxu0
    %9778 = vmatpush.bf16.msra.mxu0 %v8282
    %9779 = vmatpush.bf16.msra.mxu0 %v8278
    %9780 = vmatpush.bf16.msra.mxu0 %v8274
    %9781 = vmatpush.bf16.msra.mxu0 %v8270
    %9782 = vmatpush.bf16.msra.mxu0 %v8266
    %9783 = vmatpush.bf16.msra.mxu0 %v8262
    %9784 = vmatpush.bf16.msra.mxu0 %v8258
    %9785 = vmatpush.bf16.msra.mxu0 %v8254
    %9786 = vmatmul.bf16.gmra.mxu0 %v6894
    %v9787 = vpop.f32.mrf.mxu0
    %v9788 = vadd.f32 %v9739, %v9787
    %v9789 = vpop.f32.mrf.mxu0
    %v9790 = vadd.f32 %v9741, %v9789
    %9791 = vmatmul.bf16.gmra.mxu0 %v6903
    %v9792 = vpop.f32.mrf.mxu0
    %v9793 = vadd.f32 %v9744, %v9792
    %v9794 = vpop.f32.mrf.mxu0
    %v9795 = vadd.f32 %v9746, %v9794
    %9796 = vmatmul.bf16.gmra.mxu0 %v6912
    %v9797 = vpop.f32.mrf.mxu0
    %v9798 = vadd.f32 %v9749, %v9797
    %v9799 = vpop.f32.mrf.mxu0
    %v9800 = vadd.f32 %v9751, %v9799
    %9801 = vmatmul.bf16.gmra.mxu0 %v6921
    %v9802 = vpop.f32.mrf.mxu0
    %v9803 = vadd.f32 %v9754, %v9802
    %v9804 = vpop.f32.mrf.mxu0
    %v9805 = vadd.f32 %v9756, %v9804
    %9806 = vmatmul.bf16.gmra.mxu0 %v6930
    %v9807 = vpop.f32.mrf.mxu0
    %v9808 = vadd.f32 %v9759, %v9807
    %v9809 = vpop.f32.mrf.mxu0
    %v9810 = vadd.f32 %v9761, %v9809
    %9811 = vmatmul.bf16.gmra.mxu0 %v6939
    %v9812 = vpop.f32.mrf.mxu0
    %v9813 = vadd.f32 %v9764, %v9812
    %v9814 = vpop.f32.mrf.mxu0
    %v9815 = vadd.f32 %v9766, %v9814
    %9816 = vmatmul.bf16.gmra.mxu0 %v6948
    %v9817 = vpop.f32.mrf.mxu0
    %v9818 = vadd.f32 %v9769, %v9817
    %v9819 = vpop.f32.mrf.mxu0
    %v9820 = vadd.f32 %v9771, %v9819
    %9821 = vmatmul.bf16.gmra.mxu0 %v6957
    %v9822 = vpop.f32.mrf.mxu0
    %v9823 = vadd.f32 %v9774, %v9822
    %v9824 = vpop.f32.mrf.mxu0
    %v9825 = vadd.f32 %v9776, %v9824
    %9826 = vdwg.mxu0
    %9827 = vmatpush.bf16.msra.mxu0 %v8314
    %9828 = vmatpush.bf16.msra.mxu0 %v8310
    %9829 = vmatpush.bf16.msra.mxu0 %v8306
    %9830 = vmatpush.bf16.msra.mxu0 %v8302
    %9831 = vmatpush.bf16.msra.mxu0 %v8298
    %9832 = vmatpush.bf16.msra.mxu0 %v8294
    %9833 = vmatpush.bf16.msra.mxu0 %v8290
    %9834 = vmatpush.bf16.msra.mxu0 %v8286
    %9835 = vmatmul.bf16.gmra.mxu0 %v6895
    %v9836 = vpop.f32.mrf.mxu0
    %v9837 = vadd.f32 %v9788, %v9836
    %v9838 = vpop.f32.mrf.mxu0
    %v9839 = vadd.f32 %v9790, %v9838
    %9840 = vmatmul.bf16.gmra.mxu0 %v6904
    %v9841 = vpop.f32.mrf.mxu0
    %v9842 = vadd.f32 %v9793, %v9841
    %v9843 = vpop.f32.mrf.mxu0
    %v9844 = vadd.f32 %v9795, %v9843
    %9845 = vmatmul.bf16.gmra.mxu0 %v6913
    %v9846 = vpop.f32.mrf.mxu0
    %v9847 = vadd.f32 %v9798, %v9846
    %v9848 = vpop.f32.mrf.mxu0
    %v9849 = vadd.f32 %v9800, %v9848
    %9850 = vmatmul.bf16.gmra.mxu0 %v6922
    %v9851 = vpop.f32.mrf.mxu0
    %v9852 = vadd.f32 %v9803, %v9851
    %v9853 = vpop.f32.mrf.mxu0
    %v9854 = vadd.f32 %v9805, %v9853
    %9855 = vmatmul.bf16.gmra.mxu0 %v6931
    %v9856 = vpop.f32.mrf.mxu0
    %v9857 = vadd.f32 %v9808, %v9856
    %v9858 = vpop.f32.mrf.mxu0
    %v9859 = vadd.f32 %v9810, %v9858
    %9860 = vmatmul.bf16.gmra.mxu0 %v6940
    %v9861 = vpop.f32.mrf.mxu0
    %v9862 = vadd.f32 %v9813, %v9861
    %v9863 = vpop.f32.mrf.mxu0
    %v9864 = vadd.f32 %v9815, %v9863
    %9865 = vmatmul.bf16.gmra.mxu0 %v6949
    %v9866 = vpop.f32.mrf.mxu0
    %v9867 = vadd.f32 %v9818, %v9866
    %v9868 = vpop.f32.mrf.mxu0
    %v9869 = vadd.f32 %v9820, %v9868
    %9870 = vmatmul.bf16.gmra.mxu0 %v6958
    %v9871 = vpop.f32.mrf.mxu0
    %v9872 = vadd.f32 %v9823, %v9871
    %v9873 = vpop.f32.mrf.mxu0
    %v9874 = vadd.f32 %v9825, %v9873
    %9875 = vdwg.mxu0
    %9876 = vmatpush.bf16.msra.mxu0 %v8346
    %9877 = vmatpush.bf16.msra.mxu0 %v8342
    %9878 = vmatpush.bf16.msra.mxu0 %v8338
    %9879 = vmatpush.bf16.msra.mxu0 %v8334
    %9880 = vmatpush.bf16.msra.mxu0 %v8330
    %9881 = vmatpush.bf16.msra.mxu0 %v8326
    %9882 = vmatpush.bf16.msra.mxu0 %v8322
    %9883 = vmatpush.bf16.msra.mxu0 %v8318
    %9884 = vmatmul.bf16.gmra.mxu0 %v6896
    %v9885 = vpop.f32.mrf.mxu0
    %v9886 = vadd.f32 %v9837, %v9885
    %v9887 = vpop.f32.mrf.mxu0
    %v9888 = vadd.f32 %v9839, %v9887
    %9889 = vmatmul.bf16.gmra.mxu0 %v6905
    %v9890 = vpop.f32.mrf.mxu0
    %v9891 = vadd.f32 %v9842, %v9890
    %v9892 = vpop.f32.mrf.mxu0
    %v9893 = vadd.f32 %v9844, %v9892
    %9894 = vmatmul.bf16.gmra.mxu0 %v6914
    %v9895 = vpop.f32.mrf.mxu0
    %v9896 = vadd.f32 %v9847, %v9895
    %v9897 = vpop.f32.mrf.mxu0
    %v9898 = vadd.f32 %v9849, %v9897
    %9899 = vmatmul.bf16.gmra.mxu0 %v6923
    %v9900 = vpop.f32.mrf.mxu0
    %v9901 = vadd.f32 %v9852, %v9900
    %v9902 = vpop.f32.mrf.mxu0
    %v9903 = vadd.f32 %v9854, %v9902
    %9904 = vmatmul.bf16.gmra.mxu0 %v6932
    %v9905 = vpop.f32.mrf.mxu0
    %v9906 = vadd.f32 %v9857, %v9905
    %v9907 = vpop.f32.mrf.mxu0
    %v9908 = vadd.f32 %v9859, %v9907
    %9909 = vmatmul.bf16.gmra.mxu0 %v6941
    %v9910 = vpop.f32.mrf.mxu0
    %v9911 = vadd.f32 %v9862, %v9910
    %v9912 = vpop.f32.mrf.mxu0
    %v9913 = vadd.f32 %v9864, %v9912
    %9914 = vmatmul.bf16.gmra.mxu0 %v6950
    %v9915 = vpop.f32.mrf.mxu0
    %v9916 = vadd.f32 %v9867, %v9915
    %v9917 = vpop.f32.mrf.mxu0
    %v9918 = vadd.f32 %v9869, %v9917
    %9919 = vmatmul.bf16.gmra.mxu0 %v6959
    %v9920 = vpop.f32.mrf.mxu0
    %v9921 = vadd.f32 %v9872, %v9920
    %v9922 = vpop.f32.mrf.mxu0
    %v9923 = vadd.f32 %v9874, %v9922
    %9924 = vdwg.mxu0
    %9925 = vmatpush.bf16.msra.mxu0 %v8378
    %9926 = vmatpush.bf16.msra.mxu0 %v8374
    %9927 = vmatpush.bf16.msra.mxu0 %v8370
    %9928 = vmatpush.bf16.msra.mxu0 %v8366
    %9929 = vmatpush.bf16.msra.mxu0 %v8362
    %9930 = vmatpush.bf16.msra.mxu0 %v8358
    %9931 = vmatpush.bf16.msra.mxu0 %v8354
    %9932 = vmatpush.bf16.msra.mxu0 %v8350
    %9933 = vmatmul.bf16.gmra.mxu0 %v6897
    %v9934 = vpop.f32.mrf.mxu0
    %v9935 = vadd.f32 %v9886, %v9934
    %v9936 = vpop.f32.mrf.mxu0
    %v9937 = vadd.f32 %v9888, %v9936
    %9938 = vmatmul.bf16.gmra.mxu0 %v6906
    %v9939 = vpop.f32.mrf.mxu0
    %v9940 = vadd.f32 %v9891, %v9939
    %v9941 = vpop.f32.mrf.mxu0
    %v9942 = vadd.f32 %v9893, %v9941
    %9943 = vmatmul.bf16.gmra.mxu0 %v6915
    %v9944 = vpop.f32.mrf.mxu0
    %v9945 = vadd.f32 %v9896, %v9944
    %v9946 = vpop.f32.mrf.mxu0
    %v9947 = vadd.f32 %v9898, %v9946
    %9948 = vmatmul.bf16.gmra.mxu0 %v6924
    %v9949 = vpop.f32.mrf.mxu0
    %v9950 = vadd.f32 %v9901, %v9949
    %v9951 = vpop.f32.mrf.mxu0
    %v9952 = vadd.f32 %v9903, %v9951
    %9953 = vmatmul.bf16.gmra.mxu0 %v6933
    %v9954 = vpop.f32.mrf.mxu0
    %v9955 = vadd.f32 %v9906, %v9954
    %v9956 = vpop.f32.mrf.mxu0
    %v9957 = vadd.f32 %v9908, %v9956
    %9958 = vmatmul.bf16.gmra.mxu0 %v6942
    %v9959 = vpop.f32.mrf.mxu0
    %v9960 = vadd.f32 %v9911, %v9959
    %v9961 = vpop.f32.mrf.mxu0
    %v9962 = vadd.f32 %v9913, %v9961
    %9963 = vmatmul.bf16.gmra.mxu0 %v6951
    %v9964 = vpop.f32.mrf.mxu0
    %v9965 = vadd.f32 %v9916, %v9964
    %v9966 = vpop.f32.mrf.mxu0
    %v9967 = vadd.f32 %v9918, %v9966
    %9968 = vmatmul.bf16.gmra.mxu0 %v6960
    %v9969 = vpop.f32.mrf.mxu0
    %v9970 = vadd.f32 %v9921, %v9969
    %v9971 = vpop.f32.mrf.mxu0
    %v9972 = vadd.f32 %v9923, %v9971
    %9973 = vdwg.mxu0
    %9974 = vmatpush.bf16.msra.mxu0 %v8410
    %9975 = vmatpush.bf16.msra.mxu0 %v8406
    %9976 = vmatpush.bf16.msra.mxu0 %v8402
    %9977 = vmatpush.bf16.msra.mxu0 %v8398
    %9978 = vmatpush.bf16.msra.mxu0 %v8394
    %9979 = vmatpush.bf16.msra.mxu0 %v8390
    %9980 = vmatpush.bf16.msra.mxu0 %v8386
    %9981 = vmatpush.bf16.msra.mxu0 %v8382
    %9982 = vmatmul.bf16.gmra.mxu0 %v6898
    %v9983 = vpop.f32.mrf.mxu0
    %v9984 = vadd.f32 %v9935, %v9983
    %v9985 = vpop.f32.mrf.mxu0
    %v9986 = vadd.f32 %v9937, %v9985
    %9987 = vmatmul.bf16.gmra.mxu0 %v6907
    %v9988 = vpop.f32.mrf.mxu0
    %v9989 = vadd.f32 %v9940, %v9988
    %v9990 = vpop.f32.mrf.mxu0
    %v9991 = vadd.f32 %v9942, %v9990
    %9992 = vmatmul.bf16.gmra.mxu0 %v6916
    %v9993 = vpop.f32.mrf.mxu0
    %v9994 = vadd.f32 %v9945, %v9993
    %v9995 = vpop.f32.mrf.mxu0
    %v9996 = vadd.f32 %v9947, %v9995
    %9997 = vmatmul.bf16.gmra.mxu0 %v6925
    %v9998 = vpop.f32.mrf.mxu0
    %v9999 = vadd.f32 %v9950, %v9998
    %v10000 = vpop.f32.mrf.mxu0
    %v10001 = vadd.f32 %v9952, %v10000
    %10002 = vmatmul.bf16.gmra.mxu0 %v6934
    %v10003 = vpop.f32.mrf.mxu0
    %v10004 = vadd.f32 %v9955, %v10003
    %v10005 = vpop.f32.mrf.mxu0
    %v10006 = vadd.f32 %v9957, %v10005
    %10007 = vmatmul.bf16.gmra.mxu0 %v6943
    %v10008 = vpop.f32.mrf.mxu0
    %v10009 = vadd.f32 %v9960, %v10008
    %v10010 = vpop.f32.mrf.mxu0
    %v10011 = vadd.f32 %v9962, %v10010
    %10012 = vmatmul.bf16.gmra.mxu0 %v6952
    %v10013 = vpop.f32.mrf.mxu0
    %v10014 = vadd.f32 %v9965, %v10013
    %v10015 = vpop.f32.mrf.mxu0
    %v10016 = vadd.f32 %v9967, %v10015
    %10017 = vmatmul.bf16.gmra.mxu0 %v6961
    %v10018 = vpop.f32.mrf.mxu0
    %v10019 = vadd.f32 %v9970, %v10018
    %v10020 = vpop.f32.mrf.mxu0
    %v10021 = vadd.f32 %v9972, %v10020
    %10022 = vdwg.mxu0
    %10023 = vmatpush.bf16.msra.mxu0 %v8155
    %10024 = vmatpush.bf16.msra.mxu0 %v8151
    %10025 = vmatpush.bf16.msra.mxu0 %v8147
    %10026 = vmatpush.bf16.msra.mxu0 %v8143
    %10027 = vmatpush.bf16.msra.mxu0 %v8139
    %10028 = vmatpush.bf16.msra.mxu0 %v8135
    %10029 = vmatpush.bf16.msra.mxu0 %v8131
    %10030 = vmatpush.bf16.msra.mxu0 %v8127
    %10031 = vmatmul.bf16.gmra.mxu0 %v6890
    %v10032 = vpop.f32.mrf.mxu0
    %v10033 = vadd.f32 %v7255, %v10032
    %v10034 = vpop.f32.mrf.mxu0
    %v10035 = vadd.f32 %v7255, %v10034
    %10036 = vmatmul.bf16.gmra.mxu0 %v6899
    %v10037 = vpop.f32.mrf.mxu0
    %v10038 = vadd.f32 %v7255, %v10037
    %v10039 = vpop.f32.mrf.mxu0
    %v10040 = vadd.f32 %v7255, %v10039
    %10041 = vmatmul.bf16.gmra.mxu0 %v6908
    %v10042 = vpop.f32.mrf.mxu0
    %v10043 = vadd.f32 %v7255, %v10042
    %v10044 = vpop.f32.mrf.mxu0
    %v10045 = vadd.f32 %v7255, %v10044
    %10046 = vmatmul.bf16.gmra.mxu0 %v6917
    %v10047 = vpop.f32.mrf.mxu0
    %v10048 = vadd.f32 %v7255, %v10047
    %v10049 = vpop.f32.mrf.mxu0
    %v10050 = vadd.f32 %v7255, %v10049
    %10051 = vmatmul.bf16.gmra.mxu0 %v6926
    %v10052 = vpop.f32.mrf.mxu0
    %v10053 = vadd.f32 %v7255, %v10052
    %v10054 = vpop.f32.mrf.mxu0
    %v10055 = vadd.f32 %v7255, %v10054
    %10056 = vmatmul.bf16.gmra.mxu0 %v6935
    %v10057 = vpop.f32.mrf.mxu0
    %v10058 = vadd.f32 %v7255, %v10057
    %v10059 = vpop.f32.mrf.mxu0
    %v10060 = vadd.f32 %v7255, %v10059
    %10061 = vmatmul.bf16.gmra.mxu0 %v6944
    %v10062 = vpop.f32.mrf.mxu0
    %v10063 = vadd.f32 %v7255, %v10062
    %v10064 = vpop.f32.mrf.mxu0
    %v10065 = vadd.f32 %v7255, %v10064
    %10066 = vmatmul.bf16.gmra.mxu0 %v6953
    %v10067 = vpop.f32.mrf.mxu0
    %v10068 = vadd.f32 %v7255, %v10067
    %v10069 = vpop.f32.mrf.mxu0
    %v10070 = vadd.f32 %v7255, %v10069
    %10071 = vdwg.mxu0
    %10072 = vmatpush.bf16.msra.mxu0 %v8187
    %10073 = vmatpush.bf16.msra.mxu0 %v8183
    %10074 = vmatpush.bf16.msra.mxu0 %v8179
    %10075 = vmatpush.bf16.msra.mxu0 %v8175
    %10076 = vmatpush.bf16.msra.mxu0 %v8171
    %10077 = vmatpush.bf16.msra.mxu0 %v8167
    %10078 = vmatpush.bf16.msra.mxu0 %v8163
    %10079 = vmatpush.bf16.msra.mxu0 %v8159
    %10080 = vmatmul.bf16.gmra.mxu0 %v6891
    %v10081 = vpop.f32.mrf.mxu0
    %v10082 = vadd.f32 %v10033, %v10081
    %v10083 = vpop.f32.mrf.mxu0
    %v10084 = vadd.f32 %v10035, %v10083
    %10085 = vmatmul.bf16.gmra.mxu0 %v6900
    %v10086 = vpop.f32.mrf.mxu0
    %v10087 = vadd.f32 %v10038, %v10086
    %v10088 = vpop.f32.mrf.mxu0
    %v10089 = vadd.f32 %v10040, %v10088
    %10090 = vmatmul.bf16.gmra.mxu0 %v6909
    %v10091 = vpop.f32.mrf.mxu0
    %v10092 = vadd.f32 %v10043, %v10091
    %v10093 = vpop.f32.mrf.mxu0
    %v10094 = vadd.f32 %v10045, %v10093
    %10095 = vmatmul.bf16.gmra.mxu0 %v6918
    %v10096 = vpop.f32.mrf.mxu0
    %v10097 = vadd.f32 %v10048, %v10096
    %v10098 = vpop.f32.mrf.mxu0
    %v10099 = vadd.f32 %v10050, %v10098
    %10100 = vmatmul.bf16.gmra.mxu0 %v6927
    %v10101 = vpop.f32.mrf.mxu0
    %v10102 = vadd.f32 %v10053, %v10101
    %v10103 = vpop.f32.mrf.mxu0
    %v10104 = vadd.f32 %v10055, %v10103
    %10105 = vmatmul.bf16.gmra.mxu0 %v6936
    %v10106 = vpop.f32.mrf.mxu0
    %v10107 = vadd.f32 %v10058, %v10106
    %v10108 = vpop.f32.mrf.mxu0
    %v10109 = vadd.f32 %v10060, %v10108
    %10110 = vmatmul.bf16.gmra.mxu0 %v6945
    %v10111 = vpop.f32.mrf.mxu0
    %v10112 = vadd.f32 %v10063, %v10111
    %v10113 = vpop.f32.mrf.mxu0
    %v10114 = vadd.f32 %v10065, %v10113
    %10115 = vmatmul.bf16.gmra.mxu0 %v6954
    %v10116 = vpop.f32.mrf.mxu0
    %v10117 = vadd.f32 %v10068, %v10116
    %v10118 = vpop.f32.mrf.mxu0
    %v10119 = vadd.f32 %v10070, %v10118
    %10120 = vdwg.mxu0
    %10121 = vmatpush.bf16.msra.mxu0 %v8219
    %10122 = vmatpush.bf16.msra.mxu0 %v8215
    %10123 = vmatpush.bf16.msra.mxu0 %v8211
    %10124 = vmatpush.bf16.msra.mxu0 %v8207
    %10125 = vmatpush.bf16.msra.mxu0 %v8203
    %10126 = vmatpush.bf16.msra.mxu0 %v8199
    %10127 = vmatpush.bf16.msra.mxu0 %v8195
    %10128 = vmatpush.bf16.msra.mxu0 %v8191
    %10129 = vmatmul.bf16.gmra.mxu0 %v6892
    %v10130 = vpop.f32.mrf.mxu0
    %v10131 = vadd.f32 %v10082, %v10130
    %v10132 = vpop.f32.mrf.mxu0
    %v10133 = vadd.f32 %v10084, %v10132
    %10134 = vmatmul.bf16.gmra.mxu0 %v6901
    %v10135 = vpop.f32.mrf.mxu0
    %v10136 = vadd.f32 %v10087, %v10135
    %v10137 = vpop.f32.mrf.mxu0
    %v10138 = vadd.f32 %v10089, %v10137
    %10139 = vmatmul.bf16.gmra.mxu0 %v6910
    %v10140 = vpop.f32.mrf.mxu0
    %v10141 = vadd.f32 %v10092, %v10140
    %v10142 = vpop.f32.mrf.mxu0
    %v10143 = vadd.f32 %v10094, %v10142
    %10144 = vmatmul.bf16.gmra.mxu0 %v6919
    %v10145 = vpop.f32.mrf.mxu0
    %v10146 = vadd.f32 %v10097, %v10145
    %v10147 = vpop.f32.mrf.mxu0
    %v10148 = vadd.f32 %v10099, %v10147
    %10149 = vmatmul.bf16.gmra.mxu0 %v6928
    %v10150 = vpop.f32.mrf.mxu0
    %v10151 = vadd.f32 %v10102, %v10150
    %v10152 = vpop.f32.mrf.mxu0
    %v10153 = vadd.f32 %v10104, %v10152
    %10154 = vmatmul.bf16.gmra.mxu0 %v6937
    %v10155 = vpop.f32.mrf.mxu0
    %v10156 = vadd.f32 %v10107, %v10155
    %v10157 = vpop.f32.mrf.mxu0
    %v10158 = vadd.f32 %v10109, %v10157
    %10159 = vmatmul.bf16.gmra.mxu0 %v6946
    %v10160 = vpop.f32.mrf.mxu0
    %v10161 = vadd.f32 %v10112, %v10160
    %v10162 = vpop.f32.mrf.mxu0
    %v10163 = vadd.f32 %v10114, %v10162
    %10164 = vmatmul.bf16.gmra.mxu0 %v6955
    %v10165 = vpop.f32.mrf.mxu0
    %v10166 = vadd.f32 %v10117, %v10165
    %v10167 = vpop.f32.mrf.mxu0
    %v10168 = vadd.f32 %v10119, %v10167
    %10169 = vdwg.mxu0
    %10170 = vmatpush.bf16.msra.mxu0 %v8251
    %10171 = vmatpush.bf16.msra.mxu0 %v8247
    %10172 = vmatpush.bf16.msra.mxu0 %v8243
    %10173 = vmatpush.bf16.msra.mxu0 %v8239
    %10174 = vmatpush.bf16.msra.mxu0 %v8235
    %10175 = vmatpush.bf16.msra.mxu0 %v8231
    %10176 = vmatpush.bf16.msra.mxu0 %v8227
    %10177 = vmatpush.bf16.msra.mxu0 %v8223
    %10178 = vmatmul.bf16.gmra.mxu0 %v6893
    %v10179 = vpop.f32.mrf.mxu0
    %v10180 = vadd.f32 %v10131, %v10179
    %v10181 = vpop.f32.mrf.mxu0
    %v10182 = vadd.f32 %v10133, %v10181
    %10183 = vmatmul.bf16.gmra.mxu0 %v6902
    %v10184 = vpop.f32.mrf.mxu0
    %v10185 = vadd.f32 %v10136, %v10184
    %v10186 = vpop.f32.mrf.mxu0
    %v10187 = vadd.f32 %v10138, %v10186
    %10188 = vmatmul.bf16.gmra.mxu0 %v6911
    %v10189 = vpop.f32.mrf.mxu0
    %v10190 = vadd.f32 %v10141, %v10189
    %v10191 = vpop.f32.mrf.mxu0
    %v10192 = vadd.f32 %v10143, %v10191
    %10193 = vmatmul.bf16.gmra.mxu0 %v6920
    %v10194 = vpop.f32.mrf.mxu0
    %v10195 = vadd.f32 %v10146, %v10194
    %v10196 = vpop.f32.mrf.mxu0
    %v10197 = vadd.f32 %v10148, %v10196
    %10198 = vmatmul.bf16.gmra.mxu0 %v6929
    %v10199 = vpop.f32.mrf.mxu0
    %v10200 = vadd.f32 %v10151, %v10199
    %v10201 = vpop.f32.mrf.mxu0
    %v10202 = vadd.f32 %v10153, %v10201
    %10203 = vmatmul.bf16.gmra.mxu0 %v6938
    %v10204 = vpop.f32.mrf.mxu0
    %v10205 = vadd.f32 %v10156, %v10204
    %v10206 = vpop.f32.mrf.mxu0
    %v10207 = vadd.f32 %v10158, %v10206
    %10208 = vmatmul.bf16.gmra.mxu0 %v6947
    %v10209 = vpop.f32.mrf.mxu0
    %v10210 = vadd.f32 %v10161, %v10209
    %v10211 = vpop.f32.mrf.mxu0
    %v10212 = vadd.f32 %v10163, %v10211
    %10213 = vmatmul.bf16.gmra.mxu0 %v6956
    %v10214 = vpop.f32.mrf.mxu0
    %v10215 = vadd.f32 %v10166, %v10214
    %v10216 = vpop.f32.mrf.mxu0
    %v10217 = vadd.f32 %v10168, %v10216
    %10218 = vdwg.mxu0
    %10219 = vmatpush.bf16.msra.mxu0 %v8283
    %10220 = vmatpush.bf16.msra.mxu0 %v8279
    %10221 = vmatpush.bf16.msra.mxu0 %v8275
    %10222 = vmatpush.bf16.msra.mxu0 %v8271
    %10223 = vmatpush.bf16.msra.mxu0 %v8267
    %10224 = vmatpush.bf16.msra.mxu0 %v8263
    %10225 = vmatpush.bf16.msra.mxu0 %v8259
    %10226 = vmatpush.bf16.msra.mxu0 %v8255
    %10227 = vmatmul.bf16.gmra.mxu0 %v6894
    %v10228 = vpop.f32.mrf.mxu0
    %v10229 = vadd.f32 %v10180, %v10228
    %v10230 = vpop.f32.mrf.mxu0
    %v10231 = vadd.f32 %v10182, %v10230
    %10232 = vmatmul.bf16.gmra.mxu0 %v6903
    %v10233 = vpop.f32.mrf.mxu0
    %v10234 = vadd.f32 %v10185, %v10233
    %v10235 = vpop.f32.mrf.mxu0
    %v10236 = vadd.f32 %v10187, %v10235
    %10237 = vmatmul.bf16.gmra.mxu0 %v6912
    %v10238 = vpop.f32.mrf.mxu0
    %v10239 = vadd.f32 %v10190, %v10238
    %v10240 = vpop.f32.mrf.mxu0
    %v10241 = vadd.f32 %v10192, %v10240
    %10242 = vmatmul.bf16.gmra.mxu0 %v6921
    %v10243 = vpop.f32.mrf.mxu0
    %v10244 = vadd.f32 %v10195, %v10243
    %v10245 = vpop.f32.mrf.mxu0
    %v10246 = vadd.f32 %v10197, %v10245
    %10247 = vmatmul.bf16.gmra.mxu0 %v6930
    %v10248 = vpop.f32.mrf.mxu0
    %v10249 = vadd.f32 %v10200, %v10248
    %v10250 = vpop.f32.mrf.mxu0
    %v10251 = vadd.f32 %v10202, %v10250
    %10252 = vmatmul.bf16.gmra.mxu0 %v6939
    %v10253 = vpop.f32.mrf.mxu0
    %v10254 = vadd.f32 %v10205, %v10253
    %v10255 = vpop.f32.mrf.mxu0
    %v10256 = vadd.f32 %v10207, %v10255
    %10257 = vmatmul.bf16.gmra.mxu0 %v6948
    %v10258 = vpop.f32.mrf.mxu0
    %v10259 = vadd.f32 %v10210, %v10258
    %v10260 = vpop.f32.mrf.mxu0
    %v10261 = vadd.f32 %v10212, %v10260
    %10262 = vmatmul.bf16.gmra.mxu0 %v6957
    %v10263 = vpop.f32.mrf.mxu0
    %v10264 = vadd.f32 %v10215, %v10263
    %v10265 = vpop.f32.mrf.mxu0
    %v10266 = vadd.f32 %v10217, %v10265
    %10267 = vdwg.mxu0
    %10268 = vmatpush.bf16.msra.mxu0 %v8315
    %10269 = vmatpush.bf16.msra.mxu0 %v8311
    %10270 = vmatpush.bf16.msra.mxu0 %v8307
    %10271 = vmatpush.bf16.msra.mxu0 %v8303
    %10272 = vmatpush.bf16.msra.mxu0 %v8299
    %10273 = vmatpush.bf16.msra.mxu0 %v8295
    %10274 = vmatpush.bf16.msra.mxu0 %v8291
    %10275 = vmatpush.bf16.msra.mxu0 %v8287
    %10276 = vmatmul.bf16.gmra.mxu0 %v6895
    %v10277 = vpop.f32.mrf.mxu0
    %v10278 = vadd.f32 %v10229, %v10277
    %v10279 = vpop.f32.mrf.mxu0
    %v10280 = vadd.f32 %v10231, %v10279
    %10281 = vmatmul.bf16.gmra.mxu0 %v6904
    %v10282 = vpop.f32.mrf.mxu0
    %v10283 = vadd.f32 %v10234, %v10282
    %v10284 = vpop.f32.mrf.mxu0
    %v10285 = vadd.f32 %v10236, %v10284
    %10286 = vmatmul.bf16.gmra.mxu0 %v6913
    %v10287 = vpop.f32.mrf.mxu0
    %v10288 = vadd.f32 %v10239, %v10287
    %v10289 = vpop.f32.mrf.mxu0
    %v10290 = vadd.f32 %v10241, %v10289
    %10291 = vmatmul.bf16.gmra.mxu0 %v6922
    %v10292 = vpop.f32.mrf.mxu0
    %v10293 = vadd.f32 %v10244, %v10292
    %v10294 = vpop.f32.mrf.mxu0
    %v10295 = vadd.f32 %v10246, %v10294
    %10296 = vmatmul.bf16.gmra.mxu0 %v6931
    %v10297 = vpop.f32.mrf.mxu0
    %v10298 = vadd.f32 %v10249, %v10297
    %v10299 = vpop.f32.mrf.mxu0
    %v10300 = vadd.f32 %v10251, %v10299
    %10301 = vmatmul.bf16.gmra.mxu0 %v6940
    %v10302 = vpop.f32.mrf.mxu0
    %v10303 = vadd.f32 %v10254, %v10302
    %v10304 = vpop.f32.mrf.mxu0
    %v10305 = vadd.f32 %v10256, %v10304
    %10306 = vmatmul.bf16.gmra.mxu0 %v6949
    %v10307 = vpop.f32.mrf.mxu0
    %v10308 = vadd.f32 %v10259, %v10307
    %v10309 = vpop.f32.mrf.mxu0
    %v10310 = vadd.f32 %v10261, %v10309
    %10311 = vmatmul.bf16.gmra.mxu0 %v6958
    %v10312 = vpop.f32.mrf.mxu0
    %v10313 = vadd.f32 %v10264, %v10312
    %v10314 = vpop.f32.mrf.mxu0
    %v10315 = vadd.f32 %v10266, %v10314
    %10316 = vdwg.mxu0
    %10317 = vmatpush.bf16.msra.mxu0 %v8347
    %10318 = vmatpush.bf16.msra.mxu0 %v8343
    %10319 = vmatpush.bf16.msra.mxu0 %v8339
    %10320 = vmatpush.bf16.msra.mxu0 %v8335
    %10321 = vmatpush.bf16.msra.mxu0 %v8331
    %10322 = vmatpush.bf16.msra.mxu0 %v8327
    %10323 = vmatpush.bf16.msra.mxu0 %v8323
    %10324 = vmatpush.bf16.msra.mxu0 %v8319
    %10325 = vmatmul.bf16.gmra.mxu0 %v6896
    %v10326 = vpop.f32.mrf.mxu0
    %v10327 = vadd.f32 %v10278, %v10326
    %v10328 = vpop.f32.mrf.mxu0
    %v10329 = vadd.f32 %v10280, %v10328
    %10330 = vmatmul.bf16.gmra.mxu0 %v6905
    %v10331 = vpop.f32.mrf.mxu0
    %v10332 = vadd.f32 %v10283, %v10331
    %v10333 = vpop.f32.mrf.mxu0
    %v10334 = vadd.f32 %v10285, %v10333
    %10335 = vmatmul.bf16.gmra.mxu0 %v6914
    %v10336 = vpop.f32.mrf.mxu0
    %v10337 = vadd.f32 %v10288, %v10336
    %v10338 = vpop.f32.mrf.mxu0
    %v10339 = vadd.f32 %v10290, %v10338
    %10340 = vmatmul.bf16.gmra.mxu0 %v6923
    %v10341 = vpop.f32.mrf.mxu0
    %v10342 = vadd.f32 %v10293, %v10341
    %v10343 = vpop.f32.mrf.mxu0
    %v10344 = vadd.f32 %v10295, %v10343
    %10345 = vmatmul.bf16.gmra.mxu0 %v6932
    %v10346 = vpop.f32.mrf.mxu0
    %v10347 = vadd.f32 %v10298, %v10346
    %v10348 = vpop.f32.mrf.mxu0
    %v10349 = vadd.f32 %v10300, %v10348
    %10350 = vmatmul.bf16.gmra.mxu0 %v6941
    %v10351 = vpop.f32.mrf.mxu0
    %v10352 = vadd.f32 %v10303, %v10351
    %v10353 = vpop.f32.mrf.mxu0
    %v10354 = vadd.f32 %v10305, %v10353
    %10355 = vmatmul.bf16.gmra.mxu0 %v6950
    %v10356 = vpop.f32.mrf.mxu0
    %v10357 = vadd.f32 %v10308, %v10356
    %v10358 = vpop.f32.mrf.mxu0
    %v10359 = vadd.f32 %v10310, %v10358
    %10360 = vmatmul.bf16.gmra.mxu0 %v6959
    %v10361 = vpop.f32.mrf.mxu0
    %v10362 = vadd.f32 %v10313, %v10361
    %v10363 = vpop.f32.mrf.mxu0
    %v10364 = vadd.f32 %v10315, %v10363
    %10365 = vdwg.mxu0
    %10366 = vmatpush.bf16.msra.mxu0 %v8379
    %10367 = vmatpush.bf16.msra.mxu0 %v8375
    %10368 = vmatpush.bf16.msra.mxu0 %v8371
    %10369 = vmatpush.bf16.msra.mxu0 %v8367
    %10370 = vmatpush.bf16.msra.mxu0 %v8363
    %10371 = vmatpush.bf16.msra.mxu0 %v8359
    %10372 = vmatpush.bf16.msra.mxu0 %v8355
    %10373 = vmatpush.bf16.msra.mxu0 %v8351
    %10374 = vmatmul.bf16.gmra.mxu0 %v6897
    %v10375 = vpop.f32.mrf.mxu0
    %v10376 = vadd.f32 %v10327, %v10375
    %v10377 = vpop.f32.mrf.mxu0
    %v10378 = vadd.f32 %v10329, %v10377
    %10379 = vmatmul.bf16.gmra.mxu0 %v6906
    %v10380 = vpop.f32.mrf.mxu0
    %v10381 = vadd.f32 %v10332, %v10380
    %v10382 = vpop.f32.mrf.mxu0
    %v10383 = vadd.f32 %v10334, %v10382
    %10384 = vmatmul.bf16.gmra.mxu0 %v6915
    %v10385 = vpop.f32.mrf.mxu0
    %v10386 = vadd.f32 %v10337, %v10385
    %v10387 = vpop.f32.mrf.mxu0
    %v10388 = vadd.f32 %v10339, %v10387
    %10389 = vmatmul.bf16.gmra.mxu0 %v6924
    %v10390 = vpop.f32.mrf.mxu0
    %v10391 = vadd.f32 %v10342, %v10390
    %v10392 = vpop.f32.mrf.mxu0
    %v10393 = vadd.f32 %v10344, %v10392
    %10394 = vmatmul.bf16.gmra.mxu0 %v6933
    %v10395 = vpop.f32.mrf.mxu0
    %v10396 = vadd.f32 %v10347, %v10395
    %v10397 = vpop.f32.mrf.mxu0
    %v10398 = vadd.f32 %v10349, %v10397
    %10399 = vmatmul.bf16.gmra.mxu0 %v6942
    %v10400 = vpop.f32.mrf.mxu0
    %v10401 = vadd.f32 %v10352, %v10400
    %v10402 = vpop.f32.mrf.mxu0
    %v10403 = vadd.f32 %v10354, %v10402
    %10404 = vmatmul.bf16.gmra.mxu0 %v6951
    %v10405 = vpop.f32.mrf.mxu0
    %v10406 = vadd.f32 %v10357, %v10405
    %v10407 = vpop.f32.mrf.mxu0
    %v10408 = vadd.f32 %v10359, %v10407
    %10409 = vmatmul.bf16.gmra.mxu0 %v6960
    %v10410 = vpop.f32.mrf.mxu0
    %v10411 = vadd.f32 %v10362, %v10410
    %v10412 = vpop.f32.mrf.mxu0
    %v10413 = vadd.f32 %v10364, %v10412
    %10414 = vdwg.mxu0
    %10415 = vmatpush.bf16.msra.mxu0 %v8411
    %10416 = vmatpush.bf16.msra.mxu0 %v8407
    %10417 = vmatpush.bf16.msra.mxu0 %v8403
    %10418 = vmatpush.bf16.msra.mxu0 %v8399
    %10419 = vmatpush.bf16.msra.mxu0 %v8395
    %10420 = vmatpush.bf16.msra.mxu0 %v8391
    %10421 = vmatpush.bf16.msra.mxu0 %v8387
    %10422 = vmatpush.bf16.msra.mxu0 %v8383
    %10423 = vmatmul.bf16.gmra.mxu0 %v6898
    %v10424 = vpop.f32.mrf.mxu0
    %v10425 = vadd.f32 %v10376, %v10424
    %v10426 = vpop.f32.mrf.mxu0
    %v10427 = vadd.f32 %v10378, %v10426
    %10428 = vmatmul.bf16.gmra.mxu0 %v6907
    %v10429 = vpop.f32.mrf.mxu0
    %v10430 = vadd.f32 %v10381, %v10429
    %v10431 = vpop.f32.mrf.mxu0
    %v10432 = vadd.f32 %v10383, %v10431
    %10433 = vmatmul.bf16.gmra.mxu0 %v6916
    %v10434 = vpop.f32.mrf.mxu0
    %v10435 = vadd.f32 %v10386, %v10434
    %v10436 = vpop.f32.mrf.mxu0
    %v10437 = vadd.f32 %v10388, %v10436
    %10438 = vmatmul.bf16.gmra.mxu0 %v6925
    %v10439 = vpop.f32.mrf.mxu0
    %v10440 = vadd.f32 %v10391, %v10439
    %v10441 = vpop.f32.mrf.mxu0
    %v10442 = vadd.f32 %v10393, %v10441
    %10443 = vmatmul.bf16.gmra.mxu0 %v6934
    %v10444 = vpop.f32.mrf.mxu0
    %v10445 = vadd.f32 %v10396, %v10444
    %v10446 = vpop.f32.mrf.mxu0
    %v10447 = vadd.f32 %v10398, %v10446
    %10448 = vmatmul.bf16.gmra.mxu0 %v6943
    %v10449 = vpop.f32.mrf.mxu0
    %v10450 = vadd.f32 %v10401, %v10449
    %v10451 = vpop.f32.mrf.mxu0
    %v10452 = vadd.f32 %v10403, %v10451
    %10453 = vmatmul.bf16.gmra.mxu0 %v6952
    %v10454 = vpop.f32.mrf.mxu0
    %v10455 = vadd.f32 %v10406, %v10454
    %v10456 = vpop.f32.mrf.mxu0
    %v10457 = vadd.f32 %v10408, %v10456
    %10458 = vmatmul.bf16.gmra.mxu0 %v6961
    %v10459 = vpop.f32.mrf.mxu0
    %v10460 = vadd.f32 %v10411, %v10459
    %v10461 = vpop.f32.mrf.mxu0
    %v10462 = vadd.f32 %v10413, %v10461
    %10463 = vdwg.mxu0
    %v10464 = vmax.f32 %v9102, 0.0
    %v10465 = vmax.f32 %v9543, 0.0
    %v10466 = vmax.f32 %v9984, 0.0
    %v10467 = vmax.f32 %v10425, 0.0
    %v10468 = vmax.f32 %v9104, 0.0
    %v10469 = vmax.f32 %v9545, 0.0
    %v10470 = vmax.f32 %v9986, 0.0
    %v10471 = vmax.f32 %v10427, 0.0
    %v10472 = vmax.f32 %v9107, 0.0
    %v10473 = vmax.f32 %v9548, 0.0
    %v10474 = vmax.f32 %v9989, 0.0
    %v10475 = vmax.f32 %v10430, 0.0
    %v10476 = vmax.f32 %v9109, 0.0
    %v10477 = vmax.f32 %v9550, 0.0
    %v10478 = vmax.f32 %v9991, 0.0
    %v10479 = vmax.f32 %v10432, 0.0
    %v10480 = vmax.f32 %v9112, 0.0
    %v10481 = vmax.f32 %v9553, 0.0
    %v10482 = vmax.f32 %v9994, 0.0
    %v10483 = vmax.f32 %v10435, 0.0
    %v10484 = vmax.f32 %v9114, 0.0
    %v10485 = vmax.f32 %v9555, 0.0
    %v10486 = vmax.f32 %v9996, 0.0
    %v10487 = vmax.f32 %v10437, 0.0
    %v10488 = vmax.f32 %v9117, 0.0
    %v10489 = vmax.f32 %v9558, 0.0
    %v10490 = vmax.f32 %v9999, 0.0
    %v10491 = vmax.f32 %v10440, 0.0
    %v10492 = vmax.f32 %v9119, 0.0
    %v10493 = vmax.f32 %v9560, 0.0
    %v10494 = vmax.f32 %v10001, 0.0
    %v10495 = vmax.f32 %v10442, 0.0
    %v10496 = vmax.f32 %v9122, 0.0
    %v10497 = vmax.f32 %v9563, 0.0
    %v10498 = vmax.f32 %v10004, 0.0
    %v10499 = vmax.f32 %v10445, 0.0
    %v10500 = vmax.f32 %v9124, 0.0
    %v10501 = vmax.f32 %v9565, 0.0
    %v10502 = vmax.f32 %v10006, 0.0
    %v10503 = vmax.f32 %v10447, 0.0
    %v10504 = vmax.f32 %v9127, 0.0
    %v10505 = vmax.f32 %v9568, 0.0
    %v10506 = vmax.f32 %v10009, 0.0
    %v10507 = vmax.f32 %v10450, 0.0
    %v10508 = vmax.f32 %v9129, 0.0
    %v10509 = vmax.f32 %v9570, 0.0
    %v10510 = vmax.f32 %v10011, 0.0
    %v10511 = vmax.f32 %v10452, 0.0
    %v10512 = vmax.f32 %v9132, 0.0
    %v10513 = vmax.f32 %v9573, 0.0
    %v10514 = vmax.f32 %v10014, 0.0
    %v10515 = vmax.f32 %v10455, 0.0
    %v10516 = vmax.f32 %v9134, 0.0
    %v10517 = vmax.f32 %v9575, 0.0
    %v10518 = vmax.f32 %v10016, 0.0
    %v10519 = vmax.f32 %v10457, 0.0
    %v10520 = vmax.f32 %v9137, 0.0
    %v10521 = vmax.f32 %v9578, 0.0
    %v10522 = vmax.f32 %v10019, 0.0
    %v10523 = vmax.f32 %v10460, 0.0
    %v10524 = vmax.f32 %v9139, 0.0
    %v10525 = vmax.f32 %v9580, 0.0
    %v10526 = vmax.f32 %v10021, 0.0
    %v10527 = vmax.f32 %v10462, 0.0
    %v10528 = vpack.c.bf16 %v10468, %v10464
    %v10529 = vpack.c.bf16 %v10469, %v10465
    %v10530 = vpack.c.bf16 %v10470, %v10466
    %v10531 = vpack.c.bf16 %v10471, %v10467
    %v10532 = vpack.c.bf16 %v10476, %v10472
    %v10533 = vpack.c.bf16 %v10477, %v10473
    %v10534 = vpack.c.bf16 %v10478, %v10474
    %v10535 = vpack.c.bf16 %v10479, %v10475
    %v10536 = vpack.c.bf16 %v10484, %v10480
    %v10537 = vpack.c.bf16 %v10485, %v10481
    %v10538 = vpack.c.bf16 %v10486, %v10482
    %v10539 = vpack.c.bf16 %v10487, %v10483
    %v10540 = vpack.c.bf16 %v10492, %v10488
    %v10541 = vpack.c.bf16 %v10493, %v10489
    %v10542 = vpack.c.bf16 %v10494, %v10490
    %v10543 = vpack.c.bf16 %v10495, %v10491
    %v10544 = vpack.c.bf16 %v10500, %v10496
    %v10545 = vpack.c.bf16 %v10501, %v10497
    %v10546 = vpack.c.bf16 %v10502, %v10498
    %v10547 = vpack.c.bf16 %v10503, %v10499
    %v10548 = vpack.c.bf16 %v10508, %v10504
    %v10549 = vpack.c.bf16 %v10509, %v10505
    %v10550 = vpack.c.bf16 %v10510, %v10506
    %v10551 = vpack.c.bf16 %v10511, %v10507
    %v10552 = vpack.c.bf16 %v10516, %v10512
    %v10553 = vpack.c.bf16 %v10517, %v10513
    %v10554 = vpack.c.bf16 %v10518, %v10514
    %v10555 = vpack.c.bf16 %v10519, %v10515
    %v10556 = vpack.c.bf16 %v10524, %v10520
    %v10557 = vpack.c.bf16 %v10525, %v10521
    %v10558 = vpack.c.bf16 %v10526, %v10522
    %v10559 = vpack.c.bf16 %v10527, %v10523
    %v10560 = vld [vmem:[#allocation9] sm:$0xf]
    %v10561 = vld [vmem:[#allocation9 + $0x4] sm:$0xf]
    %v10562 = vld [vmem:[#allocation9 + $0x8] sm:$0xf]
    %v10563 = vld [vmem:[#allocation9 + $0xc] sm:$0xf]
    %v10564 = vld [vmem:[#allocation9 + $0x10] sm:$0xf]
    %v10565 = vld [vmem:[#allocation9 + $0x14] sm:$0xf]
    %v10566 = vld [vmem:[#allocation9 + $0x18] sm:$0xf]
    %v10567 = vld [vmem:[#allocation9 + $0x1c] sm:$0xf]
    %v10568 = vld [vmem:[#allocation9 + $0x20] sm:$0xf]
    %v10569 = vld [vmem:[#allocation9 + $0x24] sm:$0xf]
    %v10570 = vld [vmem:[#allocation9 + $0x28] sm:$0xf]
    %v10571 = vld [vmem:[#allocation9 + $0x2c] sm:$0xf]
    %v10572 = vld [vmem:[#allocation9 + $0x30] sm:$0xf]
    %v10573 = vld [vmem:[#allocation9 + $0x34] sm:$0xf]
    %v10574 = vld [vmem:[#allocation9 + $0x38] sm:$0xf]
    %v10575 = vld [vmem:[#allocation9 + $0x3c] sm:$0xf]
    %v10576 = vld [vmem:[#allocation9 + $0x40] sm:$0xf]
    %v10577 = vld [vmem:[#allocation9 + $0x44] sm:$0xf]
    %v10578 = vld [vmem:[#allocation9 + $0x48] sm:$0xf]
    %v10579 = vld [vmem:[#allocation9 + $0x4c] sm:$0xf]
    %v10580 = vld [vmem:[#allocation9 + $0x50] sm:$0xf]
    %v10581 = vld [vmem:[#allocation9 + $0x54] sm:$0xf]
    %v10582 = vld [vmem:[#allocation9 + $0x58] sm:$0xf]
    %v10583 = vld [vmem:[#allocation9 + $0x5c] sm:$0xf]
    %v10584 = vld [vmem:[#allocation9 + $0x60] sm:$0xf]
    %v10585 = vld [vmem:[#allocation9 + $0x64] sm:$0xf]
    %v10586 = vld [vmem:[#allocation9 + $0x68] sm:$0xf]
    %v10587 = vld [vmem:[#allocation9 + $0x6c] sm:$0xf]
    %v10588 = vld [vmem:[#allocation9 + $0x70] sm:$0xf]
    %v10589 = vld [vmem:[#allocation9 + $0x74] sm:$0xf]
    %v10590 = vld [vmem:[#allocation9 + $0x78] sm:$0xf]
    %v10591 = vld [vmem:[#allocation9 + $0x7c] sm:$0xf]
    %v10592 = vld [vmem:[#allocation9 + $0x80] sm:$0xf]
    %v10593 = vld [vmem:[#allocation9 + $0x84] sm:$0xf]
    %v10594 = vld [vmem:[#allocation9 + $0x88] sm:$0xf]
    %v10595 = vld [vmem:[#allocation9 + $0x8c] sm:$0xf]
    %v10596 = vld [vmem:[#allocation9 + $0x90] sm:$0xf]
    %v10597 = vld [vmem:[#allocation9 + $0x94] sm:$0xf]
    %v10598 = vld [vmem:[#allocation9 + $0x98] sm:$0xf]
    %v10599 = vld [vmem:[#allocation9 + $0x9c] sm:$0xf]
    %v10600 = vld [vmem:[#allocation9 + $0xa0] sm:$0xf]
    %v10601 = vld [vmem:[#allocation9 + $0xa4] sm:$0xf]
    %v10602 = vld [vmem:[#allocation9 + $0xa8] sm:$0xf]
    %v10603 = vld [vmem:[#allocation9 + $0xac] sm:$0xf]
    %v10604 = vld [vmem:[#allocation9 + $0xb0] sm:$0xf]
    %v10605 = vld [vmem:[#allocation9 + $0xb4] sm:$0xf]
    %v10606 = vld [vmem:[#allocation9 + $0xb8] sm:$0xf]
    %v10607 = vld [vmem:[#allocation9 + $0xbc] sm:$0xf]
    %v10608 = vld [vmem:[#allocation9 + $0xc0] sm:$0xf]
    %v10609 = vld [vmem:[#allocation9 + $0xc4] sm:$0xf]
    %v10610 = vld [vmem:[#allocation9 + $0xc8] sm:$0xf]
    %v10611 = vld [vmem:[#allocation9 + $0xcc] sm:$0xf]
    %v10612 = vld [vmem:[#allocation9 + $0xd0] sm:$0xf]
    %v10613 = vld [vmem:[#allocation9 + $0xd4] sm:$0xf]
    %v10614 = vld [vmem:[#allocation9 + $0xd8] sm:$0xf]
    %v10615 = vld [vmem:[#allocation9 + $0xdc] sm:$0xf]
    %v10616 = vld [vmem:[#allocation9 + $0xe0] sm:$0xf]
    %v10617 = vld [vmem:[#allocation9 + $0xe4] sm:$0xf]
    %v10618 = vld [vmem:[#allocation9 + $0xe8] sm:$0xf]
    %v10619 = vld [vmem:[#allocation9 + $0xec] sm:$0xf]
    %v10620 = vld [vmem:[#allocation9 + $0xf0] sm:$0xf]
    %v10621 = vld [vmem:[#allocation9 + $0xf4] sm:$0xf]
    %v10622 = vld [vmem:[#allocation9 + $0xf8] sm:$0xf]
    %v10623 = vld [vmem:[#allocation9 + $0xfc] sm:$0xf]
    %v10624 = vld [vmem:[#allocation10] sm:$0x1]
    %v10626 = vperm.slane %v10624, 0
    %v10692 = vunpack.c.l.b16 %v10560
    %v10693 = vunpack.c.l.b16 %v10561
    %v10694 = vunpack.c.l.b16 %v10562
    %v10695 = vunpack.c.l.b16 %v10563
    %v10696 = vunpack.c.l.b16 %v10564
    %v10697 = vunpack.c.l.b16 %v10565
    %v10698 = vunpack.c.l.b16 %v10566
    %v10699 = vunpack.c.l.b16 %v10567
    %v10700 = vunpack.c.l.b16 %v10568
    %v10701 = vunpack.c.l.b16 %v10569
    %v10702 = vunpack.c.l.b16 %v10570
    %v10703 = vunpack.c.l.b16 %v10571
    %v10704 = vunpack.c.l.b16 %v10572
    %v10705 = vunpack.c.l.b16 %v10573
    %v10706 = vunpack.c.l.b16 %v10574
    %v10707 = vunpack.c.l.b16 %v10575
    %v10708 = vunpack.c.l.b16 %v10576
    %v10709 = vunpack.c.l.b16 %v10577
    %v10710 = vunpack.c.l.b16 %v10578
    %v10711 = vunpack.c.l.b16 %v10579
    %v10712 = vunpack.c.l.b16 %v10580
    %v10713 = vunpack.c.l.b16 %v10581
    %v10714 = vunpack.c.l.b16 %v10582
    %v10715 = vunpack.c.l.b16 %v10583
    %v10716 = vunpack.c.l.b16 %v10584
    %v10717 = vunpack.c.l.b16 %v10585
    %v10718 = vunpack.c.l.b16 %v10586
    %v10719 = vunpack.c.l.b16 %v10587
    %v10720 = vunpack.c.l.b16 %v10588
    %v10721 = vunpack.c.l.b16 %v10589
    %v10722 = vunpack.c.l.b16 %v10590
    %v10723 = vunpack.c.l.b16 %v10591
    %v10724 = vunpack.c.l.b16 %v10592
    %v10725 = vunpack.c.l.b16 %v10593
    %v10726 = vunpack.c.l.b16 %v10594
    %v10727 = vunpack.c.l.b16 %v10595
    %v10728 = vunpack.c.l.b16 %v10596
    %v10729 = vunpack.c.l.b16 %v10597
    %v10730 = vunpack.c.l.b16 %v10598
    %v10731 = vunpack.c.l.b16 %v10599
    %v10732 = vunpack.c.l.b16 %v10600
    %v10733 = vunpack.c.l.b16 %v10601
    %v10734 = vunpack.c.l.b16 %v10602
    %v10735 = vunpack.c.l.b16 %v10603
    %v10736 = vunpack.c.l.b16 %v10604
    %v10737 = vunpack.c.l.b16 %v10605
    %v10738 = vunpack.c.l.b16 %v10606
    %v10739 = vunpack.c.l.b16 %v10607
    %v10740 = vunpack.c.l.b16 %v10608
    %v10741 = vunpack.c.l.b16 %v10609
    %v10742 = vunpack.c.l.b16 %v10610
    %v10743 = vunpack.c.l.b16 %v10611
    %v10744 = vunpack.c.l.b16 %v10612
    %v10745 = vunpack.c.l.b16 %v10613
    %v10746 = vunpack.c.l.b16 %v10614
    %v10747 = vunpack.c.l.b16 %v10615
    %v10748 = vunpack.c.l.b16 %v10616
    %v10749 = vunpack.c.l.b16 %v10617
    %v10750 = vunpack.c.l.b16 %v10618
    %v10751 = vunpack.c.l.b16 %v10619
    %v10752 = vunpack.c.l.b16 %v10620
    %v10753 = vunpack.c.l.b16 %v10621
    %v10754 = vunpack.c.l.b16 %v10622
    %v10755 = vunpack.c.l.b16 %v10623
    %v10756 = vpack.c.b16 %v10693, %v10692
    %v10757 = vpack.c.b16 %v10695, %v10694
    %v10758 = vpack.c.b16 %v10697, %v10696
    %v10759 = vpack.c.b16 %v10699, %v10698
    %v10760 = vpack.c.b16 %v10701, %v10700
    %v10761 = vpack.c.b16 %v10703, %v10702
    %v10762 = vpack.c.b16 %v10705, %v10704
    %v10763 = vpack.c.b16 %v10707, %v10706
    %v10764 = vpack.c.b16 %v10709, %v10708
    %v10765 = vpack.c.b16 %v10711, %v10710
    %v10766 = vpack.c.b16 %v10713, %v10712
    %v10767 = vpack.c.b16 %v10715, %v10714
    %v10768 = vpack.c.b16 %v10717, %v10716
    %v10769 = vpack.c.b16 %v10719, %v10718
    %v10770 = vpack.c.b16 %v10721, %v10720
    %v10771 = vpack.c.b16 %v10723, %v10722
    %v10772 = vpack.c.b16 %v10725, %v10724
    %v10773 = vpack.c.b16 %v10727, %v10726
    %v10774 = vpack.c.b16 %v10729, %v10728
    %v10775 = vpack.c.b16 %v10731, %v10730
    %v10776 = vpack.c.b16 %v10733, %v10732
    %v10777 = vpack.c.b16 %v10735, %v10734
    %v10778 = vpack.c.b16 %v10737, %v10736
    %v10779 = vpack.c.b16 %v10739, %v10738
    %v10780 = vpack.c.b16 %v10741, %v10740
    %v10781 = vpack.c.b16 %v10743, %v10742
    %v10782 = vpack.c.b16 %v10745, %v10744
    %v10783 = vpack.c.b16 %v10747, %v10746
    %v10784 = vpack.c.b16 %v10749, %v10748
    %v10785 = vpack.c.b16 %v10751, %v10750
    %v10786 = vpack.c.b16 %v10753, %v10752
    %v10787 = vpack.c.b16 %v10755, %v10754
    %10820 = vmatpush.bf16.msra.mxu0 %v10763
    %10821 = vmatpush.bf16.msra.mxu0 %v10762
    %10822 = vmatpush.bf16.msra.mxu0 %v10761
    %10823 = vmatpush.bf16.msra.mxu0 %v10760
    %10824 = vmatpush.bf16.msra.mxu0 %v10759
    %10825 = vmatpush.bf16.msra.mxu0 %v10758
    %10826 = vmatpush.bf16.msra.mxu0 %v10757
    %10827 = vmatpush.bf16.msra.mxu0 %v10756
    %10828 = vmatmul.bf16.gmra.mxu0 %v10528
    %v10829 = vpop.f32.mrf.mxu0
    %v10830 = vadd.f32 %v10626, %v10829
    %v10831 = vpop.f32.mrf.mxu0
    %v10832 = vadd.f32 %v10626, %v10831
    %10833 = vmatmul.bf16.gmra.mxu0 %v10532
    %v10834 = vpop.f32.mrf.mxu0
    %v10835 = vadd.f32 %v10626, %v10834
    %v10836 = vpop.f32.mrf.mxu0
    %v10837 = vadd.f32 %v10626, %v10836
    %10838 = vmatmul.bf16.gmra.mxu0 %v10536
    %v10839 = vpop.f32.mrf.mxu0
    %v10840 = vadd.f32 %v10626, %v10839
    %v10841 = vpop.f32.mrf.mxu0
    %v10842 = vadd.f32 %v10626, %v10841
    %10843 = vmatmul.bf16.gmra.mxu0 %v10540
    %v10844 = vpop.f32.mrf.mxu0
    %v10845 = vadd.f32 %v10626, %v10844
    %v10846 = vpop.f32.mrf.mxu0
    %v10847 = vadd.f32 %v10626, %v10846
    %10848 = vmatmul.bf16.gmra.mxu0 %v10544
    %v10849 = vpop.f32.mrf.mxu0
    %v10850 = vadd.f32 %v10626, %v10849
    %v10851 = vpop.f32.mrf.mxu0
    %v10852 = vadd.f32 %v10626, %v10851
    %10853 = vmatmul.bf16.gmra.mxu0 %v10548
    %v10854 = vpop.f32.mrf.mxu0
    %v10855 = vadd.f32 %v10626, %v10854
    %v10856 = vpop.f32.mrf.mxu0
    %v10857 = vadd.f32 %v10626, %v10856
    %10858 = vmatmul.bf16.gmra.mxu0 %v10552
    %v10859 = vpop.f32.mrf.mxu0
    %v10860 = vadd.f32 %v10626, %v10859
    %v10861 = vpop.f32.mrf.mxu0
    %v10862 = vadd.f32 %v10626, %v10861
    %10863 = vmatmul.bf16.gmra.mxu0 %v10556
    %v10864 = vpop.f32.mrf.mxu0
    %v10865 = vadd.f32 %v10626, %v10864
    %v10866 = vpop.f32.mrf.mxu0
    %v10867 = vadd.f32 %v10626, %v10866
    %10868 = vdwg.mxu0
    %10869 = vmatpush.bf16.msra.mxu0 %v10771
    %10870 = vmatpush.bf16.msra.mxu0 %v10770
    %10871 = vmatpush.bf16.msra.mxu0 %v10769
    %10872 = vmatpush.bf16.msra.mxu0 %v10768
    %10873 = vmatpush.bf16.msra.mxu0 %v10767
    %10874 = vmatpush.bf16.msra.mxu0 %v10766
    %10875 = vmatpush.bf16.msra.mxu0 %v10765
    %10876 = vmatpush.bf16.msra.mxu0 %v10764
    %10877 = vmatmul.bf16.gmra.mxu0 %v10529
    %v10878 = vpop.f32.mrf.mxu0
    %v10879 = vadd.f32 %v10830, %v10878
    %v10880 = vpop.f32.mrf.mxu0
    %v10881 = vadd.f32 %v10832, %v10880
    %10882 = vmatmul.bf16.gmra.mxu0 %v10533
    %v10883 = vpop.f32.mrf.mxu0
    %v10884 = vadd.f32 %v10835, %v10883
    %v10885 = vpop.f32.mrf.mxu0
    %v10886 = vadd.f32 %v10837, %v10885
    %10887 = vmatmul.bf16.gmra.mxu0 %v10537
    %v10888 = vpop.f32.mrf.mxu0
    %v10889 = vadd.f32 %v10840, %v10888
    %v10890 = vpop.f32.mrf.mxu0
    %v10891 = vadd.f32 %v10842, %v10890
    %10892 = vmatmul.bf16.gmra.mxu0 %v10541
    %v10893 = vpop.f32.mrf.mxu0
    %v10894 = vadd.f32 %v10845, %v10893
    %v10895 = vpop.f32.mrf.mxu0
    %v10896 = vadd.f32 %v10847, %v10895
    %10897 = vmatmul.bf16.gmra.mxu0 %v10545
    %v10898 = vpop.f32.mrf.mxu0
    %v10899 = vadd.f32 %v10850, %v10898
    %v10900 = vpop.f32.mrf.mxu0
    %v10901 = vadd.f32 %v10852, %v10900
    %10902 = vmatmul.bf16.gmra.mxu0 %v10549
    %v10903 = vpop.f32.mrf.mxu0
    %v10904 = vadd.f32 %v10855, %v10903
    %v10905 = vpop.f32.mrf.mxu0
    %v10906 = vadd.f32 %v10857, %v10905
    %10907 = vmatmul.bf16.gmra.mxu0 %v10553
    %v10908 = vpop.f32.mrf.mxu0
    %v10909 = vadd.f32 %v10860, %v10908
    %v10910 = vpop.f32.mrf.mxu0
    %v10911 = vadd.f32 %v10862, %v10910
    %10912 = vmatmul.bf16.gmra.mxu0 %v10557
    %v10913 = vpop.f32.mrf.mxu0
    %v10914 = vadd.f32 %v10865, %v10913
    %v10915 = vpop.f32.mrf.mxu0
    %v10916 = vadd.f32 %v10867, %v10915
    %10917 = vdwg.mxu0
    %10918 = vmatpush.bf16.msra.mxu0 %v10779
    %10919 = vmatpush.bf16.msra.mxu0 %v10778
    %10920 = vmatpush.bf16.msra.mxu0 %v10777
    %10921 = vmatpush.bf16.msra.mxu0 %v10776
    %10922 = vmatpush.bf16.msra.mxu0 %v10775
    %10923 = vmatpush.bf16.msra.mxu0 %v10774
    %10924 = vmatpush.bf16.msra.mxu0 %v10773
    %10925 = vmatpush.bf16.msra.mxu0 %v10772
    %10926 = vmatmul.bf16.gmra.mxu0 %v10530
    %v10927 = vpop.f32.mrf.mxu0
    %v10928 = vadd.f32 %v10879, %v10927
    %v10929 = vpop.f32.mrf.mxu0
    %v10930 = vadd.f32 %v10881, %v10929
    %10931 = vmatmul.bf16.gmra.mxu0 %v10534
    %v10932 = vpop.f32.mrf.mxu0
    %v10933 = vadd.f32 %v10884, %v10932
    %v10934 = vpop.f32.mrf.mxu0
    %v10935 = vadd.f32 %v10886, %v10934
    %10936 = vmatmul.bf16.gmra.mxu0 %v10538
    %v10937 = vpop.f32.mrf.mxu0
    %v10938 = vadd.f32 %v10889, %v10937
    %v10939 = vpop.f32.mrf.mxu0
    %v10940 = vadd.f32 %v10891, %v10939
    %10941 = vmatmul.bf16.gmra.mxu0 %v10542
    %v10942 = vpop.f32.mrf.mxu0
    %v10943 = vadd.f32 %v10894, %v10942
    %v10944 = vpop.f32.mrf.mxu0
    %v10945 = vadd.f32 %v10896, %v10944
    %10946 = vmatmul.bf16.gmra.mxu0 %v10546
    %v10947 = vpop.f32.mrf.mxu0
    %v10948 = vadd.f32 %v10899, %v10947
    %v10949 = vpop.f32.mrf.mxu0
    %v10950 = vadd.f32 %v10901, %v10949
    %10951 = vmatmul.bf16.gmra.mxu0 %v10550
    %v10952 = vpop.f32.mrf.mxu0
    %v10953 = vadd.f32 %v10904, %v10952
    %v10954 = vpop.f32.mrf.mxu0
    %v10955 = vadd.f32 %v10906, %v10954
    %10956 = vmatmul.bf16.gmra.mxu0 %v10554
    %v10957 = vpop.f32.mrf.mxu0
    %v10958 = vadd.f32 %v10909, %v10957
    %v10959 = vpop.f32.mrf.mxu0
    %v10960 = vadd.f32 %v10911, %v10959
    %10961 = vmatmul.bf16.gmra.mxu0 %v10558
    %v10962 = vpop.f32.mrf.mxu0
    %v10963 = vadd.f32 %v10914, %v10962
    %v10964 = vpop.f32.mrf.mxu0
    %v10965 = vadd.f32 %v10916, %v10964
    %10966 = vdwg.mxu0
    %10967 = vmatpush.bf16.msra.mxu0 %v10787
    %10968 = vmatpush.bf16.msra.mxu0 %v10786
    %10969 = vmatpush.bf16.msra.mxu0 %v10785
    %10970 = vmatpush.bf16.msra.mxu0 %v10784
    %10971 = vmatpush.bf16.msra.mxu0 %v10783
    %10972 = vmatpush.bf16.msra.mxu0 %v10782
    %10973 = vmatpush.bf16.msra.mxu0 %v10781
    %10974 = vmatpush.bf16.msra.mxu0 %v10780
    %10975 = vmatmul.bf16.gmra.mxu0 %v10531
    %v10976 = vpop.f32.mrf.mxu0
    %v10977 = vadd.f32 %v10928, %v10976
    %v10978 = vpop.f32.mrf.mxu0
    %v10979 = vadd.f32 %v10930, %v10978
    %10980 = vmatmul.bf16.gmra.mxu0 %v10535
    %v10981 = vpop.f32.mrf.mxu0
    %v10982 = vadd.f32 %v10933, %v10981
    %v10983 = vpop.f32.mrf.mxu0
    %v10984 = vadd.f32 %v10935, %v10983
    %10985 = vmatmul.bf16.gmra.mxu0 %v10539
    %v10986 = vpop.f32.mrf.mxu0
    %v10987 = vadd.f32 %v10938, %v10986
    %v10988 = vpop.f32.mrf.mxu0
    %v10989 = vadd.f32 %v10940, %v10988
    %10990 = vmatmul.bf16.gmra.mxu0 %v10543
    %v10991 = vpop.f32.mrf.mxu0
    %v10992 = vadd.f32 %v10943, %v10991
    %v10993 = vpop.f32.mrf.mxu0
    %v10994 = vadd.f32 %v10945, %v10993
    %10995 = vmatmul.bf16.gmra.mxu0 %v10547
    %v10996 = vpop.f32.mrf.mxu0
    %v10997 = vadd.f32 %v10948, %v10996
    %v10998 = vpop.f32.mrf.mxu0
    %v10999 = vadd.f32 %v10950, %v10998
    %11000 = vmatmul.bf16.gmra.mxu0 %v10551
    %v11001 = vpop.f32.mrf.mxu0
    %v11002 = vadd.f32 %v10953, %v11001
    %v11003 = vpop.f32.mrf.mxu0
    %v11004 = vadd.f32 %v10955, %v11003
    %11005 = vmatmul.bf16.gmra.mxu0 %v10555
    %v11006 = vpop.f32.mrf.mxu0
    %v11007 = vadd.f32 %v10958, %v11006
    %v11008 = vpop.f32.mrf.mxu0
    %v11009 = vadd.f32 %v10960, %v11008
    %11010 = vmatmul.bf16.gmra.mxu0 %v10559
    %v11011 = vpop.f32.mrf.mxu0
    %v11012 = vadd.f32 %v10963, %v11011
    %v11013 = vpop.f32.mrf.mxu0
    %v11014 = vadd.f32 %v10965, %v11013
    %11015 = vdwg.mxu0
    %v11016 = vmax.f32 %v10977, 0.0
    %v11017 = vmax.f32 %v10979, 0.0
    %v11018 = vmax.f32 %v10982, 0.0
    %v11019 = vmax.f32 %v10984, 0.0
    %v11020 = vmax.f32 %v10987, 0.0
    %v11021 = vmax.f32 %v10989, 0.0
    %v11022 = vmax.f32 %v10992, 0.0
    %v11023 = vmax.f32 %v10994, 0.0
    %v11024 = vmax.f32 %v10997, 0.0
    %v11025 = vmax.f32 %v10999, 0.0
    %v11026 = vmax.f32 %v11002, 0.0
    %v11027 = vmax.f32 %v11004, 0.0
    %v11028 = vmax.f32 %v11007, 0.0
    %v11029 = vmax.f32 %v11009, 0.0
    %v11030 = vmax.f32 %v11012, 0.0
    %v11031 = vmax.f32 %v11014, 0.0
    %v11032 = vpack.c.bf16 %v11017, %v11016
    %v11033 = vpack.c.bf16 %v11019, %v11018
    %v11034 = vpack.c.bf16 %v11021, %v11020
    %v11035 = vpack.c.bf16 %v11023, %v11022
    %v11036 = vpack.c.bf16 %v11025, %v11024
    %v11037 = vpack.c.bf16 %v11027, %v11026
    %v11038 = vpack.c.bf16 %v11029, %v11028
    %v11039 = vpack.c.bf16 %v11031, %v11030
    %v11040 = vld [vmem:[#allocation12] sm:$0xf]
    %v11041 = vld [vmem:[#allocation12 + $0x4] sm:$0xf]
    %v11042 = vld [vmem:[#allocation12 + $0x8] sm:$0xf]
    %v11043 = vld [vmem:[#allocation12 + $0xc] sm:$0xf]
    %v11044 = vld [vmem:[#allocation12 + $0x10] sm:$0xf]
    %v11045 = vld [vmem:[#allocation12 + $0x14] sm:$0xf]
    %v11046 = vld [vmem:[#allocation12 + $0x18] sm:$0xf]
    %v11047 = vld [vmem:[#allocation12 + $0x1c] sm:$0xf]
    %v11048 = vld [vmem:[#allocation12 + $0x20] sm:$0xf]
    %v11049 = vld [vmem:[#allocation12 + $0x24] sm:$0xf]
    %v11050 = vld [vmem:[#allocation12 + $0x28] sm:$0xf]
    %v11051 = vld [vmem:[#allocation12 + $0x2c] sm:$0xf]
    %v11052 = vld [vmem:[#allocation12 + $0x30] sm:$0xf]
    %v11053 = vld [vmem:[#allocation12 + $0x34] sm:$0xf]
    %v11054 = vld [vmem:[#allocation12 + $0x38] sm:$0xf]
    %v11055 = vld [vmem:[#allocation12 + $0x3c] sm:$0xf]
    %v11056 = vld [vmem:[#allocation13] sm:$0x1]
    %v11058 = vperm.slane %v11056, 0
    %v11076 = vunpack.c.l.b16 %v11040
    %v11077 = vunpack.c.l.b16 %v11041
    %v11078 = vunpack.c.l.b16 %v11042
    %v11079 = vunpack.c.l.b16 %v11043
    %v11080 = vunpack.c.l.b16 %v11044
    %v11081 = vunpack.c.l.b16 %v11045
    %v11082 = vunpack.c.l.b16 %v11046
    %v11083 = vunpack.c.l.b16 %v11047
    %v11084 = vunpack.c.l.b16 %v11048
    %v11085 = vunpack.c.l.b16 %v11049
    %v11086 = vunpack.c.l.b16 %v11050
    %v11087 = vunpack.c.l.b16 %v11051
    %v11088 = vunpack.c.l.b16 %v11052
    %v11089 = vunpack.c.l.b16 %v11053
    %v11090 = vunpack.c.l.b16 %v11054
    %v11091 = vunpack.c.l.b16 %v11055
    %v11092 = vpack.c.b16 %v11077, %v11076
    %v11093 = vpack.c.b16 %v11079, %v11078
    %v11094 = vpack.c.b16 %v11081, %v11080
    %v11095 = vpack.c.b16 %v11083, %v11082
    %v11096 = vpack.c.b16 %v11085, %v11084
    %v11097 = vpack.c.b16 %v11087, %v11086
    %v11098 = vpack.c.b16 %v11089, %v11088
    %v11099 = vpack.c.b16 %v11091, %v11090
    %11108 = vmatpush.bf16.msra.mxu0 %v11099
    %11109 = vmatpush.bf16.msra.mxu0 %v11098
    %11110 = vmatpush.bf16.msra.mxu0 %v11097
    %11111 = vmatpush.bf16.msra.mxu0 %v11096
    %11112 = vmatpush.bf16.msra.mxu0 %v11095
    %11113 = vmatpush.bf16.msra.mxu0 %v11094
    %11114 = vmatpush.bf16.msra.mxu0 %v11093
    %11115 = vmatpush.bf16.msra.mxu0 %v11092
    %11116 = vmatmul.bf16.gmra.mxu0 %v11032
    %v11117 = vpop.f32.mrf.mxu0
    %v11118 = vadd.f32 %v11058, %v11117
    %v11119 = vpop.f32.mrf.mxu0
    %v11120 = vadd.f32 %v11058, %v11119
    %11121 = vmatmul.bf16.gmra.mxu0 %v11033
    %v11122 = vpop.f32.mrf.mxu0
    %v11123 = vadd.f32 %v11058, %v11122
    %v11124 = vpop.f32.mrf.mxu0
    %v11125 = vadd.f32 %v11058, %v11124
    %11126 = vmatmul.bf16.gmra.mxu0 %v11034
    %v11127 = vpop.f32.mrf.mxu0
    %v11128 = vadd.f32 %v11058, %v11127
    %v11129 = vpop.f32.mrf.mxu0
    %v11130 = vadd.f32 %v11058, %v11129
    %11131 = vmatmul.bf16.gmra.mxu0 %v11035
    %v11132 = vpop.f32.mrf.mxu0
    %v11133 = vadd.f32 %v11058, %v11132
    %v11134 = vpop.f32.mrf.mxu0
    %v11135 = vadd.f32 %v11058, %v11134
    %11136 = vmatmul.bf16.gmra.mxu0 %v11036
    %v11137 = vpop.f32.mrf.mxu0
    %v11138 = vadd.f32 %v11058, %v11137
    %v11139 = vpop.f32.mrf.mxu0
    %v11140 = vadd.f32 %v11058, %v11139
    %11141 = vmatmul.bf16.gmra.mxu0 %v11037
    %v11142 = vpop.f32.mrf.mxu0
    %v11143 = vadd.f32 %v11058, %v11142
    %v11144 = vpop.f32.mrf.mxu0
    %v11145 = vadd.f32 %v11058, %v11144
    %11146 = vmatmul.bf16.gmra.mxu0 %v11038
    %v11147 = vpop.f32.mrf.mxu0
    %v11148 = vadd.f32 %v11058, %v11147
    %v11149 = vpop.f32.mrf.mxu0
    %v11150 = vadd.f32 %v11058, %v11149
    %11151 = vmatmul.bf16.gmra.mxu0 %v11039
    %v11152 = vpop.f32.mrf.mxu0
    %v11153 = vadd.f32 %v11058, %v11152
    %v11154 = vpop.f32.mrf.mxu0
    %v11155 = vadd.f32 %v11058, %v11154
    %11156 = vdwg.mxu0
    %v11157 = vmax.f32 %v11118, -30.0
    %v11158 = vmax.f32 %v11120, -30.0
    %v11159 = vmax.f32 %v11123, -30.0
    %v11160 = vmax.f32 %v11125, -30.0
    %v11161 = vmax.f32 %v11128, -30.0
    %v11162 = vmax.f32 %v11130, -30.0
    %v11163 = vmax.f32 %v11133, -30.0
    %v11164 = vmax.f32 %v11135, -30.0
    %v11165 = vmax.f32 %v11138, -30.0
    %v11166 = vmax.f32 %v11140, -30.0
    %v11167 = vmax.f32 %v11143, -30.0
    %v11168 = vmax.f32 %v11145, -30.0
    %v11169 = vmax.f32 %v11148, -30.0
    %v11170 = vmax.f32 %v11150, -30.0
    %v11171 = vmax.f32 %v11153, -30.0
    %v11172 = vmax.f32 %v11155, -30.0
    %v11173 = vmin.f32 %v11157, 30.0
    %v11174 = vmin.f32 %v11158, 30.0
    %v11175 = vmin.f32 %v11159, 30.0
    %v11176 = vmin.f32 %v11160, 30.0
    %v11177 = vmin.f32 %v11161, 30.0
    %v11178 = vmin.f32 %v11162, 30.0
    %v11179 = vmin.f32 %v11163, 30.0
    %v11180 = vmin.f32 %v11164, 30.0
    %v11181 = vmin.f32 %v11165, 30.0
    %v11182 = vmin.f32 %v11166, 30.0
    %v11183 = vmin.f32 %v11167, 30.0
    %v11184 = vmin.f32 %v11168, 30.0
    %v11185 = vmin.f32 %v11169, 30.0
    %v11186 = vmin.f32 %v11170, 30.0
    %v11187 = vmin.f32 %v11171, 30.0
    %v11188 = vmin.f32 %v11172, 30.0
    %v11189 = vsub.f32 0.0, %v11173
    %v11190 = vsub.f32 0.0, %v11174
    %v11191 = vsub.f32 0.0, %v11175
    %v11192 = vsub.f32 0.0, %v11176
    %v11193 = vsub.f32 0.0, %v11177
    %v11194 = vsub.f32 0.0, %v11178
    %v11195 = vsub.f32 0.0, %v11179
    %v11196 = vsub.f32 0.0, %v11180
    %v11197 = vsub.f32 0.0, %v11181
    %v11198 = vsub.f32 0.0, %v11182
    %v11199 = vsub.f32 0.0, %v11183
    %v11200 = vsub.f32 0.0, %v11184
    %v11201 = vsub.f32 0.0, %v11185
    %v11202 = vsub.f32 0.0, %v11186
    %v11203 = vsub.f32 0.0, %v11187
    %v11204 = vsub.f32 0.0, %v11188
    %v11205 = vmul.f32 %v11189, 1.442695
    %v11206 = vpow.pop %v11205
    %v11207 = vmul.f32 %v11190, 1.442695
    %v11208 = vpow.pop %v11207
    %v11209 = vmul.f32 %v11191, 1.442695
    %v11210 = vpow.pop %v11209
    %v11211 = vmul.f32 %v11192, 1.442695
    %v11212 = vpow.pop %v11211
    %v11213 = vmul.f32 %v11193, 1.442695
    %v11214 = vpow.pop %v11213
    %v11215 = vmul.f32 %v11194, 1.442695
    %v11216 = vpow.pop %v11215
    %v11217 = vmul.f32 %v11195, 1.442695
    %v11218 = vpow.pop %v11217
    %v11219 = vmul.f32 %v11196, 1.442695
    %v11220 = vpow.pop %v11219
    %v11221 = vmul.f32 %v11197, 1.442695
    %v11222 = vpow.pop %v11221
    %v11223 = vmul.f32 %v11198, 1.442695
    %v11224 = vpow.pop %v11223
    %v11225 = vmul.f32 %v11199, 1.442695
    %v11226 = vpow.pop %v11225
    %v11227 = vmul.f32 %v11200, 1.442695
    %v11228 = vpow.pop %v11227
    %v11229 = vmul.f32 %v11201, 1.442695
    %v11230 = vpow.pop %v11229
    %v11231 = vmul.f32 %v11202, 1.442695
    %v11232 = vpow.pop %v11231
    %v11233 = vmul.f32 %v11203, 1.442695
    %v11234 = vpow.pop %v11233
    %v11235 = vmul.f32 %v11204, 1.442695
    %v11236 = vpow.pop %v11235
    %v11237 = vadd.f32 %v11206, 1.0
    %v11238 = vadd.f32 %v11208, 1.0
    %v11239 = vadd.f32 %v11210, 1.0
    %v11240 = vadd.f32 %v11212, 1.0
    %v11241 = vadd.f32 %v11214, 1.0
    %v11242 = vadd.f32 %v11216, 1.0
    %v11243 = vadd.f32 %v11218, 1.0
    %v11244 = vadd.f32 %v11220, 1.0
    %v11245 = vadd.f32 %v11222, 1.0
    %v11246 = vadd.f32 %v11224, 1.0
    %v11247 = vadd.f32 %v11226, 1.0
    %v11248 = vadd.f32 %v11228, 1.0
    %v11249 = vadd.f32 %v11230, 1.0
    %v11250 = vadd.f32 %v11232, 1.0
    %v11251 = vadd.f32 %v11234, 1.0
    %v11252 = vadd.f32 %v11236, 1.0
    %v11253 = vrcp.pop %v11237
    %v11254 = vrcp.pop %v11238
    %v11255 = vrcp.pop %v11239
    %v11256 = vrcp.pop %v11240
    %v11257 = vrcp.pop %v11241
    %v11258 = vrcp.pop %v11242
    %v11259 = vrcp.pop %v11243
    %v11260 = vrcp.pop %v11244
    %v11261 = vrcp.pop %v11245
    %v11262 = vrcp.pop %v11246
    %v11263 = vrcp.pop %v11247
    %v11264 = vrcp.pop %v11248
    %v11265 = vrcp.pop %v11249
    %v11266 = vrcp.pop %v11250
    %v11267 = vrcp.pop %v11251
    %v11268 = vrcp.pop %v11252
    %11269 = vst [vmem:[%s9] sm:$0xff] %v11253
    %11270 = vst [vmem:[%s9 + $0x8] sm:$0xff] %v11254
    %11271 = vst [vmem:[%s9 + $0x10] sm:$0xff] %v11255
    %11272 = vst [vmem:[%s9 + $0x18] sm:$0xff] %v11256
    %11273 = vst [vmem:[%s9 + $0x20] sm:$0xff] %v11257
    %11274 = vst [vmem:[%s9 + $0x28] sm:$0xff] %v11258
    %11275 = vst [vmem:[%s9 + $0x30] sm:$0xff] %v11259
    %11276 = vst [vmem:[%s9 + $0x38] sm:$0xff] %v11260
    %11277 = vst [vmem:[%s9 + $0x40] sm:$0xff] %v11261
    %11278 = vst [vmem:[%s9 + $0x48] sm:$0xff] %v11262
    %11279 = vst [vmem:[%s9 + $0x50] sm:$0xff] %v11263
    %11280 = vst [vmem:[%s9 + $0x58] sm:$0xff] %v11264
    %11281 = vst [vmem:[%s9 + $0x60] sm:$0xff] %v11265
    %11282 = vst [vmem:[%s9 + $0x68] sm:$0xff] %v11266
    %11283 = vst [vmem:[%s9 + $0x70] sm:$0xff] %v11267
    %11284 = vst [vmem:[%s9 + $0x78] sm:$0xff] %v11268
    // Predicated region
    $region70: #{_net_forward_impl.1} parent=1 // pred_check
      _
    $region71: #{_net_forward_impl.1} parent=1 // pred_check_branch
      %11286 = sbr.rel (0) target = $region73
    $region72: #{_net_forward_impl.1} parent=1 // pred_region
      _
    $region73: #{_net_forward_impl.1} parent=1 // pred_fallthru
      _
    // Predicated region
    $region74: #{_net_forward_impl.1} parent=1 // pred_check
      _
    $region75: #{_net_forward_impl.1} parent=1 // pred_check_branch
      %11288 = sbr.rel (0) target = $region77
    $region76: #{_net_forward_impl.1} parent=1 // pred_region
      _
    $region77: #{_net_forward_impl.1} parent=1 // pred_fallthru
      _
    %11289 = vsyncpa [#allocation3], 1
    %11290 = vsyncpa [#allocation5], 1
    %11291 = vsyncpa [#allocation8], 1
    %11292 = vsyncpa [#allocation11], 1
    %11293 = vsyncpa [#allocation14], 1

</llo_original>
